<compile_context>
chip_gen: v6e
topology: v6e:2x2x1
jax: 0.10.0
libtpu: 0.0.40
codegen_flags: <defaults>
</compile_context>

<pallas_src>
import numpy as np
import jax
import jax.numpy as jnp
from jax.experimental import pallas as pl
from jax.experimental.pallas import tpu as pltpu

FEAT = 256          # self._feature_size
HID = 256
BN_EPS = 1e-5
RESNET_SIZE = 4

# ---- packed parameter layout (built in prepare_icm_params) -----------------
# w_sq_early [7, 256, 256] bf16 : feature L2,L3 ; inverse L2,L3 ; fm1 L2..L4
E_F2, E_F3, E_I2, E_I3, E_FM1 = 0, 1, 2, 3, 4
N_EARLY = 7
# w_res [11, 256, 256] bf16 (HBM, manual DMA):
#   block 0      : [wB0 @ wA1_x, wB1]
#   block i=1..3 : [wA_{2i}_x, wB_{2i} @ wA_{2i+1}_x, wB_{2i+1}]
N_RES_LATE = 3 * RESNET_SIZE - 1          # 11
# w_fm2 [5, 256, 256] bf16 (HBM, manual DMA): fm2 L1 x-half, L2..L5
N_FM2_LATE = 5
# w_act [256, (2R+1)*256] bf16 : action halves of residual-A L1s + fm2 L1
ACT_COLS = (2 * RESNET_SIZE + 1) * FEAT   # 2304
# biases [26, 256] f32
B_F1, B_F2, B_F3 = 0, 1, 2
B_I3 = 3
B_FM1 = 4            # rows 4..8  : fm1 L1..L5 biases (row 8 = b_L5)
B_RA0F = 9           # bA_0 + b_L5 @ wA0_x      (block-0 stage-1 fused bias)
B_RA = 10            # rows 10..12: bA_2, bA_4, bA_6 (blocks 1..3 stage-1)
B_RFUSE = 13         # rows 13..16: bA_{2i+1} + bB_{2i} @ wA_{2i+1}_x, i=0..3
B_RB = 17            # rows 17..20: bB_1, bB_3, bB_5, bB_7
B_FM2 = 21           # rows 21..25: fm2 L1..L5 biases
N_BIAS = 26

# raw-parameter flat layout (PyTorch order, weights [in,out]):
#   0..5   : feature        (3 Linear)
#   6..11  : inverse_model  (3 Linear; BN has gamma=1, beta=0 -> no params)
#   12..21 : forward_model1 (5 Linear)
#   22..31 : forward_model2 (5 Linear)
#   32..35 : residual stacks: wA (2R,512,256), bA (2R,256), wB (2R,256,256), bB (2R,256)
N_PARAMS = 36
_FM1_BASE = 12
_FM2_BASE = 22
_RES_BASE = 32


def _silu(x):
    # x * sigmoid(x); sigmoid via the numerically-stable tanh form (one EUP op).
    return x * (0.5 * (jnp.tanh(0.5 * x) + 1.0))


def _bn_train(x):
    # nn.BatchNorm1d in training mode with default affine init (gamma=1, beta=0).
    # TODO(synk): running_mean/running_var buffer updates are not modeled (pure fwd).
    m = jnp.mean(x, axis=0, keepdims=True)
    xc = x - m
    v = jnp.mean(xc * xc, axis=0, keepdims=True)
    return xc * jax.lax.rsqrt(v + BN_EPS)


def icm_kernel(xs_ref, act_ref, w_f1_ref, w_cat_ref, w_sqe_ref, w_l5_ref,
               w_act_ref, b_ref, w_res_hbm, w_fm2_hbm,
               ens_ref, pred_ns_ref, pred_act_ref,
               w_res_vmem, w_fm2_vmem, dma_sem):
    B = ens_ref.shape[0]

    # Kick off the late-weight DMAs immediately, in usage order (residual
    # weights first, forward_model2 second) so neither queues behind data it
    # doesn't need; both overlap the whole early phase + the wide act matmul.
    cp_res = pltpu.make_async_copy(w_res_hbm, w_res_vmem, dma_sem.at[0])
    cp_fm2 = pltpu.make_async_copy(w_fm2_hbm, w_fm2_vmem, dma_sem.at[1])
    cp_res.start()
    cp_fm2.start()

    def dot(x, w):
        # bf16 operands, f32 accumulation on the MXU.
        return jnp.dot(x.astype(jnp.bfloat16), w,
                       preferred_element_type=jnp.float32)

    def bias(i):
        return b_ref[i:i + 1, :]          # [1, 256] f32, broadcasts over batch

    # ---- hoisted action contributions: depend only on `action`, computed
    # first with one wide matmul (N = 2304 keeps both MXUs busy) -------------
    act_c = dot(act_ref[...], w_act_ref[...])           # [B, (2R+1)*256] f32

    # ---- feature trunk, run once on the stacked [2B, in] input -------------
    h = _silu(dot(xs_ref[...], w_f1_ref[...]) + bias(B_F1))
    h = _silu(dot(h, w_sqe_ref[E_F2]) + bias(B_F2))
    feat = dot(h, w_sqe_ref[E_F3]) + bias(B_F3)         # [2B, 256] f32
    es = feat[:B]                                       # encoded_state
    ens = feat[B:]                                      # encoded_next_state

    # ---- fused consumers of cat([es, ens]): inverse L1 + forward_model1 L1 --
    # hc[:, :256] == cat @ W_inverse_L1 ; hc[:, 256:] == cat @ W_fm1_L1
    # (kept as two accumulating dots: maps to MRB in-place accumulate on v7x)
    hc = dot(es, w_cat_ref[0]) + dot(ens, w_cat_ref[1])   # [B, 512] f32

    # inverse model: Linear -> BN -> SiLU -> Linear -> BN -> SiLU -> Linear
    # (L1/L2 biases dropped: a per-feature constant is exactly cancelled by
    # the BatchNorm mean subtraction with gamma=1, beta=0)
    h = _silu(_bn_train(hc[:, :HID]))
    h = _silu(_bn_train(dot(h, w_sqe_ref[E_I2])))
    pred_action = dot(h, w_sqe_ref[E_I3]) + bias(B_I3)

    # forward_model1 L1..L4 (SiLU after each)
    h = _silu(hc[:, HID:] + bias(B_FM1))
    for k in range(1, 4):
        h = _silu(dot(h, w_sqe_ref[E_FM1 + k - 1]) + bias(B_FM1 + k))
    # widened L5: one push produces both x and x's projection into residual
    # block 0's first Linear ( [W_L5 | W_L5 @ wA0_x] ).
    wide = dot(h, w_l5_ref[...])                        # [B, 512] f32
    x = wide[:, :HID] + bias(B_FM1 + 4)                 # fm1 output
    xw0 = wide[:, HID:]                                 # (x - b_L5) @ wA0_x

    # ---- residual stack: 3 serial matmuls per block (wB_j @ wA_k_x fused
    # offline; action halves precomputed in act_c) ----------------------------
    cp_res.wait()
    wl = w_res_vmem

    # block 0 (its stage-1 matmul was folded into the widened fm1 L5)
    t = _silu(xw0 + act_c[:, 0:HID] + bias(B_RA0F))
    u = _silu(dot(t, wl[0]) + act_c[:, HID:2 * HID] + bias(B_RFUSE))
    x = dot(u, wl[1]) + bias(B_RB) + x
    idx = 2
    for i in range(1, RESNET_SIZE):
        j = 2 * i
        k = j + 1
        t = _silu(dot(x, wl[idx])
                  + act_c[:, j * HID:(j + 1) * HID] + bias(B_RA + i - 1))
        u = _silu(dot(t, wl[idx + 1])
                  + act_c[:, k * HID:(k + 1) * HID] + bias(B_RFUSE + i))
        x = dot(u, wl[idx + 2]) + bias(B_RB + i) + x
        idx += 3

    # forward_model2 (5 Linear, SiLU between; L1 input = cat([x, action]))
    cp_fm2.wait()
    wf = w_fm2_vmem
    h = _silu(dot(x, wf[0])
              + act_c[:, 2 * RESNET_SIZE * HID:] + bias(B_FM2))
    for k in range(1, 5):
        h = dot(h, wf[k]) + bias(B_FM2 + k)
        if k < 4:
            h = _silu(h)

    ens_ref[...] = ens
    pred_ns_ref[...] = h
    pred_act_ref[...] = pred_action


def prepare_icm_params(p):
    """Pack / fuse / bf16-cast the raw [in,out] f32 params for the kernel."""
    bf16 = jnp.bfloat16
    wA, bA, wB, bB = p[_RES_BASE], p[_RES_BASE + 1], p[_RES_BASE + 2], p[_RES_BASE + 3]
    wA_x = wA[:, :FEAT, :]                 # [8, 256, 256]  x-halves
    wA_a = wA[:, FEAT:, :]                 # [8, 256, 256]  action-halves

    w_f1 = p[0].astype(bf16)                                        # [in, 256]
    # inverse L1 (p[6]) and fm1 L1 (p[12]) fused along N, split into es / ens
    # K-halves so the kernel never materializes cat([es, ens]).
    w_cat = jnp.stack([
        jnp.concatenate([p[6][:FEAT], p[12][:FEAT]], axis=1),
        jnp.concatenate([p[6][FEAT:], p[12][FEAT:]], axis=1),
    ]).astype(bf16)                                                 # [2,256,512]
    w_sq_early = jnp.stack(
        [p[2], p[4], p[8], p[10], p[14], p[16], p[18]]).astype(bf16)  # [7,256,256]

    # widened fm1 L5: [W_L5 | W_L5 @ wA0_x]  (offline f32 product, then bf16)
    w_l5 = p[20]
    b_l5 = p[21]
    w_fm1_l5 = jnp.concatenate([w_l5, w_l5 @ wA_x[0]], axis=1).astype(bf16)  # [256,512]

    # hoisted action weights: residual-A act-halves then fm2 L1 act-half.
    w_act = jnp.concatenate([
        jnp.transpose(wA_a, (1, 0, 2)).reshape(FEAT, -1),
        p[_FM2_BASE][FEAT:],
    ], axis=1).astype(bf16)                                         # [256, 2304]

    # late weights (HBM, manual DMA). Residual part: each block's wB_j is
    # pre-multiplied (f32) with the next half-block's wA_k x-half.
    res = []
    for i in range(RESNET_SIZE):
        j, k = 2 * i, 2 * i + 1
        if i > 0:
            res.append(wA_x[j])
        res.append(wB[j] @ wA_x[k])        # fused  (removes one serial matmul)
        res.append(wB[k])
    w_res = jnp.stack(res).astype(bf16)                             # [11,256,256]
    w_fm2 = jnp.stack([p[22][:FEAT], p[24], p[26], p[28], p[30]]).astype(bf16)  # [5,256,256]

    rows = [p[1], p[3], p[5],                        # feature L1..L3
            p[11],                                   # inverse L3
            p[13], p[15], p[17], p[19], b_l5,        # fm1 L1..L5
            bA[0] + b_l5 @ wA_x[0]]                  # block-0 stage-1 fused bias
    rows += [bA[2 * i] for i in range(1, RESNET_SIZE)]
    rows += [bA[2 * i + 1] + bB[2 * i] @ wA_x[2 * i + 1] for i in range(RESNET_SIZE)]
    rows += [bB[2 * i + 1] for i in range(RESNET_SIZE)]
    rows += [p[23], p[25], p[27], p[29], p[31]]      # fm2 L1..L5
    biases = jnp.stack(rows).astype(jnp.float32)                    # [26, 256]

    assert biases.shape == (N_BIAS, FEAT)
    assert w_sq_early.shape[0] == N_EARLY
    assert w_res.shape == (N_RES_LATE, HID, HID)
    assert w_fm2.shape == (N_FM2_LATE, HID, HID)
    assert w_act.shape == (FEAT, ACT_COLS)
    return w_f1, w_cat, w_sq_early, w_fm1_l5, w_act, biases, w_res, w_fm2


def icm_forward(state, next_state, action, raw_params, output_size=FEAT):
    assert output_size == FEAT, "module only type-checks for output_size == 256"
    B = state.shape[0]
    # f32 sublane tile: keeps feat[:B]/feat[B:] and BN batch reductions aligned.
    assert B % 8 == 0, "batch must be a multiple of 8"
    xs = jnp.concatenate([state, next_state], axis=0)               # [2B, in]
    packed = prepare_icm_params(raw_params)
    vmem = pl.BlockSpec(memory_space=pltpu.MemorySpace.VMEM)
    hbm = pl.BlockSpec(memory_space=pl.ANY)
    out_shape = (
        jax.ShapeDtypeStruct((B, FEAT), jnp.float32),          # encoded_next_state
        jax.ShapeDtypeStruct((B, HID), jnp.float32),           # pred_next_state_feature
        jax.ShapeDtypeStruct((B, output_size), jnp.float32),   # pred_action
    )
    return pl.pallas_call(
        icm_kernel,
        out_shape=out_shape,
        in_specs=[vmem, vmem, vmem, vmem, vmem, vmem, vmem, vmem, hbm, hbm],
        out_specs=(vmem, vmem, vmem),
        scratch_shapes=[
            pltpu.VMEM((N_RES_LATE, HID, HID), jnp.bfloat16),
            pltpu.VMEM((N_FM2_LATE, HID, HID), jnp.bfloat16),
            pltpu.SemaphoreType.DMA((2,)),
        ],
        compiler_params=pltpu.CompilerParams(vmem_limit_bytes=32 * 1024 * 1024),
    )(xs, action, *packed)


def make_params(key, input_size, output_size, resnet_size):
    keys = iter(jax.random.split(key, 80))

    def lin(fan_in, fan_out):
        # xavier_normal_(gain=1) for weights.  The PyTorch init zeros all
        # biases; small random biases are used here so the test exercises
        # every bias-packing / bias-fusion path (forward works for any bias).
        std = (2.0 / (fan_in + fan_out)) ** 0.5
        w = std * jax.random.normal(next(keys), (fan_in, fan_out), jnp.float32)
        b = 0.05 * jax.random.normal(next(keys), (fan_out,), jnp.float32)
        return w, b

    params = []
    for fi, fo in [(input_size, 256), (256, 256), (256, FEAT)]:          # feature
        params += list(lin(fi, fo))
    for fi, fo in [(2 * FEAT, 256), (256, 256), (256, output_size)]:     # inverse
        params += list(lin(fi, fo))
    fm_dims = [(output_size + FEAT, 256)] + [(256, 256)] * 4
    for fi, fo in fm_dims:                                               # forward_model1
        params += list(lin(fi, fo))
    for fi, fo in fm_dims:                                               # forward_model2
        params += list(lin(fi, fo))
    wA, bA, wB, bB = [], [], [], []                                      # residual blocks
    for _ in range(2 * resnet_size):
        w, b = lin(output_size + FEAT, 256); wA.append(w); bA.append(b)
        w, b = lin(256, 256); wB.append(w); bB.append(b)
    params += [jnp.stack(wA), jnp.stack(bA), jnp.stack(wB), jnp.stack(bB)]
    assert len(params) == N_PARAMS
    return params


def icm_ref(state, next_state, action, p):
    """Pure-JAX reference mirroring the module math (bf16 matmul operands,
    f32 accumulation) on the raw, unfused parameter list."""
    bf = lambda a: a.astype(jnp.bfloat16)
    dot = lambda x, w: jnp.dot(bf(x), bf(w), preferred_element_type=jnp.float32)

    def feature(x):
        h = _silu(dot(x, p[0]) + p[1])
        h = _silu(dot(h, p[2]) + p[3])
        return dot(h, p[4]) + p[5]

    es, ens = feature(state), feature(next_state)
    cat = jnp.concatenate([es, ens], axis=1)
    h = _silu(_bn_train(dot(cat, p[6]) + p[7]))
    h = _silu(_bn_train(dot(h, p[8]) + p[9]))
    pred_action = dot(h, p[10]) + p[11]

    def mlp5(x, base):
        h = x
        for k in range(5):
            h = dot(h, p[base + 2 * k]) + p[base + 2 * k + 1]
            if k < 4:
                h = _silu(h)
        return h

    x = mlp5(cat, _FM1_BASE)
    wA, bA, wB, bB = p[_RES_BASE:_RES_BASE + 4]
    for i in range(RESNET_SIZE):
        j, k = 2 * i, 2 * i + 1
        h1 = dot(_silu(dot(jnp.concatenate([x, action], 1), wA[j]) + bA[j]), wB[j]) + bB[j]
        h2 = dot(_silu(dot(jnp.concatenate([h1, action], 1), wA[k]) + bA[k]), wB[k]) + bB[k]
        x = h2 + x
    pred_next = mlp5(jnp.concatenate([x, action], 1), _FM2_BASE)
    return ens, pred_next, pred_action


if __name__ == "__main__":
    B, INPUT_SIZE, OUTPUT_SIZE = 8, 32, 256   # output_size forced to 256 (see header note)
    key = jax.random.PRNGKey(0)
    k1, k2, k3, kp = jax.random.split(key, 4)
    state = jax.random.normal(k1, (B, INPUT_SIZE), jnp.float32)
    next_state = jax.random.normal(k2, (B, INPUT_SIZE), jnp.float32)
    action = jax.random.normal(k3, (B, OUTPUT_SIZE), jnp.float32)
    params = make_params(kp, INPUT_SIZE, OUTPUT_SIZE, RESNET_SIZE)

    outs = icm_forward(state, next_state, action, params, OUTPUT_SIZE)
    outs = jax.block_until_ready(outs)

    refs = icm_ref(state, next_state, action, params)
    # Tolerance is slightly looser than pure-replication: the offline f32
    # fusion of wB_j @ wA_k_x (and W_L5 @ wA0_x) changes the bf16 rounding
    # pattern relative to the chained-matmul reference.
    for o, r in zip(outs, refs):
        assert o.shape == r.shape and o.dtype == jnp.float32
        np.testing.assert_allclose(np.asarray(o), np.asarray(r), rtol=2e-2, atol=2e-2)

    print("KERNEL_OK")
</pallas_src>

<mosaic_0001>
module attributes {stable_mosaic.version = 11 : i64} {
  func.func @icm_kernel(%arg0: memref<16x32xf32, #tpu.memory_space<vmem>>, %arg1: memref<8x256xf32, #tpu.memory_space<vmem>>, %arg2: memref<32x256xbf16, #tpu.memory_space<vmem>>, %arg3: memref<2x256x512xbf16, #tpu.memory_space<vmem>>, %arg4: memref<7x256x256xbf16, #tpu.memory_space<vmem>>, %arg5: memref<256x512xbf16, #tpu.memory_space<vmem>>, %arg6: memref<256x2304xbf16, #tpu.memory_space<vmem>>, %arg7: memref<26x256xf32, #tpu.memory_space<vmem>>, %arg8: memref<11x256x256xbf16, #tpu.memory_space<any>>, %arg9: memref<5x256x256xbf16, #tpu.memory_space<any>>, %arg10: memref<8x256xf32, #tpu.memory_space<vmem>>, %arg11: memref<8x256xf32, #tpu.memory_space<vmem>>, %arg12: memref<8x256xf32, #tpu.memory_space<vmem>>, %arg13: memref<11x256x256xbf16, #tpu.memory_space<vmem>>, %arg14: memref<5x256x256xbf16, #tpu.memory_space<vmem>>, %arg15: memref<2x!tpu.dma_semaphore, #tpu.memory_space<semaphore_mem>>) attributes {dimension_semantics = [], scalar_prefetch = 0 : i64, scratch_operands = 3 : i64, tpu.core_type = #tpu.core_type<tc>} {
    %c0_i32 = arith.constant 0 : i32
    %0 = tpu.memref_slice %arg15[%c0_i32] : memref<2x!tpu.dma_semaphore, #tpu.memory_space<semaphore_mem>> -> memref<1x!tpu.dma_semaphore, #tpu.memory_space<semaphore_mem>>
    %1 = tpu.memref_squeeze %0 : memref<1x!tpu.dma_semaphore, #tpu.memory_space<semaphore_mem>> -> memref<!tpu.dma_semaphore, #tpu.memory_space<semaphore_mem>>
    tpu.enqueue_dma source(%arg8 : memref<11x256x256xbf16, #tpu.memory_space<any>>) target(%arg13 : memref<11x256x256xbf16, #tpu.memory_space<vmem>>) target_semaphore(%1 : memref<!tpu.dma_semaphore, #tpu.memory_space<semaphore_mem>>)
    %c1_i32 = arith.constant 1 : i32
    %2 = tpu.memref_slice %arg15[%c1_i32] : memref<2x!tpu.dma_semaphore, #tpu.memory_space<semaphore_mem>> -> memref<1x!tpu.dma_semaphore, #tpu.memory_space<semaphore_mem>>
    %3 = tpu.memref_squeeze %2 : memref<1x!tpu.dma_semaphore, #tpu.memory_space<semaphore_mem>> -> memref<!tpu.dma_semaphore, #tpu.memory_space<semaphore_mem>>
    tpu.enqueue_dma source(%arg9 : memref<5x256x256xbf16, #tpu.memory_space<any>>) target(%arg14 : memref<5x256x256xbf16, #tpu.memory_space<vmem>>) target_semaphore(%3 : memref<!tpu.dma_semaphore, #tpu.memory_space<semaphore_mem>>)
    %c0 = arith.constant 0 : index
    %c0_0 = arith.constant 0 : index
    %4 = vector.load %arg1[%c0, %c0_0] : memref<8x256xf32, #tpu.memory_space<vmem>>, vector<8x256xf32>
    %c0_1 = arith.constant 0 : index
    %c0_2 = arith.constant 0 : index
    %5 = vector.load %arg6[%c0_1, %c0_2] : memref<256x2304xbf16, #tpu.memory_space<vmem>>, vector<256x2304xbf16>
    %6 = arith.truncf %4 : vector<8x256xf32> to vector<8x256xbf16>
    %cst = arith.constant dense<0.000000e+00> : vector<8x2304xf32>
    %7 = tpu.matmul %6, %5, %cst {dimension_numbers = #tpu.dot_dimension_numbers<[1], [0], [0], [1], [0, 0, 1, 1], [], []>} : vector<8x256xbf16>, vector<256x2304xbf16>, vector<8x2304xf32> -> vector<8x2304xf32>
    %c0_3 = arith.constant 0 : index
    %c0_4 = arith.constant 0 : index
    %8 = vector.load %arg0[%c0_3, %c0_4] : memref<16x32xf32, #tpu.memory_space<vmem>>, vector<16x32xf32>
    %c0_5 = arith.constant 0 : index
    %c0_6 = arith.constant 0 : index
    %9 = vector.load %arg2[%c0_5, %c0_6] : memref<32x256xbf16, #tpu.memory_space<vmem>>, vector<32x256xbf16>
    %10 = arith.truncf %8 : vector<16x32xf32> to vector<16x32xbf16>
    %cst_7 = arith.constant dense<0.000000e+00> : vector<16x256xf32>
    %11 = tpu.matmul %10, %9, %cst_7 {dimension_numbers = #tpu.dot_dimension_numbers<[1], [0], [0], [1], [0, 0, 1, 1], [], []>} : vector<16x32xbf16>, vector<32x256xbf16>, vector<16x256xf32> -> vector<16x256xf32>
    %c0_8 = arith.constant 0 : index
    %c0_9 = arith.constant 0 : index
    %12 = vector.load %arg7[%c0_8, %c0_9] : memref<26x256xf32, #tpu.memory_space<vmem>>, vector<1x256xf32>
    %13 = vector.broadcast %12 : vector<1x256xf32> to vector<16x256xf32>
    %14 = arith.addf %11, %13 : vector<16x256xf32>
    %cst_10 = arith.constant 5.000000e-01 : f32
    %15 = vector.broadcast %cst_10 : f32 to vector<16x256xf32>
    %16 = arith.mulf %15, %14 : vector<16x256xf32>
    %17 = math.tanh %16 : vector<16x256xf32>
    %cst_11 = arith.constant 1.000000e+00 : f32
    %18 = vector.broadcast %cst_11 : f32 to vector<16x256xf32>
    %19 = arith.addf %17, %18 : vector<16x256xf32>
    %cst_12 = arith.constant 5.000000e-01 : f32
    %20 = vector.broadcast %cst_12 : f32 to vector<16x256xf32>
    %21 = arith.mulf %20, %19 : vector<16x256xf32>
    %22 = arith.mulf %14, %21 : vector<16x256xf32>
    %c0_13 = arith.constant 0 : index
    %c0_14 = arith.constant 0 : index
    %c0_15 = arith.constant 0 : index
    %23 = vector.load %arg4[%c0_13, %c0_14, %c0_15] : memref<7x256x256xbf16, #tpu.memory_space<vmem>>, vector<1x256x256xbf16>
    %24 = vector.shape_cast %23 : vector<1x256x256xbf16> to vector<256x256xbf16>
    %25 = arith.truncf %22 : vector<16x256xf32> to vector<16x256xbf16>
    %cst_16 = arith.constant dense<0.000000e+00> : vector<16x256xf32>
    %26 = tpu.matmul %25, %24, %cst_16 {dimension_numbers = #tpu.dot_dimension_numbers<[1], [0], [0], [1], [0, 0, 1, 1], [], []>} : vector<16x256xbf16>, vector<256x256xbf16>, vector<16x256xf32> -> vector<16x256xf32>
    %c1 = arith.constant 1 : index
    %c0_17 = arith.constant 0 : index
    %27 = vector.load %arg7[%c1, %c0_17] : memref<26x256xf32, #tpu.memory_space<vmem>>, vector<1x256xf32>
    %28 = vector.broadcast %27 : vector<1x256xf32> to vector<16x256xf32>
    %29 = arith.addf %26, %28 : vector<16x256xf32>
    %cst_18 = arith.constant 5.000000e-01 : f32
    %30 = vector.broadcast %cst_18 : f32 to vector<16x256xf32>
    %31 = arith.mulf %30, %29 : vector<16x256xf32>
    %32 = math.tanh %31 : vector<16x256xf32>
    %cst_19 = arith.constant 1.000000e+00 : f32
    %33 = vector.broadcast %cst_19 : f32 to vector<16x256xf32>
    %34 = arith.addf %32, %33 : vector<16x256xf32>
    %cst_20 = arith.constant 5.000000e-01 : f32
    %35 = vector.broadcast %cst_20 : f32 to vector<16x256xf32>
    %36 = arith.mulf %35, %34 : vector<16x256xf32>
    %37 = arith.mulf %29, %36 : vector<16x256xf32>
    %c1_21 = arith.constant 1 : index
    %c0_22 = arith.constant 0 : index
    %c0_23 = arith.constant 0 : index
    %38 = vector.load %arg4[%c1_21, %c0_22, %c0_23] : memref<7x256x256xbf16, #tpu.memory_space<vmem>>, vector<1x256x256xbf16>
    %39 = vector.shape_cast %38 : vector<1x256x256xbf16> to vector<256x256xbf16>
    %40 = arith.truncf %37 : vector<16x256xf32> to vector<16x256xbf16>
    %cst_24 = arith.constant dense<0.000000e+00> : vector<16x256xf32>
    %41 = tpu.matmul %40, %39, %cst_24 {dimension_numbers = #tpu.dot_dimension_numbers<[1], [0], [0], [1], [0, 0, 1, 1], [], []>} : vector<16x256xbf16>, vector<256x256xbf16>, vector<16x256xf32> -> vector<16x256xf32>
    %c2 = arith.constant 2 : index
    %c0_25 = arith.constant 0 : index
    %42 = vector.load %arg7[%c2, %c0_25] : memref<26x256xf32, #tpu.memory_space<vmem>>, vector<1x256xf32>
    %43 = vector.broadcast %42 : vector<1x256xf32> to vector<16x256xf32>
    %44 = arith.addf %41, %43 : vector<16x256xf32>
    %45 = vector.extract_strided_slice %44 {offsets = [0, 0], sizes = [8, 256], strides = [1, 1]} : vector<16x256xf32> to vector<8x256xf32>
    %46 = vector.extract_strided_slice %44 {offsets = [8, 0], sizes = [8, 256], strides = [1, 1]} : vector<16x256xf32> to vector<8x256xf32>
    %c0_26 = arith.constant 0 : index
    %c0_27 = arith.constant 0 : index
    %c0_28 = arith.constant 0 : index
    %47 = vector.load %arg3[%c0_26, %c0_27, %c0_28] : memref<2x256x512xbf16, #tpu.memory_space<vmem>>, vector<1x256x512xbf16>
    %48 = vector.shape_cast %47 : vector<1x256x512xbf16> to vector<256x512xbf16>
    %49 = arith.truncf %45 : vector<8x256xf32> to vector<8x256xbf16>
    %cst_29 = arith.constant dense<0.000000e+00> : vector<8x512xf32>
    %50 = tpu.matmul %49, %48, %cst_29 {dimension_numbers = #tpu.dot_dimension_numbers<[1], [0], [0], [1], [0, 0, 1, 1], [], []>} : vector<8x256xbf16>, vector<256x512xbf16>, vector<8x512xf32> -> vector<8x512xf32>
    %c1_30 = arith.constant 1 : index
    %c0_31 = arith.constant 0 : index
    %c0_32 = arith.constant 0 : index
    %51 = vector.load %arg3[%c1_30, %c0_31, %c0_32] : memref<2x256x512xbf16, #tpu.memory_space<vmem>>, vector<1x256x512xbf16>
    %52 = vector.shape_cast %51 : vector<1x256x512xbf16> to vector<256x512xbf16>
    %53 = arith.truncf %46 : vector<8x256xf32> to vector<8x256xbf16>
    %cst_33 = arith.constant dense<0.000000e+00> : vector<8x512xf32>
    %54 = tpu.matmul %53, %52, %cst_33 {dimension_numbers = #tpu.dot_dimension_numbers<[1], [0], [0], [1], [0, 0, 1, 1], [], []>} : vector<8x256xbf16>, vector<256x512xbf16>, vector<8x512xf32> -> vector<8x512xf32>
    %55 = arith.addf %50, %54 : vector<8x512xf32>
    %56 = vector.extract_strided_slice %55 {offsets = [0, 0], sizes = [8, 256], strides = [1, 1]} : vector<8x512xf32> to vector<8x256xf32>
    %cst_34 = arith.constant dense<0.000000e+00> : vector<256xf32>
    %57 = vector.multi_reduction <add>, %56, %cst_34 [0] : vector<8x256xf32> to vector<256xf32>
    %58 = vector.shape_cast %57 : vector<256xf32> to vector<1x256xf32>
    %cst_35 = arith.constant 8.000000e+00 : f32
    %59 = vector.broadcast %cst_35 : f32 to vector<1x256xf32>
    %60 = arith.divf %58, %59 : vector<1x256xf32>
    %61 = vector.broadcast %60 : vector<1x256xf32> to vector<8x256xf32>
    %62 = arith.subf %56, %61 : vector<8x256xf32>
    %63 = arith.mulf %62, %62 : vector<8x256xf32>
    %cst_36 = arith.constant dense<0.000000e+00> : vector<256xf32>
    %64 = vector.multi_reduction <add>, %63, %cst_36 [0] : vector<8x256xf32> to vector<256xf32>
    %65 = vector.shape_cast %64 : vector<256xf32> to vector<1x256xf32>
    %cst_37 = arith.constant 8.000000e+00 : f32
    %66 = vector.broadcast %cst_37 : f32 to vector<1x256xf32>
    %67 = arith.divf %65, %66 : vector<1x256xf32>
    %cst_38 = arith.constant 9.99999974E-6 : f32
    %68 = vector.broadcast %cst_38 : f32 to vector<1x256xf32>
    %69 = arith.addf %67, %68 : vector<1x256xf32>
    %70 = math.rsqrt %69 : vector<1x256xf32>
    %71 = vector.broadcast %70 : vector<1x256xf32> to vector<8x256xf32>
    %72 = arith.mulf %62, %71 : vector<8x256xf32>
    %cst_39 = arith.constant 5.000000e-01 : f32
    %73 = vector.broadcast %cst_39 : f32 to vector<8x256xf32>
    %74 = arith.mulf %73, %72 : vector<8x256xf32>
    %75 = math.tanh %74 : vector<8x256xf32>
    %cst_40 = arith.constant 1.000000e+00 : f32
    %76 = vector.broadcast %cst_40 : f32 to vector<8x256xf32>
    %77 = arith.addf %75, %76 : vector<8x256xf32>
    %cst_41 = arith.constant 5.000000e-01 : f32
    %78 = vector.broadcast %cst_41 : f32 to vector<8x256xf32>
    %79 = arith.mulf %78, %77 : vector<8x256xf32>
    %80 = arith.mulf %72, %79 : vector<8x256xf32>
    %c2_42 = arith.constant 2 : index
    %c0_43 = arith.constant 0 : index
    %c0_44 = arith.constant 0 : index
    %81 = vector.load %arg4[%c2_42, %c0_43, %c0_44] : memref<7x256x256xbf16, #tpu.memory_space<vmem>>, vector<1x256x256xbf16>
    %82 = vector.shape_cast %81 : vector<1x256x256xbf16> to vector<256x256xbf16>
    %83 = arith.truncf %80 : vector<8x256xf32> to vector<8x256xbf16>
    %cst_45 = arith.constant dense<0.000000e+00> : vector<8x256xf32>
    %84 = tpu.matmul %83, %82, %cst_45 {dimension_numbers = #tpu.dot_dimension_numbers<[1], [0], [0], [1], [0, 0, 1, 1], [], []>} : vector<8x256xbf16>, vector<256x256xbf16>, vector<8x256xf32> -> vector<8x256xf32>
    %cst_46 = arith.constant dense<0.000000e+00> : vector<256xf32>
    %85 = vector.multi_reduction <add>, %84, %cst_46 [0] : vector<8x256xf32> to vector<256xf32>
    %86 = vector.shape_cast %85 : vector<256xf32> to vector<1x256xf32>
    %cst_47 = arith.constant 8.000000e+00 : f32
    %87 = vector.broadcast %cst_47 : f32 to vector<1x256xf32>
    %88 = arith.divf %86, %87 : vector<1x256xf32>
    %89 = vector.broadcast %88 : vector<1x256xf32> to vector<8x256xf32>
    %90 = arith.subf %84, %89 : vector<8x256xf32>
    %91 = arith.mulf %90, %90 : vector<8x256xf32>
    %cst_48 = arith.constant dense<0.000000e+00> : vector<256xf32>
    %92 = vector.multi_reduction <add>, %91, %cst_48 [0] : vector<8x256xf32> to vector<256xf32>
    %93 = vector.shape_cast %92 : vector<256xf32> to vector<1x256xf32>
    %cst_49 = arith.constant 8.000000e+00 : f32
    %94 = vector.broadcast %cst_49 : f32 to vector<1x256xf32>
    %95 = arith.divf %93, %94 : vector<1x256xf32>
    %cst_50 = arith.constant 9.99999974E-6 : f32
    %96 = vector.broadcast %cst_50 : f32 to vector<1x256xf32>
    %97 = arith.addf %95, %96 : vector<1x256xf32>
    %98 = math.rsqrt %97 : vector<1x256xf32>
    %99 = vector.broadcast %98 : vector<1x256xf32> to vector<8x256xf32>
    %100 = arith.mulf %90, %99 : vector<8x256xf32>
    %cst_51 = arith.constant 5.000000e-01 : f32
    %101 = vector.broadcast %cst_51 : f32 to vector<8x256xf32>
    %102 = arith.mulf %101, %100 : vector<8x256xf32>
    %103 = math.tanh %102 : vector<8x256xf32>
    %cst_52 = arith.constant 1.000000e+00 : f32
    %104 = vector.broadcast %cst_52 : f32 to vector<8x256xf32>
    %105 = arith.addf %103, %104 : vector<8x256xf32>
    %cst_53 = arith.constant 5.000000e-01 : f32
    %106 = vector.broadcast %cst_53 : f32 to vector<8x256xf32>
    %107 = arith.mulf %106, %105 : vector<8x256xf32>
    %108 = arith.mulf %100, %107 : vector<8x256xf32>
    %c3 = arith.constant 3 : index
    %c0_54 = arith.constant 0 : index
    %c0_55 = arith.constant 0 : index
    %109 = vector.load %arg4[%c3, %c0_54, %c0_55] : memref<7x256x256xbf16, #tpu.memory_space<vmem>>, vector<1x256x256xbf16>
    %110 = vector.shape_cast %109 : vector<1x256x256xbf16> to vector<256x256xbf16>
    %111 = arith.truncf %108 : vector<8x256xf32> to vector<8x256xbf16>
    %cst_56 = arith.constant dense<0.000000e+00> : vector<8x256xf32>
    %112 = tpu.matmul %111, %110, %cst_56 {dimension_numbers = #tpu.dot_dimension_numbers<[1], [0], [0], [1], [0, 0, 1, 1], [], []>} : vector<8x256xbf16>, vector<256x256xbf16>, vector<8x256xf32> -> vector<8x256xf32>
    %c3_57 = arith.constant 3 : index
    %c0_58 = arith.constant 0 : index
    %113 = vector.load %arg7[%c3_57, %c0_58] : memref<26x256xf32, #tpu.memory_space<vmem>>, vector<1x256xf32>
    %114 = vector.broadcast %113 : vector<1x256xf32> to vector<8x256xf32>
    %115 = arith.addf %112, %114 : vector<8x256xf32>
    %116 = vector.extract_strided_slice %55 {offsets = [0, 256], sizes = [8, 256], strides = [1, 1]} : vector<8x512xf32> to vector<8x256xf32>
    %c4 = arith.constant 4 : index
    %c0_59 = arith.constant 0 : index
    %117 = vector.load %arg7[%c4, %c0_59] : memref<26x256xf32, #tpu.memory_space<vmem>>, vector<1x256xf32>
    %118 = vector.broadcast %117 : vector<1x256xf32> to vector<8x256xf32>
    %119 = arith.addf %116, %118 : vector<8x256xf32>
    %cst_60 = arith.constant 5.000000e-01 : f32
    %120 = vector.broadcast %cst_60 : f32 to vector<8x256xf32>
    %121 = arith.mulf %120, %119 : vector<8x256xf32>
    %122 = math.tanh %121 : vector<8x256xf32>
    %cst_61 = arith.constant 1.000000e+00 : f32
    %123 = vector.broadcast %cst_61 : f32 to vector<8x256xf32>
    %124 = arith.addf %122, %123 : vector<8x256xf32>
    %cst_62 = arith.constant 5.000000e-01 : f32
    %125 = vector.broadcast %cst_62 : f32 to vector<8x256xf32>
    %126 = arith.mulf %125, %124 : vector<8x256xf32>
    %127 = arith.mulf %119, %126 : vector<8x256xf32>
    %c4_63 = arith.constant 4 : index
    %c0_64 = arith.constant 0 : index
    %c0_65 = arith.constant 0 : index
    %128 = vector.load %arg4[%c4_63, %c0_64, %c0_65] : memref<7x256x256xbf16, #tpu.memory_space<vmem>>, vector<1x256x256xbf16>
    %129 = vector.shape_cast %128 : vector<1x256x256xbf16> to vector<256x256xbf16>
    %130 = arith.truncf %127 : vector<8x256xf32> to vector<8x256xbf16>
    %cst_66 = arith.constant dense<0.000000e+00> : vector<8x256xf32>
    %131 = tpu.matmul %130, %129, %cst_66 {dimension_numbers = #tpu.dot_dimension_numbers<[1], [0], [0], [1], [0, 0, 1, 1], [], []>} : vector<8x256xbf16>, vector<256x256xbf16>, vector<8x256xf32> -> vector<8x256xf32>
    %c5 = arith.constant 5 : index
    %c0_67 = arith.constant 0 : index
    %132 = vector.load %arg7[%c5, %c0_67] : memref<26x256xf32, #tpu.memory_space<vmem>>, vector<1x256xf32>
    %133 = vector.broadcast %132 : vector<1x256xf32> to vector<8x256xf32>
    %134 = arith.addf %131, %133 : vector<8x256xf32>
    %cst_68 = arith.constant 5.000000e-01 : f32
    %135 = vector.broadcast %cst_68 : f32 to vector<8x256xf32>
    %136 = arith.mulf %135, %134 : vector<8x256xf32>
    %137 = math.tanh %136 : vector<8x256xf32>
    %cst_69 = arith.constant 1.000000e+00 : f32
    %138 = vector.broadcast %cst_69 : f32 to vector<8x256xf32>
    %139 = arith.addf %137, %138 : vector<8x256xf32>
    %cst_70 = arith.constant 5.000000e-01 : f32
    %140 = vector.broadcast %cst_70 : f32 to vector<8x256xf32>
    %141 = arith.mulf %140, %139 : vector<8x256xf32>
    %142 = arith.mulf %134, %141 : vector<8x256xf32>
    %c5_71 = arith.constant 5 : index
    %c0_72 = arith.constant 0 : index
    %c0_73 = arith.constant 0 : index
    %143 = vector.load %arg4[%c5_71, %c0_72, %c0_73] : memref<7x256x256xbf16, #tpu.memory_space<vmem>>, vector<1x256x256xbf16>
    %144 = vector.shape_cast %143 : vector<1x256x256xbf16> to vector<256x256xbf16>
    %145 = arith.truncf %142 : vector<8x256xf32> to vector<8x256xbf16>
    %cst_74 = arith.constant dense<0.000000e+00> : vector<8x256xf32>
    %146 = tpu.matmul %145, %144, %cst_74 {dimension_numbers = #tpu.dot_dimension_numbers<[1], [0], [0], [1], [0, 0, 1, 1], [], []>} : vector<8x256xbf16>, vector<256x256xbf16>, vector<8x256xf32> -> vector<8x256xf32>
    %c6 = arith.constant 6 : index
    %c0_75 = arith.constant 0 : index
    %147 = vector.load %arg7[%c6, %c0_75] : memref<26x256xf32, #tpu.memory_space<vmem>>, vector<1x256xf32>
    %148 = vector.broadcast %147 : vector<1x256xf32> to vector<8x256xf32>
    %149 = arith.addf %146, %148 : vector<8x256xf32>
    %cst_76 = arith.constant 5.000000e-01 : f32
    %150 = vector.broadcast %cst_76 : f32 to vector<8x256xf32>
    %151 = arith.mulf %150, %149 : vector<8x256xf32>
    %152 = math.tanh %151 : vector<8x256xf32>
    %cst_77 = arith.constant 1.000000e+00 : f32
    %153 = vector.broadcast %cst_77 : f32 to vector<8x256xf32>
    %154 = arith.addf %152, %153 : vector<8x256xf32>
    %cst_78 = arith.constant 5.000000e-01 : f32
    %155 = vector.broadcast %cst_78 : f32 to vector<8x256xf32>
    %156 = arith.mulf %155, %154 : vector<8x256xf32>
    %157 = arith.mulf %149, %156 : vector<8x256xf32>
    %c6_79 = arith.constant 6 : index
    %c0_80 = arith.constant 0 : index
    %c0_81 = arith.constant 0 : index
    %158 = vector.load %arg4[%c6_79, %c0_80, %c0_81] : memref<7x256x256xbf16, #tpu.memory_space<vmem>>, vector<1x256x256xbf16>
    %159 = vector.shape_cast %158 : vector<1x256x256xbf16> to vector<256x256xbf16>
    %160 = arith.truncf %157 : vector<8x256xf32> to vector<8x256xbf16>
    %cst_82 = arith.constant dense<0.000000e+00> : vector<8x256xf32>
    %161 = tpu.matmul %160, %159, %cst_82 {dimension_numbers = #tpu.dot_dimension_numbers<[1], [0], [0], [1], [0, 0, 1, 1], [], []>} : vector<8x256xbf16>, vector<256x256xbf16>, vector<8x256xf32> -> vector<8x256xf32>
    %c7 = arith.constant 7 : index
    %c0_83 = arith.constant 0 : index
    %162 = vector.load %arg7[%c7, %c0_83] : memref<26x256xf32, #tpu.memory_space<vmem>>, vector<1x256xf32>
    %163 = vector.broadcast %162 : vector<1x256xf32> to vector<8x256xf32>
    %164 = arith.addf %161, %163 : vector<8x256xf32>
    %cst_84 = arith.constant 5.000000e-01 : f32
    %165 = vector.broadcast %cst_84 : f32 to vector<8x256xf32>
    %166 = arith.mulf %165, %164 : vector<8x256xf32>
    %167 = math.tanh %166 : vector<8x256xf32>
    %cst_85 = arith.constant 1.000000e+00 : f32
    %168 = vector.broadcast %cst_85 : f32 to vector<8x256xf32>
    %169 = arith.addf %167, %168 : vector<8x256xf32>
    %cst_86 = arith.constant 5.000000e-01 : f32
    %170 = vector.broadcast %cst_86 : f32 to vector<8x256xf32>
    %171 = arith.mulf %170, %169 : vector<8x256xf32>
    %172 = arith.mulf %164, %171 : vector<8x256xf32>
    %c0_87 = arith.constant 0 : index
    %c0_88 = arith.constant 0 : index
    %173 = vector.load %arg5[%c0_87, %c0_88] : memref<256x512xbf16, #tpu.memory_space<vmem>>, vector<256x512xbf16>
    %174 = arith.truncf %172 : vector<8x256xf32> to vector<8x256xbf16>
    %cst_89 = arith.constant dense<0.000000e+00> : vector<8x512xf32>
    %175 = tpu.matmul %174, %173, %cst_89 {dimension_numbers = #tpu.dot_dimension_numbers<[1], [0], [0], [1], [0, 0, 1, 1], [], []>} : vector<8x256xbf16>, vector<256x512xbf16>, vector<8x512xf32> -> vector<8x512xf32>
    %176 = vector.extract_strided_slice %175 {offsets = [0, 0], sizes = [8, 256], strides = [1, 1]} : vector<8x512xf32> to vector<8x256xf32>
    %c8 = arith.constant 8 : index
    %c0_90 = arith.constant 0 : index
    %177 = vector.load %arg7[%c8, %c0_90] : memref<26x256xf32, #tpu.memory_space<vmem>>, vector<1x256xf32>
    %178 = vector.broadcast %177 : vector<1x256xf32> to vector<8x256xf32>
    %179 = arith.addf %176, %178 : vector<8x256xf32>
    %180 = vector.extract_strided_slice %175 {offsets = [0, 256], sizes = [8, 256], strides = [1, 1]} : vector<8x512xf32> to vector<8x256xf32>
    %c0_i32_91 = arith.constant 0 : i32
    %181 = tpu.memref_slice %arg15[%c0_i32_91] : memref<2x!tpu.dma_semaphore, #tpu.memory_space<semaphore_mem>> -> memref<1x!tpu.dma_semaphore, #tpu.memory_space<semaphore_mem>>
    %182 = tpu.memref_squeeze %181 : memref<1x!tpu.dma_semaphore, #tpu.memory_space<semaphore_mem>> -> memref<!tpu.dma_semaphore, #tpu.memory_space<semaphore_mem>>
    tpu.wait_dma2 semaphore(%182 : memref<!tpu.dma_semaphore, #tpu.memory_space<semaphore_mem>>) src(%arg8 : memref<11x256x256xbf16, #tpu.memory_space<any>>) dst(%arg13 : memref<11x256x256xbf16, #tpu.memory_space<vmem>>)
    %183 = vector.extract_strided_slice %7 {offsets = [0, 0], sizes = [8, 256], strides = [1, 1]} : vector<8x2304xf32> to vector<8x256xf32>
    %184 = arith.addf %180, %183 : vector<8x256xf32>
    %c9 = arith.constant 9 : index
    %c0_92 = arith.constant 0 : index
    %185 = vector.load %arg7[%c9, %c0_92] : memref<26x256xf32, #tpu.memory_space<vmem>>, vector<1x256xf32>
    %186 = vector.broadcast %185 : vector<1x256xf32> to vector<8x256xf32>
    %187 = arith.addf %184, %186 : vector<8x256xf32>
    %cst_93 = arith.constant 5.000000e-01 : f32
    %188 = vector.broadcast %cst_93 : f32 to vector<8x256xf32>
    %189 = arith.mulf %188, %187 : vector<8x256xf32>
    %190 = math.tanh %189 : vector<8x256xf32>
    %cst_94 = arith.constant 1.000000e+00 : f32
    %191 = vector.broadcast %cst_94 : f32 to vector<8x256xf32>
    %192 = arith.addf %190, %191 : vector<8x256xf32>
    %cst_95 = arith.constant 5.000000e-01 : f32
    %193 = vector.broadcast %cst_95 : f32 to vector<8x256xf32>
    %194 = arith.mulf %193, %192 : vector<8x256xf32>
    %195 = arith.mulf %187, %194 : vector<8x256xf32>
    %c0_96 = arith.constant 0 : index
    %c0_97 = arith.constant 0 : index
    %c0_98 = arith.constant 0 : index
    %196 = vector.load %arg13[%c0_96, %c0_97, %c0_98] : memref<11x256x256xbf16, #tpu.memory_space<vmem>>, vector<1x256x256xbf16>
    %197 = vector.shape_cast %196 : vector<1x256x256xbf16> to vector<256x256xbf16>
    %198 = arith.truncf %195 : vector<8x256xf32> to vector<8x256xbf16>
    %cst_99 = arith.constant dense<0.000000e+00> : vector<8x256xf32>
    %199 = tpu.matmul %198, %197, %cst_99 {dimension_numbers = #tpu.dot_dimension_numbers<[1], [0], [0], [1], [0, 0, 1, 1], [], []>} : vector<8x256xbf16>, vector<256x256xbf16>, vector<8x256xf32> -> vector<8x256xf32>
    %200 = vector.extract_strided_slice %7 {offsets = [0, 256], sizes = [8, 256], strides = [1, 1]} : vector<8x2304xf32> to vector<8x256xf32>
    %201 = arith.addf %199, %200 : vector<8x256xf32>
    %c13 = arith.constant 13 : index
    %c0_100 = arith.constant 0 : index
    %202 = vector.load %arg7[%c13, %c0_100] : memref<26x256xf32, #tpu.memory_space<vmem>>, vector<1x256xf32>
    %203 = vector.broadcast %202 : vector<1x256xf32> to vector<8x256xf32>
    %204 = arith.addf %201, %203 : vector<8x256xf32>
    %cst_101 = arith.constant 5.000000e-01 : f32
    %205 = vector.broadcast %cst_101 : f32 to vector<8x256xf32>
    %206 = arith.mulf %205, %204 : vector<8x256xf32>
    %207 = math.tanh %206 : vector<8x256xf32>
    %cst_102 = arith.constant 1.000000e+00 : f32
    %208 = vector.broadcast %cst_102 : f32 to vector<8x256xf32>
    %209 = arith.addf %207, %208 : vector<8x256xf32>
    %cst_103 = arith.constant 5.000000e-01 : f32
    %210 = vector.broadcast %cst_103 : f32 to vector<8x256xf32>
    %211 = arith.mulf %210, %209 : vector<8x256xf32>
    %212 = arith.mulf %204, %211 : vector<8x256xf32>
    %c1_104 = arith.constant 1 : index
    %c0_105 = arith.constant 0 : index
    %c0_106 = arith.constant 0 : index
    %213 = vector.load %arg13[%c1_104, %c0_105, %c0_106] : memref<11x256x256xbf16, #tpu.memory_space<vmem>>, vector<1x256x256xbf16>
    %214 = vector.shape_cast %213 : vector<1x256x256xbf16> to vector<256x256xbf16>
    %215 = arith.truncf %212 : vector<8x256xf32> to vector<8x256xbf16>
    %cst_107 = arith.constant dense<0.000000e+00> : vector<8x256xf32>
    %216 = tpu.matmul %215, %214, %cst_107 {dimension_numbers = #tpu.dot_dimension_numbers<[1], [0], [0], [1], [0, 0, 1, 1], [], []>} : vector<8x256xbf16>, vector<256x256xbf16>, vector<8x256xf32> -> vector<8x256xf32>
    %c17 = arith.constant 17 : index
    %c0_108 = arith.constant 0 : index
    %217 = vector.load %arg7[%c17, %c0_108] : memref<26x256xf32, #tpu.memory_space<vmem>>, vector<1x256xf32>
    %218 = vector.broadcast %217 : vector<1x256xf32> to vector<8x256xf32>
    %219 = arith.addf %216, %218 : vector<8x256xf32>
    %220 = arith.addf %219, %179 : vector<8x256xf32>
    %c2_109 = arith.constant 2 : index
    %c0_110 = arith.constant 0 : index
    %c0_111 = arith.constant 0 : index
    %221 = vector.load %arg13[%c2_109, %c0_110, %c0_111] : memref<11x256x256xbf16, #tpu.memory_space<vmem>>, vector<1x256x256xbf16>
    %222 = vector.shape_cast %221 : vector<1x256x256xbf16> to vector<256x256xbf16>
    %223 = arith.truncf %220 : vector<8x256xf32> to vector<8x256xbf16>
    %cst_112 = arith.constant dense<0.000000e+00> : vector<8x256xf32>
    %224 = tpu.matmul %223, %222, %cst_112 {dimension_numbers = #tpu.dot_dimension_numbers<[1], [0], [0], [1], [0, 0, 1, 1], [], []>} : vector<8x256xbf16>, vector<256x256xbf16>, vector<8x256xf32> -> vector<8x256xf32>
    %225 = vector.extract_strided_slice %7 {offsets = [0, 512], sizes = [8, 256], strides = [1, 1]} : vector<8x2304xf32> to vector<8x256xf32>
    %226 = arith.addf %224, %225 : vector<8x256xf32>
    %c10 = arith.constant 10 : index
    %c0_113 = arith.constant 0 : index
    %227 = vector.load %arg7[%c10, %c0_113] : memref<26x256xf32, #tpu.memory_space<vmem>>, vector<1x256xf32>
    %228 = vector.broadcast %227 : vector<1x256xf32> to vector<8x256xf32>
    %229 = arith.addf %226, %228 : vector<8x256xf32>
    %cst_114 = arith.constant 5.000000e-01 : f32
    %230 = vector.broadcast %cst_114 : f32 to vector<8x256xf32>
    %231 = arith.mulf %230, %229 : vector<8x256xf32>
    %232 = math.tanh %231 : vector<8x256xf32>
    %cst_115 = arith.constant 1.000000e+00 : f32
    %233 = vector.broadcast %cst_115 : f32 to vector<8x256xf32>
    %234 = arith.addf %232, %233 : vector<8x256xf32>
    %cst_116 = arith.constant 5.000000e-01 : f32
    %235 = vector.broadcast %cst_116 : f32 to vector<8x256xf32>
    %236 = arith.mulf %235, %234 : vector<8x256xf32>
    %237 = arith.mulf %229, %236 : vector<8x256xf32>
    %c3_117 = arith.constant 3 : index
    %c0_118 = arith.constant 0 : index
    %c0_119 = arith.constant 0 : index
    %238 = vector.load %arg13[%c3_117, %c0_118, %c0_119] : memref<11x256x256xbf16, #tpu.memory_space<vmem>>, vector<1x256x256xbf16>
    %239 = vector.shape_cast %238 : vector<1x256x256xbf16> to vector<256x256xbf16>
    %240 = arith.truncf %237 : vector<8x256xf32> to vector<8x256xbf16>
    %cst_120 = arith.constant dense<0.000000e+00> : vector<8x256xf32>
    %241 = tpu.matmul %240, %239, %cst_120 {dimension_numbers = #tpu.dot_dimension_numbers<[1], [0], [0], [1], [0, 0, 1, 1], [], []>} : vector<8x256xbf16>, vector<256x256xbf16>, vector<8x256xf32> -> vector<8x256xf32>
    %242 = vector.extract_strided_slice %7 {offsets = [0, 768], sizes = [8, 256], strides = [1, 1]} : vector<8x2304xf32> to vector<8x256xf32>
    %243 = arith.addf %241, %242 : vector<8x256xf32>
    %c14 = arith.constant 14 : index
    %c0_121 = arith.constant 0 : index
    %244 = vector.load %arg7[%c14, %c0_121] : memref<26x256xf32, #tpu.memory_space<vmem>>, vector<1x256xf32>
    %245 = vector.broadcast %244 : vector<1x256xf32> to vector<8x256xf32>
    %246 = arith.addf %243, %245 : vector<8x256xf32>
    %cst_122 = arith.constant 5.000000e-01 : f32
    %247 = vector.broadcast %cst_122 : f32 to vector<8x256xf32>
    %248 = arith.mulf %247, %246 : vector<8x256xf32>
    %249 = math.tanh %248 : vector<8x256xf32>
    %cst_123 = arith.constant 1.000000e+00 : f32
    %250 = vector.broadcast %cst_123 : f32 to vector<8x256xf32>
    %251 = arith.addf %249, %250 : vector<8x256xf32>
    %cst_124 = arith.constant 5.000000e-01 : f32
    %252 = vector.broadcast %cst_124 : f32 to vector<8x256xf32>
    %253 = arith.mulf %252, %251 : vector<8x256xf32>
    %254 = arith.mulf %246, %253 : vector<8x256xf32>
    %c4_125 = arith.constant 4 : index
    %c0_126 = arith.constant 0 : index
    %c0_127 = arith.constant 0 : index
    %255 = vector.load %arg13[%c4_125, %c0_126, %c0_127] : memref<11x256x256xbf16, #tpu.memory_space<vmem>>, vector<1x256x256xbf16>
    %256 = vector.shape_cast %255 : vector<1x256x256xbf16> to vector<256x256xbf16>
    %257 = arith.truncf %254 : vector<8x256xf32> to vector<8x256xbf16>
    %cst_128 = arith.constant dense<0.000000e+00> : vector<8x256xf32>
    %258 = tpu.matmul %257, %256, %cst_128 {dimension_numbers = #tpu.dot_dimension_numbers<[1], [0], [0], [1], [0, 0, 1, 1], [], []>} : vector<8x256xbf16>, vector<256x256xbf16>, vector<8x256xf32> -> vector<8x256xf32>
    %c18 = arith.constant 18 : index
    %c0_129 = arith.constant 0 : index
    %259 = vector.load %arg7[%c18, %c0_129] : memref<26x256xf32, #tpu.memory_space<vmem>>, vector<1x256xf32>
    %260 = vector.broadcast %259 : vector<1x256xf32> to vector<8x256xf32>
    %261 = arith.addf %258, %260 : vector<8x256xf32>
    %262 = arith.addf %261, %220 : vector<8x256xf32>
    %c5_130 = arith.constant 5 : index
    %c0_131 = arith.constant 0 : index
    %c0_132 = arith.constant 0 : index
    %263 = vector.load %arg13[%c5_130, %c0_131, %c0_132] : memref<11x256x256xbf16, #tpu.memory_space<vmem>>, vector<1x256x256xbf16>
    %264 = vector.shape_cast %263 : vector<1x256x256xbf16> to vector<256x256xbf16>
    %265 = arith.truncf %262 : vector<8x256xf32> to vector<8x256xbf16>
    %cst_133 = arith.constant dense<0.000000e+00> : vector<8x256xf32>
    %266 = tpu.matmul %265, %264, %cst_133 {dimension_numbers = #tpu.dot_dimension_numbers<[1], [0], [0], [1], [0, 0, 1, 1], [], []>} : vector<8x256xbf16>, vector<256x256xbf16>, vector<8x256xf32> -> vector<8x256xf32>
    %267 = vector.extract_strided_slice %7 {offsets = [0, 1024], sizes = [8, 256], strides = [1, 1]} : vector<8x2304xf32> to vector<8x256xf32>
    %268 = arith.addf %266, %267 : vector<8x256xf32>
    %c11 = arith.constant 11 : index
    %c0_134 = arith.constant 0 : index
    %269 = vector.load %arg7[%c11, %c0_134] : memref<26x256xf32, #tpu.memory_space<vmem>>, vector<1x256xf32>
    %270 = vector.broadcast %269 : vector<1x256xf32> to vector<8x256xf32>
    %271 = arith.addf %268, %270 : vector<8x256xf32>
    %cst_135 = arith.constant 5.000000e-01 : f32
    %272 = vector.broadcast %cst_135 : f32 to vector<8x256xf32>
    %273 = arith.mulf %272, %271 : vector<8x256xf32>
    %274 = math.tanh %273 : vector<8x256xf32>
    %cst_136 = arith.constant 1.000000e+00 : f32
    %275 = vector.broadcast %cst_136 : f32 to vector<8x256xf32>
    %276 = arith.addf %274, %275 : vector<8x256xf32>
    %cst_137 = arith.constant 5.000000e-01 : f32
    %277 = vector.broadcast %cst_137 : f32 to vector<8x256xf32>
    %278 = arith.mulf %277, %276 : vector<8x256xf32>
    %279 = arith.mulf %271, %278 : vector<8x256xf32>
    %c6_138 = arith.constant 6 : index
    %c0_139 = arith.constant 0 : index
    %c0_140 = arith.constant 0 : index
    %280 = vector.load %arg13[%c6_138, %c0_139, %c0_140] : memref<11x256x256xbf16, #tpu.memory_space<vmem>>, vector<1x256x256xbf16>
    %281 = vector.shape_cast %280 : vector<1x256x256xbf16> to vector<256x256xbf16>
    %282 = arith.truncf %279 : vector<8x256xf32> to vector<8x256xbf16>
    %cst_141 = arith.constant dense<0.000000e+00> : vector<8x256xf32>
    %283 = tpu.matmul %282, %281, %cst_141 {dimension_numbers = #tpu.dot_dimension_numbers<[1], [0], [0], [1], [0, 0, 1, 1], [], []>} : vector<8x256xbf16>, vector<256x256xbf16>, vector<8x256xf32> -> vector<8x256xf32>
    %284 = vector.extract_strided_slice %7 {offsets = [0, 1280], sizes = [8, 256], strides = [1, 1]} : vector<8x2304xf32> to vector<8x256xf32>
    %285 = arith.addf %283, %284 : vector<8x256xf32>
    %c15 = arith.constant 15 : index
    %c0_142 = arith.constant 0 : index
    %286 = vector.load %arg7[%c15, %c0_142] : memref<26x256xf32, #tpu.memory_space<vmem>>, vector<1x256xf32>
    %287 = vector.broadcast %286 : vector<1x256xf32> to vector<8x256xf32>
    %288 = arith.addf %285, %287 : vector<8x256xf32>
    %cst_143 = arith.constant 5.000000e-01 : f32
    %289 = vector.broadcast %cst_143 : f32 to vector<8x256xf32>
    %290 = arith.mulf %289, %288 : vector<8x256xf32>
    %291 = math.tanh %290 : vector<8x256xf32>
    %cst_144 = arith.constant 1.000000e+00 : f32
    %292 = vector.broadcast %cst_144 : f32 to vector<8x256xf32>
    %293 = arith.addf %291, %292 : vector<8x256xf32>
    %cst_145 = arith.constant 5.000000e-01 : f32
    %294 = vector.broadcast %cst_145 : f32 to vector<8x256xf32>
    %295 = arith.mulf %294, %293 : vector<8x256xf32>
    %296 = arith.mulf %288, %295 : vector<8x256xf32>
    %c7_146 = arith.constant 7 : index
    %c0_147 = arith.constant 0 : index
    %c0_148 = arith.constant 0 : index
    %297 = vector.load %arg13[%c7_146, %c0_147, %c0_148] : memref<11x256x256xbf16, #tpu.memory_space<vmem>>, vector<1x256x256xbf16>
    %298 = vector.shape_cast %297 : vector<1x256x256xbf16> to vector<256x256xbf16>
    %299 = arith.truncf %296 : vector<8x256xf32> to vector<8x256xbf16>
    %cst_149 = arith.constant dense<0.000000e+00> : vector<8x256xf32>
    %300 = tpu.matmul %299, %298, %cst_149 {dimension_numbers = #tpu.dot_dimension_numbers<[1], [0], [0], [1], [0, 0, 1, 1], [], []>} : vector<8x256xbf16>, vector<256x256xbf16>, vector<8x256xf32> -> vector<8x256xf32>
    %c19 = arith.constant 19 : index
    %c0_150 = arith.constant 0 : index
    %301 = vector.load %arg7[%c19, %c0_150] : memref<26x256xf32, #tpu.memory_space<vmem>>, vector<1x256xf32>
    %302 = vector.broadcast %301 : vector<1x256xf32> to vector<8x256xf32>
    %303 = arith.addf %300, %302 : vector<8x256xf32>
    %304 = arith.addf %303, %262 : vector<8x256xf32>
    %c8_151 = arith.constant 8 : index
    %c0_152 = arith.constant 0 : index
    %c0_153 = arith.constant 0 : index
    %305 = vector.load %arg13[%c8_151, %c0_152, %c0_153] : memref<11x256x256xbf16, #tpu.memory_space<vmem>>, vector<1x256x256xbf16>
    %306 = vector.shape_cast %305 : vector<1x256x256xbf16> to vector<256x256xbf16>
    %307 = arith.truncf %304 : vector<8x256xf32> to vector<8x256xbf16>
    %cst_154 = arith.constant dense<0.000000e+00> : vector<8x256xf32>
    %308 = tpu.matmul %307, %306, %cst_154 {dimension_numbers = #tpu.dot_dimension_numbers<[1], [0], [0], [1], [0, 0, 1, 1], [], []>} : vector<8x256xbf16>, vector<256x256xbf16>, vector<8x256xf32> -> vector<8x256xf32>
    %309 = vector.extract_strided_slice %7 {offsets = [0, 1536], sizes = [8, 256], strides = [1, 1]} : vector<8x2304xf32> to vector<8x256xf32>
    %310 = arith.addf %308, %309 : vector<8x256xf32>
    %c12 = arith.constant 12 : index
    %c0_155 = arith.constant 0 : index
    %311 = vector.load %arg7[%c12, %c0_155] : memref<26x256xf32, #tpu.memory_space<vmem>>, vector<1x256xf32>
    %312 = vector.broadcast %311 : vector<1x256xf32> to vector<8x256xf32>
    %313 = arith.addf %310, %312 : vector<8x256xf32>
    %cst_156 = arith.constant 5.000000e-01 : f32
    %314 = vector.broadcast %cst_156 : f32 to vector<8x256xf32>
    %315 = arith.mulf %314, %313 : vector<8x256xf32>
    %316 = math.tanh %315 : vector<8x256xf32>
    %cst_157 = arith.constant 1.000000e+00 : f32
    %317 = vector.broadcast %cst_157 : f32 to vector<8x256xf32>
    %318 = arith.addf %316, %317 : vector<8x256xf32>
    %cst_158 = arith.constant 5.000000e-01 : f32
    %319 = vector.broadcast %cst_158 : f32 to vector<8x256xf32>
    %320 = arith.mulf %319, %318 : vector<8x256xf32>
    %321 = arith.mulf %313, %320 : vector<8x256xf32>
    %c9_159 = arith.constant 9 : index
    %c0_160 = arith.constant 0 : index
    %c0_161 = arith.constant 0 : index
    %322 = vector.load %arg13[%c9_159, %c0_160, %c0_161] : memref<11x256x256xbf16, #tpu.memory_space<vmem>>, vector<1x256x256xbf16>
    %323 = vector.shape_cast %322 : vector<1x256x256xbf16> to vector<256x256xbf16>
    %324 = arith.truncf %321 : vector<8x256xf32> to vector<8x256xbf16>
    %cst_162 = arith.constant dense<0.000000e+00> : vector<8x256xf32>
    %325 = tpu.matmul %324, %323, %cst_162 {dimension_numbers = #tpu.dot_dimension_numbers<[1], [0], [0], [1], [0, 0, 1, 1], [], []>} : vector<8x256xbf16>, vector<256x256xbf16>, vector<8x256xf32> -> vector<8x256xf32>
    %326 = vector.extract_strided_slice %7 {offsets = [0, 1792], sizes = [8, 256], strides = [1, 1]} : vector<8x2304xf32> to vector<8x256xf32>
    %327 = arith.addf %325, %326 : vector<8x256xf32>
    %c16 = arith.constant 16 : index
    %c0_163 = arith.constant 0 : index
    %328 = vector.load %arg7[%c16, %c0_163] : memref<26x256xf32, #tpu.memory_space<vmem>>, vector<1x256xf32>
    %329 = vector.broadcast %328 : vector<1x256xf32> to vector<8x256xf32>
    %330 = arith.addf %327, %329 : vector<8x256xf32>
    %cst_164 = arith.constant 5.000000e-01 : f32
    %331 = vector.broadcast %cst_164 : f32 to vector<8x256xf32>
    %332 = arith.mulf %331, %330 : vector<8x256xf32>
    %333 = math.tanh %332 : vector<8x256xf32>
    %cst_165 = arith.constant 1.000000e+00 : f32
    %334 = vector.broadcast %cst_165 : f32 to vector<8x256xf32>
    %335 = arith.addf %333, %334 : vector<8x256xf32>
    %cst_166 = arith.constant 5.000000e-01 : f32
    %336 = vector.broadcast %cst_166 : f32 to vector<8x256xf32>
    %337 = arith.mulf %336, %335 : vector<8x256xf32>
    %338 = arith.mulf %330, %337 : vector<8x256xf32>
    %c10_167 = arith.constant 10 : index
    %c0_168 = arith.constant 0 : index
    %c0_169 = arith.constant 0 : index
    %339 = vector.load %arg13[%c10_167, %c0_168, %c0_169] : memref<11x256x256xbf16, #tpu.memory_space<vmem>>, vector<1x256x256xbf16>
    %340 = vector.shape_cast %339 : vector<1x256x256xbf16> to vector<256x256xbf16>
    %341 = arith.truncf %338 : vector<8x256xf32> to vector<8x256xbf16>
    %cst_170 = arith.constant dense<0.000000e+00> : vector<8x256xf32>
    %342 = tpu.matmul %341, %340, %cst_170 {dimension_numbers = #tpu.dot_dimension_numbers<[1], [0], [0], [1], [0, 0, 1, 1], [], []>} : vector<8x256xbf16>, vector<256x256xbf16>, vector<8x256xf32> -> vector<8x256xf32>
    %c20 = arith.constant 20 : index
    %c0_171 = arith.constant 0 : index
    %343 = vector.load %arg7[%c20, %c0_171] : memref<26x256xf32, #tpu.memory_space<vmem>>, vector<1x256xf32>
    %344 = vector.broadcast %343 : vector<1x256xf32> to vector<8x256xf32>
    %345 = arith.addf %342, %344 : vector<8x256xf32>
    %346 = arith.addf %345, %304 : vector<8x256xf32>
    %c1_i32_172 = arith.constant 1 : i32
    %347 = tpu.memref_slice %arg15[%c1_i32_172] : memref<2x!tpu.dma_semaphore, #tpu.memory_space<semaphore_mem>> -> memref<1x!tpu.dma_semaphore, #tpu.memory_space<semaphore_mem>>
    %348 = tpu.memref_squeeze %347 : memref<1x!tpu.dma_semaphore, #tpu.memory_space<semaphore_mem>> -> memref<!tpu.dma_semaphore, #tpu.memory_space<semaphore_mem>>
    tpu.wait_dma2 semaphore(%348 : memref<!tpu.dma_semaphore, #tpu.memory_space<semaphore_mem>>) src(%arg9 : memref<5x256x256xbf16, #tpu.memory_space<any>>) dst(%arg14 : memref<5x256x256xbf16, #tpu.memory_space<vmem>>)
    %c0_173 = arith.constant 0 : index
    %c0_174 = arith.constant 0 : index
    %c0_175 = arith.constant 0 : index
    %349 = vector.load %arg14[%c0_173, %c0_174, %c0_175] : memref<5x256x256xbf16, #tpu.memory_space<vmem>>, vector<1x256x256xbf16>
    %350 = vector.shape_cast %349 : vector<1x256x256xbf16> to vector<256x256xbf16>
    %351 = arith.truncf %346 : vector<8x256xf32> to vector<8x256xbf16>
    %cst_176 = arith.constant dense<0.000000e+00> : vector<8x256xf32>
    %352 = tpu.matmul %351, %350, %cst_176 {dimension_numbers = #tpu.dot_dimension_numbers<[1], [0], [0], [1], [0, 0, 1, 1], [], []>} : vector<8x256xbf16>, vector<256x256xbf16>, vector<8x256xf32> -> vector<8x256xf32>
    %353 = vector.extract_strided_slice %7 {offsets = [0, 2048], sizes = [8, 256], strides = [1, 1]} : vector<8x2304xf32> to vector<8x256xf32>
    %354 = arith.addf %352, %353 : vector<8x256xf32>
    %c21 = arith.constant 21 : index
    %c0_177 = arith.constant 0 : index
    %355 = vector.load %arg7[%c21, %c0_177] : memref<26x256xf32, #tpu.memory_space<vmem>>, vector<1x256xf32>
    %356 = vector.broadcast %355 : vector<1x256xf32> to vector<8x256xf32>
    %357 = arith.addf %354, %356 : vector<8x256xf32>
    %cst_178 = arith.constant 5.000000e-01 : f32
    %358 = vector.broadcast %cst_178 : f32 to vector<8x256xf32>
    %359 = arith.mulf %358, %357 : vector<8x256xf32>
    %360 = math.tanh %359 : vector<8x256xf32>
    %cst_179 = arith.constant 1.000000e+00 : f32
    %361 = vector.broadcast %cst_179 : f32 to vector<8x256xf32>
    %362 = arith.addf %360, %361 : vector<8x256xf32>
    %cst_180 = arith.constant 5.000000e-01 : f32
    %363 = vector.broadcast %cst_180 : f32 to vector<8x256xf32>
    %364 = arith.mulf %363, %362 : vector<8x256xf32>
    %365 = arith.mulf %357, %364 : vector<8x256xf32>
    %c1_181 = arith.constant 1 : index
    %c0_182 = arith.constant 0 : index
    %c0_183 = arith.constant 0 : index
    %366 = vector.load %arg14[%c1_181, %c0_182, %c0_183] : memref<5x256x256xbf16, #tpu.memory_space<vmem>>, vector<1x256x256xbf16>
    %367 = vector.shape_cast %366 : vector<1x256x256xbf16> to vector<256x256xbf16>
    %368 = arith.truncf %365 : vector<8x256xf32> to vector<8x256xbf16>
    %cst_184 = arith.constant dense<0.000000e+00> : vector<8x256xf32>
    %369 = tpu.matmul %368, %367, %cst_184 {dimension_numbers = #tpu.dot_dimension_numbers<[1], [0], [0], [1], [0, 0, 1, 1], [], []>} : vector<8x256xbf16>, vector<256x256xbf16>, vector<8x256xf32> -> vector<8x256xf32>
    %c22 = arith.constant 22 : index
    %c0_185 = arith.constant 0 : index
    %370 = vector.load %arg7[%c22, %c0_185] : memref<26x256xf32, #tpu.memory_space<vmem>>, vector<1x256xf32>
    %371 = vector.broadcast %370 : vector<1x256xf32> to vector<8x256xf32>
    %372 = arith.addf %369, %371 : vector<8x256xf32>
    %cst_186 = arith.constant 5.000000e-01 : f32
    %373 = vector.broadcast %cst_186 : f32 to vector<8x256xf32>
    %374 = arith.mulf %373, %372 : vector<8x256xf32>
    %375 = math.tanh %374 : vector<8x256xf32>
    %cst_187 = arith.constant 1.000000e+00 : f32
    %376 = vector.broadcast %cst_187 : f32 to vector<8x256xf32>
    %377 = arith.addf %375, %376 : vector<8x256xf32>
    %cst_188 = arith.constant 5.000000e-01 : f32
    %378 = vector.broadcast %cst_188 : f32 to vector<8x256xf32>
    %379 = arith.mulf %378, %377 : vector<8x256xf32>
    %380 = arith.mulf %372, %379 : vector<8x256xf32>
    %c2_189 = arith.constant 2 : index
    %c0_190 = arith.constant 0 : index
    %c0_191 = arith.constant 0 : index
    %381 = vector.load %arg14[%c2_189, %c0_190, %c0_191] : memref<5x256x256xbf16, #tpu.memory_space<vmem>>, vector<1x256x256xbf16>
    %382 = vector.shape_cast %381 : vector<1x256x256xbf16> to vector<256x256xbf16>
    %383 = arith.truncf %380 : vector<8x256xf32> to vector<8x256xbf16>
    %cst_192 = arith.constant dense<0.000000e+00> : vector<8x256xf32>
    %384 = tpu.matmul %383, %382, %cst_192 {dimension_numbers = #tpu.dot_dimension_numbers<[1], [0], [0], [1], [0, 0, 1, 1], [], []>} : vector<8x256xbf16>, vector<256x256xbf16>, vector<8x256xf32> -> vector<8x256xf32>
    %c23 = arith.constant 23 : index
    %c0_193 = arith.constant 0 : index
    %385 = vector.load %arg7[%c23, %c0_193] : memref<26x256xf32, #tpu.memory_space<vmem>>, vector<1x256xf32>
    %386 = vector.broadcast %385 : vector<1x256xf32> to vector<8x256xf32>
    %387 = arith.addf %384, %386 : vector<8x256xf32>
    %cst_194 = arith.constant 5.000000e-01 : f32
    %388 = vector.broadcast %cst_194 : f32 to vector<8x256xf32>
    %389 = arith.mulf %388, %387 : vector<8x256xf32>
    %390 = math.tanh %389 : vector<8x256xf32>
    %cst_195 = arith.constant 1.000000e+00 : f32
    %391 = vector.broadcast %cst_195 : f32 to vector<8x256xf32>
    %392 = arith.addf %390, %391 : vector<8x256xf32>
    %cst_196 = arith.constant 5.000000e-01 : f32
    %393 = vector.broadcast %cst_196 : f32 to vector<8x256xf32>
    %394 = arith.mulf %393, %392 : vector<8x256xf32>
    %395 = arith.mulf %387, %394 : vector<8x256xf32>
    %c3_197 = arith.constant 3 : index
    %c0_198 = arith.constant 0 : index
    %c0_199 = arith.constant 0 : index
    %396 = vector.load %arg14[%c3_197, %c0_198, %c0_199] : memref<5x256x256xbf16, #tpu.memory_space<vmem>>, vector<1x256x256xbf16>
    %397 = vector.shape_cast %396 : vector<1x256x256xbf16> to vector<256x256xbf16>
    %398 = arith.truncf %395 : vector<8x256xf32> to vector<8x256xbf16>
    %cst_200 = arith.constant dense<0.000000e+00> : vector<8x256xf32>
    %399 = tpu.matmul %398, %397, %cst_200 {dimension_numbers = #tpu.dot_dimension_numbers<[1], [0], [0], [1], [0, 0, 1, 1], [], []>} : vector<8x256xbf16>, vector<256x256xbf16>, vector<8x256xf32> -> vector<8x256xf32>
    %c24 = arith.constant 24 : index
    %c0_201 = arith.constant 0 : index
    %400 = vector.load %arg7[%c24, %c0_201] : memref<26x256xf32, #tpu.memory_space<vmem>>, vector<1x256xf32>
    %401 = vector.broadcast %400 : vector<1x256xf32> to vector<8x256xf32>
    %402 = arith.addf %399, %401 : vector<8x256xf32>
    %cst_202 = arith.constant 5.000000e-01 : f32
    %403 = vector.broadcast %cst_202 : f32 to vector<8x256xf32>
    %404 = arith.mulf %403, %402 : vector<8x256xf32>
    %405 = math.tanh %404 : vector<8x256xf32>
    %cst_203 = arith.constant 1.000000e+00 : f32
    %406 = vector.broadcast %cst_203 : f32 to vector<8x256xf32>
    %407 = arith.addf %405, %406 : vector<8x256xf32>
    %cst_204 = arith.constant 5.000000e-01 : f32
    %408 = vector.broadcast %cst_204 : f32 to vector<8x256xf32>
    %409 = arith.mulf %408, %407 : vector<8x256xf32>
    %410 = arith.mulf %402, %409 : vector<8x256xf32>
    %c4_205 = arith.constant 4 : index
    %c0_206 = arith.constant 0 : index
    %c0_207 = arith.constant 0 : index
    %411 = vector.load %arg14[%c4_205, %c0_206, %c0_207] : memref<5x256x256xbf16, #tpu.memory_space<vmem>>, vector<1x256x256xbf16>
    %412 = vector.shape_cast %411 : vector<1x256x256xbf16> to vector<256x256xbf16>
    %413 = arith.truncf %410 : vector<8x256xf32> to vector<8x256xbf16>
    %cst_208 = arith.constant dense<0.000000e+00> : vector<8x256xf32>
    %414 = tpu.matmul %413, %412, %cst_208 {dimension_numbers = #tpu.dot_dimension_numbers<[1], [0], [0], [1], [0, 0, 1, 1], [], []>} : vector<8x256xbf16>, vector<256x256xbf16>, vector<8x256xf32> -> vector<8x256xf32>
    %c25 = arith.constant 25 : index
    %c0_209 = arith.constant 0 : index
    %415 = vector.load %arg7[%c25, %c0_209] : memref<26x256xf32, #tpu.memory_space<vmem>>, vector<1x256xf32>
    %416 = vector.broadcast %415 : vector<1x256xf32> to vector<8x256xf32>
    %417 = arith.addf %414, %416 : vector<8x256xf32>
    %c0_210 = arith.constant 0 : index
    %c0_211 = arith.constant 0 : index
    %418 = vector.load %arg10[%c0_210, %c0_211] : memref<8x256xf32, #tpu.memory_space<vmem>>, vector<8x256xf32>
    tpu.vector_store %arg10[%c0_210, %c0_211], %46 {strides = array<i32>} : memref<8x256xf32, #tpu.memory_space<vmem>>, vector<8x256xf32>,
    %c0_212 = arith.constant 0 : index
    %c0_213 = arith.constant 0 : index
    %419 = vector.load %arg11[%c0_212, %c0_213] : memref<8x256xf32, #tpu.memory_space<vmem>>, vector<8x256xf32>
    tpu.vector_store %arg11[%c0_212, %c0_213], %417 {strides = array<i32>} : memref<8x256xf32, #tpu.memory_space<vmem>>, vector<8x256xf32>,
    %c0_214 = arith.constant 0 : index
    %c0_215 = arith.constant 0 : index
    %420 = vector.load %arg12[%c0_214, %c0_215] : memref<8x256xf32, #tpu.memory_space<vmem>>, vector<8x256xf32>
    tpu.vector_store %arg12[%c0_214, %c0_215], %115 {strides = array<i32>} : memref<8x256xf32, #tpu.memory_space<vmem>>, vector<8x256xf32>,
    return
  }
}

</mosaic_0001>

<llo_original>
// kernel: tpu_custom_call.1
$region0: #{tpu_custom_call.1}
  #allocation0 [shape = 'u32[]', space=smem, size = 0x4, offset = 0x4, fixed_abs, tag = 'smem constant byte address 0x4 - core index']
  #allocation1 [shape = 'u32[144,128]{1,0:T(1,128)}', space=vmem, size = 0x12000, scoped, tag = 'internal scratch']
  #allocation2 [shape = 'bf16[11,256,256]{2,1,0:T(8,128)(2,1)}', space=vmem, size = 0x160000, scoped, tag = 'scratch operand']
  #allocation3 [shape = 'bf16[5,256,256]{2,1,0:T(8,128)(2,1)}', space=vmem, size = 0xa0000, scoped, tag = 'scratch operand']
  #allocation4 [shape = 's32[2]{0}', space=sflag, size = 0x8, scoped, tag = 'scratch operand']
  #allocation23 [shape = 's32[]', space=sflag, size = 0x4, offset = 0, fixed_abs, tag = 'sflag constant byte address 0x0 - dummy sync flag']
  #allocation24 [shape = 's32[]', space=sflag, size = 0x4, offset = 0, fixed_abs, tag = 'sflag constant byte address 0x0 - dummy sync flag']
  #allocation25 [shape = 'u32[]', space=smem, size = 0x4, offset = 0x44, fixed_abs, tag = 'smem constant byte address 0x44 - assertion arg 0']
  #allocation26 [shape = 'u32[]', space=smem, size = 0x4, offset = 0x48, fixed_abs, tag = 'smem constant byte address 0x48 - assertion arg 1']
  #allocation27 [shape = 's32[]', space=sflag, size = 0x4, offset = 0, fixed_abs, tag = 'sflag constant byte address 0x0 - dummy sync flag']
  #allocation28 [shape = 's32[]', space=sflag, size = 0x4, offset = 0, fixed_abs, tag = 'sflag constant byte address 0x0 - dummy sync flag']
  %s0 = inlined_call_operand.hbm [shape: f32[16,32], index: 0, kind: input, shape index: {}]
  %s1 = inlined_call_operand.hbm [shape: f32[8,256], index: 1, kind: input, shape index: {}]
  %s2 = inlined_call_operand.hbm [shape: bf16[32,256], index: 2, kind: input, shape index: {}]
  %s3 = inlined_call_operand.hbm [shape: bf16[2,256,512], index: 3, kind: input, shape index: {}]
  %s4 = inlined_call_operand.hbm [shape: bf16[7,256,256], index: 4, kind: input, shape index: {}]
  %s5 = inlined_call_operand.hbm [shape: bf16[256,512], index: 5, kind: input, shape index: {}]
  %s6 = inlined_call_operand.hbm [shape: bf16[256,2304], index: 6, kind: input, shape index: {}]
  %s7 = inlined_call_operand.hbm [shape: f32[26,256], index: 7, kind: input, shape index: {}]
  %s8 = inlined_call_operand.hbm [shape: bf16[11,256,256], index: 8, kind: input, shape index: {}]
  %s9 = inlined_call_operand.hbm [shape: bf16[5,256,256], index: 9, kind: input, shape index: {}]
  %s10 = inlined_call_operand.hbm [shape: f32[8,256], index: 10, kind: output, shape index: {0}]
  %s11 = inlined_call_operand.hbm [shape: f32[8,256], index: 11, kind: output, shape index: {1}]
  %s12 = inlined_call_operand.hbm [shape: f32[8,256], index: 12, kind: output, shape index: {2}]
  %13 = xla_tuple %s10, %s11, %s12
  %s14 = sld [smem:[#allocation0]]
  $region98: #{tpu_custom_call.1} parent=0
    _
  %s16 = ssub.s32 1, %s14
  %s17 = scalar_select 0, %s16, %s14
  $region1: #{tpu_custom_call.1} parent=0
    #allocation5 [shape = 'u8[8192]{0}', space=vmem, size = 0x2000, scoped, tag = 'input window, operand 0, single buffered']
    #allocation6 [shape = 's32[1]{0}', space=sflag, size = 0x4, scoped, tag = 'scoped memory for tpu_custom_call.1']
    #allocation7 [shape = 's32[1]{0}', space=sflag, size = 0x4, scoped, tag = 'scoped memory for tpu_custom_call.1']
    #allocation8 [shape = 'u8[8192]{0}', space=vmem, size = 0x2000, scoped, tag = 'input window, operand 1, single buffered']
    #allocation9 [shape = 's32[1]{0}', space=sflag, size = 0x4, scoped, tag = 'scoped memory for tpu_custom_call.1']
    #allocation10 [shape = 'u8[16384]{0}', space=vmem, size = 0x4000, scoped, tag = 'input window, operand 2, single buffered']
    #allocation11 [shape = 'u8[524288]{0}', space=vmem, size = 0x80000, scoped, tag = 'input window, operand 3, single buffered']
    #allocation12 [shape = 's32[1]{0}', space=sflag, size = 0x4, scoped, tag = 'scoped memory for tpu_custom_call.1']
    #allocation13 [shape = 'u8[917504]{0}', space=vmem, size = 0xe0000, scoped, tag = 'input window, operand 4, single buffered']
    #allocation14 [shape = 'u8[262144]{0}', space=vmem, size = 0x40000, scoped, tag = 'input window, operand 5, single buffered']
    #allocation15 [shape = 's32[1]{0}', space=sflag, size = 0x4, scoped, tag = 'scoped memory for tpu_custom_call.1']
    #allocation16 [shape = 'u8[1179648]{0}', space=vmem, size = 0x120000, scoped, tag = 'input window, operand 6, single buffered']
    #allocation17 [shape = 'u8[32768]{0}', space=vmem, size = 0x8000, scoped, tag = 'input window, operand 7, single buffered']
    #allocation18 [shape = 's32[1]{0}', space=sflag, size = 0x4, scoped, tag = 'scoped memory for tpu_custom_call.1']
    #allocation19 [shape = 'u8[8192]{0}', space=vmem, size = 0x2000, scoped, tag = 'output window, operand 0, single buffered']
    #allocation20 [shape = 'u8[8192]{0}', space=vmem, size = 0x2000, scoped, tag = 'output window, operand 1, single buffered']
    #allocation21 [shape = 's32[1]{0}', space=sflag, size = 0x4, scoped, tag = 'scoped memory for tpu_custom_call.1']
    #allocation22 [shape = 'u8[8192]{0}', space=vmem, size = 0x2000, scoped, tag = 'output window, operand 2, single buffered']
    %18 = vsyncpa [#allocation6], 0
    %19 = vsyncpa [#allocation9], 0
    %20 = vsyncpa [#allocation12], 0
    %21 = vsyncpa [#allocation15], 0
    %22 = vsyncpa [#allocation18], 0
    %23 = vsyncpa [#allocation7], 0
    %24 = vsyncpa [#allocation21], 0
    // Predicated region
    $region2: #{tpu_custom_call.1} parent=1 // pred_check
      _
    $region3: #{tpu_custom_call.1} parent=1 // pred_check_branch
      %26 = sbr.rel (0) target = $region5
    $region4: #{tpu_custom_call.1} parent=1 // pred_region
      %s28 = ssub.s32 256, 256
      %29 = vsyncadd [#allocation6], %s28
      %s30 = sshll.u32 [#allocation5], 4
      %s31 = int_to_ptr.vmem [resolvable:$true] %s30
      %36 = dma.hbm_to_vmem [thread:$0]  %s0, 256, %s31, [#allocation6], 128, 128, 8
    $region5: #{tpu_custom_call.1} parent=1 // pred_fallthru
      _
    // Predicated region
    $region6: #{tpu_custom_call.1} parent=1 // pred_check
      _
    $region7: #{tpu_custom_call.1} parent=1 // pred_check_branch
      %38 = sbr.rel (0) target = $region9
    $region8: #{tpu_custom_call.1} parent=1 // pred_region
      %s40 = ssub.s32 256, 256
      %41 = vsyncadd [#allocation9], %s40
      %s43 = sshll.u32 [#allocation8], 4
      %s44 = int_to_ptr.vmem [resolvable:$true] %s43
      %46 = dma.hbm_to_vmem [thread:$0]  %s1, 256, %s44, [#allocation9]
    $region9: #{tpu_custom_call.1} parent=1 // pred_fallthru
      _
    // Predicated region
    $region10: #{tpu_custom_call.1} parent=1 // pred_check
      _
    $region11: #{tpu_custom_call.1} parent=1 // pred_check_branch
      %48 = sbr.rel (0) target = $region13
    $region12: #{tpu_custom_call.1} parent=1 // pred_region
      %s50 = ssub.s32 512, 512
      %51 = vsyncadd [#allocation9], %s50
      %s52 = sshll.u32 [#allocation10], 4
      %s53 = int_to_ptr.vmem [resolvable:$true] %s52
      %58 = dma.hbm_to_vmem [thread:$0]  %s2, 512, %s53, [#allocation9], 128, 128, 8
    $region13: #{tpu_custom_call.1} parent=1 // pred_fallthru
      _
    // Predicated region
    $region14: #{tpu_custom_call.1} parent=1 // pred_check
      _
    $region15: #{tpu_custom_call.1} parent=1 // pred_check_branch
      %60 = sbr.rel (0) target = $region17
    $region16: #{tpu_custom_call.1} parent=1 // pred_region
      %s62 = ssub.s32 16384, 16384
      %63 = vsyncadd [#allocation12], %s62
      %s64 = sshll.u32 [#allocation11], 4
      %s65 = int_to_ptr.vmem [resolvable:$true] %s64
      %70 = dma.hbm_to_vmem [thread:$0]  %s3, 16384, %s65, [#allocation12], 256, 256, 16
    $region17: #{tpu_custom_call.1} parent=1 // pred_fallthru
      _
    // Predicated region
    $region18: #{tpu_custom_call.1} parent=1 // pred_check
      _
    $region19: #{tpu_custom_call.1} parent=1 // pred_check_branch
      %72 = sbr.rel (0) target = $region21
    $region20: #{tpu_custom_call.1} parent=1 // pred_region
      %s74 = ssub.s32 28672, 28672
      %75 = vsyncadd [#allocation12], %s74
      %s76 = sshll.u32 [#allocation13], 4
      %s77 = int_to_ptr.vmem [resolvable:$true] %s76
      %82 = dma.hbm_to_vmem [thread:$0]  %s4, 28672, %s77, [#allocation12], 128, 128, 8
    $region21: #{tpu_custom_call.1} parent=1 // pred_fallthru
      _
    // Predicated region
    $region22: #{tpu_custom_call.1} parent=1 // pred_check
      _
    $region23: #{tpu_custom_call.1} parent=1 // pred_check_branch
      %84 = sbr.rel (0) target = $region25
    $region24: #{tpu_custom_call.1} parent=1 // pred_region
      %s86 = ssub.s32 8192, 8192
      %87 = vsyncadd [#allocation15], %s86
      %s88 = sshll.u32 [#allocation14], 4
      %s89 = int_to_ptr.vmem [resolvable:$true] %s88
      %94 = dma.hbm_to_vmem [thread:$0]  %s5, 8192, %s89, [#allocation15], 256, 256, 16
    $region25: #{tpu_custom_call.1} parent=1 // pred_fallthru
      _
    // Predicated region
    $region26: #{tpu_custom_call.1} parent=1 // pred_check
      _
    $region27: #{tpu_custom_call.1} parent=1 // pred_check_branch
      %96 = sbr.rel (0) target = $region29
    $region28: #{tpu_custom_call.1} parent=1 // pred_region
      %s98 = ssub.s32 36864, 36864
      %99 = vsyncadd [#allocation15], %s98
      %s100 = sshll.u32 [#allocation16], 4
      %s101 = int_to_ptr.vmem [resolvable:$true] %s100
      %106 = dma.hbm_to_vmem [thread:$0]  %s6, 36864, %s101, [#allocation15], 1152, 1152, 72
    $region29: #{tpu_custom_call.1} parent=1 // pred_fallthru
      _
    // Predicated region
    $region30: #{tpu_custom_call.1} parent=1 // pred_check
      _
    $region31: #{tpu_custom_call.1} parent=1 // pred_check_branch
      %108 = sbr.rel (0) target = $region33
    $region32: #{tpu_custom_call.1} parent=1 // pred_region
      %s110 = ssub.s32 1024, 1024
      %111 = vsyncadd [#allocation18], %s110
      %s112 = sshll.u32 [#allocation17], 4
      %s113 = int_to_ptr.vmem [resolvable:$true] %s112
      %118 = dma.hbm_to_vmem [thread:$0]  %s7, 1024, %s113, [#allocation18], 256, 256, 16
    $region33: #{tpu_custom_call.1} parent=1 // pred_fallthru
      _
    // Predicated region
    $region34: #{tpu_custom_call.1} parent=1 // pred_check
      _
    $region35: #{tpu_custom_call.1} parent=1 // pred_check_branch
      %120 = sbr.rel (0) target = $region37
    $region36: #{tpu_custom_call.1} parent=1 // pred_region
      %121 = dma.done [#allocation6], 256
    $region37: #{tpu_custom_call.1} parent=1 // pred_fallthru
      _
    // Predicated region
    $region38: #{tpu_custom_call.1} parent=1 // pred_check
      _
    $region39: #{tpu_custom_call.1} parent=1 // pred_check_branch
      %123 = sbr.rel (0) target = $region41
    $region40: #{tpu_custom_call.1} parent=1 // pred_region
      %124 = dma.done [#allocation9], 256
    $region41: #{tpu_custom_call.1} parent=1 // pred_fallthru
      _
    // Predicated region
    $region42: #{tpu_custom_call.1} parent=1 // pred_check
      _
    $region43: #{tpu_custom_call.1} parent=1 // pred_check_branch
      %126 = sbr.rel (0) target = $region45
    $region44: #{tpu_custom_call.1} parent=1 // pred_region
      %127 = dma.done [#allocation9], 512
    $region45: #{tpu_custom_call.1} parent=1 // pred_fallthru
      _
    // Predicated region
    $region46: #{tpu_custom_call.1} parent=1 // pred_check
      _
    $region47: #{tpu_custom_call.1} parent=1 // pred_check_branch
      %129 = sbr.rel (0) target = $region49
    $region48: #{tpu_custom_call.1} parent=1 // pred_region
      %130 = dma.done [#allocation12], 16384
    $region49: #{tpu_custom_call.1} parent=1 // pred_fallthru
      _
    // Predicated region
    $region50: #{tpu_custom_call.1} parent=1 // pred_check
      _
    $region51: #{tpu_custom_call.1} parent=1 // pred_check_branch
      %132 = sbr.rel (0) target = $region53
    $region52: #{tpu_custom_call.1} parent=1 // pred_region
      %133 = dma.done [#allocation12], 28672
    $region53: #{tpu_custom_call.1} parent=1 // pred_fallthru
      _
    // Predicated region
    $region54: #{tpu_custom_call.1} parent=1 // pred_check
      _
    $region55: #{tpu_custom_call.1} parent=1 // pred_check_branch
      %135 = sbr.rel (0) target = $region57
    $region56: #{tpu_custom_call.1} parent=1 // pred_region
      %136 = dma.done [#allocation15], 8192
    $region57: #{tpu_custom_call.1} parent=1 // pred_fallthru
      _
    // Predicated region
    $region58: #{tpu_custom_call.1} parent=1 // pred_check
      _
    $region59: #{tpu_custom_call.1} parent=1 // pred_check_branch
      %138 = sbr.rel (0) target = $region61
    $region60: #{tpu_custom_call.1} parent=1 // pred_region
      %139 = dma.done [#allocation15], 36864
    $region61: #{tpu_custom_call.1} parent=1 // pred_fallthru
      _
    // Predicated region
    $region62: #{tpu_custom_call.1} parent=1 // pred_check
      _
    $region63: #{tpu_custom_call.1} parent=1 // pred_check_branch
      %141 = sbr.rel (0) target = $region65
    $region64: #{tpu_custom_call.1} parent=1 // pred_region
      %142 = dma.done [#allocation18], 1024
    $region65: #{tpu_custom_call.1} parent=1 // pred_fallthru
      _
    // Predicated region
    $region66: #{tpu_custom_call.1} parent=1 // pred_check
      _
    $region67: #{tpu_custom_call.1} parent=1 // pred_check_branch
      %145 = sbr.rel target = $region69
    $region68: #{tpu_custom_call.1} parent=1 // pred_region
      %146 = sst [smem:[#allocation25]] [#allocation24]
      %147 = sst [smem:[#allocation26]] [#allocation23]
    $region69: #{tpu_custom_call.1} parent=1 // pred_fallthru
      _
    %149 = shalt.err (0)
    %s151 = sshll.u32 [#allocation2], 4
    %s152 = int_to_ptr.vmem [resolvable:$true] %s151
    %154 = dma.hbm_to_vmem [thread:$0]  %s8, 45056, %s152, [#allocation4]
    %s155 = scalar_lea.sflag [#allocation4], 1
    // Predicated region
    $region70: #{tpu_custom_call.1} parent=1 // pred_check
      _
    $region71: #{tpu_custom_call.1} parent=1 // pred_check_branch
      %157 = sbr.rel target = $region73
    $region72: #{tpu_custom_call.1} parent=1 // pred_region
      %158 = sst [smem:[#allocation25]] [#allocation28]
      %159 = sst [smem:[#allocation26]] [#allocation27]
    $region73: #{tpu_custom_call.1} parent=1 // pred_fallthru
      _
    %161 = shalt.err (0)
    %s163 = sshll.u32 [#allocation3], 4
    %s164 = int_to_ptr.vmem [resolvable:$true] %s163
    %166 = dma.hbm_to_vmem [thread:$0]  %s9, 20480, %s164, %s155
    %v167 = vld [vmem:[#allocation8] sm:$0xff]
    %v168 = vld [vmem:[#allocation8 + $0x8] sm:$0xff]
    %v169 = vld [vmem:[#allocation16] sm:$0xff]
    %v170 = vld [vmem:[#allocation16 + $0x8] sm:$0xff]
    %v171 = vld [vmem:[#allocation16 + $0x10] sm:$0xff]
    %v172 = vld [vmem:[#allocation16 + $0x18] sm:$0xff]
    %v173 = vld [vmem:[#allocation16 + $0x20] sm:$0xff]
    %v174 = vld [vmem:[#allocation16 + $0x28] sm:$0xff]
    %v175 = vld [vmem:[#allocation16 + $0x30] sm:$0xff]
    %v176 = vld [vmem:[#allocation16 + $0x38] sm:$0xff]
    %v177 = vld [vmem:[#allocation16 + $0x40] sm:$0xff]
    %v178 = vld [vmem:[#allocation16 + $0x48] sm:$0xff]
    %v179 = vld [vmem:[#allocation16 + $0x50] sm:$0xff]
    %v180 = vld [vmem:[#allocation16 + $0x58] sm:$0xff]
    %v181 = vld [vmem:[#allocation16 + $0x60] sm:$0xff]
    %v182 = vld [vmem:[#allocation16 + $0x68] sm:$0xff]
    %v183 = vld [vmem:[#allocation16 + $0x70] sm:$0xff]
    %v184 = vld [vmem:[#allocation16 + $0x78] sm:$0xff]
    %v185 = vld [vmem:[#allocation16 + $0x80] sm:$0xff]
    %v186 = vld [vmem:[#allocation16 + $0x88] sm:$0xff]
    %v187 = vld [vmem:[#allocation16 + $0x90] sm:$0xff]
    %v188 = vld [vmem:[#allocation16 + $0x98] sm:$0xff]
    %v189 = vld [vmem:[#allocation16 + $0xa0] sm:$0xff]
    %v190 = vld [vmem:[#allocation16 + $0xa8] sm:$0xff]
    %v191 = vld [vmem:[#allocation16 + $0xb0] sm:$0xff]
    %v192 = vld [vmem:[#allocation16 + $0xb8] sm:$0xff]
    %v193 = vld [vmem:[#allocation16 + $0xc0] sm:$0xff]
    %v194 = vld [vmem:[#allocation16 + $0xc8] sm:$0xff]
    %v195 = vld [vmem:[#allocation16 + $0xd0] sm:$0xff]
    %v196 = vld [vmem:[#allocation16 + $0xd8] sm:$0xff]
    %v197 = vld [vmem:[#allocation16 + $0xe0] sm:$0xff]
    %v198 = vld [vmem:[#allocation16 + $0xe8] sm:$0xff]
    %v199 = vld [vmem:[#allocation16 + $0xf0] sm:$0xff]
    %v200 = vld [vmem:[#allocation16 + $0xf8] sm:$0xff]
    %v201 = vld [vmem:[#allocation16 + $0x100] sm:$0xff]
    %v202 = vld [vmem:[#allocation16 + $0x108] sm:$0xff]
    %v203 = vld [vmem:[#allocation16 + $0x110] sm:$0xff]
    %v204 = vld [vmem:[#allocation16 + $0x118] sm:$0xff]
    %v205 = vld [vmem:[#allocation16 + $0x120] sm:$0xff]
    %v206 = vld [vmem:[#allocation16 + $0x128] sm:$0xff]
    %v207 = vld [vmem:[#allocation16 + $0x130] sm:$0xff]
    %v208 = vld [vmem:[#allocation16 + $0x138] sm:$0xff]
    %v209 = vld [vmem:[#allocation16 + $0x140] sm:$0xff]
    %v210 = vld [vmem:[#allocation16 + $0x148] sm:$0xff]
    %v211 = vld [vmem:[#allocation16 + $0x150] sm:$0xff]
    %v212 = vld [vmem:[#allocation16 + $0x158] sm:$0xff]
    %v213 = vld [vmem:[#allocation16 + $0x160] sm:$0xff]
    %v214 = vld [vmem:[#allocation16 + $0x168] sm:$0xff]
    %v215 = vld [vmem:[#allocation16 + $0x170] sm:$0xff]
    %v216 = vld [vmem:[#allocation16 + $0x178] sm:$0xff]
    %v217 = vld [vmem:[#allocation16 + $0x180] sm:$0xff]
    %v218 = vld [vmem:[#allocation16 + $0x188] sm:$0xff]
    %v219 = vld [vmem:[#allocation16 + $0x190] sm:$0xff]
    %v220 = vld [vmem:[#allocation16 + $0x198] sm:$0xff]
    %v221 = vld [vmem:[#allocation16 + $0x1a0] sm:$0xff]
    %v222 = vld [vmem:[#allocation16 + $0x1a8] sm:$0xff]
    %v223 = vld [vmem:[#allocation16 + $0x1b0] sm:$0xff]
    %v224 = vld [vmem:[#allocation16 + $0x1b8] sm:$0xff]
    %v225 = vld [vmem:[#allocation16 + $0x1c0] sm:$0xff]
    %v226 = vld [vmem:[#allocation16 + $0x1c8] sm:$0xff]
    %v227 = vld [vmem:[#allocation16 + $0x1d0] sm:$0xff]
    %v228 = vld [vmem:[#allocation16 + $0x1d8] sm:$0xff]
    %v229 = vld [vmem:[#allocation16 + $0x1e0] sm:$0xff]
    %v230 = vld [vmem:[#allocation16 + $0x1e8] sm:$0xff]
    %v231 = vld [vmem:[#allocation16 + $0x1f0] sm:$0xff]
    %v232 = vld [vmem:[#allocation16 + $0x1f8] sm:$0xff]
    %v233 = vld [vmem:[#allocation16 + $0x200] sm:$0xff]
    %v234 = vld [vmem:[#allocation16 + $0x208] sm:$0xff]
    %v235 = vld [vmem:[#allocation16 + $0x210] sm:$0xff]
    %v236 = vld [vmem:[#allocation16 + $0x218] sm:$0xff]
    %v237 = vld [vmem:[#allocation16 + $0x220] sm:$0xff]
    %v238 = vld [vmem:[#allocation16 + $0x228] sm:$0xff]
    %v239 = vld [vmem:[#allocation16 + $0x230] sm:$0xff]
    %v240 = vld [vmem:[#allocation16 + $0x238] sm:$0xff]
    %v241 = vld [vmem:[#allocation16 + $0x240] sm:$0xff]
    %v242 = vld [vmem:[#allocation16 + $0x248] sm:$0xff]
    %v243 = vld [vmem:[#allocation16 + $0x250] sm:$0xff]
    %v244 = vld [vmem:[#allocation16 + $0x258] sm:$0xff]
    %v245 = vld [vmem:[#allocation16 + $0x260] sm:$0xff]
    %v246 = vld [vmem:[#allocation16 + $0x268] sm:$0xff]
    %v247 = vld [vmem:[#allocation16 + $0x270] sm:$0xff]
    %v248 = vld [vmem:[#allocation16 + $0x278] sm:$0xff]
    %v249 = vld [vmem:[#allocation16 + $0x280] sm:$0xff]
    %v250 = vld [vmem:[#allocation16 + $0x288] sm:$0xff]
    %v251 = vld [vmem:[#allocation16 + $0x290] sm:$0xff]
    %v252 = vld [vmem:[#allocation16 + $0x298] sm:$0xff]
    %v253 = vld [vmem:[#allocation16 + $0x2a0] sm:$0xff]
    %v254 = vld [vmem:[#allocation16 + $0x2a8] sm:$0xff]
    %v255 = vld [vmem:[#allocation16 + $0x2b0] sm:$0xff]
    %v256 = vld [vmem:[#allocation16 + $0x2b8] sm:$0xff]
    %v257 = vld [vmem:[#allocation16 + $0x2c0] sm:$0xff]
    %v258 = vld [vmem:[#allocation16 + $0x2c8] sm:$0xff]
    %v259 = vld [vmem:[#allocation16 + $0x2d0] sm:$0xff]
    %v260 = vld [vmem:[#allocation16 + $0x2d8] sm:$0xff]
    %v261 = vld [vmem:[#allocation16 + $0x2e0] sm:$0xff]
    %v262 = vld [vmem:[#allocation16 + $0x2e8] sm:$0xff]
    %v263 = vld [vmem:[#allocation16 + $0x2f0] sm:$0xff]
    %v264 = vld [vmem:[#allocation16 + $0x2f8] sm:$0xff]
    %v265 = vld [vmem:[#allocation16 + $0x300] sm:$0xff]
    %v266 = vld [vmem:[#allocation16 + $0x308] sm:$0xff]
    %v267 = vld [vmem:[#allocation16 + $0x310] sm:$0xff]
    %v268 = vld [vmem:[#allocation16 + $0x318] sm:$0xff]
    %v269 = vld [vmem:[#allocation16 + $0x320] sm:$0xff]
    %v270 = vld [vmem:[#allocation16 + $0x328] sm:$0xff]
    %v271 = vld [vmem:[#allocation16 + $0x330] sm:$0xff]
    %v272 = vld [vmem:[#allocation16 + $0x338] sm:$0xff]
    %v273 = vld [vmem:[#allocation16 + $0x340] sm:$0xff]
    %v274 = vld [vmem:[#allocation16 + $0x348] sm:$0xff]
    %v275 = vld [vmem:[#allocation16 + $0x350] sm:$0xff]
    %v276 = vld [vmem:[#allocation16 + $0x358] sm:$0xff]
    %v277 = vld [vmem:[#allocation16 + $0x360] sm:$0xff]
    %v278 = vld [vmem:[#allocation16 + $0x368] sm:$0xff]
    %v279 = vld [vmem:[#allocation16 + $0x370] sm:$0xff]
    %v280 = vld [vmem:[#allocation16 + $0x378] sm:$0xff]
    %v281 = vld [vmem:[#allocation16 + $0x380] sm:$0xff]
    %v282 = vld [vmem:[#allocation16 + $0x388] sm:$0xff]
    %v283 = vld [vmem:[#allocation16 + $0x390] sm:$0xff]
    %v284 = vld [vmem:[#allocation16 + $0x398] sm:$0xff]
    %v285 = vld [vmem:[#allocation16 + $0x3a0] sm:$0xff]
    %v286 = vld [vmem:[#allocation16 + $0x3a8] sm:$0xff]
    %v287 = vld [vmem:[#allocation16 + $0x3b0] sm:$0xff]
    %v288 = vld [vmem:[#allocation16 + $0x3b8] sm:$0xff]
    %v289 = vld [vmem:[#allocation16 + $0x3c0] sm:$0xff]
    %v290 = vld [vmem:[#allocation16 + $0x3c8] sm:$0xff]
    %v291 = vld [vmem:[#allocation16 + $0x3d0] sm:$0xff]
    %v292 = vld [vmem:[#allocation16 + $0x3d8] sm:$0xff]
    %v293 = vld [vmem:[#allocation16 + $0x3e0] sm:$0xff]
    %v294 = vld [vmem:[#allocation16 + $0x3e8] sm:$0xff]
    %v295 = vld [vmem:[#allocation16 + $0x3f0] sm:$0xff]
    %v296 = vld [vmem:[#allocation16 + $0x3f8] sm:$0xff]
    %v297 = vld [vmem:[#allocation16 + $0x400] sm:$0xff]
    %v298 = vld [vmem:[#allocation16 + $0x408] sm:$0xff]
    %v299 = vld [vmem:[#allocation16 + $0x410] sm:$0xff]
    %v300 = vld [vmem:[#allocation16 + $0x418] sm:$0xff]
    %v301 = vld [vmem:[#allocation16 + $0x420] sm:$0xff]
    %v302 = vld [vmem:[#allocation16 + $0x428] sm:$0xff]
    %v303 = vld [vmem:[#allocation16 + $0x430] sm:$0xff]
    %v304 = vld [vmem:[#allocation16 + $0x438] sm:$0xff]
    %v305 = vld [vmem:[#allocation16 + $0x440] sm:$0xff]
    %v306 = vld [vmem:[#allocation16 + $0x448] sm:$0xff]
    %v307 = vld [vmem:[#allocation16 + $0x450] sm:$0xff]
    %v308 = vld [vmem:[#allocation16 + $0x458] sm:$0xff]
    %v309 = vld [vmem:[#allocation16 + $0x460] sm:$0xff]
    %v310 = vld [vmem:[#allocation16 + $0x468] sm:$0xff]
    %v311 = vld [vmem:[#allocation16 + $0x470] sm:$0xff]
    %v312 = vld [vmem:[#allocation16 + $0x478] sm:$0xff]
    %v313 = vld [vmem:[#allocation16 + $0x480] sm:$0xff]
    %v314 = vld [vmem:[#allocation16 + $0x488] sm:$0xff]
    %v315 = vld [vmem:[#allocation16 + $0x490] sm:$0xff]
    %v316 = vld [vmem:[#allocation16 + $0x498] sm:$0xff]
    %v317 = vld [vmem:[#allocation16 + $0x4a0] sm:$0xff]
    %v318 = vld [vmem:[#allocation16 + $0x4a8] sm:$0xff]
    %v319 = vld [vmem:[#allocation16 + $0x4b0] sm:$0xff]
    %v320 = vld [vmem:[#allocation16 + $0x4b8] sm:$0xff]
    %v321 = vld [vmem:[#allocation16 + $0x4c0] sm:$0xff]
    %v322 = vld [vmem:[#allocation16 + $0x4c8] sm:$0xff]
    %v323 = vld [vmem:[#allocation16 + $0x4d0] sm:$0xff]
    %v324 = vld [vmem:[#allocation16 + $0x4d8] sm:$0xff]
    %v325 = vld [vmem:[#allocation16 + $0x4e0] sm:$0xff]
    %v326 = vld [vmem:[#allocation16 + $0x4e8] sm:$0xff]
    %v327 = vld [vmem:[#allocation16 + $0x4f0] sm:$0xff]
    %v328 = vld [vmem:[#allocation16 + $0x4f8] sm:$0xff]
    %v329 = vld [vmem:[#allocation16 + $0x500] sm:$0xff]
    %v330 = vld [vmem:[#allocation16 + $0x508] sm:$0xff]
    %v331 = vld [vmem:[#allocation16 + $0x510] sm:$0xff]
    %v332 = vld [vmem:[#allocation16 + $0x518] sm:$0xff]
    %v333 = vld [vmem:[#allocation16 + $0x520] sm:$0xff]
    %v334 = vld [vmem:[#allocation16 + $0x528] sm:$0xff]
    %v335 = vld [vmem:[#allocation16 + $0x530] sm:$0xff]
    %v336 = vld [vmem:[#allocation16 + $0x538] sm:$0xff]
    %v337 = vld [vmem:[#allocation16 + $0x540] sm:$0xff]
    %v338 = vld [vmem:[#allocation16 + $0x548] sm:$0xff]
    %v339 = vld [vmem:[#allocation16 + $0x550] sm:$0xff]
    %v340 = vld [vmem:[#allocation16 + $0x558] sm:$0xff]
    %v341 = vld [vmem:[#allocation16 + $0x560] sm:$0xff]
    %v342 = vld [vmem:[#allocation16 + $0x568] sm:$0xff]
    %v343 = vld [vmem:[#allocation16 + $0x570] sm:$0xff]
    %v344 = vld [vmem:[#allocation16 + $0x578] sm:$0xff]
    %v345 = vld [vmem:[#allocation16 + $0x580] sm:$0xff]
    %v346 = vld [vmem:[#allocation16 + $0x588] sm:$0xff]
    %v347 = vld [vmem:[#allocation16 + $0x590] sm:$0xff]
    %v348 = vld [vmem:[#allocation16 + $0x598] sm:$0xff]
    %v349 = vld [vmem:[#allocation16 + $0x5a0] sm:$0xff]
    %v350 = vld [vmem:[#allocation16 + $0x5a8] sm:$0xff]
    %v351 = vld [vmem:[#allocation16 + $0x5b0] sm:$0xff]
    %v352 = vld [vmem:[#allocation16 + $0x5b8] sm:$0xff]
    %v353 = vld [vmem:[#allocation16 + $0x5c0] sm:$0xff]
    %v354 = vld [vmem:[#allocation16 + $0x5c8] sm:$0xff]
    %v355 = vld [vmem:[#allocation16 + $0x5d0] sm:$0xff]
    %v356 = vld [vmem:[#allocation16 + $0x5d8] sm:$0xff]
    %v357 = vld [vmem:[#allocation16 + $0x5e0] sm:$0xff]
    %v358 = vld [vmem:[#allocation16 + $0x5e8] sm:$0xff]
    %v359 = vld [vmem:[#allocation16 + $0x5f0] sm:$0xff]
    %v360 = vld [vmem:[#allocation16 + $0x5f8] sm:$0xff]
    %v361 = vld [vmem:[#allocation16 + $0x600] sm:$0xff]
    %v362 = vld [vmem:[#allocation16 + $0x608] sm:$0xff]
    %v363 = vld [vmem:[#allocation16 + $0x610] sm:$0xff]
    %v364 = vld [vmem:[#allocation16 + $0x618] sm:$0xff]
    %v365 = vld [vmem:[#allocation16 + $0x620] sm:$0xff]
    %v366 = vld [vmem:[#allocation16 + $0x628] sm:$0xff]
    %v367 = vld [vmem:[#allocation16 + $0x630] sm:$0xff]
    %v368 = vld [vmem:[#allocation16 + $0x638] sm:$0xff]
    %v369 = vld [vmem:[#allocation16 + $0x640] sm:$0xff]
    %v370 = vld [vmem:[#allocation16 + $0x648] sm:$0xff]
    %v371 = vld [vmem:[#allocation16 + $0x650] sm:$0xff]
    %v372 = vld [vmem:[#allocation16 + $0x658] sm:$0xff]
    %v373 = vld [vmem:[#allocation16 + $0x660] sm:$0xff]
    %v374 = vld [vmem:[#allocation16 + $0x668] sm:$0xff]
    %v375 = vld [vmem:[#allocation16 + $0x670] sm:$0xff]
    %v376 = vld [vmem:[#allocation16 + $0x678] sm:$0xff]
    %v377 = vld [vmem:[#allocation16 + $0x680] sm:$0xff]
    %v378 = vld [vmem:[#allocation16 + $0x688] sm:$0xff]
    %v379 = vld [vmem:[#allocation16 + $0x690] sm:$0xff]
    %v380 = vld [vmem:[#allocation16 + $0x698] sm:$0xff]
    %v381 = vld [vmem:[#allocation16 + $0x6a0] sm:$0xff]
    %v382 = vld [vmem:[#allocation16 + $0x6a8] sm:$0xff]
    %v383 = vld [vmem:[#allocation16 + $0x6b0] sm:$0xff]
    %v384 = vld [vmem:[#allocation16 + $0x6b8] sm:$0xff]
    %v385 = vld [vmem:[#allocation16 + $0x6c0] sm:$0xff]
    %v386 = vld [vmem:[#allocation16 + $0x6c8] sm:$0xff]
    %v387 = vld [vmem:[#allocation16 + $0x6d0] sm:$0xff]
    %v388 = vld [vmem:[#allocation16 + $0x6d8] sm:$0xff]
    %v389 = vld [vmem:[#allocation16 + $0x6e0] sm:$0xff]
    %v390 = vld [vmem:[#allocation16 + $0x6e8] sm:$0xff]
    %v391 = vld [vmem:[#allocation16 + $0x6f0] sm:$0xff]
    %v392 = vld [vmem:[#allocation16 + $0x6f8] sm:$0xff]
    %v393 = vld [vmem:[#allocation16 + $0x700] sm:$0xff]
    %v394 = vld [vmem:[#allocation16 + $0x708] sm:$0xff]
    %v395 = vld [vmem:[#allocation16 + $0x710] sm:$0xff]
    %v396 = vld [vmem:[#allocation16 + $0x718] sm:$0xff]
    %v397 = vld [vmem:[#allocation16 + $0x720] sm:$0xff]
    %v398 = vld [vmem:[#allocation16 + $0x728] sm:$0xff]
    %v399 = vld [vmem:[#allocation16 + $0x730] sm:$0xff]
    %v400 = vld [vmem:[#allocation16 + $0x738] sm:$0xff]
    %v401 = vld [vmem:[#allocation16 + $0x740] sm:$0xff]
    %v402 = vld [vmem:[#allocation16 + $0x748] sm:$0xff]
    %v403 = vld [vmem:[#allocation16 + $0x750] sm:$0xff]
    %v404 = vld [vmem:[#allocation16 + $0x758] sm:$0xff]
    %v405 = vld [vmem:[#allocation16 + $0x760] sm:$0xff]
    %v406 = vld [vmem:[#allocation16 + $0x768] sm:$0xff]
    %v407 = vld [vmem:[#allocation16 + $0x770] sm:$0xff]
    %v408 = vld [vmem:[#allocation16 + $0x778] sm:$0xff]
    %v409 = vld [vmem:[#allocation16 + $0x780] sm:$0xff]
    %v410 = vld [vmem:[#allocation16 + $0x788] sm:$0xff]
    %v411 = vld [vmem:[#allocation16 + $0x790] sm:$0xff]
    %v412 = vld [vmem:[#allocation16 + $0x798] sm:$0xff]
    %v413 = vld [vmem:[#allocation16 + $0x7a0] sm:$0xff]
    %v414 = vld [vmem:[#allocation16 + $0x7a8] sm:$0xff]
    %v415 = vld [vmem:[#allocation16 + $0x7b0] sm:$0xff]
    %v416 = vld [vmem:[#allocation16 + $0x7b8] sm:$0xff]
    %v417 = vld [vmem:[#allocation16 + $0x7c0] sm:$0xff]
    %v418 = vld [vmem:[#allocation16 + $0x7c8] sm:$0xff]
    %v419 = vld [vmem:[#allocation16 + $0x7d0] sm:$0xff]
    %v420 = vld [vmem:[#allocation16 + $0x7d8] sm:$0xff]
    %v421 = vld [vmem:[#allocation16 + $0x7e0] sm:$0xff]
    %v422 = vld [vmem:[#allocation16 + $0x7e8] sm:$0xff]
    %v423 = vld [vmem:[#allocation16 + $0x7f0] sm:$0xff]
    %v424 = vld [vmem:[#allocation16 + $0x7f8] sm:$0xff]
    %v425 = vld [vmem:[#allocation16 + $0x800] sm:$0xff]
    %v426 = vld [vmem:[#allocation16 + $0x808] sm:$0xff]
    %v427 = vld [vmem:[#allocation16 + $0x810] sm:$0xff]
    %v428 = vld [vmem:[#allocation16 + $0x818] sm:$0xff]
    %v429 = vld [vmem:[#allocation16 + $0x820] sm:$0xff]
    %v430 = vld [vmem:[#allocation16 + $0x828] sm:$0xff]
    %v431 = vld [vmem:[#allocation16 + $0x830] sm:$0xff]
    %v432 = vld [vmem:[#allocation16 + $0x838] sm:$0xff]
    %v433 = vld [vmem:[#allocation16 + $0x840] sm:$0xff]
    %v434 = vld [vmem:[#allocation16 + $0x848] sm:$0xff]
    %v435 = vld [vmem:[#allocation16 + $0x850] sm:$0xff]
    %v436 = vld [vmem:[#allocation16 + $0x858] sm:$0xff]
    %v437 = vld [vmem:[#allocation16 + $0x860] sm:$0xff]
    %v438 = vld [vmem:[#allocation16 + $0x868] sm:$0xff]
    %v439 = vld [vmem:[#allocation16 + $0x870] sm:$0xff]
    %v440 = vld [vmem:[#allocation16 + $0x878] sm:$0xff]
    %v441 = vld [vmem:[#allocation16 + $0x880] sm:$0xff]
    %v442 = vld [vmem:[#allocation16 + $0x888] sm:$0xff]
    %v443 = vld [vmem:[#allocation16 + $0x890] sm:$0xff]
    %v444 = vld [vmem:[#allocation16 + $0x898] sm:$0xff]
    %v445 = vld [vmem:[#allocation16 + $0x8a0] sm:$0xff]
    %v446 = vld [vmem:[#allocation16 + $0x8a8] sm:$0xff]
    %v447 = vld [vmem:[#allocation16 + $0x8b0] sm:$0xff]
    %v448 = vld [vmem:[#allocation16 + $0x8b8] sm:$0xff]
    %v449 = vld [vmem:[#allocation16 + $0x8c0] sm:$0xff]
    %v450 = vld [vmem:[#allocation16 + $0x8c8] sm:$0xff]
    %v451 = vld [vmem:[#allocation16 + $0x8d0] sm:$0xff]
    %v452 = vld [vmem:[#allocation16 + $0x8d8] sm:$0xff]
    %v453 = vld [vmem:[#allocation16 + $0x8e0] sm:$0xff]
    %v454 = vld [vmem:[#allocation16 + $0x8e8] sm:$0xff]
    %v455 = vld [vmem:[#allocation16 + $0x8f0] sm:$0xff]
    %v456 = vld [vmem:[#allocation16 + $0x8f8] sm:$0xff]
    %v457 = vpack.c.bf16 %v167, %v167
    %v458 = vpack.c.bf16 %v168, %v168
    %v747 = vunpack.c.l.b16 %v169
    %v748 = vunpack.c.h.b16 %v169
    %v749 = vunpack.c.l.b16 %v170
    %v750 = vunpack.c.h.b16 %v170
    %v751 = vunpack.c.l.b16 %v171
    %v752 = vunpack.c.h.b16 %v171
    %v753 = vunpack.c.l.b16 %v172
    %v754 = vunpack.c.h.b16 %v172
    %v755 = vunpack.c.l.b16 %v173
    %v756 = vunpack.c.h.b16 %v173
    %v757 = vunpack.c.l.b16 %v174
    %v758 = vunpack.c.h.b16 %v174
    %v759 = vunpack.c.l.b16 %v175
    %v760 = vunpack.c.h.b16 %v175
    %v761 = vunpack.c.l.b16 %v176
    %v762 = vunpack.c.h.b16 %v176
    %v763 = vunpack.c.l.b16 %v177
    %v764 = vunpack.c.h.b16 %v177
    %v765 = vunpack.c.l.b16 %v178
    %v766 = vunpack.c.h.b16 %v178
    %v767 = vunpack.c.l.b16 %v179
    %v768 = vunpack.c.h.b16 %v179
    %v769 = vunpack.c.l.b16 %v180
    %v770 = vunpack.c.h.b16 %v180
    %v771 = vunpack.c.l.b16 %v181
    %v772 = vunpack.c.h.b16 %v181
    %v773 = vunpack.c.l.b16 %v182
    %v774 = vunpack.c.h.b16 %v182
    %v775 = vunpack.c.l.b16 %v183
    %v776 = vunpack.c.h.b16 %v183
    %v777 = vunpack.c.l.b16 %v184
    %v778 = vunpack.c.h.b16 %v184
    %v779 = vunpack.c.l.b16 %v185
    %v780 = vunpack.c.h.b16 %v185
    %v781 = vunpack.c.l.b16 %v186
    %v782 = vunpack.c.h.b16 %v186
    %v783 = vunpack.c.l.b16 %v187
    %v784 = vunpack.c.h.b16 %v187
    %v785 = vunpack.c.l.b16 %v188
    %v786 = vunpack.c.h.b16 %v188
    %v787 = vunpack.c.l.b16 %v189
    %v788 = vunpack.c.h.b16 %v189
    %v789 = vunpack.c.l.b16 %v190
    %v790 = vunpack.c.h.b16 %v190
    %v791 = vunpack.c.l.b16 %v191
    %v792 = vunpack.c.h.b16 %v191
    %v793 = vunpack.c.l.b16 %v192
    %v794 = vunpack.c.h.b16 %v192
    %v795 = vunpack.c.l.b16 %v193
    %v796 = vunpack.c.h.b16 %v193
    %v797 = vunpack.c.l.b16 %v194
    %v798 = vunpack.c.h.b16 %v194
    %v799 = vunpack.c.l.b16 %v195
    %v800 = vunpack.c.h.b16 %v195
    %v801 = vunpack.c.l.b16 %v196
    %v802 = vunpack.c.h.b16 %v196
    %v803 = vunpack.c.l.b16 %v197
    %v804 = vunpack.c.h.b16 %v197
    %v805 = vunpack.c.l.b16 %v198
    %v806 = vunpack.c.h.b16 %v198
    %v807 = vunpack.c.l.b16 %v199
    %v808 = vunpack.c.h.b16 %v199
    %v809 = vunpack.c.l.b16 %v200
    %v810 = vunpack.c.h.b16 %v200
    %v811 = vunpack.c.l.b16 %v201
    %v812 = vunpack.c.h.b16 %v201
    %v813 = vunpack.c.l.b16 %v202
    %v814 = vunpack.c.h.b16 %v202
    %v815 = vunpack.c.l.b16 %v203
    %v816 = vunpack.c.h.b16 %v203
    %v817 = vunpack.c.l.b16 %v204
    %v818 = vunpack.c.h.b16 %v204
    %v819 = vunpack.c.l.b16 %v205
    %v820 = vunpack.c.h.b16 %v205
    %v821 = vunpack.c.l.b16 %v206
    %v822 = vunpack.c.h.b16 %v206
    %v823 = vunpack.c.l.b16 %v207
    %v824 = vunpack.c.h.b16 %v207
    %v825 = vunpack.c.l.b16 %v208
    %v826 = vunpack.c.h.b16 %v208
    %v827 = vunpack.c.l.b16 %v209
    %v828 = vunpack.c.h.b16 %v209
    %v829 = vunpack.c.l.b16 %v210
    %v830 = vunpack.c.h.b16 %v210
    %v831 = vunpack.c.l.b16 %v211
    %v832 = vunpack.c.h.b16 %v211
    %v833 = vunpack.c.l.b16 %v212
    %v834 = vunpack.c.h.b16 %v212
    %v835 = vunpack.c.l.b16 %v213
    %v836 = vunpack.c.h.b16 %v213
    %v837 = vunpack.c.l.b16 %v214
    %v838 = vunpack.c.h.b16 %v214
    %v839 = vunpack.c.l.b16 %v215
    %v840 = vunpack.c.h.b16 %v215
    %v841 = vunpack.c.l.b16 %v216
    %v842 = vunpack.c.h.b16 %v216
    %v843 = vunpack.c.l.b16 %v217
    %v844 = vunpack.c.h.b16 %v217
    %v845 = vunpack.c.l.b16 %v218
    %v846 = vunpack.c.h.b16 %v218
    %v847 = vunpack.c.l.b16 %v219
    %v848 = vunpack.c.h.b16 %v219
    %v849 = vunpack.c.l.b16 %v220
    %v850 = vunpack.c.h.b16 %v220
    %v851 = vunpack.c.l.b16 %v221
    %v852 = vunpack.c.h.b16 %v221
    %v853 = vunpack.c.l.b16 %v222
    %v854 = vunpack.c.h.b16 %v222
    %v855 = vunpack.c.l.b16 %v223
    %v856 = vunpack.c.h.b16 %v223
    %v857 = vunpack.c.l.b16 %v224
    %v858 = vunpack.c.h.b16 %v224
    %v859 = vunpack.c.l.b16 %v225
    %v860 = vunpack.c.h.b16 %v225
    %v861 = vunpack.c.l.b16 %v226
    %v862 = vunpack.c.h.b16 %v226
    %v863 = vunpack.c.l.b16 %v227
    %v864 = vunpack.c.h.b16 %v227
    %v865 = vunpack.c.l.b16 %v228
    %v866 = vunpack.c.h.b16 %v228
    %v867 = vunpack.c.l.b16 %v229
    %v868 = vunpack.c.h.b16 %v229
    %v869 = vunpack.c.l.b16 %v230
    %v870 = vunpack.c.h.b16 %v230
    %v871 = vunpack.c.l.b16 %v231
    %v872 = vunpack.c.h.b16 %v231
    %v873 = vunpack.c.l.b16 %v232
    %v874 = vunpack.c.h.b16 %v232
    %v875 = vunpack.c.l.b16 %v233
    %v876 = vunpack.c.h.b16 %v233
    %v877 = vunpack.c.l.b16 %v234
    %v878 = vunpack.c.h.b16 %v234
    %v879 = vunpack.c.l.b16 %v235
    %v880 = vunpack.c.h.b16 %v235
    %v881 = vunpack.c.l.b16 %v236
    %v882 = vunpack.c.h.b16 %v236
    %v883 = vunpack.c.l.b16 %v237
    %v884 = vunpack.c.h.b16 %v237
    %v885 = vunpack.c.l.b16 %v238
    %v886 = vunpack.c.h.b16 %v238
    %v887 = vunpack.c.l.b16 %v239
    %v888 = vunpack.c.h.b16 %v239
    %v889 = vunpack.c.l.b16 %v240
    %v890 = vunpack.c.h.b16 %v240
    %v891 = vunpack.c.l.b16 %v241
    %v892 = vunpack.c.h.b16 %v241
    %v893 = vunpack.c.l.b16 %v242
    %v894 = vunpack.c.h.b16 %v242
    %v895 = vunpack.c.l.b16 %v243
    %v896 = vunpack.c.h.b16 %v243
    %v897 = vunpack.c.l.b16 %v244
    %v898 = vunpack.c.h.b16 %v244
    %v899 = vunpack.c.l.b16 %v245
    %v900 = vunpack.c.h.b16 %v245
    %v901 = vunpack.c.l.b16 %v246
    %v902 = vunpack.c.h.b16 %v246
    %v903 = vunpack.c.l.b16 %v247
    %v904 = vunpack.c.h.b16 %v247
    %v905 = vunpack.c.l.b16 %v248
    %v906 = vunpack.c.h.b16 %v248
    %v907 = vunpack.c.l.b16 %v249
    %v908 = vunpack.c.h.b16 %v249
    %v909 = vunpack.c.l.b16 %v250
    %v910 = vunpack.c.h.b16 %v250
    %v911 = vunpack.c.l.b16 %v251
    %v912 = vunpack.c.h.b16 %v251
    %v913 = vunpack.c.l.b16 %v252
    %v914 = vunpack.c.h.b16 %v252
    %v915 = vunpack.c.l.b16 %v253
    %v916 = vunpack.c.h.b16 %v253
    %v917 = vunpack.c.l.b16 %v254
    %v918 = vunpack.c.h.b16 %v254
    %v919 = vunpack.c.l.b16 %v255
    %v920 = vunpack.c.h.b16 %v255
    %v921 = vunpack.c.l.b16 %v256
    %v922 = vunpack.c.h.b16 %v256
    %v923 = vunpack.c.l.b16 %v257
    %v924 = vunpack.c.h.b16 %v257
    %v925 = vunpack.c.l.b16 %v258
    %v926 = vunpack.c.h.b16 %v258
    %v927 = vunpack.c.l.b16 %v259
    %v928 = vunpack.c.h.b16 %v259
    %v929 = vunpack.c.l.b16 %v260
    %v930 = vunpack.c.h.b16 %v260
    %v931 = vunpack.c.l.b16 %v261
    %v932 = vunpack.c.h.b16 %v261
    %v933 = vunpack.c.l.b16 %v262
    %v934 = vunpack.c.h.b16 %v262
    %v935 = vunpack.c.l.b16 %v263
    %v936 = vunpack.c.h.b16 %v263
    %v937 = vunpack.c.l.b16 %v264
    %v938 = vunpack.c.h.b16 %v264
    %v939 = vunpack.c.l.b16 %v265
    %v940 = vunpack.c.h.b16 %v265
    %v941 = vunpack.c.l.b16 %v266
    %v942 = vunpack.c.h.b16 %v266
    %v943 = vunpack.c.l.b16 %v267
    %v944 = vunpack.c.h.b16 %v267
    %v945 = vunpack.c.l.b16 %v268
    %v946 = vunpack.c.h.b16 %v268
    %v947 = vunpack.c.l.b16 %v269
    %v948 = vunpack.c.h.b16 %v269
    %v949 = vunpack.c.l.b16 %v270
    %v950 = vunpack.c.h.b16 %v270
    %v951 = vunpack.c.l.b16 %v271
    %v952 = vunpack.c.h.b16 %v271
    %v953 = vunpack.c.l.b16 %v272
    %v954 = vunpack.c.h.b16 %v272
    %v955 = vunpack.c.l.b16 %v273
    %v956 = vunpack.c.h.b16 %v273
    %v957 = vunpack.c.l.b16 %v274
    %v958 = vunpack.c.h.b16 %v274
    %v959 = vunpack.c.l.b16 %v275
    %v960 = vunpack.c.h.b16 %v275
    %v961 = vunpack.c.l.b16 %v276
    %v962 = vunpack.c.h.b16 %v276
    %v963 = vunpack.c.l.b16 %v277
    %v964 = vunpack.c.h.b16 %v277
    %v965 = vunpack.c.l.b16 %v278
    %v966 = vunpack.c.h.b16 %v278
    %v967 = vunpack.c.l.b16 %v279
    %v968 = vunpack.c.h.b16 %v279
    %v969 = vunpack.c.l.b16 %v280
    %v970 = vunpack.c.h.b16 %v280
    %v971 = vunpack.c.l.b16 %v281
    %v972 = vunpack.c.h.b16 %v281
    %v973 = vunpack.c.l.b16 %v282
    %v974 = vunpack.c.h.b16 %v282
    %v975 = vunpack.c.l.b16 %v283
    %v976 = vunpack.c.h.b16 %v283
    %v977 = vunpack.c.l.b16 %v284
    %v978 = vunpack.c.h.b16 %v284
    %v979 = vunpack.c.l.b16 %v285
    %v980 = vunpack.c.h.b16 %v285
    %v981 = vunpack.c.l.b16 %v286
    %v982 = vunpack.c.h.b16 %v286
    %v983 = vunpack.c.l.b16 %v287
    %v984 = vunpack.c.h.b16 %v287
    %v985 = vunpack.c.l.b16 %v288
    %v986 = vunpack.c.h.b16 %v288
    %v987 = vunpack.c.l.b16 %v289
    %v988 = vunpack.c.h.b16 %v289
    %v989 = vunpack.c.l.b16 %v290
    %v990 = vunpack.c.h.b16 %v290
    %v991 = vunpack.c.l.b16 %v291
    %v992 = vunpack.c.h.b16 %v291
    %v993 = vunpack.c.l.b16 %v292
    %v994 = vunpack.c.h.b16 %v292
    %v995 = vunpack.c.l.b16 %v293
    %v996 = vunpack.c.h.b16 %v293
    %v997 = vunpack.c.l.b16 %v294
    %v998 = vunpack.c.h.b16 %v294
    %v999 = vunpack.c.l.b16 %v295
    %v1000 = vunpack.c.h.b16 %v295
    %v1001 = vunpack.c.l.b16 %v296
    %v1002 = vunpack.c.h.b16 %v296
    %v1003 = vunpack.c.l.b16 %v297
    %v1004 = vunpack.c.h.b16 %v297
    %v1005 = vunpack.c.l.b16 %v298
    %v1006 = vunpack.c.h.b16 %v298
    %v1007 = vunpack.c.l.b16 %v299
    %v1008 = vunpack.c.h.b16 %v299
    %v1009 = vunpack.c.l.b16 %v300
    %v1010 = vunpack.c.h.b16 %v300
    %v1011 = vunpack.c.l.b16 %v301
    %v1012 = vunpack.c.h.b16 %v301
    %v1013 = vunpack.c.l.b16 %v302
    %v1014 = vunpack.c.h.b16 %v302
    %v1015 = vunpack.c.l.b16 %v303
    %v1016 = vunpack.c.h.b16 %v303
    %v1017 = vunpack.c.l.b16 %v304
    %v1018 = vunpack.c.h.b16 %v304
    %v1019 = vunpack.c.l.b16 %v305
    %v1020 = vunpack.c.h.b16 %v305
    %v1021 = vunpack.c.l.b16 %v306
    %v1022 = vunpack.c.h.b16 %v306
    %v1023 = vunpack.c.l.b16 %v307
    %v1024 = vunpack.c.h.b16 %v307
    %v1025 = vunpack.c.l.b16 %v308
    %v1026 = vunpack.c.h.b16 %v308
    %v1027 = vunpack.c.l.b16 %v309
    %v1028 = vunpack.c.h.b16 %v309
    %v1029 = vunpack.c.l.b16 %v310
    %v1030 = vunpack.c.h.b16 %v310
    %v1031 = vunpack.c.l.b16 %v311
    %v1032 = vunpack.c.h.b16 %v311
    %v1033 = vunpack.c.l.b16 %v312
    %v1034 = vunpack.c.h.b16 %v312
    %v1035 = vunpack.c.l.b16 %v313
    %v1036 = vunpack.c.h.b16 %v313
    %v1037 = vunpack.c.l.b16 %v314
    %v1038 = vunpack.c.h.b16 %v314
    %v1039 = vunpack.c.l.b16 %v315
    %v1040 = vunpack.c.h.b16 %v315
    %v1041 = vunpack.c.l.b16 %v316
    %v1042 = vunpack.c.h.b16 %v316
    %v1043 = vunpack.c.l.b16 %v317
    %v1044 = vunpack.c.h.b16 %v317
    %v1045 = vunpack.c.l.b16 %v318
    %v1046 = vunpack.c.h.b16 %v318
    %v1047 = vunpack.c.l.b16 %v319
    %v1048 = vunpack.c.h.b16 %v319
    %v1049 = vunpack.c.l.b16 %v320
    %v1050 = vunpack.c.h.b16 %v320
    %v1051 = vunpack.c.l.b16 %v321
    %v1052 = vunpack.c.h.b16 %v321
    %v1053 = vunpack.c.l.b16 %v322
    %v1054 = vunpack.c.h.b16 %v322
    %v1055 = vunpack.c.l.b16 %v323
    %v1056 = vunpack.c.h.b16 %v323
    %v1057 = vunpack.c.l.b16 %v324
    %v1058 = vunpack.c.h.b16 %v324
    %v1059 = vunpack.c.l.b16 %v325
    %v1060 = vunpack.c.h.b16 %v325
    %v1061 = vunpack.c.l.b16 %v326
    %v1062 = vunpack.c.h.b16 %v326
    %v1063 = vunpack.c.l.b16 %v327
    %v1064 = vunpack.c.h.b16 %v327
    %v1065 = vunpack.c.l.b16 %v328
    %v1066 = vunpack.c.h.b16 %v328
    %v1067 = vunpack.c.l.b16 %v329
    %v1068 = vunpack.c.h.b16 %v329
    %v1069 = vunpack.c.l.b16 %v330
    %v1070 = vunpack.c.h.b16 %v330
    %v1071 = vunpack.c.l.b16 %v331
    %v1072 = vunpack.c.h.b16 %v331
    %v1073 = vunpack.c.l.b16 %v332
    %v1074 = vunpack.c.h.b16 %v332
    %v1075 = vunpack.c.l.b16 %v333
    %v1076 = vunpack.c.h.b16 %v333
    %v1077 = vunpack.c.l.b16 %v334
    %v1078 = vunpack.c.h.b16 %v334
    %v1079 = vunpack.c.l.b16 %v335
    %v1080 = vunpack.c.h.b16 %v335
    %v1081 = vunpack.c.l.b16 %v336
    %v1082 = vunpack.c.h.b16 %v336
    %v1083 = vunpack.c.l.b16 %v337
    %v1084 = vunpack.c.h.b16 %v337
    %v1085 = vunpack.c.l.b16 %v338
    %v1086 = vunpack.c.h.b16 %v338
    %v1087 = vunpack.c.l.b16 %v339
    %v1088 = vunpack.c.h.b16 %v339
    %v1089 = vunpack.c.l.b16 %v340
    %v1090 = vunpack.c.h.b16 %v340
    %v1091 = vunpack.c.l.b16 %v341
    %v1092 = vunpack.c.h.b16 %v341
    %v1093 = vunpack.c.l.b16 %v342
    %v1094 = vunpack.c.h.b16 %v342
    %v1095 = vunpack.c.l.b16 %v343
    %v1096 = vunpack.c.h.b16 %v343
    %v1097 = vunpack.c.l.b16 %v344
    %v1098 = vunpack.c.h.b16 %v344
    %v1099 = vunpack.c.l.b16 %v345
    %v1100 = vunpack.c.h.b16 %v345
    %v1101 = vunpack.c.l.b16 %v346
    %v1102 = vunpack.c.h.b16 %v346
    %v1103 = vunpack.c.l.b16 %v347
    %v1104 = vunpack.c.h.b16 %v347
    %v1105 = vunpack.c.l.b16 %v348
    %v1106 = vunpack.c.h.b16 %v348
    %v1107 = vunpack.c.l.b16 %v349
    %v1108 = vunpack.c.h.b16 %v349
    %v1109 = vunpack.c.l.b16 %v350
    %v1110 = vunpack.c.h.b16 %v350
    %v1111 = vunpack.c.l.b16 %v351
    %v1112 = vunpack.c.h.b16 %v351
    %v1113 = vunpack.c.l.b16 %v352
    %v1114 = vunpack.c.h.b16 %v352
    %v1115 = vunpack.c.l.b16 %v353
    %v1116 = vunpack.c.h.b16 %v353
    %v1117 = vunpack.c.l.b16 %v354
    %v1118 = vunpack.c.h.b16 %v354
    %v1119 = vunpack.c.l.b16 %v355
    %v1120 = vunpack.c.h.b16 %v355
    %v1121 = vunpack.c.l.b16 %v356
    %v1122 = vunpack.c.h.b16 %v356
    %v1123 = vunpack.c.l.b16 %v357
    %v1124 = vunpack.c.h.b16 %v357
    %v1125 = vunpack.c.l.b16 %v358
    %v1126 = vunpack.c.h.b16 %v358
    %v1127 = vunpack.c.l.b16 %v359
    %v1128 = vunpack.c.h.b16 %v359
    %v1129 = vunpack.c.l.b16 %v360
    %v1130 = vunpack.c.h.b16 %v360
    %v1131 = vunpack.c.l.b16 %v361
    %v1132 = vunpack.c.h.b16 %v361
    %v1133 = vunpack.c.l.b16 %v362
    %v1134 = vunpack.c.h.b16 %v362
    %v1135 = vunpack.c.l.b16 %v363
    %v1136 = vunpack.c.h.b16 %v363
    %v1137 = vunpack.c.l.b16 %v364
    %v1138 = vunpack.c.h.b16 %v364
    %v1139 = vunpack.c.l.b16 %v365
    %v1140 = vunpack.c.h.b16 %v365
    %v1141 = vunpack.c.l.b16 %v366
    %v1142 = vunpack.c.h.b16 %v366
    %v1143 = vunpack.c.l.b16 %v367
    %v1144 = vunpack.c.h.b16 %v367
    %v1145 = vunpack.c.l.b16 %v368
    %v1146 = vunpack.c.h.b16 %v368
    %v1147 = vunpack.c.l.b16 %v369
    %v1148 = vunpack.c.h.b16 %v369
    %v1149 = vunpack.c.l.b16 %v370
    %v1150 = vunpack.c.h.b16 %v370
    %v1151 = vunpack.c.l.b16 %v371
    %v1152 = vunpack.c.h.b16 %v371
    %v1153 = vunpack.c.l.b16 %v372
    %v1154 = vunpack.c.h.b16 %v372
    %v1155 = vunpack.c.l.b16 %v373
    %v1156 = vunpack.c.h.b16 %v373
    %v1157 = vunpack.c.l.b16 %v374
    %v1158 = vunpack.c.h.b16 %v374
    %v1159 = vunpack.c.l.b16 %v375
    %v1160 = vunpack.c.h.b16 %v375
    %v1161 = vunpack.c.l.b16 %v376
    %v1162 = vunpack.c.h.b16 %v376
    %v1163 = vunpack.c.l.b16 %v377
    %v1164 = vunpack.c.h.b16 %v377
    %v1165 = vunpack.c.l.b16 %v378
    %v1166 = vunpack.c.h.b16 %v378
    %v1167 = vunpack.c.l.b16 %v379
    %v1168 = vunpack.c.h.b16 %v379
    %v1169 = vunpack.c.l.b16 %v380
    %v1170 = vunpack.c.h.b16 %v380
    %v1171 = vunpack.c.l.b16 %v381
    %v1172 = vunpack.c.h.b16 %v381
    %v1173 = vunpack.c.l.b16 %v382
    %v1174 = vunpack.c.h.b16 %v382
    %v1175 = vunpack.c.l.b16 %v383
    %v1176 = vunpack.c.h.b16 %v383
    %v1177 = vunpack.c.l.b16 %v384
    %v1178 = vunpack.c.h.b16 %v384
    %v1179 = vunpack.c.l.b16 %v385
    %v1180 = vunpack.c.h.b16 %v385
    %v1181 = vunpack.c.l.b16 %v386
    %v1182 = vunpack.c.h.b16 %v386
    %v1183 = vunpack.c.l.b16 %v387
    %v1184 = vunpack.c.h.b16 %v387
    %v1185 = vunpack.c.l.b16 %v388
    %v1186 = vunpack.c.h.b16 %v388
    %v1187 = vunpack.c.l.b16 %v389
    %v1188 = vunpack.c.h.b16 %v389
    %v1189 = vunpack.c.l.b16 %v390
    %v1190 = vunpack.c.h.b16 %v390
    %v1191 = vunpack.c.l.b16 %v391
    %v1192 = vunpack.c.h.b16 %v391
    %v1193 = vunpack.c.l.b16 %v392
    %v1194 = vunpack.c.h.b16 %v392
    %v1195 = vunpack.c.l.b16 %v393
    %v1196 = vunpack.c.h.b16 %v393
    %v1197 = vunpack.c.l.b16 %v394
    %v1198 = vunpack.c.h.b16 %v394
    %v1199 = vunpack.c.l.b16 %v395
    %v1200 = vunpack.c.h.b16 %v395
    %v1201 = vunpack.c.l.b16 %v396
    %v1202 = vunpack.c.h.b16 %v396
    %v1203 = vunpack.c.l.b16 %v397
    %v1204 = vunpack.c.h.b16 %v397
    %v1205 = vunpack.c.l.b16 %v398
    %v1206 = vunpack.c.h.b16 %v398
    %v1207 = vunpack.c.l.b16 %v399
    %v1208 = vunpack.c.h.b16 %v399
    %v1209 = vunpack.c.l.b16 %v400
    %v1210 = vunpack.c.h.b16 %v400
    %v1211 = vunpack.c.l.b16 %v401
    %v1212 = vunpack.c.h.b16 %v401
    %v1213 = vunpack.c.l.b16 %v402
    %v1214 = vunpack.c.h.b16 %v402
    %v1215 = vunpack.c.l.b16 %v403
    %v1216 = vunpack.c.h.b16 %v403
    %v1217 = vunpack.c.l.b16 %v404
    %v1218 = vunpack.c.h.b16 %v404
    %v1219 = vunpack.c.l.b16 %v405
    %v1220 = vunpack.c.h.b16 %v405
    %v1221 = vunpack.c.l.b16 %v406
    %v1222 = vunpack.c.h.b16 %v406
    %v1223 = vunpack.c.l.b16 %v407
    %v1224 = vunpack.c.h.b16 %v407
    %v1225 = vunpack.c.l.b16 %v408
    %v1226 = vunpack.c.h.b16 %v408
    %v1227 = vunpack.c.l.b16 %v409
    %v1228 = vunpack.c.h.b16 %v409
    %v1229 = vunpack.c.l.b16 %v410
    %v1230 = vunpack.c.h.b16 %v410
    %v1231 = vunpack.c.l.b16 %v411
    %v1232 = vunpack.c.h.b16 %v411
    %v1233 = vunpack.c.l.b16 %v412
    %v1234 = vunpack.c.h.b16 %v412
    %v1235 = vunpack.c.l.b16 %v413
    %v1236 = vunpack.c.h.b16 %v413
    %v1237 = vunpack.c.l.b16 %v414
    %v1238 = vunpack.c.h.b16 %v414
    %v1239 = vunpack.c.l.b16 %v415
    %v1240 = vunpack.c.h.b16 %v415
    %v1241 = vunpack.c.l.b16 %v416
    %v1242 = vunpack.c.h.b16 %v416
    %v1243 = vunpack.c.l.b16 %v417
    %v1244 = vunpack.c.h.b16 %v417
    %v1245 = vunpack.c.l.b16 %v418
    %v1246 = vunpack.c.h.b16 %v418
    %v1247 = vunpack.c.l.b16 %v419
    %v1248 = vunpack.c.h.b16 %v419
    %v1249 = vunpack.c.l.b16 %v420
    %v1250 = vunpack.c.h.b16 %v420
    %v1251 = vunpack.c.l.b16 %v421
    %v1252 = vunpack.c.h.b16 %v421
    %v1253 = vunpack.c.l.b16 %v422
    %v1254 = vunpack.c.h.b16 %v422
    %v1255 = vunpack.c.l.b16 %v423
    %v1256 = vunpack.c.h.b16 %v423
    %v1257 = vunpack.c.l.b16 %v424
    %v1258 = vunpack.c.h.b16 %v424
    %v1259 = vunpack.c.l.b16 %v425
    %v1260 = vunpack.c.h.b16 %v425
    %v1261 = vunpack.c.l.b16 %v426
    %v1262 = vunpack.c.h.b16 %v426
    %v1263 = vunpack.c.l.b16 %v427
    %v1264 = vunpack.c.h.b16 %v427
    %v1265 = vunpack.c.l.b16 %v428
    %v1266 = vunpack.c.h.b16 %v428
    %v1267 = vunpack.c.l.b16 %v429
    %v1268 = vunpack.c.h.b16 %v429
    %v1269 = vunpack.c.l.b16 %v430
    %v1270 = vunpack.c.h.b16 %v430
    %v1271 = vunpack.c.l.b16 %v431
    %v1272 = vunpack.c.h.b16 %v431
    %v1273 = vunpack.c.l.b16 %v432
    %v1274 = vunpack.c.h.b16 %v432
    %v1275 = vunpack.c.l.b16 %v433
    %v1276 = vunpack.c.h.b16 %v433
    %v1277 = vunpack.c.l.b16 %v434
    %v1278 = vunpack.c.h.b16 %v434
    %v1279 = vunpack.c.l.b16 %v435
    %v1280 = vunpack.c.h.b16 %v435
    %v1281 = vunpack.c.l.b16 %v436
    %v1282 = vunpack.c.h.b16 %v436
    %v1283 = vunpack.c.l.b16 %v437
    %v1284 = vunpack.c.h.b16 %v437
    %v1285 = vunpack.c.l.b16 %v438
    %v1286 = vunpack.c.h.b16 %v438
    %v1287 = vunpack.c.l.b16 %v439
    %v1288 = vunpack.c.h.b16 %v439
    %v1289 = vunpack.c.l.b16 %v440
    %v1290 = vunpack.c.h.b16 %v440
    %v1291 = vunpack.c.l.b16 %v441
    %v1292 = vunpack.c.h.b16 %v441
    %v1293 = vunpack.c.l.b16 %v442
    %v1294 = vunpack.c.h.b16 %v442
    %v1295 = vunpack.c.l.b16 %v443
    %v1296 = vunpack.c.h.b16 %v443
    %v1297 = vunpack.c.l.b16 %v444
    %v1298 = vunpack.c.h.b16 %v444
    %v1299 = vunpack.c.l.b16 %v445
    %v1300 = vunpack.c.h.b16 %v445
    %v1301 = vunpack.c.l.b16 %v446
    %v1302 = vunpack.c.h.b16 %v446
    %v1303 = vunpack.c.l.b16 %v447
    %v1304 = vunpack.c.h.b16 %v447
    %v1305 = vunpack.c.l.b16 %v448
    %v1306 = vunpack.c.h.b16 %v448
    %v1307 = vunpack.c.l.b16 %v449
    %v1308 = vunpack.c.h.b16 %v449
    %v1309 = vunpack.c.l.b16 %v450
    %v1310 = vunpack.c.h.b16 %v450
    %v1311 = vunpack.c.l.b16 %v451
    %v1312 = vunpack.c.h.b16 %v451
    %v1313 = vunpack.c.l.b16 %v452
    %v1314 = vunpack.c.h.b16 %v452
    %v1315 = vunpack.c.l.b16 %v453
    %v1316 = vunpack.c.h.b16 %v453
    %v1317 = vunpack.c.l.b16 %v454
    %v1318 = vunpack.c.h.b16 %v454
    %v1319 = vunpack.c.l.b16 %v455
    %v1320 = vunpack.c.h.b16 %v455
    %v1321 = vunpack.c.l.b16 %v456
    %v1322 = vunpack.c.h.b16 %v456
    %v1323 = vpack.c.b16 %v765, %v747
    %v1324 = vpack.c.b16 %v766, %v748
    %v1325 = vpack.c.b16 %v767, %v749
    %v1326 = vpack.c.b16 %v768, %v750
    %v1327 = vpack.c.b16 %v769, %v751
    %v1328 = vpack.c.b16 %v770, %v752
    %v1329 = vpack.c.b16 %v771, %v753
    %v1330 = vpack.c.b16 %v772, %v754
    %v1331 = vpack.c.b16 %v773, %v755
    %v1332 = vpack.c.b16 %v774, %v756
    %v1333 = vpack.c.b16 %v775, %v757
    %v1334 = vpack.c.b16 %v776, %v758
    %v1335 = vpack.c.b16 %v777, %v759
    %v1336 = vpack.c.b16 %v778, %v760
    %v1337 = vpack.c.b16 %v779, %v761
    %v1338 = vpack.c.b16 %v780, %v762
    %v1339 = vpack.c.b16 %v781, %v763
    %v1340 = vpack.c.b16 %v782, %v764
    %v1341 = vpack.c.b16 %v801, %v783
    %v1342 = vpack.c.b16 %v802, %v784
    %v1343 = vpack.c.b16 %v803, %v785
    %v1344 = vpack.c.b16 %v804, %v786
    %v1345 = vpack.c.b16 %v805, %v787
    %v1346 = vpack.c.b16 %v806, %v788
    %v1347 = vpack.c.b16 %v807, %v789
    %v1348 = vpack.c.b16 %v808, %v790
    %v1349 = vpack.c.b16 %v809, %v791
    %v1350 = vpack.c.b16 %v810, %v792
    %v1351 = vpack.c.b16 %v811, %v793
    %v1352 = vpack.c.b16 %v812, %v794
    %v1353 = vpack.c.b16 %v813, %v795
    %v1354 = vpack.c.b16 %v814, %v796
    %v1355 = vpack.c.b16 %v815, %v797
    %v1356 = vpack.c.b16 %v816, %v798
    %v1357 = vpack.c.b16 %v817, %v799
    %v1358 = vpack.c.b16 %v818, %v800
    %v1359 = vpack.c.b16 %v837, %v819
    %v1360 = vpack.c.b16 %v838, %v820
    %v1361 = vpack.c.b16 %v839, %v821
    %v1362 = vpack.c.b16 %v840, %v822
    %v1363 = vpack.c.b16 %v841, %v823
    %v1364 = vpack.c.b16 %v842, %v824
    %v1365 = vpack.c.b16 %v843, %v825
    %v1366 = vpack.c.b16 %v844, %v826
    %v1367 = vpack.c.b16 %v845, %v827
    %v1368 = vpack.c.b16 %v846, %v828
    %v1369 = vpack.c.b16 %v847, %v829
    %v1370 = vpack.c.b16 %v848, %v830
    %v1371 = vpack.c.b16 %v849, %v831
    %v1372 = vpack.c.b16 %v850, %v832
    %v1373 = vpack.c.b16 %v851, %v833
    %v1374 = vpack.c.b16 %v852, %v834
    %v1375 = vpack.c.b16 %v853, %v835
    %v1376 = vpack.c.b16 %v854, %v836
    %v1377 = vpack.c.b16 %v873, %v855
    %v1378 = vpack.c.b16 %v874, %v856
    %v1379 = vpack.c.b16 %v875, %v857
    %v1380 = vpack.c.b16 %v876, %v858
    %v1381 = vpack.c.b16 %v877, %v859
    %v1382 = vpack.c.b16 %v878, %v860
    %v1383 = vpack.c.b16 %v879, %v861
    %v1384 = vpack.c.b16 %v880, %v862
    %v1385 = vpack.c.b16 %v881, %v863
    %v1386 = vpack.c.b16 %v882, %v864
    %v1387 = vpack.c.b16 %v883, %v865
    %v1388 = vpack.c.b16 %v884, %v866
    %v1389 = vpack.c.b16 %v885, %v867
    %v1390 = vpack.c.b16 %v886, %v868
    %v1391 = vpack.c.b16 %v887, %v869
    %v1392 = vpack.c.b16 %v888, %v870
    %v1393 = vpack.c.b16 %v889, %v871
    %v1394 = vpack.c.b16 %v890, %v872
    %v1395 = vpack.c.b16 %v909, %v891
    %v1396 = vpack.c.b16 %v910, %v892
    %v1397 = vpack.c.b16 %v911, %v893
    %v1398 = vpack.c.b16 %v912, %v894
    %v1399 = vpack.c.b16 %v913, %v895
    %v1400 = vpack.c.b16 %v914, %v896
    %v1401 = vpack.c.b16 %v915, %v897
    %v1402 = vpack.c.b16 %v916, %v898
    %v1403 = vpack.c.b16 %v917, %v899
    %v1404 = vpack.c.b16 %v918, %v900
    %v1405 = vpack.c.b16 %v919, %v901
    %v1406 = vpack.c.b16 %v920, %v902
    %v1407 = vpack.c.b16 %v921, %v903
    %v1408 = vpack.c.b16 %v922, %v904
    %v1409 = vpack.c.b16 %v923, %v905
    %v1410 = vpack.c.b16 %v924, %v906
    %v1411 = vpack.c.b16 %v925, %v907
    %v1412 = vpack.c.b16 %v926, %v908
    %v1413 = vpack.c.b16 %v945, %v927
    %v1414 = vpack.c.b16 %v946, %v928
    %v1415 = vpack.c.b16 %v947, %v929
    %v1416 = vpack.c.b16 %v948, %v930
    %v1417 = vpack.c.b16 %v949, %v931
    %v1418 = vpack.c.b16 %v950, %v932
    %v1419 = vpack.c.b16 %v951, %v933
    %v1420 = vpack.c.b16 %v952, %v934
    %v1421 = vpack.c.b16 %v953, %v935
    %v1422 = vpack.c.b16 %v954, %v936
    %v1423 = vpack.c.b16 %v955, %v937
    %v1424 = vpack.c.b16 %v956, %v938
    %v1425 = vpack.c.b16 %v957, %v939
    %v1426 = vpack.c.b16 %v958, %v940
    %v1427 = vpack.c.b16 %v959, %v941
    %v1428 = vpack.c.b16 %v960, %v942
    %v1429 = vpack.c.b16 %v961, %v943
    %v1430 = vpack.c.b16 %v962, %v944
    %v1431 = vpack.c.b16 %v981, %v963
    %v1432 = vpack.c.b16 %v982, %v964
    %v1433 = vpack.c.b16 %v983, %v965
    %v1434 = vpack.c.b16 %v984, %v966
    %v1435 = vpack.c.b16 %v985, %v967
    %v1436 = vpack.c.b16 %v986, %v968
    %v1437 = vpack.c.b16 %v987, %v969
    %v1438 = vpack.c.b16 %v988, %v970
    %v1439 = vpack.c.b16 %v989, %v971
    %v1440 = vpack.c.b16 %v990, %v972
    %v1441 = vpack.c.b16 %v991, %v973
    %v1442 = vpack.c.b16 %v992, %v974
    %v1443 = vpack.c.b16 %v993, %v975
    %v1444 = vpack.c.b16 %v994, %v976
    %v1445 = vpack.c.b16 %v995, %v977
    %v1446 = vpack.c.b16 %v996, %v978
    %v1447 = vpack.c.b16 %v997, %v979
    %v1448 = vpack.c.b16 %v998, %v980
    %v1449 = vpack.c.b16 %v1017, %v999
    %v1450 = vpack.c.b16 %v1018, %v1000
    %v1451 = vpack.c.b16 %v1019, %v1001
    %v1452 = vpack.c.b16 %v1020, %v1002
    %v1453 = vpack.c.b16 %v1021, %v1003
    %v1454 = vpack.c.b16 %v1022, %v1004
    %v1455 = vpack.c.b16 %v1023, %v1005
    %v1456 = vpack.c.b16 %v1024, %v1006
    %v1457 = vpack.c.b16 %v1025, %v1007
    %v1458 = vpack.c.b16 %v1026, %v1008
    %v1459 = vpack.c.b16 %v1027, %v1009
    %v1460 = vpack.c.b16 %v1028, %v1010
    %v1461 = vpack.c.b16 %v1029, %v1011
    %v1462 = vpack.c.b16 %v1030, %v1012
    %v1463 = vpack.c.b16 %v1031, %v1013
    %v1464 = vpack.c.b16 %v1032, %v1014
    %v1465 = vpack.c.b16 %v1033, %v1015
    %v1466 = vpack.c.b16 %v1034, %v1016
    %v1467 = vpack.c.b16 %v1053, %v1035
    %v1468 = vpack.c.b16 %v1054, %v1036
    %v1469 = vpack.c.b16 %v1055, %v1037
    %v1470 = vpack.c.b16 %v1056, %v1038
    %v1471 = vpack.c.b16 %v1057, %v1039
    %v1472 = vpack.c.b16 %v1058, %v1040
    %v1473 = vpack.c.b16 %v1059, %v1041
    %v1474 = vpack.c.b16 %v1060, %v1042
    %v1475 = vpack.c.b16 %v1061, %v1043
    %v1476 = vpack.c.b16 %v1062, %v1044
    %v1477 = vpack.c.b16 %v1063, %v1045
    %v1478 = vpack.c.b16 %v1064, %v1046
    %v1479 = vpack.c.b16 %v1065, %v1047
    %v1480 = vpack.c.b16 %v1066, %v1048
    %v1481 = vpack.c.b16 %v1067, %v1049
    %v1482 = vpack.c.b16 %v1068, %v1050
    %v1483 = vpack.c.b16 %v1069, %v1051
    %v1484 = vpack.c.b16 %v1070, %v1052
    %v1485 = vpack.c.b16 %v1089, %v1071
    %v1486 = vpack.c.b16 %v1090, %v1072
    %v1487 = vpack.c.b16 %v1091, %v1073
    %v1488 = vpack.c.b16 %v1092, %v1074
    %v1489 = vpack.c.b16 %v1093, %v1075
    %v1490 = vpack.c.b16 %v1094, %v1076
    %v1491 = vpack.c.b16 %v1095, %v1077
    %v1492 = vpack.c.b16 %v1096, %v1078
    %v1493 = vpack.c.b16 %v1097, %v1079
    %v1494 = vpack.c.b16 %v1098, %v1080
    %v1495 = vpack.c.b16 %v1099, %v1081
    %v1496 = vpack.c.b16 %v1100, %v1082
    %v1497 = vpack.c.b16 %v1101, %v1083
    %v1498 = vpack.c.b16 %v1102, %v1084
    %v1499 = vpack.c.b16 %v1103, %v1085
    %v1500 = vpack.c.b16 %v1104, %v1086
    %v1501 = vpack.c.b16 %v1105, %v1087
    %v1502 = vpack.c.b16 %v1106, %v1088
    %v1503 = vpack.c.b16 %v1125, %v1107
    %v1504 = vpack.c.b16 %v1126, %v1108
    %v1505 = vpack.c.b16 %v1127, %v1109
    %v1506 = vpack.c.b16 %v1128, %v1110
    %v1507 = vpack.c.b16 %v1129, %v1111
    %v1508 = vpack.c.b16 %v1130, %v1112
    %v1509 = vpack.c.b16 %v1131, %v1113
    %v1510 = vpack.c.b16 %v1132, %v1114
    %v1511 = vpack.c.b16 %v1133, %v1115
    %v1512 = vpack.c.b16 %v1134, %v1116
    %v1513 = vpack.c.b16 %v1135, %v1117
    %v1514 = vpack.c.b16 %v1136, %v1118
    %v1515 = vpack.c.b16 %v1137, %v1119
    %v1516 = vpack.c.b16 %v1138, %v1120
    %v1517 = vpack.c.b16 %v1139, %v1121
    %v1518 = vpack.c.b16 %v1140, %v1122
    %v1519 = vpack.c.b16 %v1141, %v1123
    %v1520 = vpack.c.b16 %v1142, %v1124
    %v1521 = vpack.c.b16 %v1161, %v1143
    %v1522 = vpack.c.b16 %v1162, %v1144
    %v1523 = vpack.c.b16 %v1163, %v1145
    %v1524 = vpack.c.b16 %v1164, %v1146
    %v1525 = vpack.c.b16 %v1165, %v1147
    %v1526 = vpack.c.b16 %v1166, %v1148
    %v1527 = vpack.c.b16 %v1167, %v1149
    %v1528 = vpack.c.b16 %v1168, %v1150
    %v1529 = vpack.c.b16 %v1169, %v1151
    %v1530 = vpack.c.b16 %v1170, %v1152
    %v1531 = vpack.c.b16 %v1171, %v1153
    %v1532 = vpack.c.b16 %v1172, %v1154
    %v1533 = vpack.c.b16 %v1173, %v1155
    %v1534 = vpack.c.b16 %v1174, %v1156
    %v1535 = vpack.c.b16 %v1175, %v1157
    %v1536 = vpack.c.b16 %v1176, %v1158
    %v1537 = vpack.c.b16 %v1177, %v1159
    %v1538 = vpack.c.b16 %v1178, %v1160
    %v1539 = vpack.c.b16 %v1197, %v1179
    %v1540 = vpack.c.b16 %v1198, %v1180
    %v1541 = vpack.c.b16 %v1199, %v1181
    %v1542 = vpack.c.b16 %v1200, %v1182
    %v1543 = vpack.c.b16 %v1201, %v1183
    %v1544 = vpack.c.b16 %v1202, %v1184
    %v1545 = vpack.c.b16 %v1203, %v1185
    %v1546 = vpack.c.b16 %v1204, %v1186
    %v1547 = vpack.c.b16 %v1205, %v1187
    %v1548 = vpack.c.b16 %v1206, %v1188
    %v1549 = vpack.c.b16 %v1207, %v1189
    %v1550 = vpack.c.b16 %v1208, %v1190
    %v1551 = vpack.c.b16 %v1209, %v1191
    %v1552 = vpack.c.b16 %v1210, %v1192
    %v1553 = vpack.c.b16 %v1211, %v1193
    %v1554 = vpack.c.b16 %v1212, %v1194
    %v1555 = vpack.c.b16 %v1213, %v1195
    %v1556 = vpack.c.b16 %v1214, %v1196
    %v1557 = vpack.c.b16 %v1233, %v1215
    %v1558 = vpack.c.b16 %v1234, %v1216
    %v1559 = vpack.c.b16 %v1235, %v1217
    %v1560 = vpack.c.b16 %v1236, %v1218
    %v1561 = vpack.c.b16 %v1237, %v1219
    %v1562 = vpack.c.b16 %v1238, %v1220
    %v1563 = vpack.c.b16 %v1239, %v1221
    %v1564 = vpack.c.b16 %v1240, %v1222
    %v1565 = vpack.c.b16 %v1241, %v1223
    %v1566 = vpack.c.b16 %v1242, %v1224
    %v1567 = vpack.c.b16 %v1243, %v1225
    %v1568 = vpack.c.b16 %v1244, %v1226
    %v1569 = vpack.c.b16 %v1245, %v1227
    %v1570 = vpack.c.b16 %v1246, %v1228
    %v1571 = vpack.c.b16 %v1247, %v1229
    %v1572 = vpack.c.b16 %v1248, %v1230
    %v1573 = vpack.c.b16 %v1249, %v1231
    %v1574 = vpack.c.b16 %v1250, %v1232
    %v1575 = vpack.c.b16 %v1269, %v1251
    %v1576 = vpack.c.b16 %v1270, %v1252
    %v1577 = vpack.c.b16 %v1271, %v1253
    %v1578 = vpack.c.b16 %v1272, %v1254
    %v1579 = vpack.c.b16 %v1273, %v1255
    %v1580 = vpack.c.b16 %v1274, %v1256
    %v1581 = vpack.c.b16 %v1275, %v1257
    %v1582 = vpack.c.b16 %v1276, %v1258
    %v1583 = vpack.c.b16 %v1277, %v1259
    %v1584 = vpack.c.b16 %v1278, %v1260
    %v1585 = vpack.c.b16 %v1279, %v1261
    %v1586 = vpack.c.b16 %v1280, %v1262
    %v1587 = vpack.c.b16 %v1281, %v1263
    %v1588 = vpack.c.b16 %v1282, %v1264
    %v1589 = vpack.c.b16 %v1283, %v1265
    %v1590 = vpack.c.b16 %v1284, %v1266
    %v1591 = vpack.c.b16 %v1285, %v1267
    %v1592 = vpack.c.b16 %v1286, %v1268
    %v1593 = vpack.c.b16 %v1305, %v1287
    %v1594 = vpack.c.b16 %v1306, %v1288
    %v1595 = vpack.c.b16 %v1307, %v1289
    %v1596 = vpack.c.b16 %v1308, %v1290
    %v1597 = vpack.c.b16 %v1309, %v1291
    %v1598 = vpack.c.b16 %v1310, %v1292
    %v1599 = vpack.c.b16 %v1311, %v1293
    %v1600 = vpack.c.b16 %v1312, %v1294
    %v1601 = vpack.c.b16 %v1313, %v1295
    %v1602 = vpack.c.b16 %v1314, %v1296
    %v1603 = vpack.c.b16 %v1315, %v1297
    %v1604 = vpack.c.b16 %v1316, %v1298
    %v1605 = vpack.c.b16 %v1317, %v1299
    %v1606 = vpack.c.b16 %v1318, %v1300
    %v1607 = vpack.c.b16 %v1319, %v1301
    %v1608 = vpack.c.b16 %v1320, %v1302
    %v1609 = vpack.c.b16 %v1321, %v1303
    %v1610 = vpack.c.b16 %v1322, %v1304
    %1899 = vmatprep.subr.bf16.mxu0 %v1450
    %1900 = vmatpush1.bf16.msra.mxu0 %v1449
    %1901 = vmatprep.subr.bf16.mxu0 %v1432
    %1902 = vmatpush1.bf16.msra.mxu0 %v1431
    %1903 = vmatprep.subr.bf16.mxu0 %v1414
    %1904 = vmatpush1.bf16.msra.mxu0 %v1413
    %1905 = vmatprep.subr.bf16.mxu0 %v1396
    %1906 = vmatpush1.bf16.msra.mxu0 %v1395
    %1907 = vmatprep.subr.bf16.mxu0 %v1378
    %1908 = vmatpush1.bf16.msra.mxu0 %v1377
    %1909 = vmatprep.subr.bf16.mxu0 %v1360
    %1910 = vmatpush1.bf16.msra.mxu0 %v1359
    %1911 = vmatprep.subr.bf16.mxu0 %v1342
    %1912 = vmatpush1.bf16.msra.mxu0 %v1341
    %1913 = vmatprep.subr.bf16.mxu0 %v1324
    %1914 = vmatpush1.bf16.msra.mxu0 %v1323
    %1915 = vmatprep.subr.bf16.mxu0 %v1594
    %1916 = vmatpush2.bf16.msra.mxu0 %v1593
    %1917 = vmatprep.subr.bf16.mxu0 %v1576
    %1918 = vmatpush2.bf16.msra.mxu0 %v1575
    %1919 = vmatprep.subr.bf16.mxu0 %v1558
    %1920 = vmatpush2.bf16.msra.mxu0 %v1557
    %1921 = vmatprep.subr.bf16.mxu0 %v1540
    %1922 = vmatpush2.bf16.msra.mxu0 %v1539
    %1923 = vmatprep.subr.bf16.mxu0 %v1522
    %1924 = vmatpush2.bf16.msra.mxu0 %v1521
    %1925 = vmatprep.subr.bf16.mxu0 %v1504
    %1926 = vmatpush2.bf16.msra.mxu0 %v1503
    %1927 = vmatprep.subr.bf16.mxu0 %v1486
    %1928 = vmatpush2.bf16.msra.mxu0 %v1485
    %1929 = vmatprep.subr.bf16.mxu0 %v1468
    %1930 = vmatpush2.bf16.msra.mxu0 %v1467
    %1931 = vmatprep.mubr.bf16.mxu0 %v458
    %1932 = vmatmul.mubr.bf16.gmra.mxu0 %v457
    %v1933 = vpop.f32.mrf.mxu0
    %v1934 = vadd.f32 0.0, %v1933
    %v1935 = vpop.f32.mrf.mxu0
    %v1936 = vadd.f32 0.0, %v1935
    %v1937 = vpop.f32.mrf.mxu0
    %v1938 = vpop.f32.mrf.mxu0
    %1939 = vdwg.mxu0
    %1940 = vmatprep.subr.bf16.mxu0 %v1452
    %1941 = vmatpush1.bf16.msra.mxu0 %v1451
    %1942 = vmatprep.subr.bf16.mxu0 %v1434
    %1943 = vmatpush1.bf16.msra.mxu0 %v1433
    %1944 = vmatprep.subr.bf16.mxu0 %v1416
    %1945 = vmatpush1.bf16.msra.mxu0 %v1415
    %1946 = vmatprep.subr.bf16.mxu0 %v1398
    %1947 = vmatpush1.bf16.msra.mxu0 %v1397
    %1948 = vmatprep.subr.bf16.mxu0 %v1380
    %1949 = vmatpush1.bf16.msra.mxu0 %v1379
    %1950 = vmatprep.subr.bf16.mxu0 %v1362
    %1951 = vmatpush1.bf16.msra.mxu0 %v1361
    %1952 = vmatprep.subr.bf16.mxu0 %v1344
    %1953 = vmatpush1.bf16.msra.mxu0 %v1343
    %1954 = vmatprep.subr.bf16.mxu0 %v1326
    %1955 = vmatpush1.bf16.msra.mxu0 %v1325
    %1956 = vmatprep.subr.bf16.mxu0 %v1596
    %1957 = vmatpush2.bf16.msra.mxu0 %v1595
    %1958 = vmatprep.subr.bf16.mxu0 %v1578
    %1959 = vmatpush2.bf16.msra.mxu0 %v1577
    %1960 = vmatprep.subr.bf16.mxu0 %v1560
    %1961 = vmatpush2.bf16.msra.mxu0 %v1559
    %1962 = vmatprep.subr.bf16.mxu0 %v1542
    %1963 = vmatpush2.bf16.msra.mxu0 %v1541
    %1964 = vmatprep.subr.bf16.mxu0 %v1524
    %1965 = vmatpush2.bf16.msra.mxu0 %v1523
    %1966 = vmatprep.subr.bf16.mxu0 %v1506
    %1967 = vmatpush2.bf16.msra.mxu0 %v1505
    %1968 = vmatprep.subr.bf16.mxu0 %v1488
    %1969 = vmatpush2.bf16.msra.mxu0 %v1487
    %1970 = vmatprep.subr.bf16.mxu0 %v1470
    %1971 = vmatpush2.bf16.msra.mxu0 %v1469
    %1972 = vmatprep.mubr.bf16.mxu0 %v458
    %1973 = vmatmul.mubr.bf16.gmra.mxu0 %v457
    %v1974 = vpop.f32.mrf.mxu0
    %v1975 = vadd.f32 0.0, %v1974
    %v1976 = vpop.f32.mrf.mxu0
    %v1977 = vadd.f32 0.0, %v1976
    %v1978 = vpop.f32.mrf.mxu0
    %v1979 = vpop.f32.mrf.mxu0
    %1980 = vdwg.mxu0
    %1981 = vmatprep.subr.bf16.mxu0 %v1454
    %1982 = vmatpush1.bf16.msra.mxu0 %v1453
    %1983 = vmatprep.subr.bf16.mxu0 %v1436
    %1984 = vmatpush1.bf16.msra.mxu0 %v1435
    %1985 = vmatprep.subr.bf16.mxu0 %v1418
    %1986 = vmatpush1.bf16.msra.mxu0 %v1417
    %1987 = vmatprep.subr.bf16.mxu0 %v1400
    %1988 = vmatpush1.bf16.msra.mxu0 %v1399
    %1989 = vmatprep.subr.bf16.mxu0 %v1382
    %1990 = vmatpush1.bf16.msra.mxu0 %v1381
    %1991 = vmatprep.subr.bf16.mxu0 %v1364
    %1992 = vmatpush1.bf16.msra.mxu0 %v1363
    %1993 = vmatprep.subr.bf16.mxu0 %v1346
    %1994 = vmatpush1.bf16.msra.mxu0 %v1345
    %1995 = vmatprep.subr.bf16.mxu0 %v1328
    %1996 = vmatpush1.bf16.msra.mxu0 %v1327
    %1997 = vmatprep.subr.bf16.mxu0 %v1598
    %1998 = vmatpush2.bf16.msra.mxu0 %v1597
    %1999 = vmatprep.subr.bf16.mxu0 %v1580
    %2000 = vmatpush2.bf16.msra.mxu0 %v1579
    %2001 = vmatprep.subr.bf16.mxu0 %v1562
    %2002 = vmatpush2.bf16.msra.mxu0 %v1561
    %2003 = vmatprep.subr.bf16.mxu0 %v1544
    %2004 = vmatpush2.bf16.msra.mxu0 %v1543
    %2005 = vmatprep.subr.bf16.mxu0 %v1526
    %2006 = vmatpush2.bf16.msra.mxu0 %v1525
    %2007 = vmatprep.subr.bf16.mxu0 %v1508
    %2008 = vmatpush2.bf16.msra.mxu0 %v1507
    %2009 = vmatprep.subr.bf16.mxu0 %v1490
    %2010 = vmatpush2.bf16.msra.mxu0 %v1489
    %2011 = vmatprep.subr.bf16.mxu0 %v1472
    %2012 = vmatpush2.bf16.msra.mxu0 %v1471
    %2013 = vmatprep.mubr.bf16.mxu0 %v458
    %2014 = vmatmul.mubr.bf16.gmra.mxu0 %v457
    %v2015 = vpop.f32.mrf.mxu0
    %v2016 = vadd.f32 0.0, %v2015
    %v2017 = vpop.f32.mrf.mxu0
    %v2018 = vadd.f32 0.0, %v2017
    %v2019 = vpop.f32.mrf.mxu0
    %v2020 = vpop.f32.mrf.mxu0
    %2021 = vdwg.mxu0
    %2022 = vmatprep.subr.bf16.mxu0 %v1456
    %2023 = vmatpush1.bf16.msra.mxu0 %v1455
    %2024 = vmatprep.subr.bf16.mxu0 %v1438
    %2025 = vmatpush1.bf16.msra.mxu0 %v1437
    %2026 = vmatprep.subr.bf16.mxu0 %v1420
    %2027 = vmatpush1.bf16.msra.mxu0 %v1419
    %2028 = vmatprep.subr.bf16.mxu0 %v1402
    %2029 = vmatpush1.bf16.msra.mxu0 %v1401
    %2030 = vmatprep.subr.bf16.mxu0 %v1384
    %2031 = vmatpush1.bf16.msra.mxu0 %v1383
    %2032 = vmatprep.subr.bf16.mxu0 %v1366
    %2033 = vmatpush1.bf16.msra.mxu0 %v1365
    %2034 = vmatprep.subr.bf16.mxu0 %v1348
    %2035 = vmatpush1.bf16.msra.mxu0 %v1347
    %2036 = vmatprep.subr.bf16.mxu0 %v1330
    %2037 = vmatpush1.bf16.msra.mxu0 %v1329
    %2038 = vmatprep.subr.bf16.mxu0 %v1600
    %2039 = vmatpush2.bf16.msra.mxu0 %v1599
    %2040 = vmatprep.subr.bf16.mxu0 %v1582
    %2041 = vmatpush2.bf16.msra.mxu0 %v1581
    %2042 = vmatprep.subr.bf16.mxu0 %v1564
    %2043 = vmatpush2.bf16.msra.mxu0 %v1563
    %2044 = vmatprep.subr.bf16.mxu0 %v1546
    %2045 = vmatpush2.bf16.msra.mxu0 %v1545
    %2046 = vmatprep.subr.bf16.mxu0 %v1528
    %2047 = vmatpush2.bf16.msra.mxu0 %v1527
    %2048 = vmatprep.subr.bf16.mxu0 %v1510
    %2049 = vmatpush2.bf16.msra.mxu0 %v1509
    %2050 = vmatprep.subr.bf16.mxu0 %v1492
    %2051 = vmatpush2.bf16.msra.mxu0 %v1491
    %2052 = vmatprep.subr.bf16.mxu0 %v1474
    %2053 = vmatpush2.bf16.msra.mxu0 %v1473
    %2054 = vmatprep.mubr.bf16.mxu0 %v458
    %2055 = vmatmul.mubr.bf16.gmra.mxu0 %v457
    %v2056 = vpop.f32.mrf.mxu0
    %v2057 = vadd.f32 0.0, %v2056
    %v2058 = vpop.f32.mrf.mxu0
    %v2059 = vadd.f32 0.0, %v2058
    %v2060 = vpop.f32.mrf.mxu0
    %v2061 = vpop.f32.mrf.mxu0
    %2062 = vdwg.mxu0
    %2063 = vmatprep.subr.bf16.mxu0 %v1458
    %2064 = vmatpush1.bf16.msra.mxu0 %v1457
    %2065 = vmatprep.subr.bf16.mxu0 %v1440
    %2066 = vmatpush1.bf16.msra.mxu0 %v1439
    %2067 = vmatprep.subr.bf16.mxu0 %v1422
    %2068 = vmatpush1.bf16.msra.mxu0 %v1421
    %2069 = vmatprep.subr.bf16.mxu0 %v1404
    %2070 = vmatpush1.bf16.msra.mxu0 %v1403
    %2071 = vmatprep.subr.bf16.mxu0 %v1386
    %2072 = vmatpush1.bf16.msra.mxu0 %v1385
    %2073 = vmatprep.subr.bf16.mxu0 %v1368
    %2074 = vmatpush1.bf16.msra.mxu0 %v1367
    %2075 = vmatprep.subr.bf16.mxu0 %v1350
    %2076 = vmatpush1.bf16.msra.mxu0 %v1349
    %2077 = vmatprep.subr.bf16.mxu0 %v1332
    %2078 = vmatpush1.bf16.msra.mxu0 %v1331
    %2079 = vmatprep.subr.bf16.mxu0 %v1602
    %2080 = vmatpush2.bf16.msra.mxu0 %v1601
    %2081 = vmatprep.subr.bf16.mxu0 %v1584
    %2082 = vmatpush2.bf16.msra.mxu0 %v1583
    %2083 = vmatprep.subr.bf16.mxu0 %v1566
    %2084 = vmatpush2.bf16.msra.mxu0 %v1565
    %2085 = vmatprep.subr.bf16.mxu0 %v1548
    %2086 = vmatpush2.bf16.msra.mxu0 %v1547
    %2087 = vmatprep.subr.bf16.mxu0 %v1530
    %2088 = vmatpush2.bf16.msra.mxu0 %v1529
    %2089 = vmatprep.subr.bf16.mxu0 %v1512
    %2090 = vmatpush2.bf16.msra.mxu0 %v1511
    %2091 = vmatprep.subr.bf16.mxu0 %v1494
    %2092 = vmatpush2.bf16.msra.mxu0 %v1493
    %2093 = vmatprep.subr.bf16.mxu0 %v1476
    %2094 = vmatpush2.bf16.msra.mxu0 %v1475
    %2095 = vmatprep.mubr.bf16.mxu0 %v458
    %2096 = vmatmul.mubr.bf16.gmra.mxu0 %v457
    %v2097 = vpop.f32.mrf.mxu0
    %v2098 = vadd.f32 0.0, %v2097
    %v2099 = vpop.f32.mrf.mxu0
    %v2100 = vadd.f32 0.0, %v2099
    %v2101 = vpop.f32.mrf.mxu0
    %v2102 = vpop.f32.mrf.mxu0
    %2103 = vdwg.mxu0
    %2104 = vmatprep.subr.bf16.mxu0 %v1460
    %2105 = vmatpush1.bf16.msra.mxu0 %v1459
    %2106 = vmatprep.subr.bf16.mxu0 %v1442
    %2107 = vmatpush1.bf16.msra.mxu0 %v1441
    %2108 = vmatprep.subr.bf16.mxu0 %v1424
    %2109 = vmatpush1.bf16.msra.mxu0 %v1423
    %2110 = vmatprep.subr.bf16.mxu0 %v1406
    %2111 = vmatpush1.bf16.msra.mxu0 %v1405
    %2112 = vmatprep.subr.bf16.mxu0 %v1388
    %2113 = vmatpush1.bf16.msra.mxu0 %v1387
    %2114 = vmatprep.subr.bf16.mxu0 %v1370
    %2115 = vmatpush1.bf16.msra.mxu0 %v1369
    %2116 = vmatprep.subr.bf16.mxu0 %v1352
    %2117 = vmatpush1.bf16.msra.mxu0 %v1351
    %2118 = vmatprep.subr.bf16.mxu0 %v1334
    %2119 = vmatpush1.bf16.msra.mxu0 %v1333
    %2120 = vmatprep.subr.bf16.mxu0 %v1604
    %2121 = vmatpush2.bf16.msra.mxu0 %v1603
    %2122 = vmatprep.subr.bf16.mxu0 %v1586
    %2123 = vmatpush2.bf16.msra.mxu0 %v1585
    %2124 = vmatprep.subr.bf16.mxu0 %v1568
    %2125 = vmatpush2.bf16.msra.mxu0 %v1567
    %2126 = vmatprep.subr.bf16.mxu0 %v1550
    %2127 = vmatpush2.bf16.msra.mxu0 %v1549
    %2128 = vmatprep.subr.bf16.mxu0 %v1532
    %2129 = vmatpush2.bf16.msra.mxu0 %v1531
    %2130 = vmatprep.subr.bf16.mxu0 %v1514
    %2131 = vmatpush2.bf16.msra.mxu0 %v1513
    %2132 = vmatprep.subr.bf16.mxu0 %v1496
    %2133 = vmatpush2.bf16.msra.mxu0 %v1495
    %2134 = vmatprep.subr.bf16.mxu0 %v1478
    %2135 = vmatpush2.bf16.msra.mxu0 %v1477
    %2136 = vmatprep.mubr.bf16.mxu0 %v458
    %2137 = vmatmul.mubr.bf16.gmra.mxu0 %v457
    %v2138 = vpop.f32.mrf.mxu0
    %v2139 = vadd.f32 0.0, %v2138
    %v2140 = vpop.f32.mrf.mxu0
    %v2141 = vadd.f32 0.0, %v2140
    %v2142 = vpop.f32.mrf.mxu0
    %v2143 = vpop.f32.mrf.mxu0
    %2144 = vdwg.mxu0
    %2145 = vmatprep.subr.bf16.mxu0 %v1462
    %2146 = vmatpush1.bf16.msra.mxu0 %v1461
    %2147 = vmatprep.subr.bf16.mxu0 %v1444
    %2148 = vmatpush1.bf16.msra.mxu0 %v1443
    %2149 = vmatprep.subr.bf16.mxu0 %v1426
    %2150 = vmatpush1.bf16.msra.mxu0 %v1425
    %2151 = vmatprep.subr.bf16.mxu0 %v1408
    %2152 = vmatpush1.bf16.msra.mxu0 %v1407
    %2153 = vmatprep.subr.bf16.mxu0 %v1390
    %2154 = vmatpush1.bf16.msra.mxu0 %v1389
    %2155 = vmatprep.subr.bf16.mxu0 %v1372
    %2156 = vmatpush1.bf16.msra.mxu0 %v1371
    %2157 = vmatprep.subr.bf16.mxu0 %v1354
    %2158 = vmatpush1.bf16.msra.mxu0 %v1353
    %2159 = vmatprep.subr.bf16.mxu0 %v1336
    %2160 = vmatpush1.bf16.msra.mxu0 %v1335
    %2161 = vmatprep.subr.bf16.mxu0 %v1606
    %2162 = vmatpush2.bf16.msra.mxu0 %v1605
    %2163 = vmatprep.subr.bf16.mxu0 %v1588
    %2164 = vmatpush2.bf16.msra.mxu0 %v1587
    %2165 = vmatprep.subr.bf16.mxu0 %v1570
    %2166 = vmatpush2.bf16.msra.mxu0 %v1569
    %2167 = vmatprep.subr.bf16.mxu0 %v1552
    %2168 = vmatpush2.bf16.msra.mxu0 %v1551
    %2169 = vmatprep.subr.bf16.mxu0 %v1534
    %2170 = vmatpush2.bf16.msra.mxu0 %v1533
    %2171 = vmatprep.subr.bf16.mxu0 %v1516
    %2172 = vmatpush2.bf16.msra.mxu0 %v1515
    %2173 = vmatprep.subr.bf16.mxu0 %v1498
    %2174 = vmatpush2.bf16.msra.mxu0 %v1497
    %2175 = vmatprep.subr.bf16.mxu0 %v1480
    %2176 = vmatpush2.bf16.msra.mxu0 %v1479
    %2177 = vmatprep.mubr.bf16.mxu0 %v458
    %2178 = vmatmul.mubr.bf16.gmra.mxu0 %v457
    %v2179 = vpop.f32.mrf.mxu0
    %v2180 = vadd.f32 0.0, %v2179
    %v2181 = vpop.f32.mrf.mxu0
    %v2182 = vadd.f32 0.0, %v2181
    %v2183 = vpop.f32.mrf.mxu0
    %v2184 = vpop.f32.mrf.mxu0
    %2185 = vdwg.mxu0
    %2186 = vmatprep.subr.bf16.mxu0 %v1464
    %2187 = vmatpush1.bf16.msra.mxu0 %v1463
    %2188 = vmatprep.subr.bf16.mxu0 %v1446
    %2189 = vmatpush1.bf16.msra.mxu0 %v1445
    %2190 = vmatprep.subr.bf16.mxu0 %v1428
    %2191 = vmatpush1.bf16.msra.mxu0 %v1427
    %2192 = vmatprep.subr.bf16.mxu0 %v1410
    %2193 = vmatpush1.bf16.msra.mxu0 %v1409
    %2194 = vmatprep.subr.bf16.mxu0 %v1392
    %2195 = vmatpush1.bf16.msra.mxu0 %v1391
    %2196 = vmatprep.subr.bf16.mxu0 %v1374
    %2197 = vmatpush1.bf16.msra.mxu0 %v1373
    %2198 = vmatprep.subr.bf16.mxu0 %v1356
    %2199 = vmatpush1.bf16.msra.mxu0 %v1355
    %2200 = vmatprep.subr.bf16.mxu0 %v1338
    %2201 = vmatpush1.bf16.msra.mxu0 %v1337
    %2202 = vmatprep.subr.bf16.mxu0 %v1608
    %2203 = vmatpush2.bf16.msra.mxu0 %v1607
    %2204 = vmatprep.subr.bf16.mxu0 %v1590
    %2205 = vmatpush2.bf16.msra.mxu0 %v1589
    %2206 = vmatprep.subr.bf16.mxu0 %v1572
    %2207 = vmatpush2.bf16.msra.mxu0 %v1571
    %2208 = vmatprep.subr.bf16.mxu0 %v1554
    %2209 = vmatpush2.bf16.msra.mxu0 %v1553
    %2210 = vmatprep.subr.bf16.mxu0 %v1536
    %2211 = vmatpush2.bf16.msra.mxu0 %v1535
    %2212 = vmatprep.subr.bf16.mxu0 %v1518
    %2213 = vmatpush2.bf16.msra.mxu0 %v1517
    %2214 = vmatprep.subr.bf16.mxu0 %v1500
    %2215 = vmatpush2.bf16.msra.mxu0 %v1499
    %2216 = vmatprep.subr.bf16.mxu0 %v1482
    %2217 = vmatpush2.bf16.msra.mxu0 %v1481
    %2218 = vmatprep.mubr.bf16.mxu0 %v458
    %2219 = vmatmul.mubr.bf16.gmra.mxu0 %v457
    %v2220 = vpop.f32.mrf.mxu0
    %v2221 = vadd.f32 0.0, %v2220
    %v2222 = vpop.f32.mrf.mxu0
    %v2223 = vadd.f32 0.0, %v2222
    %v2224 = vpop.f32.mrf.mxu0
    %v2225 = vpop.f32.mrf.mxu0
    %2226 = vdwg.mxu0
    %2227 = vmatprep.subr.bf16.mxu0 %v1466
    %2228 = vmatpush1.bf16.msra.mxu0 %v1465
    %2229 = vmatprep.subr.bf16.mxu0 %v1448
    %2230 = vmatpush1.bf16.msra.mxu0 %v1447
    %2231 = vmatprep.subr.bf16.mxu0 %v1430
    %2232 = vmatpush1.bf16.msra.mxu0 %v1429
    %2233 = vmatprep.subr.bf16.mxu0 %v1412
    %2234 = vmatpush1.bf16.msra.mxu0 %v1411
    %2235 = vmatprep.subr.bf16.mxu0 %v1394
    %2236 = vmatpush1.bf16.msra.mxu0 %v1393
    %2237 = vmatprep.subr.bf16.mxu0 %v1376
    %2238 = vmatpush1.bf16.msra.mxu0 %v1375
    %2239 = vmatprep.subr.bf16.mxu0 %v1358
    %2240 = vmatpush1.bf16.msra.mxu0 %v1357
    %2241 = vmatprep.subr.bf16.mxu0 %v1340
    %2242 = vmatpush1.bf16.msra.mxu0 %v1339
    %2243 = vmatprep.subr.bf16.mxu0 %v1610
    %2244 = vmatpush2.bf16.msra.mxu0 %v1609
    %2245 = vmatprep.subr.bf16.mxu0 %v1592
    %2246 = vmatpush2.bf16.msra.mxu0 %v1591
    %2247 = vmatprep.subr.bf16.mxu0 %v1574
    %2248 = vmatpush2.bf16.msra.mxu0 %v1573
    %2249 = vmatprep.subr.bf16.mxu0 %v1556
    %2250 = vmatpush2.bf16.msra.mxu0 %v1555
    %2251 = vmatprep.subr.bf16.mxu0 %v1538
    %2252 = vmatpush2.bf16.msra.mxu0 %v1537
    %2253 = vmatprep.subr.bf16.mxu0 %v1520
    %2254 = vmatpush2.bf16.msra.mxu0 %v1519
    %2255 = vmatprep.subr.bf16.mxu0 %v1502
    %2256 = vmatpush2.bf16.msra.mxu0 %v1501
    %2257 = vmatprep.subr.bf16.mxu0 %v1484
    %2258 = vmatpush2.bf16.msra.mxu0 %v1483
    %2259 = vmatprep.mubr.bf16.mxu0 %v458
    %2260 = vmatmul.mubr.bf16.gmra.mxu0 %v457
    %v2261 = vpop.f32.mrf.mxu0
    %v2262 = vadd.f32 0.0, %v2261
    %v2263 = vpop.f32.mrf.mxu0
    %v2264 = vadd.f32 0.0, %v2263
    %v2265 = vpop.f32.mrf.mxu0
    %v2266 = vpop.f32.mrf.mxu0
    %2267 = vdwg.mxu0
    %v2268 = vld [vmem:[#allocation5] sm:$0xff]
    %v2269 = vld [vmem:[#allocation5 + $0x8] sm:$0xff]
    %v2270 = vld [vmem:[#allocation10] sm:$0xff]
    %v2271 = vld [vmem:[#allocation10 + $0x8] sm:$0xff]
    %v2272 = vld [vmem:[#allocation10 + $0x10] sm:$0xff]
    %v2273 = vld [vmem:[#allocation10 + $0x18] sm:$0xff]
    %v2274 = vpack.c.bf16 %v2269, %v2268
    %v2275 = vld [vmem:[#allocation17] ss:$8 sm:$0x3]
    %v2277 = vlaneseq
    %v2278 = vshrl.u32 %v2277, 7
    %v2279 = vsub.s32 0, %v2278
    %v2280 = vrot.slane %v2275, %v2279
    %v2281 = vlaneseq
    %v2282 = vshrl.u32 %v2281, 7
    %v2283 = vsub.s32 1, %v2282
    %v2284 = vrot.slane %v2275, %v2283
    %v2291 = vunpack.c.l.b16 %v2270
    %v2292 = vunpack.c.h.b16 %v2270
    %v2293 = vunpack.c.l.b16 %v2271
    %v2294 = vunpack.c.h.b16 %v2271
    %v2295 = vunpack.c.l.b16 %v2272
    %v2296 = vunpack.c.h.b16 %v2272
    %v2297 = vunpack.c.l.b16 %v2273
    %v2298 = vunpack.c.h.b16 %v2273
    %v2299 = vpack.c.b16 %v2293, %v2291
    %v2300 = vpack.c.b16 %v2294, %v2292
    %v2301 = vpack.c.b16 %v2297, %v2295
    %v2302 = vpack.c.b16 %v2298, %v2296
    %vm2307 = vcmask 261120
    %v2309 = vsel %vm2307, %v2274, 0
    %2311 = vmatprep.subr.bf16.mxu0 0
    %2312 = vmatpush1.bf16.msra.mxu0 0
    %2313 = vmatprep.subr.bf16.mxu0 0
    %2314 = vmatpush1.bf16.msra.mxu0 0
    %2315 = vmatprep.subr.bf16.mxu0 0
    %2316 = vmatpush1.bf16.msra.mxu0 0
    %2317 = vmatprep.subr.bf16.mxu0 0
    %2318 = vmatpush1.bf16.msra.mxu0 0
    %2319 = vmatprep.subr.bf16.mxu0 0
    %2320 = vmatpush1.bf16.msra.mxu0 0
    %2321 = vmatprep.subr.bf16.mxu0 0
    %2322 = vmatpush1.bf16.msra.mxu0 0
    %2323 = vmatprep.subr.bf16.mxu0 %v2302
    %2324 = vmatpush1.bf16.msra.mxu0 %v2301
    %2325 = vmatprep.subr.bf16.mxu0 %v2300
    %2326 = vmatpush1.bf16.msra.mxu0 %v2299
    %2327 = vmatprep.subr.bf16.mxu0 0
    %2328 = vmatpush2.bf16.msra.mxu0 0
    %2329 = vmatprep.subr.bf16.mxu0 0
    %2330 = vmatpush2.bf16.msra.mxu0 0
    %2331 = vmatprep.subr.bf16.mxu0 0
    %2332 = vmatpush2.bf16.msra.mxu0 0
    %2333 = vmatprep.subr.bf16.mxu0 0
    %2334 = vmatpush2.bf16.msra.mxu0 0
    %2335 = vmatprep.subr.bf16.mxu0 0
    %2336 = vmatpush2.bf16.msra.mxu0 0
    %2337 = vmatprep.subr.bf16.mxu0 0
    %2338 = vmatpush2.bf16.msra.mxu0 0
    %2339 = vmatprep.subr.bf16.mxu0 0
    %2340 = vmatpush2.bf16.msra.mxu0 0
    %2341 = vmatprep.subr.bf16.mxu0 0
    %2342 = vmatpush2.bf16.msra.mxu0 0
    %2343 = vmatprep.mubr.bf16.mxu0 0
    %2344 = vmatmul.mubr.bf16.gmra.mxu0 %v2309
    %v2345 = vpop.f32.mrf.mxu0
    %v2346 = vadd.f32 %v2280, %v2345
    %v2347 = vpop.f32.mrf.mxu0
    %v2348 = vadd.f32 %v2284, %v2347
    %v2349 = vpop.f32.mrf.mxu0
    %v2350 = vadd.f32 %v2280, %v2349
    %v2351 = vpop.f32.mrf.mxu0
    %v2352 = vadd.f32 %v2284, %v2351
    %2353 = vdwg.mxu0
    %v2354 = vmul.f32 %v2346, 0.5
    %v2355 = vmul.f32 %v2348, 0.5
    %v2356 = vmul.f32 %v2350, 0.5
    %v2357 = vmul.f32 %v2352, 0.5
    %v2358 = vtanh.pop %v2354
    %v2359 = vtanh.pop %v2355
    %v2360 = vtanh.pop %v2356
    %v2361 = vtanh.pop %v2357
    %v2362 = vadd.f32 %v2358, 1.0
    %v2363 = vadd.f32 %v2359, 1.0
    %v2364 = vadd.f32 %v2360, 1.0
    %v2365 = vadd.f32 %v2361, 1.0
    %v2366 = vmul.f32 %v2362, 0.5
    %v2367 = vmul.f32 %v2363, 0.5
    %v2368 = vmul.f32 %v2364, 0.5
    %v2369 = vmul.f32 %v2365, 0.5
    %v2370 = vmul.f32 %v2346, %v2366
    %v2371 = vmul.f32 %v2348, %v2367
    %v2372 = vmul.f32 %v2350, %v2368
    %v2373 = vmul.f32 %v2352, %v2369
    %v2374 = vld [vmem:[#allocation13] sm:$0xff]
    %v2375 = vld [vmem:[#allocation13 + $0x8] sm:$0xff]
    %v2376 = vld [vmem:[#allocation13 + $0x10] sm:$0xff]
    %v2377 = vld [vmem:[#allocation13 + $0x18] sm:$0xff]
    %v2378 = vld [vmem:[#allocation13 + $0x20] sm:$0xff]
    %v2379 = vld [vmem:[#allocation13 + $0x28] sm:$0xff]
    %v2380 = vld [vmem:[#allocation13 + $0x30] sm:$0xff]
    %v2381 = vld [vmem:[#allocation13 + $0x38] sm:$0xff]
    %v2382 = vld [vmem:[#allocation13 + $0x40] sm:$0xff]
    %v2383 = vld [vmem:[#allocation13 + $0x48] sm:$0xff]
    %v2384 = vld [vmem:[#allocation13 + $0x50] sm:$0xff]
    %v2385 = vld [vmem:[#allocation13 + $0x58] sm:$0xff]
    %v2386 = vld [vmem:[#allocation13 + $0x60] sm:$0xff]
    %v2387 = vld [vmem:[#allocation13 + $0x68] sm:$0xff]
    %v2388 = vld [vmem:[#allocation13 + $0x70] sm:$0xff]
    %v2389 = vld [vmem:[#allocation13 + $0x78] sm:$0xff]
    %v2390 = vld [vmem:[#allocation13 + $0x80] sm:$0xff]
    %v2391 = vld [vmem:[#allocation13 + $0x88] sm:$0xff]
    %v2392 = vld [vmem:[#allocation13 + $0x90] sm:$0xff]
    %v2393 = vld [vmem:[#allocation13 + $0x98] sm:$0xff]
    %v2394 = vld [vmem:[#allocation13 + $0xa0] sm:$0xff]
    %v2395 = vld [vmem:[#allocation13 + $0xa8] sm:$0xff]
    %v2396 = vld [vmem:[#allocation13 + $0xb0] sm:$0xff]
    %v2397 = vld [vmem:[#allocation13 + $0xb8] sm:$0xff]
    %v2398 = vld [vmem:[#allocation13 + $0xc0] sm:$0xff]
    %v2399 = vld [vmem:[#allocation13 + $0xc8] sm:$0xff]
    %v2400 = vld [vmem:[#allocation13 + $0xd0] sm:$0xff]
    %v2401 = vld [vmem:[#allocation13 + $0xd8] sm:$0xff]
    %v2402 = vld [vmem:[#allocation13 + $0xe0] sm:$0xff]
    %v2403 = vld [vmem:[#allocation13 + $0xe8] sm:$0xff]
    %v2404 = vld [vmem:[#allocation13 + $0xf0] sm:$0xff]
    %v2405 = vld [vmem:[#allocation13 + $0xf8] sm:$0xff]
    %v2406 = vpack.c.bf16 %v2372, %v2370
    %v2407 = vpack.c.bf16 %v2373, %v2371
    %s2408 = scalar_lea.vmem [#allocation17], 1
    %v2409 = vld [vmem:[%s2408] ss:$8 sm:$0x3]
    %v2411 = vlaneseq
    %v2412 = vshrl.u32 %v2411, 7
    %v2413 = vsub.s32 0, %v2412
    %v2414 = vrot.slane %v2409, %v2413
    %v2415 = vlaneseq
    %v2416 = vshrl.u32 %v2415, 7
    %v2417 = vsub.s32 1, %v2416
    %v2418 = vrot.slane %v2409, %v2417
    %v2453 = vunpack.c.l.b16 %v2374
    %v2454 = vunpack.c.h.b16 %v2374
    %v2455 = vunpack.c.l.b16 %v2375
    %v2456 = vunpack.c.h.b16 %v2375
    %v2457 = vunpack.c.l.b16 %v2376
    %v2458 = vunpack.c.h.b16 %v2376
    %v2459 = vunpack.c.l.b16 %v2377
    %v2460 = vunpack.c.h.b16 %v2377
    %v2461 = vunpack.c.l.b16 %v2378
    %v2462 = vunpack.c.h.b16 %v2378
    %v2463 = vunpack.c.l.b16 %v2379
    %v2464 = vunpack.c.h.b16 %v2379
    %v2465 = vunpack.c.l.b16 %v2380
    %v2466 = vunpack.c.h.b16 %v2380
    %v2467 = vunpack.c.l.b16 %v2381
    %v2468 = vunpack.c.h.b16 %v2381
    %v2469 = vunpack.c.l.b16 %v2382
    %v2470 = vunpack.c.h.b16 %v2382
    %v2471 = vunpack.c.l.b16 %v2383
    %v2472 = vunpack.c.h.b16 %v2383
    %v2473 = vunpack.c.l.b16 %v2384
    %v2474 = vunpack.c.h.b16 %v2384
    %v2475 = vunpack.c.l.b16 %v2385
    %v2476 = vunpack.c.h.b16 %v2385
    %v2477 = vunpack.c.l.b16 %v2386
    %v2478 = vunpack.c.h.b16 %v2386
    %v2479 = vunpack.c.l.b16 %v2387
    %v2480 = vunpack.c.h.b16 %v2387
    %v2481 = vunpack.c.l.b16 %v2388
    %v2482 = vunpack.c.h.b16 %v2388
    %v2483 = vunpack.c.l.b16 %v2389
    %v2484 = vunpack.c.h.b16 %v2389
    %v2485 = vunpack.c.l.b16 %v2390
    %v2486 = vunpack.c.h.b16 %v2390
    %v2487 = vunpack.c.l.b16 %v2391
    %v2488 = vunpack.c.h.b16 %v2391
    %v2489 = vunpack.c.l.b16 %v2392
    %v2490 = vunpack.c.h.b16 %v2392
    %v2491 = vunpack.c.l.b16 %v2393
    %v2492 = vunpack.c.h.b16 %v2393
    %v2493 = vunpack.c.l.b16 %v2394
    %v2494 = vunpack.c.h.b16 %v2394
    %v2495 = vunpack.c.l.b16 %v2395
    %v2496 = vunpack.c.h.b16 %v2395
    %v2497 = vunpack.c.l.b16 %v2396
    %v2498 = vunpack.c.h.b16 %v2396
    %v2499 = vunpack.c.l.b16 %v2397
    %v2500 = vunpack.c.h.b16 %v2397
    %v2501 = vunpack.c.l.b16 %v2398
    %v2502 = vunpack.c.h.b16 %v2398
    %v2503 = vunpack.c.l.b16 %v2399
    %v2504 = vunpack.c.h.b16 %v2399
    %v2505 = vunpack.c.l.b16 %v2400
    %v2506 = vunpack.c.h.b16 %v2400
    %v2507 = vunpack.c.l.b16 %v2401
    %v2508 = vunpack.c.h.b16 %v2401
    %v2509 = vunpack.c.l.b16 %v2402
    %v2510 = vunpack.c.h.b16 %v2402
    %v2511 = vunpack.c.l.b16 %v2403
    %v2512 = vunpack.c.h.b16 %v2403
    %v2513 = vunpack.c.l.b16 %v2404
    %v2514 = vunpack.c.h.b16 %v2404
    %v2515 = vunpack.c.l.b16 %v2405
    %v2516 = vunpack.c.h.b16 %v2405
    %v2517 = vpack.c.b16 %v2455, %v2453
    %v2518 = vpack.c.b16 %v2456, %v2454
    %v2519 = vpack.c.b16 %v2459, %v2457
    %v2520 = vpack.c.b16 %v2460, %v2458
    %v2521 = vpack.c.b16 %v2463, %v2461
    %v2522 = vpack.c.b16 %v2464, %v2462
    %v2523 = vpack.c.b16 %v2467, %v2465
    %v2524 = vpack.c.b16 %v2468, %v2466
    %v2525 = vpack.c.b16 %v2471, %v2469
    %v2526 = vpack.c.b16 %v2472, %v2470
    %v2527 = vpack.c.b16 %v2475, %v2473
    %v2528 = vpack.c.b16 %v2476, %v2474
    %v2529 = vpack.c.b16 %v2479, %v2477
    %v2530 = vpack.c.b16 %v2480, %v2478
    %v2531 = vpack.c.b16 %v2483, %v2481
    %v2532 = vpack.c.b16 %v2484, %v2482
    %v2533 = vpack.c.b16 %v2487, %v2485
    %v2534 = vpack.c.b16 %v2488, %v2486
    %v2535 = vpack.c.b16 %v2491, %v2489
    %v2536 = vpack.c.b16 %v2492, %v2490
    %v2537 = vpack.c.b16 %v2495, %v2493
    %v2538 = vpack.c.b16 %v2496, %v2494
    %v2539 = vpack.c.b16 %v2499, %v2497
    %v2540 = vpack.c.b16 %v2500, %v2498
    %v2541 = vpack.c.b16 %v2503, %v2501
    %v2542 = vpack.c.b16 %v2504, %v2502
    %v2543 = vpack.c.b16 %v2507, %v2505
    %v2544 = vpack.c.b16 %v2508, %v2506
    %v2545 = vpack.c.b16 %v2511, %v2509
    %v2546 = vpack.c.b16 %v2512, %v2510
    %v2547 = vpack.c.b16 %v2515, %v2513
    %v2548 = vpack.c.b16 %v2516, %v2514
    %2581 = vmatprep.subr.bf16.mxu0 %v2532
    %2582 = vmatpush1.bf16.msra.mxu0 %v2531
    %2583 = vmatprep.subr.bf16.mxu0 %v2530
    %2584 = vmatpush1.bf16.msra.mxu0 %v2529
    %2585 = vmatprep.subr.bf16.mxu0 %v2528
    %2586 = vmatpush1.bf16.msra.mxu0 %v2527
    %2587 = vmatprep.subr.bf16.mxu0 %v2526
    %2588 = vmatpush1.bf16.msra.mxu0 %v2525
    %2589 = vmatprep.subr.bf16.mxu0 %v2524
    %2590 = vmatpush1.bf16.msra.mxu0 %v2523
    %2591 = vmatprep.subr.bf16.mxu0 %v2522
    %2592 = vmatpush1.bf16.msra.mxu0 %v2521
    %2593 = vmatprep.subr.bf16.mxu0 %v2520
    %2594 = vmatpush1.bf16.msra.mxu0 %v2519
    %2595 = vmatprep.subr.bf16.mxu0 %v2518
    %2596 = vmatpush1.bf16.msra.mxu0 %v2517
    %2597 = vmatprep.subr.bf16.mxu0 %v2548
    %2598 = vmatpush2.bf16.msra.mxu0 %v2547
    %2599 = vmatprep.subr.bf16.mxu0 %v2546
    %2600 = vmatpush2.bf16.msra.mxu0 %v2545
    %2601 = vmatprep.subr.bf16.mxu0 %v2544
    %2602 = vmatpush2.bf16.msra.mxu0 %v2543
    %2603 = vmatprep.subr.bf16.mxu0 %v2542
    %2604 = vmatpush2.bf16.msra.mxu0 %v2541
    %2605 = vmatprep.subr.bf16.mxu0 %v2540
    %2606 = vmatpush2.bf16.msra.mxu0 %v2539
    %2607 = vmatprep.subr.bf16.mxu0 %v2538
    %2608 = vmatpush2.bf16.msra.mxu0 %v2537
    %2609 = vmatprep.subr.bf16.mxu0 %v2536
    %2610 = vmatpush2.bf16.msra.mxu0 %v2535
    %2611 = vmatprep.subr.bf16.mxu0 %v2534
    %2612 = vmatpush2.bf16.msra.mxu0 %v2533
    %2613 = vmatprep.mubr.bf16.mxu0 %v2407
    %2614 = vmatmul.mubr.bf16.gmra.mxu0 %v2406
    %v2615 = vpop.f32.mrf.mxu0
    %v2616 = vadd.f32 %v2414, %v2615
    %v2617 = vpop.f32.mrf.mxu0
    %v2618 = vadd.f32 %v2418, %v2617
    %v2619 = vpop.f32.mrf.mxu0
    %v2620 = vadd.f32 %v2414, %v2619
    %v2621 = vpop.f32.mrf.mxu0
    %v2622 = vadd.f32 %v2418, %v2621
    %2623 = vdwg.mxu0
    %v2624 = vmul.f32 %v2616, 0.5
    %v2625 = vmul.f32 %v2618, 0.5
    %v2626 = vmul.f32 %v2620, 0.5
    %v2627 = vmul.f32 %v2622, 0.5
    %v2628 = vtanh.pop %v2624
    %v2629 = vtanh.pop %v2625
    %v2630 = vtanh.pop %v2626
    %v2631 = vtanh.pop %v2627
    %v2632 = vadd.f32 %v2628, 1.0
    %v2633 = vadd.f32 %v2629, 1.0
    %v2634 = vadd.f32 %v2630, 1.0
    %v2635 = vadd.f32 %v2631, 1.0
    %v2636 = vmul.f32 %v2632, 0.5
    %v2637 = vmul.f32 %v2633, 0.5
    %v2638 = vmul.f32 %v2634, 0.5
    %v2639 = vmul.f32 %v2635, 0.5
    %v2640 = vmul.f32 %v2616, %v2636
    %v2641 = vmul.f32 %v2618, %v2637
    %v2642 = vmul.f32 %v2620, %v2638
    %v2643 = vmul.f32 %v2622, %v2639
    %s2644 = scalar_lea.vmem [#allocation13], 256
    %v2645 = vld [vmem:[%s2644] sm:$0xff]
    %v2646 = vld [vmem:[%s2644 + $0x8] sm:$0xff]
    %v2647 = vld [vmem:[%s2644 + $0x10] sm:$0xff]
    %v2648 = vld [vmem:[%s2644 + $0x18] sm:$0xff]
    %v2649 = vld [vmem:[%s2644 + $0x20] sm:$0xff]
    %v2650 = vld [vmem:[%s2644 + $0x28] sm:$0xff]
    %v2651 = vld [vmem:[%s2644 + $0x30] sm:$0xff]
    %v2652 = vld [vmem:[%s2644 + $0x38] sm:$0xff]
    %v2653 = vld [vmem:[%s2644 + $0x40] sm:$0xff]
    %v2654 = vld [vmem:[%s2644 + $0x48] sm:$0xff]
    %v2655 = vld [vmem:[%s2644 + $0x50] sm:$0xff]
    %v2656 = vld [vmem:[%s2644 + $0x58] sm:$0xff]
    %v2657 = vld [vmem:[%s2644 + $0x60] sm:$0xff]
    %v2658 = vld [vmem:[%s2644 + $0x68] sm:$0xff]
    %v2659 = vld [vmem:[%s2644 + $0x70] sm:$0xff]
    %v2660 = vld [vmem:[%s2644 + $0x78] sm:$0xff]
    %v2661 = vld [vmem:[%s2644 + $0x80] sm:$0xff]
    %v2662 = vld [vmem:[%s2644 + $0x88] sm:$0xff]
    %v2663 = vld [vmem:[%s2644 + $0x90] sm:$0xff]
    %v2664 = vld [vmem:[%s2644 + $0x98] sm:$0xff]
    %v2665 = vld [vmem:[%s2644 + $0xa0] sm:$0xff]
    %v2666 = vld [vmem:[%s2644 + $0xa8] sm:$0xff]
    %v2667 = vld [vmem:[%s2644 + $0xb0] sm:$0xff]
    %v2668 = vld [vmem:[%s2644 + $0xb8] sm:$0xff]
    %v2669 = vld [vmem:[%s2644 + $0xc0] sm:$0xff]
    %v2670 = vld [vmem:[%s2644 + $0xc8] sm:$0xff]
    %v2671 = vld [vmem:[%s2644 + $0xd0] sm:$0xff]
    %v2672 = vld [vmem:[%s2644 + $0xd8] sm:$0xff]
    %v2673 = vld [vmem:[%s2644 + $0xe0] sm:$0xff]
    %v2674 = vld [vmem:[%s2644 + $0xe8] sm:$0xff]
    %v2675 = vld [vmem:[%s2644 + $0xf0] sm:$0xff]
    %v2676 = vld [vmem:[%s2644 + $0xf8] sm:$0xff]
    %v2677 = vpack.c.bf16 %v2642, %v2640
    %v2678 = vpack.c.bf16 %v2643, %v2641
    %s2679 = scalar_lea.vmem [#allocation17], 2
    %v2680 = vld [vmem:[%s2679] ss:$8 sm:$0x3]
    %v2682 = vlaneseq
    %v2683 = vshrl.u32 %v2682, 7
    %v2684 = vsub.s32 0, %v2683
    %v2685 = vrot.slane %v2680, %v2684
    %v2686 = vlaneseq
    %v2687 = vshrl.u32 %v2686, 7
    %v2688 = vsub.s32 1, %v2687
    %v2689 = vrot.slane %v2680, %v2688
    %v2724 = vunpack.c.l.b16 %v2645
    %v2725 = vunpack.c.h.b16 %v2645
    %v2726 = vunpack.c.l.b16 %v2646
    %v2727 = vunpack.c.h.b16 %v2646
    %v2728 = vunpack.c.l.b16 %v2647
    %v2729 = vunpack.c.h.b16 %v2647
    %v2730 = vunpack.c.l.b16 %v2648
    %v2731 = vunpack.c.h.b16 %v2648
    %v2732 = vunpack.c.l.b16 %v2649
    %v2733 = vunpack.c.h.b16 %v2649
    %v2734 = vunpack.c.l.b16 %v2650
    %v2735 = vunpack.c.h.b16 %v2650
    %v2736 = vunpack.c.l.b16 %v2651
    %v2737 = vunpack.c.h.b16 %v2651
    %v2738 = vunpack.c.l.b16 %v2652
    %v2739 = vunpack.c.h.b16 %v2652
    %v2740 = vunpack.c.l.b16 %v2653
    %v2741 = vunpack.c.h.b16 %v2653
    %v2742 = vunpack.c.l.b16 %v2654
    %v2743 = vunpack.c.h.b16 %v2654
    %v2744 = vunpack.c.l.b16 %v2655
    %v2745 = vunpack.c.h.b16 %v2655
    %v2746 = vunpack.c.l.b16 %v2656
    %v2747 = vunpack.c.h.b16 %v2656
    %v2748 = vunpack.c.l.b16 %v2657
    %v2749 = vunpack.c.h.b16 %v2657
    %v2750 = vunpack.c.l.b16 %v2658
    %v2751 = vunpack.c.h.b16 %v2658
    %v2752 = vunpack.c.l.b16 %v2659
    %v2753 = vunpack.c.h.b16 %v2659
    %v2754 = vunpack.c.l.b16 %v2660
    %v2755 = vunpack.c.h.b16 %v2660
    %v2756 = vunpack.c.l.b16 %v2661
    %v2757 = vunpack.c.h.b16 %v2661
    %v2758 = vunpack.c.l.b16 %v2662
    %v2759 = vunpack.c.h.b16 %v2662
    %v2760 = vunpack.c.l.b16 %v2663
    %v2761 = vunpack.c.h.b16 %v2663
    %v2762 = vunpack.c.l.b16 %v2664
    %v2763 = vunpack.c.h.b16 %v2664
    %v2764 = vunpack.c.l.b16 %v2665
    %v2765 = vunpack.c.h.b16 %v2665
    %v2766 = vunpack.c.l.b16 %v2666
    %v2767 = vunpack.c.h.b16 %v2666
    %v2768 = vunpack.c.l.b16 %v2667
    %v2769 = vunpack.c.h.b16 %v2667
    %v2770 = vunpack.c.l.b16 %v2668
    %v2771 = vunpack.c.h.b16 %v2668
    %v2772 = vunpack.c.l.b16 %v2669
    %v2773 = vunpack.c.h.b16 %v2669
    %v2774 = vunpack.c.l.b16 %v2670
    %v2775 = vunpack.c.h.b16 %v2670
    %v2776 = vunpack.c.l.b16 %v2671
    %v2777 = vunpack.c.h.b16 %v2671
    %v2778 = vunpack.c.l.b16 %v2672
    %v2779 = vunpack.c.h.b16 %v2672
    %v2780 = vunpack.c.l.b16 %v2673
    %v2781 = vunpack.c.h.b16 %v2673
    %v2782 = vunpack.c.l.b16 %v2674
    %v2783 = vunpack.c.h.b16 %v2674
    %v2784 = vunpack.c.l.b16 %v2675
    %v2785 = vunpack.c.h.b16 %v2675
    %v2786 = vunpack.c.l.b16 %v2676
    %v2787 = vunpack.c.h.b16 %v2676
    %v2788 = vpack.c.b16 %v2726, %v2724
    %v2789 = vpack.c.b16 %v2727, %v2725
    %v2790 = vpack.c.b16 %v2730, %v2728
    %v2791 = vpack.c.b16 %v2731, %v2729
    %v2792 = vpack.c.b16 %v2734, %v2732
    %v2793 = vpack.c.b16 %v2735, %v2733
    %v2794 = vpack.c.b16 %v2738, %v2736
    %v2795 = vpack.c.b16 %v2739, %v2737
    %v2796 = vpack.c.b16 %v2742, %v2740
    %v2797 = vpack.c.b16 %v2743, %v2741
    %v2798 = vpack.c.b16 %v2746, %v2744
    %v2799 = vpack.c.b16 %v2747, %v2745
    %v2800 = vpack.c.b16 %v2750, %v2748
    %v2801 = vpack.c.b16 %v2751, %v2749
    %v2802 = vpack.c.b16 %v2754, %v2752
    %v2803 = vpack.c.b16 %v2755, %v2753
    %v2804 = vpack.c.b16 %v2758, %v2756
    %v2805 = vpack.c.b16 %v2759, %v2757
    %v2806 = vpack.c.b16 %v2762, %v2760
    %v2807 = vpack.c.b16 %v2763, %v2761
    %v2808 = vpack.c.b16 %v2766, %v2764
    %v2809 = vpack.c.b16 %v2767, %v2765
    %v2810 = vpack.c.b16 %v2770, %v2768
    %v2811 = vpack.c.b16 %v2771, %v2769
    %v2812 = vpack.c.b16 %v2774, %v2772
    %v2813 = vpack.c.b16 %v2775, %v2773
    %v2814 = vpack.c.b16 %v2778, %v2776
    %v2815 = vpack.c.b16 %v2779, %v2777
    %v2816 = vpack.c.b16 %v2782, %v2780
    %v2817 = vpack.c.b16 %v2783, %v2781
    %v2818 = vpack.c.b16 %v2786, %v2784
    %v2819 = vpack.c.b16 %v2787, %v2785
    %2852 = vmatprep.subr.bf16.mxu0 %v2803
    %2853 = vmatpush1.bf16.msra.mxu0 %v2802
    %2854 = vmatprep.subr.bf16.mxu0 %v2801
    %2855 = vmatpush1.bf16.msra.mxu0 %v2800
    %2856 = vmatprep.subr.bf16.mxu0 %v2799
    %2857 = vmatpush1.bf16.msra.mxu0 %v2798
    %2858 = vmatprep.subr.bf16.mxu0 %v2797
    %2859 = vmatpush1.bf16.msra.mxu0 %v2796
    %2860 = vmatprep.subr.bf16.mxu0 %v2795
    %2861 = vmatpush1.bf16.msra.mxu0 %v2794
    %2862 = vmatprep.subr.bf16.mxu0 %v2793
    %2863 = vmatpush1.bf16.msra.mxu0 %v2792
    %2864 = vmatprep.subr.bf16.mxu0 %v2791
    %2865 = vmatpush1.bf16.msra.mxu0 %v2790
    %2866 = vmatprep.subr.bf16.mxu0 %v2789
    %2867 = vmatpush1.bf16.msra.mxu0 %v2788
    %2868 = vmatprep.subr.bf16.mxu0 %v2819
    %2869 = vmatpush2.bf16.msra.mxu0 %v2818
    %2870 = vmatprep.subr.bf16.mxu0 %v2817
    %2871 = vmatpush2.bf16.msra.mxu0 %v2816
    %2872 = vmatprep.subr.bf16.mxu0 %v2815
    %2873 = vmatpush2.bf16.msra.mxu0 %v2814
    %2874 = vmatprep.subr.bf16.mxu0 %v2813
    %2875 = vmatpush2.bf16.msra.mxu0 %v2812
    %2876 = vmatprep.subr.bf16.mxu0 %v2811
    %2877 = vmatpush2.bf16.msra.mxu0 %v2810
    %2878 = vmatprep.subr.bf16.mxu0 %v2809
    %2879 = vmatpush2.bf16.msra.mxu0 %v2808
    %2880 = vmatprep.subr.bf16.mxu0 %v2807
    %2881 = vmatpush2.bf16.msra.mxu0 %v2806
    %2882 = vmatprep.subr.bf16.mxu0 %v2805
    %2883 = vmatpush2.bf16.msra.mxu0 %v2804
    %2884 = vmatprep.mubr.bf16.mxu0 %v2678
    %2885 = vmatmul.mubr.bf16.gmra.mxu0 %v2677
    %v2886 = vpop.f32.mrf.mxu0
    %v2887 = vadd.f32 %v2685, %v2886
    %v2888 = vpop.f32.mrf.mxu0
    %v2889 = vadd.f32 %v2689, %v2888
    %v2890 = vpop.f32.mrf.mxu0
    %v2891 = vadd.f32 %v2685, %v2890
    %v2892 = vpop.f32.mrf.mxu0
    %v2893 = vadd.f32 %v2689, %v2892
    %2894 = vdwg.mxu0
    %v2895 = vld [vmem:[#allocation11] sm:$0xff]
    %v2896 = vld [vmem:[#allocation11 + $0x8] sm:$0xff]
    %v2897 = vld [vmem:[#allocation11 + $0x10] sm:$0xff]
    %v2898 = vld [vmem:[#allocation11 + $0x18] sm:$0xff]
    %v2899 = vld [vmem:[#allocation11 + $0x20] sm:$0xff]
    %v2900 = vld [vmem:[#allocation11 + $0x28] sm:$0xff]
    %v2901 = vld [vmem:[#allocation11 + $0x30] sm:$0xff]
    %v2902 = vld [vmem:[#allocation11 + $0x38] sm:$0xff]
    %v2903 = vld [vmem:[#allocation11 + $0x40] sm:$0xff]
    %v2904 = vld [vmem:[#allocation11 + $0x48] sm:$0xff]
    %v2905 = vld [vmem:[#allocation11 + $0x50] sm:$0xff]
    %v2906 = vld [vmem:[#allocation11 + $0x58] sm:$0xff]
    %v2907 = vld [vmem:[#allocation11 + $0x60] sm:$0xff]
    %v2908 = vld [vmem:[#allocation11 + $0x68] sm:$0xff]
    %v2909 = vld [vmem:[#allocation11 + $0x70] sm:$0xff]
    %v2910 = vld [vmem:[#allocation11 + $0x78] sm:$0xff]
    %v2911 = vld [vmem:[#allocation11 + $0x80] sm:$0xff]
    %v2912 = vld [vmem:[#allocation11 + $0x88] sm:$0xff]
    %v2913 = vld [vmem:[#allocation11 + $0x90] sm:$0xff]
    %v2914 = vld [vmem:[#allocation11 + $0x98] sm:$0xff]
    %v2915 = vld [vmem:[#allocation11 + $0xa0] sm:$0xff]
    %v2916 = vld [vmem:[#allocation11 + $0xa8] sm:$0xff]
    %v2917 = vld [vmem:[#allocation11 + $0xb0] sm:$0xff]
    %v2918 = vld [vmem:[#allocation11 + $0xb8] sm:$0xff]
    %v2919 = vld [vmem:[#allocation11 + $0xc0] sm:$0xff]
    %v2920 = vld [vmem:[#allocation11 + $0xc8] sm:$0xff]
    %v2921 = vld [vmem:[#allocation11 + $0xd0] sm:$0xff]
    %v2922 = vld [vmem:[#allocation11 + $0xd8] sm:$0xff]
    %v2923 = vld [vmem:[#allocation11 + $0xe0] sm:$0xff]
    %v2924 = vld [vmem:[#allocation11 + $0xe8] sm:$0xff]
    %v2925 = vld [vmem:[#allocation11 + $0xf0] sm:$0xff]
    %v2926 = vld [vmem:[#allocation11 + $0xf8] sm:$0xff]
    %v2927 = vld [vmem:[#allocation11 + $0x100] sm:$0xff]
    %v2928 = vld [vmem:[#allocation11 + $0x108] sm:$0xff]
    %v2929 = vld [vmem:[#allocation11 + $0x110] sm:$0xff]
    %v2930 = vld [vmem:[#allocation11 + $0x118] sm:$0xff]
    %v2931 = vld [vmem:[#allocation11 + $0x120] sm:$0xff]
    %v2932 = vld [vmem:[#allocation11 + $0x128] sm:$0xff]
    %v2933 = vld [vmem:[#allocation11 + $0x130] sm:$0xff]
    %v2934 = vld [vmem:[#allocation11 + $0x138] sm:$0xff]
    %v2935 = vld [vmem:[#allocation11 + $0x140] sm:$0xff]
    %v2936 = vld [vmem:[#allocation11 + $0x148] sm:$0xff]
    %v2937 = vld [vmem:[#allocation11 + $0x150] sm:$0xff]
    %v2938 = vld [vmem:[#allocation11 + $0x158] sm:$0xff]
    %v2939 = vld [vmem:[#allocation11 + $0x160] sm:$0xff]
    %v2940 = vld [vmem:[#allocation11 + $0x168] sm:$0xff]
    %v2941 = vld [vmem:[#allocation11 + $0x170] sm:$0xff]
    %v2942 = vld [vmem:[#allocation11 + $0x178] sm:$0xff]
    %v2943 = vld [vmem:[#allocation11 + $0x180] sm:$0xff]
    %v2944 = vld [vmem:[#allocation11 + $0x188] sm:$0xff]
    %v2945 = vld [vmem:[#allocation11 + $0x190] sm:$0xff]
    %v2946 = vld [vmem:[#allocation11 + $0x198] sm:$0xff]
    %v2947 = vld [vmem:[#allocation11 + $0x1a0] sm:$0xff]
    %v2948 = vld [vmem:[#allocation11 + $0x1a8] sm:$0xff]
    %v2949 = vld [vmem:[#allocation11 + $0x1b0] sm:$0xff]
    %v2950 = vld [vmem:[#allocation11 + $0x1b8] sm:$0xff]
    %v2951 = vld [vmem:[#allocation11 + $0x1c0] sm:$0xff]
    %v2952 = vld [vmem:[#allocation11 + $0x1c8] sm:$0xff]
    %v2953 = vld [vmem:[#allocation11 + $0x1d0] sm:$0xff]
    %v2954 = vld [vmem:[#allocation11 + $0x1d8] sm:$0xff]
    %v2955 = vld [vmem:[#allocation11 + $0x1e0] sm:$0xff]
    %v2956 = vld [vmem:[#allocation11 + $0x1e8] sm:$0xff]
    %v2957 = vld [vmem:[#allocation11 + $0x1f0] sm:$0xff]
    %v2958 = vld [vmem:[#allocation11 + $0x1f8] sm:$0xff]
    %v2959 = vpack.c.bf16 %v2887, %v2887
    %v2960 = vpack.c.bf16 %v2889, %v2889
    %s2961 = scalar_lea.vmem [#allocation11], 512
    %v2962 = vld [vmem:[%s2961] sm:$0xff]
    %v2963 = vld [vmem:[%s2961 + $0x8] sm:$0xff]
    %v2964 = vld [vmem:[%s2961 + $0x10] sm:$0xff]
    %v2965 = vld [vmem:[%s2961 + $0x18] sm:$0xff]
    %v2966 = vld [vmem:[%s2961 + $0x20] sm:$0xff]
    %v2967 = vld [vmem:[%s2961 + $0x28] sm:$0xff]
    %v2968 = vld [vmem:[%s2961 + $0x30] sm:$0xff]
    %v2969 = vld [vmem:[%s2961 + $0x38] sm:$0xff]
    %v2970 = vld [vmem:[%s2961 + $0x40] sm:$0xff]
    %v2971 = vld [vmem:[%s2961 + $0x48] sm:$0xff]
    %v2972 = vld [vmem:[%s2961 + $0x50] sm:$0xff]
    %v2973 = vld [vmem:[%s2961 + $0x58] sm:$0xff]
    %v2974 = vld [vmem:[%s2961 + $0x60] sm:$0xff]
    %v2975 = vld [vmem:[%s2961 + $0x68] sm:$0xff]
    %v2976 = vld [vmem:[%s2961 + $0x70] sm:$0xff]
    %v2977 = vld [vmem:[%s2961 + $0x78] sm:$0xff]
    %v2978 = vld [vmem:[%s2961 + $0x80] sm:$0xff]
    %v2979 = vld [vmem:[%s2961 + $0x88] sm:$0xff]
    %v2980 = vld [vmem:[%s2961 + $0x90] sm:$0xff]
    %v2981 = vld [vmem:[%s2961 + $0x98] sm:$0xff]
    %v2982 = vld [vmem:[%s2961 + $0xa0] sm:$0xff]
    %v2983 = vld [vmem:[%s2961 + $0xa8] sm:$0xff]
    %v2984 = vld [vmem:[%s2961 + $0xb0] sm:$0xff]
    %v2985 = vld [vmem:[%s2961 + $0xb8] sm:$0xff]
    %v2986 = vld [vmem:[%s2961 + $0xc0] sm:$0xff]
    %v2987 = vld [vmem:[%s2961 + $0xc8] sm:$0xff]
    %v2988 = vld [vmem:[%s2961 + $0xd0] sm:$0xff]
    %v2989 = vld [vmem:[%s2961 + $0xd8] sm:$0xff]
    %v2990 = vld [vmem:[%s2961 + $0xe0] sm:$0xff]
    %v2991 = vld [vmem:[%s2961 + $0xe8] sm:$0xff]
    %v2992 = vld [vmem:[%s2961 + $0xf0] sm:$0xff]
    %v2993 = vld [vmem:[%s2961 + $0xf8] sm:$0xff]
    %v2994 = vld [vmem:[%s2961 + $0x100] sm:$0xff]
    %v2995 = vld [vmem:[%s2961 + $0x108] sm:$0xff]
    %v2996 = vld [vmem:[%s2961 + $0x110] sm:$0xff]
    %v2997 = vld [vmem:[%s2961 + $0x118] sm:$0xff]
    %v2998 = vld [vmem:[%s2961 + $0x120] sm:$0xff]
    %v2999 = vld [vmem:[%s2961 + $0x128] sm:$0xff]
    %v3000 = vld [vmem:[%s2961 + $0x130] sm:$0xff]
    %v3001 = vld [vmem:[%s2961 + $0x138] sm:$0xff]
    %v3002 = vld [vmem:[%s2961 + $0x140] sm:$0xff]
    %v3003 = vld [vmem:[%s2961 + $0x148] sm:$0xff]
    %v3004 = vld [vmem:[%s2961 + $0x150] sm:$0xff]
    %v3005 = vld [vmem:[%s2961 + $0x158] sm:$0xff]
    %v3006 = vld [vmem:[%s2961 + $0x160] sm:$0xff]
    %v3007 = vld [vmem:[%s2961 + $0x168] sm:$0xff]
    %v3008 = vld [vmem:[%s2961 + $0x170] sm:$0xff]
    %v3009 = vld [vmem:[%s2961 + $0x178] sm:$0xff]
    %v3010 = vld [vmem:[%s2961 + $0x180] sm:$0xff]
    %v3011 = vld [vmem:[%s2961 + $0x188] sm:$0xff]
    %v3012 = vld [vmem:[%s2961 + $0x190] sm:$0xff]
    %v3013 = vld [vmem:[%s2961 + $0x198] sm:$0xff]
    %v3014 = vld [vmem:[%s2961 + $0x1a0] sm:$0xff]
    %v3015 = vld [vmem:[%s2961 + $0x1a8] sm:$0xff]
    %v3016 = vld [vmem:[%s2961 + $0x1b0] sm:$0xff]
    %v3017 = vld [vmem:[%s2961 + $0x1b8] sm:$0xff]
    %v3018 = vld [vmem:[%s2961 + $0x1c0] sm:$0xff]
    %v3019 = vld [vmem:[%s2961 + $0x1c8] sm:$0xff]
    %v3020 = vld [vmem:[%s2961 + $0x1d0] sm:$0xff]
    %v3021 = vld [vmem:[%s2961 + $0x1d8] sm:$0xff]
    %v3022 = vld [vmem:[%s2961 + $0x1e0] sm:$0xff]
    %v3023 = vld [vmem:[%s2961 + $0x1e8] sm:$0xff]
    %v3024 = vld [vmem:[%s2961 + $0x1f0] sm:$0xff]
    %v3025 = vld [vmem:[%s2961 + $0x1f8] sm:$0xff]
    %v3026 = vpack.c.bf16 %v2891, %v2891
    %v3027 = vpack.c.bf16 %v2893, %v2893
    %v3092 = vunpack.c.l.b16 %v2962
    %v3093 = vunpack.c.h.b16 %v2962
    %v3094 = vunpack.c.l.b16 %v2963
    %v3095 = vunpack.c.h.b16 %v2963
    %v3096 = vunpack.c.l.b16 %v2964
    %v3097 = vunpack.c.h.b16 %v2964
    %v3098 = vunpack.c.l.b16 %v2965
    %v3099 = vunpack.c.h.b16 %v2965
    %v3100 = vunpack.c.l.b16 %v2966
    %v3101 = vunpack.c.h.b16 %v2966
    %v3102 = vunpack.c.l.b16 %v2967
    %v3103 = vunpack.c.h.b16 %v2967
    %v3104 = vunpack.c.l.b16 %v2968
    %v3105 = vunpack.c.h.b16 %v2968
    %v3106 = vunpack.c.l.b16 %v2969
    %v3107 = vunpack.c.h.b16 %v2969
    %v3108 = vunpack.c.l.b16 %v2970
    %v3109 = vunpack.c.h.b16 %v2970
    %v3110 = vunpack.c.l.b16 %v2971
    %v3111 = vunpack.c.h.b16 %v2971
    %v3112 = vunpack.c.l.b16 %v2972
    %v3113 = vunpack.c.h.b16 %v2972
    %v3114 = vunpack.c.l.b16 %v2973
    %v3115 = vunpack.c.h.b16 %v2973
    %v3116 = vunpack.c.l.b16 %v2974
    %v3117 = vunpack.c.h.b16 %v2974
    %v3118 = vunpack.c.l.b16 %v2975
    %v3119 = vunpack.c.h.b16 %v2975
    %v3120 = vunpack.c.l.b16 %v2976
    %v3121 = vunpack.c.h.b16 %v2976
    %v3122 = vunpack.c.l.b16 %v2977
    %v3123 = vunpack.c.h.b16 %v2977
    %v3124 = vunpack.c.l.b16 %v2978
    %v3125 = vunpack.c.h.b16 %v2978
    %v3126 = vunpack.c.l.b16 %v2979
    %v3127 = vunpack.c.h.b16 %v2979
    %v3128 = vunpack.c.l.b16 %v2980
    %v3129 = vunpack.c.h.b16 %v2980
    %v3130 = vunpack.c.l.b16 %v2981
    %v3131 = vunpack.c.h.b16 %v2981
    %v3132 = vunpack.c.l.b16 %v2982
    %v3133 = vunpack.c.h.b16 %v2982
    %v3134 = vunpack.c.l.b16 %v2983
    %v3135 = vunpack.c.h.b16 %v2983
    %v3136 = vunpack.c.l.b16 %v2984
    %v3137 = vunpack.c.h.b16 %v2984
    %v3138 = vunpack.c.l.b16 %v2985
    %v3139 = vunpack.c.h.b16 %v2985
    %v3140 = vunpack.c.l.b16 %v2986
    %v3141 = vunpack.c.h.b16 %v2986
    %v3142 = vunpack.c.l.b16 %v2987
    %v3143 = vunpack.c.h.b16 %v2987
    %v3144 = vunpack.c.l.b16 %v2988
    %v3145 = vunpack.c.h.b16 %v2988
    %v3146 = vunpack.c.l.b16 %v2989
    %v3147 = vunpack.c.h.b16 %v2989
    %v3148 = vunpack.c.l.b16 %v2990
    %v3149 = vunpack.c.h.b16 %v2990
    %v3150 = vunpack.c.l.b16 %v2991
    %v3151 = vunpack.c.h.b16 %v2991
    %v3152 = vunpack.c.l.b16 %v2992
    %v3153 = vunpack.c.h.b16 %v2992
    %v3154 = vunpack.c.l.b16 %v2993
    %v3155 = vunpack.c.h.b16 %v2993
    %v3156 = vunpack.c.l.b16 %v2994
    %v3157 = vunpack.c.h.b16 %v2994
    %v3158 = vunpack.c.l.b16 %v2995
    %v3159 = vunpack.c.h.b16 %v2995
    %v3160 = vunpack.c.l.b16 %v2996
    %v3161 = vunpack.c.h.b16 %v2996
    %v3162 = vunpack.c.l.b16 %v2997
    %v3163 = vunpack.c.h.b16 %v2997
    %v3164 = vunpack.c.l.b16 %v2998
    %v3165 = vunpack.c.h.b16 %v2998
    %v3166 = vunpack.c.l.b16 %v2999
    %v3167 = vunpack.c.h.b16 %v2999
    %v3168 = vunpack.c.l.b16 %v3000
    %v3169 = vunpack.c.h.b16 %v3000
    %v3170 = vunpack.c.l.b16 %v3001
    %v3171 = vunpack.c.h.b16 %v3001
    %v3172 = vunpack.c.l.b16 %v3002
    %v3173 = vunpack.c.h.b16 %v3002
    %v3174 = vunpack.c.l.b16 %v3003
    %v3175 = vunpack.c.h.b16 %v3003
    %v3176 = vunpack.c.l.b16 %v3004
    %v3177 = vunpack.c.h.b16 %v3004
    %v3178 = vunpack.c.l.b16 %v3005
    %v3179 = vunpack.c.h.b16 %v3005
    %v3180 = vunpack.c.l.b16 %v3006
    %v3181 = vunpack.c.h.b16 %v3006
    %v3182 = vunpack.c.l.b16 %v3007
    %v3183 = vunpack.c.h.b16 %v3007
    %v3184 = vunpack.c.l.b16 %v3008
    %v3185 = vunpack.c.h.b16 %v3008
    %v3186 = vunpack.c.l.b16 %v3009
    %v3187 = vunpack.c.h.b16 %v3009
    %v3188 = vunpack.c.l.b16 %v3010
    %v3189 = vunpack.c.h.b16 %v3010
    %v3190 = vunpack.c.l.b16 %v3011
    %v3191 = vunpack.c.h.b16 %v3011
    %v3192 = vunpack.c.l.b16 %v3012
    %v3193 = vunpack.c.h.b16 %v3012
    %v3194 = vunpack.c.l.b16 %v3013
    %v3195 = vunpack.c.h.b16 %v3013
    %v3196 = vunpack.c.l.b16 %v3014
    %v3197 = vunpack.c.h.b16 %v3014
    %v3198 = vunpack.c.l.b16 %v3015
    %v3199 = vunpack.c.h.b16 %v3015
    %v3200 = vunpack.c.l.b16 %v3016
    %v3201 = vunpack.c.h.b16 %v3016
    %v3202 = vunpack.c.l.b16 %v3017
    %v3203 = vunpack.c.h.b16 %v3017
    %v3204 = vunpack.c.l.b16 %v3018
    %v3205 = vunpack.c.h.b16 %v3018
    %v3206 = vunpack.c.l.b16 %v3019
    %v3207 = vunpack.c.h.b16 %v3019
    %v3208 = vunpack.c.l.b16 %v3020
    %v3209 = vunpack.c.h.b16 %v3020
    %v3210 = vunpack.c.l.b16 %v3021
    %v3211 = vunpack.c.h.b16 %v3021
    %v3212 = vunpack.c.l.b16 %v3022
    %v3213 = vunpack.c.h.b16 %v3022
    %v3214 = vunpack.c.l.b16 %v3023
    %v3215 = vunpack.c.h.b16 %v3023
    %v3216 = vunpack.c.l.b16 %v3024
    %v3217 = vunpack.c.h.b16 %v3024
    %v3218 = vunpack.c.l.b16 %v3025
    %v3219 = vunpack.c.h.b16 %v3025
    %v3220 = vpack.c.b16 %v3096, %v3092
    %v3221 = vpack.c.b16 %v3097, %v3093
    %v3222 = vpack.c.b16 %v3098, %v3094
    %v3223 = vpack.c.b16 %v3099, %v3095
    %v3224 = vpack.c.b16 %v3104, %v3100
    %v3225 = vpack.c.b16 %v3105, %v3101
    %v3226 = vpack.c.b16 %v3106, %v3102
    %v3227 = vpack.c.b16 %v3107, %v3103
    %v3228 = vpack.c.b16 %v3112, %v3108
    %v3229 = vpack.c.b16 %v3113, %v3109
    %v3230 = vpack.c.b16 %v3114, %v3110
    %v3231 = vpack.c.b16 %v3115, %v3111
    %v3232 = vpack.c.b16 %v3120, %v3116
    %v3233 = vpack.c.b16 %v3121, %v3117
    %v3234 = vpack.c.b16 %v3122, %v3118
    %v3235 = vpack.c.b16 %v3123, %v3119
    %v3236 = vpack.c.b16 %v3128, %v3124
    %v3237 = vpack.c.b16 %v3129, %v3125
    %v3238 = vpack.c.b16 %v3130, %v3126
    %v3239 = vpack.c.b16 %v3131, %v3127
    %v3240 = vpack.c.b16 %v3136, %v3132
    %v3241 = vpack.c.b16 %v3137, %v3133
    %v3242 = vpack.c.b16 %v3138, %v3134
    %v3243 = vpack.c.b16 %v3139, %v3135
    %v3244 = vpack.c.b16 %v3144, %v3140
    %v3245 = vpack.c.b16 %v3145, %v3141
    %v3246 = vpack.c.b16 %v3146, %v3142
    %v3247 = vpack.c.b16 %v3147, %v3143
    %v3248 = vpack.c.b16 %v3152, %v3148
    %v3249 = vpack.c.b16 %v3153, %v3149
    %v3250 = vpack.c.b16 %v3154, %v3150
    %v3251 = vpack.c.b16 %v3155, %v3151
    %v3252 = vpack.c.b16 %v3160, %v3156
    %v3253 = vpack.c.b16 %v3161, %v3157
    %v3254 = vpack.c.b16 %v3162, %v3158
    %v3255 = vpack.c.b16 %v3163, %v3159
    %v3256 = vpack.c.b16 %v3168, %v3164
    %v3257 = vpack.c.b16 %v3169, %v3165
    %v3258 = vpack.c.b16 %v3170, %v3166
    %v3259 = vpack.c.b16 %v3171, %v3167
    %v3260 = vpack.c.b16 %v3176, %v3172
    %v3261 = vpack.c.b16 %v3177, %v3173
    %v3262 = vpack.c.b16 %v3178, %v3174
    %v3263 = vpack.c.b16 %v3179, %v3175
    %v3264 = vpack.c.b16 %v3184, %v3180
    %v3265 = vpack.c.b16 %v3185, %v3181
    %v3266 = vpack.c.b16 %v3186, %v3182
    %v3267 = vpack.c.b16 %v3187, %v3183
    %v3268 = vpack.c.b16 %v3192, %v3188
    %v3269 = vpack.c.b16 %v3193, %v3189
    %v3270 = vpack.c.b16 %v3194, %v3190
    %v3271 = vpack.c.b16 %v3195, %v3191
    %v3272 = vpack.c.b16 %v3200, %v3196
    %v3273 = vpack.c.b16 %v3201, %v3197
    %v3274 = vpack.c.b16 %v3202, %v3198
    %v3275 = vpack.c.b16 %v3203, %v3199
    %v3276 = vpack.c.b16 %v3208, %v3204
    %v3277 = vpack.c.b16 %v3209, %v3205
    %v3278 = vpack.c.b16 %v3210, %v3206
    %v3279 = vpack.c.b16 %v3211, %v3207
    %v3280 = vpack.c.b16 %v3216, %v3212
    %v3281 = vpack.c.b16 %v3217, %v3213
    %v3282 = vpack.c.b16 %v3218, %v3214
    %v3283 = vpack.c.b16 %v3219, %v3215
    %3348 = vmatprep.subr.bf16.mxu0 %v3249
    %3349 = vmatpush1.bf16.msra.mxu0 %v3248
    %3350 = vmatprep.subr.bf16.mxu0 %v3245
    %3351 = vmatpush1.bf16.msra.mxu0 %v3244
    %3352 = vmatprep.subr.bf16.mxu0 %v3241
    %3353 = vmatpush1.bf16.msra.mxu0 %v3240
    %3354 = vmatprep.subr.bf16.mxu0 %v3237
    %3355 = vmatpush1.bf16.msra.mxu0 %v3236
    %3356 = vmatprep.subr.bf16.mxu0 %v3233
    %3357 = vmatpush1.bf16.msra.mxu0 %v3232
    %3358 = vmatprep.subr.bf16.mxu0 %v3229
    %3359 = vmatpush1.bf16.msra.mxu0 %v3228
    %3360 = vmatprep.subr.bf16.mxu0 %v3225
    %3361 = vmatpush1.bf16.msra.mxu0 %v3224
    %3362 = vmatprep.subr.bf16.mxu0 %v3221
    %3363 = vmatpush1.bf16.msra.mxu0 %v3220
    %3364 = vmatprep.subr.bf16.mxu0 %v3281
    %3365 = vmatpush2.bf16.msra.mxu0 %v3280
    %3366 = vmatprep.subr.bf16.mxu0 %v3277
    %3367 = vmatpush2.bf16.msra.mxu0 %v3276
    %3368 = vmatprep.subr.bf16.mxu0 %v3273
    %3369 = vmatpush2.bf16.msra.mxu0 %v3272
    %3370 = vmatprep.subr.bf16.mxu0 %v3269
    %3371 = vmatpush2.bf16.msra.mxu0 %v3268
    %3372 = vmatprep.subr.bf16.mxu0 %v3265
    %3373 = vmatpush2.bf16.msra.mxu0 %v3264
    %3374 = vmatprep.subr.bf16.mxu0 %v3261
    %3375 = vmatpush2.bf16.msra.mxu0 %v3260
    %3376 = vmatprep.subr.bf16.mxu0 %v3257
    %3377 = vmatpush2.bf16.msra.mxu0 %v3256
    %3378 = vmatprep.subr.bf16.mxu0 %v3253
    %3379 = vmatpush2.bf16.msra.mxu0 %v3252
    %3380 = vmatprep.mubr.bf16.mxu0 %v3027
    %3381 = vmatmul.mubr.bf16.gmra.mxu0 %v3026
    %v3382 = vpop.f32.mrf.mxu0
    %v3383 = vadd.f32 0.0, %v3382
    %v3384 = vpop.f32.mrf.mxu0
    %v3385 = vadd.f32 0.0, %v3384
    %v3386 = vpop.f32.mrf.mxu0
    %v3387 = vpop.f32.mrf.mxu0
    %3388 = vdwg.mxu0
    %3389 = vmatprep.subr.bf16.mxu0 %v3251
    %3390 = vmatpush1.bf16.msra.mxu0 %v3250
    %3391 = vmatprep.subr.bf16.mxu0 %v3247
    %3392 = vmatpush1.bf16.msra.mxu0 %v3246
    %3393 = vmatprep.subr.bf16.mxu0 %v3243
    %3394 = vmatpush1.bf16.msra.mxu0 %v3242
    %3395 = vmatprep.subr.bf16.mxu0 %v3239
    %3396 = vmatpush1.bf16.msra.mxu0 %v3238
    %3397 = vmatprep.subr.bf16.mxu0 %v3235
    %3398 = vmatpush1.bf16.msra.mxu0 %v3234
    %3399 = vmatprep.subr.bf16.mxu0 %v3231
    %3400 = vmatpush1.bf16.msra.mxu0 %v3230
    %3401 = vmatprep.subr.bf16.mxu0 %v3227
    %3402 = vmatpush1.bf16.msra.mxu0 %v3226
    %3403 = vmatprep.subr.bf16.mxu0 %v3223
    %3404 = vmatpush1.bf16.msra.mxu0 %v3222
    %3405 = vmatprep.subr.bf16.mxu0 %v3283
    %3406 = vmatpush2.bf16.msra.mxu0 %v3282
    %3407 = vmatprep.subr.bf16.mxu0 %v3279
    %3408 = vmatpush2.bf16.msra.mxu0 %v3278
    %3409 = vmatprep.subr.bf16.mxu0 %v3275
    %3410 = vmatpush2.bf16.msra.mxu0 %v3274
    %3411 = vmatprep.subr.bf16.mxu0 %v3271
    %3412 = vmatpush2.bf16.msra.mxu0 %v3270
    %3413 = vmatprep.subr.bf16.mxu0 %v3267
    %3414 = vmatpush2.bf16.msra.mxu0 %v3266
    %3415 = vmatprep.subr.bf16.mxu0 %v3263
    %3416 = vmatpush2.bf16.msra.mxu0 %v3262
    %3417 = vmatprep.subr.bf16.mxu0 %v3259
    %3418 = vmatpush2.bf16.msra.mxu0 %v3258
    %3419 = vmatprep.subr.bf16.mxu0 %v3255
    %3420 = vmatpush2.bf16.msra.mxu0 %v3254
    %3421 = vmatprep.mubr.bf16.mxu0 %v3027
    %3422 = vmatmul.mubr.bf16.gmra.mxu0 %v3026
    %v3423 = vpop.f32.mrf.mxu0
    %v3424 = vadd.f32 0.0, %v3423
    %v3425 = vpop.f32.mrf.mxu0
    %v3426 = vadd.f32 0.0, %v3425
    %v3427 = vpop.f32.mrf.mxu0
    %v3428 = vpop.f32.mrf.mxu0
    %3429 = vdwg.mxu0
    %v3494 = vunpack.c.l.b16 %v2895
    %v3495 = vunpack.c.h.b16 %v2895
    %v3496 = vunpack.c.l.b16 %v2896
    %v3497 = vunpack.c.h.b16 %v2896
    %v3498 = vunpack.c.l.b16 %v2897
    %v3499 = vunpack.c.h.b16 %v2897
    %v3500 = vunpack.c.l.b16 %v2898
    %v3501 = vunpack.c.h.b16 %v2898
    %v3502 = vunpack.c.l.b16 %v2899
    %v3503 = vunpack.c.h.b16 %v2899
    %v3504 = vunpack.c.l.b16 %v2900
    %v3505 = vunpack.c.h.b16 %v2900
    %v3506 = vunpack.c.l.b16 %v2901
    %v3507 = vunpack.c.h.b16 %v2901
    %v3508 = vunpack.c.l.b16 %v2902
    %v3509 = vunpack.c.h.b16 %v2902
    %v3510 = vunpack.c.l.b16 %v2903
    %v3511 = vunpack.c.h.b16 %v2903
    %v3512 = vunpack.c.l.b16 %v2904
    %v3513 = vunpack.c.h.b16 %v2904
    %v3514 = vunpack.c.l.b16 %v2905
    %v3515 = vunpack.c.h.b16 %v2905
    %v3516 = vunpack.c.l.b16 %v2906
    %v3517 = vunpack.c.h.b16 %v2906
    %v3518 = vunpack.c.l.b16 %v2907
    %v3519 = vunpack.c.h.b16 %v2907
    %v3520 = vunpack.c.l.b16 %v2908
    %v3521 = vunpack.c.h.b16 %v2908
    %v3522 = vunpack.c.l.b16 %v2909
    %v3523 = vunpack.c.h.b16 %v2909
    %v3524 = vunpack.c.l.b16 %v2910
    %v3525 = vunpack.c.h.b16 %v2910
    %v3526 = vunpack.c.l.b16 %v2911
    %v3527 = vunpack.c.h.b16 %v2911
    %v3528 = vunpack.c.l.b16 %v2912
    %v3529 = vunpack.c.h.b16 %v2912
    %v3530 = vunpack.c.l.b16 %v2913
    %v3531 = vunpack.c.h.b16 %v2913
    %v3532 = vunpack.c.l.b16 %v2914
    %v3533 = vunpack.c.h.b16 %v2914
    %v3534 = vunpack.c.l.b16 %v2915
    %v3535 = vunpack.c.h.b16 %v2915
    %v3536 = vunpack.c.l.b16 %v2916
    %v3537 = vunpack.c.h.b16 %v2916
    %v3538 = vunpack.c.l.b16 %v2917
    %v3539 = vunpack.c.h.b16 %v2917
    %v3540 = vunpack.c.l.b16 %v2918
    %v3541 = vunpack.c.h.b16 %v2918
    %v3542 = vunpack.c.l.b16 %v2919
    %v3543 = vunpack.c.h.b16 %v2919
    %v3544 = vunpack.c.l.b16 %v2920
    %v3545 = vunpack.c.h.b16 %v2920
    %v3546 = vunpack.c.l.b16 %v2921
    %v3547 = vunpack.c.h.b16 %v2921
    %v3548 = vunpack.c.l.b16 %v2922
    %v3549 = vunpack.c.h.b16 %v2922
    %v3550 = vunpack.c.l.b16 %v2923
    %v3551 = vunpack.c.h.b16 %v2923
    %v3552 = vunpack.c.l.b16 %v2924
    %v3553 = vunpack.c.h.b16 %v2924
    %v3554 = vunpack.c.l.b16 %v2925
    %v3555 = vunpack.c.h.b16 %v2925
    %v3556 = vunpack.c.l.b16 %v2926
    %v3557 = vunpack.c.h.b16 %v2926
    %v3558 = vunpack.c.l.b16 %v2927
    %v3559 = vunpack.c.h.b16 %v2927
    %v3560 = vunpack.c.l.b16 %v2928
    %v3561 = vunpack.c.h.b16 %v2928
    %v3562 = vunpack.c.l.b16 %v2929
    %v3563 = vunpack.c.h.b16 %v2929
    %v3564 = vunpack.c.l.b16 %v2930
    %v3565 = vunpack.c.h.b16 %v2930
    %v3566 = vunpack.c.l.b16 %v2931
    %v3567 = vunpack.c.h.b16 %v2931
    %v3568 = vunpack.c.l.b16 %v2932
    %v3569 = vunpack.c.h.b16 %v2932
    %v3570 = vunpack.c.l.b16 %v2933
    %v3571 = vunpack.c.h.b16 %v2933
    %v3572 = vunpack.c.l.b16 %v2934
    %v3573 = vunpack.c.h.b16 %v2934
    %v3574 = vunpack.c.l.b16 %v2935
    %v3575 = vunpack.c.h.b16 %v2935
    %v3576 = vunpack.c.l.b16 %v2936
    %v3577 = vunpack.c.h.b16 %v2936
    %v3578 = vunpack.c.l.b16 %v2937
    %v3579 = vunpack.c.h.b16 %v2937
    %v3580 = vunpack.c.l.b16 %v2938
    %v3581 = vunpack.c.h.b16 %v2938
    %v3582 = vunpack.c.l.b16 %v2939
    %v3583 = vunpack.c.h.b16 %v2939
    %v3584 = vunpack.c.l.b16 %v2940
    %v3585 = vunpack.c.h.b16 %v2940
    %v3586 = vunpack.c.l.b16 %v2941
    %v3587 = vunpack.c.h.b16 %v2941
    %v3588 = vunpack.c.l.b16 %v2942
    %v3589 = vunpack.c.h.b16 %v2942
    %v3590 = vunpack.c.l.b16 %v2943
    %v3591 = vunpack.c.h.b16 %v2943
    %v3592 = vunpack.c.l.b16 %v2944
    %v3593 = vunpack.c.h.b16 %v2944
    %v3594 = vunpack.c.l.b16 %v2945
    %v3595 = vunpack.c.h.b16 %v2945
    %v3596 = vunpack.c.l.b16 %v2946
    %v3597 = vunpack.c.h.b16 %v2946
    %v3598 = vunpack.c.l.b16 %v2947
    %v3599 = vunpack.c.h.b16 %v2947
    %v3600 = vunpack.c.l.b16 %v2948
    %v3601 = vunpack.c.h.b16 %v2948
    %v3602 = vunpack.c.l.b16 %v2949
    %v3603 = vunpack.c.h.b16 %v2949
    %v3604 = vunpack.c.l.b16 %v2950
    %v3605 = vunpack.c.h.b16 %v2950
    %v3606 = vunpack.c.l.b16 %v2951
    %v3607 = vunpack.c.h.b16 %v2951
    %v3608 = vunpack.c.l.b16 %v2952
    %v3609 = vunpack.c.h.b16 %v2952
    %v3610 = vunpack.c.l.b16 %v2953
    %v3611 = vunpack.c.h.b16 %v2953
    %v3612 = vunpack.c.l.b16 %v2954
    %v3613 = vunpack.c.h.b16 %v2954
    %v3614 = vunpack.c.l.b16 %v2955
    %v3615 = vunpack.c.h.b16 %v2955
    %v3616 = vunpack.c.l.b16 %v2956
    %v3617 = vunpack.c.h.b16 %v2956
    %v3618 = vunpack.c.l.b16 %v2957
    %v3619 = vunpack.c.h.b16 %v2957
    %v3620 = vunpack.c.l.b16 %v2958
    %v3621 = vunpack.c.h.b16 %v2958
    %v3622 = vpack.c.b16 %v3498, %v3494
    %v3623 = vpack.c.b16 %v3499, %v3495
    %v3624 = vpack.c.b16 %v3500, %v3496
    %v3625 = vpack.c.b16 %v3501, %v3497
    %v3626 = vpack.c.b16 %v3506, %v3502
    %v3627 = vpack.c.b16 %v3507, %v3503
    %v3628 = vpack.c.b16 %v3508, %v3504
    %v3629 = vpack.c.b16 %v3509, %v3505
    %v3630 = vpack.c.b16 %v3514, %v3510
    %v3631 = vpack.c.b16 %v3515, %v3511
    %v3632 = vpack.c.b16 %v3516, %v3512
    %v3633 = vpack.c.b16 %v3517, %v3513
    %v3634 = vpack.c.b16 %v3522, %v3518
    %v3635 = vpack.c.b16 %v3523, %v3519
    %v3636 = vpack.c.b16 %v3524, %v3520
    %v3637 = vpack.c.b16 %v3525, %v3521
    %v3638 = vpack.c.b16 %v3530, %v3526
    %v3639 = vpack.c.b16 %v3531, %v3527
    %v3640 = vpack.c.b16 %v3532, %v3528
    %v3641 = vpack.c.b16 %v3533, %v3529
    %v3642 = vpack.c.b16 %v3538, %v3534
    %v3643 = vpack.c.b16 %v3539, %v3535
    %v3644 = vpack.c.b16 %v3540, %v3536
    %v3645 = vpack.c.b16 %v3541, %v3537
    %v3646 = vpack.c.b16 %v3546, %v3542
    %v3647 = vpack.c.b16 %v3547, %v3543
    %v3648 = vpack.c.b16 %v3548, %v3544
    %v3649 = vpack.c.b16 %v3549, %v3545
    %v3650 = vpack.c.b16 %v3554, %v3550
    %v3651 = vpack.c.b16 %v3555, %v3551
    %v3652 = vpack.c.b16 %v3556, %v3552
    %v3653 = vpack.c.b16 %v3557, %v3553
    %v3654 = vpack.c.b16 %v3562, %v3558
    %v3655 = vpack.c.b16 %v3563, %v3559
    %v3656 = vpack.c.b16 %v3564, %v3560
    %v3657 = vpack.c.b16 %v3565, %v3561
    %v3658 = vpack.c.b16 %v3570, %v3566
    %v3659 = vpack.c.b16 %v3571, %v3567
    %v3660 = vpack.c.b16 %v3572, %v3568
    %v3661 = vpack.c.b16 %v3573, %v3569
    %v3662 = vpack.c.b16 %v3578, %v3574
    %v3663 = vpack.c.b16 %v3579, %v3575
    %v3664 = vpack.c.b16 %v3580, %v3576
    %v3665 = vpack.c.b16 %v3581, %v3577
    %v3666 = vpack.c.b16 %v3586, %v3582
    %v3667 = vpack.c.b16 %v3587, %v3583
    %v3668 = vpack.c.b16 %v3588, %v3584
    %v3669 = vpack.c.b16 %v3589, %v3585
    %v3670 = vpack.c.b16 %v3594, %v3590
    %v3671 = vpack.c.b16 %v3595, %v3591
    %v3672 = vpack.c.b16 %v3596, %v3592
    %v3673 = vpack.c.b16 %v3597, %v3593
    %v3674 = vpack.c.b16 %v3602, %v3598
    %v3675 = vpack.c.b16 %v3603, %v3599
    %v3676 = vpack.c.b16 %v3604, %v3600
    %v3677 = vpack.c.b16 %v3605, %v3601
    %v3678 = vpack.c.b16 %v3610, %v3606
    %v3679 = vpack.c.b16 %v3611, %v3607
    %v3680 = vpack.c.b16 %v3612, %v3608
    %v3681 = vpack.c.b16 %v3613, %v3609
    %v3682 = vpack.c.b16 %v3618, %v3614
    %v3683 = vpack.c.b16 %v3619, %v3615
    %v3684 = vpack.c.b16 %v3620, %v3616
    %v3685 = vpack.c.b16 %v3621, %v3617
    %3750 = vmatprep.subr.bf16.mxu0 %v3651
    %3751 = vmatpush1.bf16.msra.mxu0 %v3650
    %3752 = vmatprep.subr.bf16.mxu0 %v3647
    %3753 = vmatpush1.bf16.msra.mxu0 %v3646
    %3754 = vmatprep.subr.bf16.mxu0 %v3643
    %3755 = vmatpush1.bf16.msra.mxu0 %v3642
    %3756 = vmatprep.subr.bf16.mxu0 %v3639
    %3757 = vmatpush1.bf16.msra.mxu0 %v3638
    %3758 = vmatprep.subr.bf16.mxu0 %v3635
    %3759 = vmatpush1.bf16.msra.mxu0 %v3634
    %3760 = vmatprep.subr.bf16.mxu0 %v3631
    %3761 = vmatpush1.bf16.msra.mxu0 %v3630
    %3762 = vmatprep.subr.bf16.mxu0 %v3627
    %3763 = vmatpush1.bf16.msra.mxu0 %v3626
    %3764 = vmatprep.subr.bf16.mxu0 %v3623
    %3765 = vmatpush1.bf16.msra.mxu0 %v3622
    %3766 = vmatprep.subr.bf16.mxu0 %v3683
    %3767 = vmatpush2.bf16.msra.mxu0 %v3682
    %3768 = vmatprep.subr.bf16.mxu0 %v3679
    %3769 = vmatpush2.bf16.msra.mxu0 %v3678
    %3770 = vmatprep.subr.bf16.mxu0 %v3675
    %3771 = vmatpush2.bf16.msra.mxu0 %v3674
    %3772 = vmatprep.subr.bf16.mxu0 %v3671
    %3773 = vmatpush2.bf16.msra.mxu0 %v3670
    %3774 = vmatprep.subr.bf16.mxu0 %v3667
    %3775 = vmatpush2.bf16.msra.mxu0 %v3666
    %3776 = vmatprep.subr.bf16.mxu0 %v3663
    %3777 = vmatpush2.bf16.msra.mxu0 %v3662
    %3778 = vmatprep.subr.bf16.mxu0 %v3659
    %3779 = vmatpush2.bf16.msra.mxu0 %v3658
    %3780 = vmatprep.subr.bf16.mxu0 %v3655
    %3781 = vmatpush2.bf16.msra.mxu0 %v3654
    %3782 = vmatprep.mubr.bf16.mxu0 %v2960
    %3783 = vmatmul.mubr.bf16.gmra.mxu0 %v2959
    %v3784 = vpop.f32.mrf.mxu0
    %v3785 = vadd.f32 %v3383, %v3784
    %v3786 = vpop.f32.mrf.mxu0
    %v3787 = vadd.f32 %v3385, %v3786
    %v3788 = vpop.f32.mrf.mxu0
    %v3789 = vpop.f32.mrf.mxu0
    %3790 = vdwg.mxu0
    %3791 = vmatprep.subr.bf16.mxu0 %v3653
    %3792 = vmatpush1.bf16.msra.mxu0 %v3652
    %3793 = vmatprep.subr.bf16.mxu0 %v3649
    %3794 = vmatpush1.bf16.msra.mxu0 %v3648
    %3795 = vmatprep.subr.bf16.mxu0 %v3645
    %3796 = vmatpush1.bf16.msra.mxu0 %v3644
    %3797 = vmatprep.subr.bf16.mxu0 %v3641
    %3798 = vmatpush1.bf16.msra.mxu0 %v3640
    %3799 = vmatprep.subr.bf16.mxu0 %v3637
    %3800 = vmatpush1.bf16.msra.mxu0 %v3636
    %3801 = vmatprep.subr.bf16.mxu0 %v3633
    %3802 = vmatpush1.bf16.msra.mxu0 %v3632
    %3803 = vmatprep.subr.bf16.mxu0 %v3629
    %3804 = vmatpush1.bf16.msra.mxu0 %v3628
    %3805 = vmatprep.subr.bf16.mxu0 %v3625
    %3806 = vmatpush1.bf16.msra.mxu0 %v3624
    %3807 = vmatprep.subr.bf16.mxu0 %v3685
    %3808 = vmatpush2.bf16.msra.mxu0 %v3684
    %3809 = vmatprep.subr.bf16.mxu0 %v3681
    %3810 = vmatpush2.bf16.msra.mxu0 %v3680
    %3811 = vmatprep.subr.bf16.mxu0 %v3677
    %3812 = vmatpush2.bf16.msra.mxu0 %v3676
    %3813 = vmatprep.subr.bf16.mxu0 %v3673
    %3814 = vmatpush2.bf16.msra.mxu0 %v3672
    %3815 = vmatprep.subr.bf16.mxu0 %v3669
    %3816 = vmatpush2.bf16.msra.mxu0 %v3668
    %3817 = vmatprep.subr.bf16.mxu0 %v3665
    %3818 = vmatpush2.bf16.msra.mxu0 %v3664
    %3819 = vmatprep.subr.bf16.mxu0 %v3661
    %3820 = vmatpush2.bf16.msra.mxu0 %v3660
    %3821 = vmatprep.subr.bf16.mxu0 %v3657
    %3822 = vmatpush2.bf16.msra.mxu0 %v3656
    %3823 = vmatprep.mubr.bf16.mxu0 %v2960
    %3824 = vmatmul.mubr.bf16.gmra.mxu0 %v2959
    %v3825 = vpop.f32.mrf.mxu0
    %v3826 = vadd.f32 %v3424, %v3825
    %v3827 = vpop.f32.mrf.mxu0
    %v3828 = vadd.f32 %v3426, %v3827
    %v3829 = vpop.f32.mrf.mxu0
    %v3830 = vpop.f32.mrf.mxu0
    %3831 = vdwg.mxu0
    %v3832 = vrot.slane %v3785, 4
    %v3833 = vadd.f32 %v3785, %v3832
    %v3834 = vrot.slane %v3833, 2
    %v3835 = vadd.f32 %v3833, %v3834
    %v3836 = vrot.slane %v3835, 1
    %v3837 = vadd.f32 %v3835, %v3836
    %v3838 = vrot.slane %v3787, 4
    %v3839 = vadd.f32 %v3787, %v3838
    %v3840 = vrot.slane %v3839, 2
    %v3841 = vadd.f32 %v3839, %v3840
    %v3842 = vrot.slane %v3841, 1
    %v3843 = vadd.f32 %v3841, %v3842
    %v3844 = vrcp.pop 8.0
    %v3845 = vmul.f32 %v3837, %v3844
    %v3846 = vmul.f32 %v3843, %v3844
    %v3847 = vsub.f32 %v3785, %v3845
    %v3848 = vsub.f32 %v3787, %v3846
    %v3849 = vmul.f32 %v3847, %v3847
    %v3850 = vmul.f32 %v3848, %v3848
    %v3851 = vrot.slane %v3849, 4
    %v3852 = vadd.f32 %v3849, %v3851
    %v3853 = vrot.slane %v3852, 2
    %v3854 = vadd.f32 %v3852, %v3853
    %v3855 = vrot.slane %v3854, 1
    %v3856 = vadd.f32 %v3854, %v3855
    %v3857 = vrot.slane %v3850, 4
    %v3858 = vadd.f32 %v3850, %v3857
    %v3859 = vrot.slane %v3858, 2
    %v3860 = vadd.f32 %v3858, %v3859
    %v3861 = vrot.slane %v3860, 1
    %v3862 = vadd.f32 %v3860, %v3861
    %v3863 = vmul.f32 %v3856, %v3844
    %v3864 = vmul.f32 %v3862, %v3844
    %v3865 = vadd.f32 %v3863, 1e-05
    %v3866 = vadd.f32 %v3864, 1e-05
    %v3867 = vrsqrt.pop %v3865
    %v3868 = vrsqrt.pop %v3866
    %v3869 = vmul.f32 %v3847, %v3867
    %v3870 = vmul.f32 %v3848, %v3868
    %v3871 = vmul.f32 %v3869, 0.5
    %v3872 = vmul.f32 %v3870, 0.5
    %v3873 = vtanh.pop %v3871
    %v3874 = vtanh.pop %v3872
    %v3875 = vadd.f32 %v3873, 1.0
    %v3876 = vadd.f32 %v3874, 1.0
    %v3877 = vmul.f32 %v3875, 0.5
    %v3878 = vmul.f32 %v3876, 0.5
    %v3879 = vmul.f32 %v3869, %v3877
    %v3880 = vmul.f32 %v3870, %v3878
    %s3881 = scalar_lea.vmem [#allocation13], 512
    %v3882 = vld [vmem:[%s3881] sm:$0xff]
    %v3883 = vld [vmem:[%s3881 + $0x8] sm:$0xff]
    %v3884 = vld [vmem:[%s3881 + $0x10] sm:$0xff]
    %v3885 = vld [vmem:[%s3881 + $0x18] sm:$0xff]
    %v3886 = vld [vmem:[%s3881 + $0x20] sm:$0xff]
    %v3887 = vld [vmem:[%s3881 + $0x28] sm:$0xff]
    %v3888 = vld [vmem:[%s3881 + $0x30] sm:$0xff]
    %v3889 = vld [vmem:[%s3881 + $0x38] sm:$0xff]
    %v3890 = vld [vmem:[%s3881 + $0x40] sm:$0xff]
    %v3891 = vld [vmem:[%s3881 + $0x48] sm:$0xff]
    %v3892 = vld [vmem:[%s3881 + $0x50] sm:$0xff]
    %v3893 = vld [vmem:[%s3881 + $0x58] sm:$0xff]
    %v3894 = vld [vmem:[%s3881 + $0x60] sm:$0xff]
    %v3895 = vld [vmem:[%s3881 + $0x68] sm:$0xff]
    %v3896 = vld [vmem:[%s3881 + $0x70] sm:$0xff]
    %v3897 = vld [vmem:[%s3881 + $0x78] sm:$0xff]
    %v3898 = vld [vmem:[%s3881 + $0x80] sm:$0xff]
    %v3899 = vld [vmem:[%s3881 + $0x88] sm:$0xff]
    %v3900 = vld [vmem:[%s3881 + $0x90] sm:$0xff]
    %v3901 = vld [vmem:[%s3881 + $0x98] sm:$0xff]
    %v3902 = vld [vmem:[%s3881 + $0xa0] sm:$0xff]
    %v3903 = vld [vmem:[%s3881 + $0xa8] sm:$0xff]
    %v3904 = vld [vmem:[%s3881 + $0xb0] sm:$0xff]
    %v3905 = vld [vmem:[%s3881 + $0xb8] sm:$0xff]
    %v3906 = vld [vmem:[%s3881 + $0xc0] sm:$0xff]
    %v3907 = vld [vmem:[%s3881 + $0xc8] sm:$0xff]
    %v3908 = vld [vmem:[%s3881 + $0xd0] sm:$0xff]
    %v3909 = vld [vmem:[%s3881 + $0xd8] sm:$0xff]
    %v3910 = vld [vmem:[%s3881 + $0xe0] sm:$0xff]
    %v3911 = vld [vmem:[%s3881 + $0xe8] sm:$0xff]
    %v3912 = vld [vmem:[%s3881 + $0xf0] sm:$0xff]
    %v3913 = vld [vmem:[%s3881 + $0xf8] sm:$0xff]
    %v3914 = vpack.c.bf16 %v3879, %v3879
    %v3915 = vpack.c.bf16 %v3880, %v3880
    %v3948 = vunpack.c.l.b16 %v3882
    %v3949 = vunpack.c.h.b16 %v3882
    %v3950 = vunpack.c.l.b16 %v3883
    %v3951 = vunpack.c.h.b16 %v3883
    %v3952 = vunpack.c.l.b16 %v3884
    %v3953 = vunpack.c.h.b16 %v3884
    %v3954 = vunpack.c.l.b16 %v3885
    %v3955 = vunpack.c.h.b16 %v3885
    %v3956 = vunpack.c.l.b16 %v3886
    %v3957 = vunpack.c.h.b16 %v3886
    %v3958 = vunpack.c.l.b16 %v3887
    %v3959 = vunpack.c.h.b16 %v3887
    %v3960 = vunpack.c.l.b16 %v3888
    %v3961 = vunpack.c.h.b16 %v3888
    %v3962 = vunpack.c.l.b16 %v3889
    %v3963 = vunpack.c.h.b16 %v3889
    %v3964 = vunpack.c.l.b16 %v3890
    %v3965 = vunpack.c.h.b16 %v3890
    %v3966 = vunpack.c.l.b16 %v3891
    %v3967 = vunpack.c.h.b16 %v3891
    %v3968 = vunpack.c.l.b16 %v3892
    %v3969 = vunpack.c.h.b16 %v3892
    %v3970 = vunpack.c.l.b16 %v3893
    %v3971 = vunpack.c.h.b16 %v3893
    %v3972 = vunpack.c.l.b16 %v3894
    %v3973 = vunpack.c.h.b16 %v3894
    %v3974 = vunpack.c.l.b16 %v3895
    %v3975 = vunpack.c.h.b16 %v3895
    %v3976 = vunpack.c.l.b16 %v3896
    %v3977 = vunpack.c.h.b16 %v3896
    %v3978 = vunpack.c.l.b16 %v3897
    %v3979 = vunpack.c.h.b16 %v3897
    %v3980 = vunpack.c.l.b16 %v3898
    %v3981 = vunpack.c.h.b16 %v3898
    %v3982 = vunpack.c.l.b16 %v3899
    %v3983 = vunpack.c.h.b16 %v3899
    %v3984 = vunpack.c.l.b16 %v3900
    %v3985 = vunpack.c.h.b16 %v3900
    %v3986 = vunpack.c.l.b16 %v3901
    %v3987 = vunpack.c.h.b16 %v3901
    %v3988 = vunpack.c.l.b16 %v3902
    %v3989 = vunpack.c.h.b16 %v3902
    %v3990 = vunpack.c.l.b16 %v3903
    %v3991 = vunpack.c.h.b16 %v3903
    %v3992 = vunpack.c.l.b16 %v3904
    %v3993 = vunpack.c.h.b16 %v3904
    %v3994 = vunpack.c.l.b16 %v3905
    %v3995 = vunpack.c.h.b16 %v3905
    %v3996 = vunpack.c.l.b16 %v3906
    %v3997 = vunpack.c.h.b16 %v3906
    %v3998 = vunpack.c.l.b16 %v3907
    %v3999 = vunpack.c.h.b16 %v3907
    %v4000 = vunpack.c.l.b16 %v3908
    %v4001 = vunpack.c.h.b16 %v3908
    %v4002 = vunpack.c.l.b16 %v3909
    %v4003 = vunpack.c.h.b16 %v3909
    %v4004 = vunpack.c.l.b16 %v3910
    %v4005 = vunpack.c.h.b16 %v3910
    %v4006 = vunpack.c.l.b16 %v3911
    %v4007 = vunpack.c.h.b16 %v3911
    %v4008 = vunpack.c.l.b16 %v3912
    %v4009 = vunpack.c.h.b16 %v3912
    %v4010 = vunpack.c.l.b16 %v3913
    %v4011 = vunpack.c.h.b16 %v3913
    %v4012 = vpack.c.b16 %v3950, %v3948
    %v4013 = vpack.c.b16 %v3951, %v3949
    %v4014 = vpack.c.b16 %v3954, %v3952
    %v4015 = vpack.c.b16 %v3955, %v3953
    %v4016 = vpack.c.b16 %v3958, %v3956
    %v4017 = vpack.c.b16 %v3959, %v3957
    %v4018 = vpack.c.b16 %v3962, %v3960
    %v4019 = vpack.c.b16 %v3963, %v3961
    %v4020 = vpack.c.b16 %v3966, %v3964
    %v4021 = vpack.c.b16 %v3967, %v3965
    %v4022 = vpack.c.b16 %v3970, %v3968
    %v4023 = vpack.c.b16 %v3971, %v3969
    %v4024 = vpack.c.b16 %v3974, %v3972
    %v4025 = vpack.c.b16 %v3975, %v3973
    %v4026 = vpack.c.b16 %v3978, %v3976
    %v4027 = vpack.c.b16 %v3979, %v3977
    %v4028 = vpack.c.b16 %v3982, %v3980
    %v4029 = vpack.c.b16 %v3983, %v3981
    %v4030 = vpack.c.b16 %v3986, %v3984
    %v4031 = vpack.c.b16 %v3987, %v3985
    %v4032 = vpack.c.b16 %v3990, %v3988
    %v4033 = vpack.c.b16 %v3991, %v3989
    %v4034 = vpack.c.b16 %v3994, %v3992
    %v4035 = vpack.c.b16 %v3995, %v3993
    %v4036 = vpack.c.b16 %v3998, %v3996
    %v4037 = vpack.c.b16 %v3999, %v3997
    %v4038 = vpack.c.b16 %v4002, %v4000
    %v4039 = vpack.c.b16 %v4003, %v4001
    %v4040 = vpack.c.b16 %v4006, %v4004
    %v4041 = vpack.c.b16 %v4007, %v4005
    %v4042 = vpack.c.b16 %v4010, %v4008
    %v4043 = vpack.c.b16 %v4011, %v4009
    %4076 = vmatprep.subr.bf16.mxu0 %v4027
    %4077 = vmatpush1.bf16.msra.mxu0 %v4026
    %4078 = vmatprep.subr.bf16.mxu0 %v4025
    %4079 = vmatpush1.bf16.msra.mxu0 %v4024
    %4080 = vmatprep.subr.bf16.mxu0 %v4023
    %4081 = vmatpush1.bf16.msra.mxu0 %v4022
    %4082 = vmatprep.subr.bf16.mxu0 %v4021
    %4083 = vmatpush1.bf16.msra.mxu0 %v4020
    %4084 = vmatprep.subr.bf16.mxu0 %v4019
    %4085 = vmatpush1.bf16.msra.mxu0 %v4018
    %4086 = vmatprep.subr.bf16.mxu0 %v4017
    %4087 = vmatpush1.bf16.msra.mxu0 %v4016
    %4088 = vmatprep.subr.bf16.mxu0 %v4015
    %4089 = vmatpush1.bf16.msra.mxu0 %v4014
    %4090 = vmatprep.subr.bf16.mxu0 %v4013
    %4091 = vmatpush1.bf16.msra.mxu0 %v4012
    %4092 = vmatprep.subr.bf16.mxu0 %v4043
    %4093 = vmatpush2.bf16.msra.mxu0 %v4042
    %4094 = vmatprep.subr.bf16.mxu0 %v4041
    %4095 = vmatpush2.bf16.msra.mxu0 %v4040
    %4096 = vmatprep.subr.bf16.mxu0 %v4039
    %4097 = vmatpush2.bf16.msra.mxu0 %v4038
    %4098 = vmatprep.subr.bf16.mxu0 %v4037
    %4099 = vmatpush2.bf16.msra.mxu0 %v4036
    %4100 = vmatprep.subr.bf16.mxu0 %v4035
    %4101 = vmatpush2.bf16.msra.mxu0 %v4034
    %4102 = vmatprep.subr.bf16.mxu0 %v4033
    %4103 = vmatpush2.bf16.msra.mxu0 %v4032
    %4104 = vmatprep.subr.bf16.mxu0 %v4031
    %4105 = vmatpush2.bf16.msra.mxu0 %v4030
    %4106 = vmatprep.subr.bf16.mxu0 %v4029
    %4107 = vmatpush2.bf16.msra.mxu0 %v4028
    %4108 = vmatprep.mubr.bf16.mxu0 %v3915
    %4109 = vmatmul.mubr.bf16.gmra.mxu0 %v3914
    %v4110 = vpop.f32.mrf.mxu0
    %v4111 = vadd.f32 0.0, %v4110
    %v4112 = vpop.f32.mrf.mxu0
    %v4113 = vadd.f32 0.0, %v4112
    %v4114 = vpop.f32.mrf.mxu0
    %v4115 = vpop.f32.mrf.mxu0
    %4116 = vdwg.mxu0
    %v4117 = vrot.slane %v4111, 4
    %v4118 = vadd.f32 %v4111, %v4117
    %v4119 = vrot.slane %v4118, 2
    %v4120 = vadd.f32 %v4118, %v4119
    %v4121 = vrot.slane %v4120, 1
    %v4122 = vadd.f32 %v4120, %v4121
    %v4123 = vrot.slane %v4113, 4
    %v4124 = vadd.f32 %v4113, %v4123
    %v4125 = vrot.slane %v4124, 2
    %v4126 = vadd.f32 %v4124, %v4125
    %v4127 = vrot.slane %v4126, 1
    %v4128 = vadd.f32 %v4126, %v4127
    %v4129 = vmul.f32 %v4122, %v3844
    %v4130 = vmul.f32 %v4128, %v3844
    %v4131 = vsub.f32 %v4111, %v4129
    %v4132 = vsub.f32 %v4113, %v4130
    %v4133 = vmul.f32 %v4131, %v4131
    %v4134 = vmul.f32 %v4132, %v4132
    %v4135 = vrot.slane %v4133, 4
    %v4136 = vadd.f32 %v4133, %v4135
    %v4137 = vrot.slane %v4136, 2
    %v4138 = vadd.f32 %v4136, %v4137
    %v4139 = vrot.slane %v4138, 1
    %v4140 = vadd.f32 %v4138, %v4139
    %v4141 = vrot.slane %v4134, 4
    %v4142 = vadd.f32 %v4134, %v4141
    %v4143 = vrot.slane %v4142, 2
    %v4144 = vadd.f32 %v4142, %v4143
    %v4145 = vrot.slane %v4144, 1
    %v4146 = vadd.f32 %v4144, %v4145
    %v4147 = vmul.f32 %v4140, %v3844
    %v4148 = vmul.f32 %v4146, %v3844
    %v4149 = vadd.f32 %v4147, 1e-05
    %v4150 = vadd.f32 %v4148, 1e-05
    %v4151 = vrsqrt.pop %v4149
    %v4152 = vrsqrt.pop %v4150
    %v4153 = vmul.f32 %v4131, %v4151
    %v4154 = vmul.f32 %v4132, %v4152
    %v4155 = vmul.f32 %v4153, 0.5
    %v4156 = vmul.f32 %v4154, 0.5
    %v4157 = vtanh.pop %v4155
    %v4158 = vtanh.pop %v4156
    %v4159 = vadd.f32 %v4157, 1.0
    %v4160 = vadd.f32 %v4158, 1.0
    %v4161 = vmul.f32 %v4159, 0.5
    %v4162 = vmul.f32 %v4160, 0.5
    %v4163 = vmul.f32 %v4153, %v4161
    %v4164 = vmul.f32 %v4154, %v4162
    %s4165 = scalar_lea.vmem [#allocation13], 768
    %v4166 = vld [vmem:[%s4165] sm:$0xff]
    %v4167 = vld [vmem:[%s4165 + $0x8] sm:$0xff]
    %v4168 = vld [vmem:[%s4165 + $0x10] sm:$0xff]
    %v4169 = vld [vmem:[%s4165 + $0x18] sm:$0xff]
    %v4170 = vld [vmem:[%s4165 + $0x20] sm:$0xff]
    %v4171 = vld [vmem:[%s4165 + $0x28] sm:$0xff]
    %v4172 = vld [vmem:[%s4165 + $0x30] sm:$0xff]
    %v4173 = vld [vmem:[%s4165 + $0x38] sm:$0xff]
    %v4174 = vld [vmem:[%s4165 + $0x40] sm:$0xff]
    %v4175 = vld [vmem:[%s4165 + $0x48] sm:$0xff]
    %v4176 = vld [vmem:[%s4165 + $0x50] sm:$0xff]
    %v4177 = vld [vmem:[%s4165 + $0x58] sm:$0xff]
    %v4178 = vld [vmem:[%s4165 + $0x60] sm:$0xff]
    %v4179 = vld [vmem:[%s4165 + $0x68] sm:$0xff]
    %v4180 = vld [vmem:[%s4165 + $0x70] sm:$0xff]
    %v4181 = vld [vmem:[%s4165 + $0x78] sm:$0xff]
    %v4182 = vld [vmem:[%s4165 + $0x80] sm:$0xff]
    %v4183 = vld [vmem:[%s4165 + $0x88] sm:$0xff]
    %v4184 = vld [vmem:[%s4165 + $0x90] sm:$0xff]
    %v4185 = vld [vmem:[%s4165 + $0x98] sm:$0xff]
    %v4186 = vld [vmem:[%s4165 + $0xa0] sm:$0xff]
    %v4187 = vld [vmem:[%s4165 + $0xa8] sm:$0xff]
    %v4188 = vld [vmem:[%s4165 + $0xb0] sm:$0xff]
    %v4189 = vld [vmem:[%s4165 + $0xb8] sm:$0xff]
    %v4190 = vld [vmem:[%s4165 + $0xc0] sm:$0xff]
    %v4191 = vld [vmem:[%s4165 + $0xc8] sm:$0xff]
    %v4192 = vld [vmem:[%s4165 + $0xd0] sm:$0xff]
    %v4193 = vld [vmem:[%s4165 + $0xd8] sm:$0xff]
    %v4194 = vld [vmem:[%s4165 + $0xe0] sm:$0xff]
    %v4195 = vld [vmem:[%s4165 + $0xe8] sm:$0xff]
    %v4196 = vld [vmem:[%s4165 + $0xf0] sm:$0xff]
    %v4197 = vld [vmem:[%s4165 + $0xf8] sm:$0xff]
    %v4198 = vpack.c.bf16 %v4163, %v4163
    %v4199 = vpack.c.bf16 %v4164, %v4164
    %s4200 = scalar_lea.vmem [#allocation17], 3
    %v4201 = vld [vmem:[%s4200] ss:$8 sm:$0x3]
    %v4203 = vlaneseq
    %v4204 = vshrl.u32 %v4203, 7
    %v4205 = vsub.s32 0, %v4204
    %v4206 = vrot.slane %v4201, %v4205
    %v4207 = vlaneseq
    %v4208 = vshrl.u32 %v4207, 7
    %v4209 = vsub.s32 1, %v4208
    %v4210 = vrot.slane %v4201, %v4209
    %v4245 = vunpack.c.l.b16 %v4166
    %v4246 = vunpack.c.h.b16 %v4166
    %v4247 = vunpack.c.l.b16 %v4167
    %v4248 = vunpack.c.h.b16 %v4167
    %v4249 = vunpack.c.l.b16 %v4168
    %v4250 = vunpack.c.h.b16 %v4168
    %v4251 = vunpack.c.l.b16 %v4169
    %v4252 = vunpack.c.h.b16 %v4169
    %v4253 = vunpack.c.l.b16 %v4170
    %v4254 = vunpack.c.h.b16 %v4170
    %v4255 = vunpack.c.l.b16 %v4171
    %v4256 = vunpack.c.h.b16 %v4171
    %v4257 = vunpack.c.l.b16 %v4172
    %v4258 = vunpack.c.h.b16 %v4172
    %v4259 = vunpack.c.l.b16 %v4173
    %v4260 = vunpack.c.h.b16 %v4173
    %v4261 = vunpack.c.l.b16 %v4174
    %v4262 = vunpack.c.h.b16 %v4174
    %v4263 = vunpack.c.l.b16 %v4175
    %v4264 = vunpack.c.h.b16 %v4175
    %v4265 = vunpack.c.l.b16 %v4176
    %v4266 = vunpack.c.h.b16 %v4176
    %v4267 = vunpack.c.l.b16 %v4177
    %v4268 = vunpack.c.h.b16 %v4177
    %v4269 = vunpack.c.l.b16 %v4178
    %v4270 = vunpack.c.h.b16 %v4178
    %v4271 = vunpack.c.l.b16 %v4179
    %v4272 = vunpack.c.h.b16 %v4179
    %v4273 = vunpack.c.l.b16 %v4180
    %v4274 = vunpack.c.h.b16 %v4180
    %v4275 = vunpack.c.l.b16 %v4181
    %v4276 = vunpack.c.h.b16 %v4181
    %v4277 = vunpack.c.l.b16 %v4182
    %v4278 = vunpack.c.h.b16 %v4182
    %v4279 = vunpack.c.l.b16 %v4183
    %v4280 = vunpack.c.h.b16 %v4183
    %v4281 = vunpack.c.l.b16 %v4184
    %v4282 = vunpack.c.h.b16 %v4184
    %v4283 = vunpack.c.l.b16 %v4185
    %v4284 = vunpack.c.h.b16 %v4185
    %v4285 = vunpack.c.l.b16 %v4186
    %v4286 = vunpack.c.h.b16 %v4186
    %v4287 = vunpack.c.l.b16 %v4187
    %v4288 = vunpack.c.h.b16 %v4187
    %v4289 = vunpack.c.l.b16 %v4188
    %v4290 = vunpack.c.h.b16 %v4188
    %v4291 = vunpack.c.l.b16 %v4189
    %v4292 = vunpack.c.h.b16 %v4189
    %v4293 = vunpack.c.l.b16 %v4190
    %v4294 = vunpack.c.h.b16 %v4190
    %v4295 = vunpack.c.l.b16 %v4191
    %v4296 = vunpack.c.h.b16 %v4191
    %v4297 = vunpack.c.l.b16 %v4192
    %v4298 = vunpack.c.h.b16 %v4192
    %v4299 = vunpack.c.l.b16 %v4193
    %v4300 = vunpack.c.h.b16 %v4193
    %v4301 = vunpack.c.l.b16 %v4194
    %v4302 = vunpack.c.h.b16 %v4194
    %v4303 = vunpack.c.l.b16 %v4195
    %v4304 = vunpack.c.h.b16 %v4195
    %v4305 = vunpack.c.l.b16 %v4196
    %v4306 = vunpack.c.h.b16 %v4196
    %v4307 = vunpack.c.l.b16 %v4197
    %v4308 = vunpack.c.h.b16 %v4197
    %v4309 = vpack.c.b16 %v4247, %v4245
    %v4310 = vpack.c.b16 %v4248, %v4246
    %v4311 = vpack.c.b16 %v4251, %v4249
    %v4312 = vpack.c.b16 %v4252, %v4250
    %v4313 = vpack.c.b16 %v4255, %v4253
    %v4314 = vpack.c.b16 %v4256, %v4254
    %v4315 = vpack.c.b16 %v4259, %v4257
    %v4316 = vpack.c.b16 %v4260, %v4258
    %v4317 = vpack.c.b16 %v4263, %v4261
    %v4318 = vpack.c.b16 %v4264, %v4262
    %v4319 = vpack.c.b16 %v4267, %v4265
    %v4320 = vpack.c.b16 %v4268, %v4266
    %v4321 = vpack.c.b16 %v4271, %v4269
    %v4322 = vpack.c.b16 %v4272, %v4270
    %v4323 = vpack.c.b16 %v4275, %v4273
    %v4324 = vpack.c.b16 %v4276, %v4274
    %v4325 = vpack.c.b16 %v4279, %v4277
    %v4326 = vpack.c.b16 %v4280, %v4278
    %v4327 = vpack.c.b16 %v4283, %v4281
    %v4328 = vpack.c.b16 %v4284, %v4282
    %v4329 = vpack.c.b16 %v4287, %v4285
    %v4330 = vpack.c.b16 %v4288, %v4286
    %v4331 = vpack.c.b16 %v4291, %v4289
    %v4332 = vpack.c.b16 %v4292, %v4290
    %v4333 = vpack.c.b16 %v4295, %v4293
    %v4334 = vpack.c.b16 %v4296, %v4294
    %v4335 = vpack.c.b16 %v4299, %v4297
    %v4336 = vpack.c.b16 %v4300, %v4298
    %v4337 = vpack.c.b16 %v4303, %v4301
    %v4338 = vpack.c.b16 %v4304, %v4302
    %v4339 = vpack.c.b16 %v4307, %v4305
    %v4340 = vpack.c.b16 %v4308, %v4306
    %4373 = vmatprep.subr.bf16.mxu0 %v4324
    %4374 = vmatpush1.bf16.msra.mxu0 %v4323
    %4375 = vmatprep.subr.bf16.mxu0 %v4322
    %4376 = vmatpush1.bf16.msra.mxu0 %v4321
    %4377 = vmatprep.subr.bf16.mxu0 %v4320
    %4378 = vmatpush1.bf16.msra.mxu0 %v4319
    %4379 = vmatprep.subr.bf16.mxu0 %v4318
    %4380 = vmatpush1.bf16.msra.mxu0 %v4317
    %4381 = vmatprep.subr.bf16.mxu0 %v4316
    %4382 = vmatpush1.bf16.msra.mxu0 %v4315
    %4383 = vmatprep.subr.bf16.mxu0 %v4314
    %4384 = vmatpush1.bf16.msra.mxu0 %v4313
    %4385 = vmatprep.subr.bf16.mxu0 %v4312
    %4386 = vmatpush1.bf16.msra.mxu0 %v4311
    %4387 = vmatprep.subr.bf16.mxu0 %v4310
    %4388 = vmatpush1.bf16.msra.mxu0 %v4309
    %4389 = vmatprep.subr.bf16.mxu0 %v4340
    %4390 = vmatpush2.bf16.msra.mxu0 %v4339
    %4391 = vmatprep.subr.bf16.mxu0 %v4338
    %4392 = vmatpush2.bf16.msra.mxu0 %v4337
    %4393 = vmatprep.subr.bf16.mxu0 %v4336
    %4394 = vmatpush2.bf16.msra.mxu0 %v4335
    %4395 = vmatprep.subr.bf16.mxu0 %v4334
    %4396 = vmatpush2.bf16.msra.mxu0 %v4333
    %4397 = vmatprep.subr.bf16.mxu0 %v4332
    %4398 = vmatpush2.bf16.msra.mxu0 %v4331
    %4399 = vmatprep.subr.bf16.mxu0 %v4330
    %4400 = vmatpush2.bf16.msra.mxu0 %v4329
    %4401 = vmatprep.subr.bf16.mxu0 %v4328
    %4402 = vmatpush2.bf16.msra.mxu0 %v4327
    %4403 = vmatprep.subr.bf16.mxu0 %v4326
    %4404 = vmatpush2.bf16.msra.mxu0 %v4325
    %4405 = vmatprep.mubr.bf16.mxu0 %v4199
    %4406 = vmatmul.mubr.bf16.gmra.mxu0 %v4198
    %v4407 = vpop.f32.mrf.mxu0
    %v4408 = vadd.f32 %v4206, %v4407
    %v4409 = vpop.f32.mrf.mxu0
    %v4410 = vadd.f32 %v4210, %v4409
    %v4411 = vpop.f32.mrf.mxu0
    %v4412 = vpop.f32.mrf.mxu0
    %4413 = vdwg.mxu0
    %s4414 = scalar_lea.vmem [#allocation17], 4
    %v4415 = vld [vmem:[%s4414] ss:$8 sm:$0x3]
    %v4417 = vlaneseq
    %v4418 = vshrl.u32 %v4417, 7
    %v4419 = vsub.s32 0, %v4418
    %v4420 = vrot.slane %v4415, %v4419
    %v4421 = vlaneseq
    %v4422 = vshrl.u32 %v4421, 7
    %v4423 = vsub.s32 1, %v4422
    %v4424 = vrot.slane %v4415, %v4423
    %v4427 = vadd.f32 %v3826, %v4420
    %v4428 = vadd.f32 %v3828, %v4424
    %v4429 = vmul.f32 %v4427, 0.5
    %v4430 = vmul.f32 %v4428, 0.5
    %v4431 = vtanh.pop %v4429
    %v4432 = vtanh.pop %v4430
    %v4433 = vadd.f32 %v4431, 1.0
    %v4434 = vadd.f32 %v4432, 1.0
    %v4435 = vmul.f32 %v4433, 0.5
    %v4436 = vmul.f32 %v4434, 0.5
    %v4437 = vmul.f32 %v4427, %v4435
    %v4438 = vmul.f32 %v4428, %v4436
    %s4439 = scalar_lea.vmem [#allocation13], 1024
    %v4440 = vld [vmem:[%s4439] sm:$0xff]
    %v4441 = vld [vmem:[%s4439 + $0x8] sm:$0xff]
    %v4442 = vld [vmem:[%s4439 + $0x10] sm:$0xff]
    %v4443 = vld [vmem:[%s4439 + $0x18] sm:$0xff]
    %v4444 = vld [vmem:[%s4439 + $0x20] sm:$0xff]
    %v4445 = vld [vmem:[%s4439 + $0x28] sm:$0xff]
    %v4446 = vld [vmem:[%s4439 + $0x30] sm:$0xff]
    %v4447 = vld [vmem:[%s4439 + $0x38] sm:$0xff]
    %v4448 = vld [vmem:[%s4439 + $0x40] sm:$0xff]
    %v4449 = vld [vmem:[%s4439 + $0x48] sm:$0xff]
    %v4450 = vld [vmem:[%s4439 + $0x50] sm:$0xff]
    %v4451 = vld [vmem:[%s4439 + $0x58] sm:$0xff]
    %v4452 = vld [vmem:[%s4439 + $0x60] sm:$0xff]
    %v4453 = vld [vmem:[%s4439 + $0x68] sm:$0xff]
    %v4454 = vld [vmem:[%s4439 + $0x70] sm:$0xff]
    %v4455 = vld [vmem:[%s4439 + $0x78] sm:$0xff]
    %v4456 = vld [vmem:[%s4439 + $0x80] sm:$0xff]
    %v4457 = vld [vmem:[%s4439 + $0x88] sm:$0xff]
    %v4458 = vld [vmem:[%s4439 + $0x90] sm:$0xff]
    %v4459 = vld [vmem:[%s4439 + $0x98] sm:$0xff]
    %v4460 = vld [vmem:[%s4439 + $0xa0] sm:$0xff]
    %v4461 = vld [vmem:[%s4439 + $0xa8] sm:$0xff]
    %v4462 = vld [vmem:[%s4439 + $0xb0] sm:$0xff]
    %v4463 = vld [vmem:[%s4439 + $0xb8] sm:$0xff]
    %v4464 = vld [vmem:[%s4439 + $0xc0] sm:$0xff]
    %v4465 = vld [vmem:[%s4439 + $0xc8] sm:$0xff]
    %v4466 = vld [vmem:[%s4439 + $0xd0] sm:$0xff]
    %v4467 = vld [vmem:[%s4439 + $0xd8] sm:$0xff]
    %v4468 = vld [vmem:[%s4439 + $0xe0] sm:$0xff]
    %v4469 = vld [vmem:[%s4439 + $0xe8] sm:$0xff]
    %v4470 = vld [vmem:[%s4439 + $0xf0] sm:$0xff]
    %v4471 = vld [vmem:[%s4439 + $0xf8] sm:$0xff]
    %v4472 = vpack.c.bf16 %v4437, %v4437
    %v4473 = vpack.c.bf16 %v4438, %v4438
    %s4474 = scalar_lea.vmem [#allocation17], 5
    %v4475 = vld [vmem:[%s4474] ss:$8 sm:$0x3]
    %v4477 = vlaneseq
    %v4478 = vshrl.u32 %v4477, 7
    %v4479 = vsub.s32 0, %v4478
    %v4480 = vrot.slane %v4475, %v4479
    %v4481 = vlaneseq
    %v4482 = vshrl.u32 %v4481, 7
    %v4483 = vsub.s32 1, %v4482
    %v4484 = vrot.slane %v4475, %v4483
    %v4519 = vunpack.c.l.b16 %v4440
    %v4520 = vunpack.c.h.b16 %v4440
    %v4521 = vunpack.c.l.b16 %v4441
    %v4522 = vunpack.c.h.b16 %v4441
    %v4523 = vunpack.c.l.b16 %v4442
    %v4524 = vunpack.c.h.b16 %v4442
    %v4525 = vunpack.c.l.b16 %v4443
    %v4526 = vunpack.c.h.b16 %v4443
    %v4527 = vunpack.c.l.b16 %v4444
    %v4528 = vunpack.c.h.b16 %v4444
    %v4529 = vunpack.c.l.b16 %v4445
    %v4530 = vunpack.c.h.b16 %v4445
    %v4531 = vunpack.c.l.b16 %v4446
    %v4532 = vunpack.c.h.b16 %v4446
    %v4533 = vunpack.c.l.b16 %v4447
    %v4534 = vunpack.c.h.b16 %v4447
    %v4535 = vunpack.c.l.b16 %v4448
    %v4536 = vunpack.c.h.b16 %v4448
    %v4537 = vunpack.c.l.b16 %v4449
    %v4538 = vunpack.c.h.b16 %v4449
    %v4539 = vunpack.c.l.b16 %v4450
    %v4540 = vunpack.c.h.b16 %v4450
    %v4541 = vunpack.c.l.b16 %v4451
    %v4542 = vunpack.c.h.b16 %v4451
    %v4543 = vunpack.c.l.b16 %v4452
    %v4544 = vunpack.c.h.b16 %v4452
    %v4545 = vunpack.c.l.b16 %v4453
    %v4546 = vunpack.c.h.b16 %v4453
    %v4547 = vunpack.c.l.b16 %v4454
    %v4548 = vunpack.c.h.b16 %v4454
    %v4549 = vunpack.c.l.b16 %v4455
    %v4550 = vunpack.c.h.b16 %v4455
    %v4551 = vunpack.c.l.b16 %v4456
    %v4552 = vunpack.c.h.b16 %v4456
    %v4553 = vunpack.c.l.b16 %v4457
    %v4554 = vunpack.c.h.b16 %v4457
    %v4555 = vunpack.c.l.b16 %v4458
    %v4556 = vunpack.c.h.b16 %v4458
    %v4557 = vunpack.c.l.b16 %v4459
    %v4558 = vunpack.c.h.b16 %v4459
    %v4559 = vunpack.c.l.b16 %v4460
    %v4560 = vunpack.c.h.b16 %v4460
    %v4561 = vunpack.c.l.b16 %v4461
    %v4562 = vunpack.c.h.b16 %v4461
    %v4563 = vunpack.c.l.b16 %v4462
    %v4564 = vunpack.c.h.b16 %v4462
    %v4565 = vunpack.c.l.b16 %v4463
    %v4566 = vunpack.c.h.b16 %v4463
    %v4567 = vunpack.c.l.b16 %v4464
    %v4568 = vunpack.c.h.b16 %v4464
    %v4569 = vunpack.c.l.b16 %v4465
    %v4570 = vunpack.c.h.b16 %v4465
    %v4571 = vunpack.c.l.b16 %v4466
    %v4572 = vunpack.c.h.b16 %v4466
    %v4573 = vunpack.c.l.b16 %v4467
    %v4574 = vunpack.c.h.b16 %v4467
    %v4575 = vunpack.c.l.b16 %v4468
    %v4576 = vunpack.c.h.b16 %v4468
    %v4577 = vunpack.c.l.b16 %v4469
    %v4578 = vunpack.c.h.b16 %v4469
    %v4579 = vunpack.c.l.b16 %v4470
    %v4580 = vunpack.c.h.b16 %v4470
    %v4581 = vunpack.c.l.b16 %v4471
    %v4582 = vunpack.c.h.b16 %v4471
    %v4583 = vpack.c.b16 %v4521, %v4519
    %v4584 = vpack.c.b16 %v4522, %v4520
    %v4585 = vpack.c.b16 %v4525, %v4523
    %v4586 = vpack.c.b16 %v4526, %v4524
    %v4587 = vpack.c.b16 %v4529, %v4527
    %v4588 = vpack.c.b16 %v4530, %v4528
    %v4589 = vpack.c.b16 %v4533, %v4531
    %v4590 = vpack.c.b16 %v4534, %v4532
    %v4591 = vpack.c.b16 %v4537, %v4535
    %v4592 = vpack.c.b16 %v4538, %v4536
    %v4593 = vpack.c.b16 %v4541, %v4539
    %v4594 = vpack.c.b16 %v4542, %v4540
    %v4595 = vpack.c.b16 %v4545, %v4543
    %v4596 = vpack.c.b16 %v4546, %v4544
    %v4597 = vpack.c.b16 %v4549, %v4547
    %v4598 = vpack.c.b16 %v4550, %v4548
    %v4599 = vpack.c.b16 %v4553, %v4551
    %v4600 = vpack.c.b16 %v4554, %v4552
    %v4601 = vpack.c.b16 %v4557, %v4555
    %v4602 = vpack.c.b16 %v4558, %v4556
    %v4603 = vpack.c.b16 %v4561, %v4559
    %v4604 = vpack.c.b16 %v4562, %v4560
    %v4605 = vpack.c.b16 %v4565, %v4563
    %v4606 = vpack.c.b16 %v4566, %v4564
    %v4607 = vpack.c.b16 %v4569, %v4567
    %v4608 = vpack.c.b16 %v4570, %v4568
    %v4609 = vpack.c.b16 %v4573, %v4571
    %v4610 = vpack.c.b16 %v4574, %v4572
    %v4611 = vpack.c.b16 %v4577, %v4575
    %v4612 = vpack.c.b16 %v4578, %v4576
    %v4613 = vpack.c.b16 %v4581, %v4579
    %v4614 = vpack.c.b16 %v4582, %v4580
    %4647 = vmatprep.subr.bf16.mxu0 %v4598
    %4648 = vmatpush1.bf16.msra.mxu0 %v4597
    %4649 = vmatprep.subr.bf16.mxu0 %v4596
    %4650 = vmatpush1.bf16.msra.mxu0 %v4595
    %4651 = vmatprep.subr.bf16.mxu0 %v4594
    %4652 = vmatpush1.bf16.msra.mxu0 %v4593
    %4653 = vmatprep.subr.bf16.mxu0 %v4592
    %4654 = vmatpush1.bf16.msra.mxu0 %v4591
    %4655 = vmatprep.subr.bf16.mxu0 %v4590
    %4656 = vmatpush1.bf16.msra.mxu0 %v4589
    %4657 = vmatprep.subr.bf16.mxu0 %v4588
    %4658 = vmatpush1.bf16.msra.mxu0 %v4587
    %4659 = vmatprep.subr.bf16.mxu0 %v4586
    %4660 = vmatpush1.bf16.msra.mxu0 %v4585
    %4661 = vmatprep.subr.bf16.mxu0 %v4584
    %4662 = vmatpush1.bf16.msra.mxu0 %v4583
    %4663 = vmatprep.subr.bf16.mxu0 %v4614
    %4664 = vmatpush2.bf16.msra.mxu0 %v4613
    %4665 = vmatprep.subr.bf16.mxu0 %v4612
    %4666 = vmatpush2.bf16.msra.mxu0 %v4611
    %4667 = vmatprep.subr.bf16.mxu0 %v4610
    %4668 = vmatpush2.bf16.msra.mxu0 %v4609
    %4669 = vmatprep.subr.bf16.mxu0 %v4608
    %4670 = vmatpush2.bf16.msra.mxu0 %v4607
    %4671 = vmatprep.subr.bf16.mxu0 %v4606
    %4672 = vmatpush2.bf16.msra.mxu0 %v4605
    %4673 = vmatprep.subr.bf16.mxu0 %v4604
    %4674 = vmatpush2.bf16.msra.mxu0 %v4603
    %4675 = vmatprep.subr.bf16.mxu0 %v4602
    %4676 = vmatpush2.bf16.msra.mxu0 %v4601
    %4677 = vmatprep.subr.bf16.mxu0 %v4600
    %4678 = vmatpush2.bf16.msra.mxu0 %v4599
    %4679 = vmatprep.mubr.bf16.mxu0 %v4473
    %4680 = vmatmul.mubr.bf16.gmra.mxu0 %v4472
    %v4681 = vpop.f32.mrf.mxu0
    %v4682 = vadd.f32 %v4480, %v4681
    %v4683 = vpop.f32.mrf.mxu0
    %v4684 = vadd.f32 %v4484, %v4683
    %v4685 = vpop.f32.mrf.mxu0
    %v4686 = vpop.f32.mrf.mxu0
    %4687 = vdwg.mxu0
    %v4688 = vmul.f32 %v4682, 0.5
    %v4689 = vmul.f32 %v4684, 0.5
    %v4690 = vtanh.pop %v4688
    %v4691 = vtanh.pop %v4689
    %v4692 = vadd.f32 %v4690, 1.0
    %v4693 = vadd.f32 %v4691, 1.0
    %v4694 = vmul.f32 %v4692, 0.5
    %v4695 = vmul.f32 %v4693, 0.5
    %v4696 = vmul.f32 %v4682, %v4694
    %v4697 = vmul.f32 %v4684, %v4695
    %s4698 = scalar_lea.vmem [#allocation13], 1280
    %v4699 = vld [vmem:[%s4698] sm:$0xff]
    %v4700 = vld [vmem:[%s4698 + $0x8] sm:$0xff]
    %v4701 = vld [vmem:[%s4698 + $0x10] sm:$0xff]
    %v4702 = vld [vmem:[%s4698 + $0x18] sm:$0xff]
    %v4703 = vld [vmem:[%s4698 + $0x20] sm:$0xff]
    %v4704 = vld [vmem:[%s4698 + $0x28] sm:$0xff]
    %v4705 = vld [vmem:[%s4698 + $0x30] sm:$0xff]
    %v4706 = vld [vmem:[%s4698 + $0x38] sm:$0xff]
    %v4707 = vld [vmem:[%s4698 + $0x40] sm:$0xff]
    %v4708 = vld [vmem:[%s4698 + $0x48] sm:$0xff]
    %v4709 = vld [vmem:[%s4698 + $0x50] sm:$0xff]
    %v4710 = vld [vmem:[%s4698 + $0x58] sm:$0xff]
    %v4711 = vld [vmem:[%s4698 + $0x60] sm:$0xff]
    %v4712 = vld [vmem:[%s4698 + $0x68] sm:$0xff]
    %v4713 = vld [vmem:[%s4698 + $0x70] sm:$0xff]
    %v4714 = vld [vmem:[%s4698 + $0x78] sm:$0xff]
    %v4715 = vld [vmem:[%s4698 + $0x80] sm:$0xff]
    %v4716 = vld [vmem:[%s4698 + $0x88] sm:$0xff]
    %v4717 = vld [vmem:[%s4698 + $0x90] sm:$0xff]
    %v4718 = vld [vmem:[%s4698 + $0x98] sm:$0xff]
    %v4719 = vld [vmem:[%s4698 + $0xa0] sm:$0xff]
    %v4720 = vld [vmem:[%s4698 + $0xa8] sm:$0xff]
    %v4721 = vld [vmem:[%s4698 + $0xb0] sm:$0xff]
    %v4722 = vld [vmem:[%s4698 + $0xb8] sm:$0xff]
    %v4723 = vld [vmem:[%s4698 + $0xc0] sm:$0xff]
    %v4724 = vld [vmem:[%s4698 + $0xc8] sm:$0xff]
    %v4725 = vld [vmem:[%s4698 + $0xd0] sm:$0xff]
    %v4726 = vld [vmem:[%s4698 + $0xd8] sm:$0xff]
    %v4727 = vld [vmem:[%s4698 + $0xe0] sm:$0xff]
    %v4728 = vld [vmem:[%s4698 + $0xe8] sm:$0xff]
    %v4729 = vld [vmem:[%s4698 + $0xf0] sm:$0xff]
    %v4730 = vld [vmem:[%s4698 + $0xf8] sm:$0xff]
    %v4731 = vpack.c.bf16 %v4696, %v4696
    %v4732 = vpack.c.bf16 %v4697, %v4697
    %s4733 = scalar_lea.vmem [#allocation17], 6
    %v4734 = vld [vmem:[%s4733] ss:$8 sm:$0x3]
    %v4736 = vlaneseq
    %v4737 = vshrl.u32 %v4736, 7
    %v4738 = vsub.s32 0, %v4737
    %v4739 = vrot.slane %v4734, %v4738
    %v4740 = vlaneseq
    %v4741 = vshrl.u32 %v4740, 7
    %v4742 = vsub.s32 1, %v4741
    %v4743 = vrot.slane %v4734, %v4742
    %v4778 = vunpack.c.l.b16 %v4699
    %v4779 = vunpack.c.h.b16 %v4699
    %v4780 = vunpack.c.l.b16 %v4700
    %v4781 = vunpack.c.h.b16 %v4700
    %v4782 = vunpack.c.l.b16 %v4701
    %v4783 = vunpack.c.h.b16 %v4701
    %v4784 = vunpack.c.l.b16 %v4702
    %v4785 = vunpack.c.h.b16 %v4702
    %v4786 = vunpack.c.l.b16 %v4703
    %v4787 = vunpack.c.h.b16 %v4703
    %v4788 = vunpack.c.l.b16 %v4704
    %v4789 = vunpack.c.h.b16 %v4704
    %v4790 = vunpack.c.l.b16 %v4705
    %v4791 = vunpack.c.h.b16 %v4705
    %v4792 = vunpack.c.l.b16 %v4706
    %v4793 = vunpack.c.h.b16 %v4706
    %v4794 = vunpack.c.l.b16 %v4707
    %v4795 = vunpack.c.h.b16 %v4707
    %v4796 = vunpack.c.l.b16 %v4708
    %v4797 = vunpack.c.h.b16 %v4708
    %v4798 = vunpack.c.l.b16 %v4709
    %v4799 = vunpack.c.h.b16 %v4709
    %v4800 = vunpack.c.l.b16 %v4710
    %v4801 = vunpack.c.h.b16 %v4710
    %v4802 = vunpack.c.l.b16 %v4711
    %v4803 = vunpack.c.h.b16 %v4711
    %v4804 = vunpack.c.l.b16 %v4712
    %v4805 = vunpack.c.h.b16 %v4712
    %v4806 = vunpack.c.l.b16 %v4713
    %v4807 = vunpack.c.h.b16 %v4713
    %v4808 = vunpack.c.l.b16 %v4714
    %v4809 = vunpack.c.h.b16 %v4714
    %v4810 = vunpack.c.l.b16 %v4715
    %v4811 = vunpack.c.h.b16 %v4715
    %v4812 = vunpack.c.l.b16 %v4716
    %v4813 = vunpack.c.h.b16 %v4716
    %v4814 = vunpack.c.l.b16 %v4717
    %v4815 = vunpack.c.h.b16 %v4717
    %v4816 = vunpack.c.l.b16 %v4718
    %v4817 = vunpack.c.h.b16 %v4718
    %v4818 = vunpack.c.l.b16 %v4719
    %v4819 = vunpack.c.h.b16 %v4719
    %v4820 = vunpack.c.l.b16 %v4720
    %v4821 = vunpack.c.h.b16 %v4720
    %v4822 = vunpack.c.l.b16 %v4721
    %v4823 = vunpack.c.h.b16 %v4721
    %v4824 = vunpack.c.l.b16 %v4722
    %v4825 = vunpack.c.h.b16 %v4722
    %v4826 = vunpack.c.l.b16 %v4723
    %v4827 = vunpack.c.h.b16 %v4723
    %v4828 = vunpack.c.l.b16 %v4724
    %v4829 = vunpack.c.h.b16 %v4724
    %v4830 = vunpack.c.l.b16 %v4725
    %v4831 = vunpack.c.h.b16 %v4725
    %v4832 = vunpack.c.l.b16 %v4726
    %v4833 = vunpack.c.h.b16 %v4726
    %v4834 = vunpack.c.l.b16 %v4727
    %v4835 = vunpack.c.h.b16 %v4727
    %v4836 = vunpack.c.l.b16 %v4728
    %v4837 = vunpack.c.h.b16 %v4728
    %v4838 = vunpack.c.l.b16 %v4729
    %v4839 = vunpack.c.h.b16 %v4729
    %v4840 = vunpack.c.l.b16 %v4730
    %v4841 = vunpack.c.h.b16 %v4730
    %v4842 = vpack.c.b16 %v4780, %v4778
    %v4843 = vpack.c.b16 %v4781, %v4779
    %v4844 = vpack.c.b16 %v4784, %v4782
    %v4845 = vpack.c.b16 %v4785, %v4783
    %v4846 = vpack.c.b16 %v4788, %v4786
    %v4847 = vpack.c.b16 %v4789, %v4787
    %v4848 = vpack.c.b16 %v4792, %v4790
    %v4849 = vpack.c.b16 %v4793, %v4791
    %v4850 = vpack.c.b16 %v4796, %v4794
    %v4851 = vpack.c.b16 %v4797, %v4795
    %v4852 = vpack.c.b16 %v4800, %v4798
    %v4853 = vpack.c.b16 %v4801, %v4799
    %v4854 = vpack.c.b16 %v4804, %v4802
    %v4855 = vpack.c.b16 %v4805, %v4803
    %v4856 = vpack.c.b16 %v4808, %v4806
    %v4857 = vpack.c.b16 %v4809, %v4807
    %v4858 = vpack.c.b16 %v4812, %v4810
    %v4859 = vpack.c.b16 %v4813, %v4811
    %v4860 = vpack.c.b16 %v4816, %v4814
    %v4861 = vpack.c.b16 %v4817, %v4815
    %v4862 = vpack.c.b16 %v4820, %v4818
    %v4863 = vpack.c.b16 %v4821, %v4819
    %v4864 = vpack.c.b16 %v4824, %v4822
    %v4865 = vpack.c.b16 %v4825, %v4823
    %v4866 = vpack.c.b16 %v4828, %v4826
    %v4867 = vpack.c.b16 %v4829, %v4827
    %v4868 = vpack.c.b16 %v4832, %v4830
    %v4869 = vpack.c.b16 %v4833, %v4831
    %v4870 = vpack.c.b16 %v4836, %v4834
    %v4871 = vpack.c.b16 %v4837, %v4835
    %v4872 = vpack.c.b16 %v4840, %v4838
    %v4873 = vpack.c.b16 %v4841, %v4839
    %4906 = vmatprep.subr.bf16.mxu0 %v4857
    %4907 = vmatpush1.bf16.msra.mxu0 %v4856
    %4908 = vmatprep.subr.bf16.mxu0 %v4855
    %4909 = vmatpush1.bf16.msra.mxu0 %v4854
    %4910 = vmatprep.subr.bf16.mxu0 %v4853
    %4911 = vmatpush1.bf16.msra.mxu0 %v4852
    %4912 = vmatprep.subr.bf16.mxu0 %v4851
    %4913 = vmatpush1.bf16.msra.mxu0 %v4850
    %4914 = vmatprep.subr.bf16.mxu0 %v4849
    %4915 = vmatpush1.bf16.msra.mxu0 %v4848
    %4916 = vmatprep.subr.bf16.mxu0 %v4847
    %4917 = vmatpush1.bf16.msra.mxu0 %v4846
    %4918 = vmatprep.subr.bf16.mxu0 %v4845
    %4919 = vmatpush1.bf16.msra.mxu0 %v4844
    %4920 = vmatprep.subr.bf16.mxu0 %v4843
    %4921 = vmatpush1.bf16.msra.mxu0 %v4842
    %4922 = vmatprep.subr.bf16.mxu0 %v4873
    %4923 = vmatpush2.bf16.msra.mxu0 %v4872
    %4924 = vmatprep.subr.bf16.mxu0 %v4871
    %4925 = vmatpush2.bf16.msra.mxu0 %v4870
    %4926 = vmatprep.subr.bf16.mxu0 %v4869
    %4927 = vmatpush2.bf16.msra.mxu0 %v4868
    %4928 = vmatprep.subr.bf16.mxu0 %v4867
    %4929 = vmatpush2.bf16.msra.mxu0 %v4866
    %4930 = vmatprep.subr.bf16.mxu0 %v4865
    %4931 = vmatpush2.bf16.msra.mxu0 %v4864
    %4932 = vmatprep.subr.bf16.mxu0 %v4863
    %4933 = vmatpush2.bf16.msra.mxu0 %v4862
    %4934 = vmatprep.subr.bf16.mxu0 %v4861
    %4935 = vmatpush2.bf16.msra.mxu0 %v4860
    %4936 = vmatprep.subr.bf16.mxu0 %v4859
    %4937 = vmatpush2.bf16.msra.mxu0 %v4858
    %4938 = vmatprep.mubr.bf16.mxu0 %v4732
    %4939 = vmatmul.mubr.bf16.gmra.mxu0 %v4731
    %v4940 = vpop.f32.mrf.mxu0
    %v4941 = vadd.f32 %v4739, %v4940
    %v4942 = vpop.f32.mrf.mxu0
    %v4943 = vadd.f32 %v4743, %v4942
    %v4944 = vpop.f32.mrf.mxu0
    %v4945 = vpop.f32.mrf.mxu0
    %4946 = vdwg.mxu0
    %v4947 = vmul.f32 %v4941, 0.5
    %v4948 = vmul.f32 %v4943, 0.5
    %v4949 = vtanh.pop %v4947
    %v4950 = vtanh.pop %v4948
    %v4951 = vadd.f32 %v4949, 1.0
    %v4952 = vadd.f32 %v4950, 1.0
    %v4953 = vmul.f32 %v4951, 0.5
    %v4954 = vmul.f32 %v4952, 0.5
    %v4955 = vmul.f32 %v4941, %v4953
    %v4956 = vmul.f32 %v4943, %v4954
    %s4957 = scalar_lea.vmem [#allocation13], 1536
    %v4958 = vld [vmem:[%s4957] sm:$0xff]
    %v4959 = vld [vmem:[%s4957 + $0x8] sm:$0xff]
    %v4960 = vld [vmem:[%s4957 + $0x10] sm:$0xff]
    %v4961 = vld [vmem:[%s4957 + $0x18] sm:$0xff]
    %v4962 = vld [vmem:[%s4957 + $0x20] sm:$0xff]
    %v4963 = vld [vmem:[%s4957 + $0x28] sm:$0xff]
    %v4964 = vld [vmem:[%s4957 + $0x30] sm:$0xff]
    %v4965 = vld [vmem:[%s4957 + $0x38] sm:$0xff]
    %v4966 = vld [vmem:[%s4957 + $0x40] sm:$0xff]
    %v4967 = vld [vmem:[%s4957 + $0x48] sm:$0xff]
    %v4968 = vld [vmem:[%s4957 + $0x50] sm:$0xff]
    %v4969 = vld [vmem:[%s4957 + $0x58] sm:$0xff]
    %v4970 = vld [vmem:[%s4957 + $0x60] sm:$0xff]
    %v4971 = vld [vmem:[%s4957 + $0x68] sm:$0xff]
    %v4972 = vld [vmem:[%s4957 + $0x70] sm:$0xff]
    %v4973 = vld [vmem:[%s4957 + $0x78] sm:$0xff]
    %v4974 = vld [vmem:[%s4957 + $0x80] sm:$0xff]
    %v4975 = vld [vmem:[%s4957 + $0x88] sm:$0xff]
    %v4976 = vld [vmem:[%s4957 + $0x90] sm:$0xff]
    %v4977 = vld [vmem:[%s4957 + $0x98] sm:$0xff]
    %v4978 = vld [vmem:[%s4957 + $0xa0] sm:$0xff]
    %v4979 = vld [vmem:[%s4957 + $0xa8] sm:$0xff]
    %v4980 = vld [vmem:[%s4957 + $0xb0] sm:$0xff]
    %v4981 = vld [vmem:[%s4957 + $0xb8] sm:$0xff]
    %v4982 = vld [vmem:[%s4957 + $0xc0] sm:$0xff]
    %v4983 = vld [vmem:[%s4957 + $0xc8] sm:$0xff]
    %v4984 = vld [vmem:[%s4957 + $0xd0] sm:$0xff]
    %v4985 = vld [vmem:[%s4957 + $0xd8] sm:$0xff]
    %v4986 = vld [vmem:[%s4957 + $0xe0] sm:$0xff]
    %v4987 = vld [vmem:[%s4957 + $0xe8] sm:$0xff]
    %v4988 = vld [vmem:[%s4957 + $0xf0] sm:$0xff]
    %v4989 = vld [vmem:[%s4957 + $0xf8] sm:$0xff]
    %v4990 = vpack.c.bf16 %v4955, %v4955
    %v4991 = vpack.c.bf16 %v4956, %v4956
    %s4992 = scalar_lea.vmem [#allocation17], 7
    %v4993 = vld [vmem:[%s4992] ss:$8 sm:$0x3]
    %v4995 = vlaneseq
    %v4996 = vshrl.u32 %v4995, 7
    %v4997 = vsub.s32 0, %v4996
    %v4998 = vrot.slane %v4993, %v4997
    %v4999 = vlaneseq
    %v5000 = vshrl.u32 %v4999, 7
    %v5001 = vsub.s32 1, %v5000
    %v5002 = vrot.slane %v4993, %v5001
    %v5037 = vunpack.c.l.b16 %v4958
    %v5038 = vunpack.c.h.b16 %v4958
    %v5039 = vunpack.c.l.b16 %v4959
    %v5040 = vunpack.c.h.b16 %v4959
    %v5041 = vunpack.c.l.b16 %v4960
    %v5042 = vunpack.c.h.b16 %v4960
    %v5043 = vunpack.c.l.b16 %v4961
    %v5044 = vunpack.c.h.b16 %v4961
    %v5045 = vunpack.c.l.b16 %v4962
    %v5046 = vunpack.c.h.b16 %v4962
    %v5047 = vunpack.c.l.b16 %v4963
    %v5048 = vunpack.c.h.b16 %v4963
    %v5049 = vunpack.c.l.b16 %v4964
    %v5050 = vunpack.c.h.b16 %v4964
    %v5051 = vunpack.c.l.b16 %v4965
    %v5052 = vunpack.c.h.b16 %v4965
    %v5053 = vunpack.c.l.b16 %v4966
    %v5054 = vunpack.c.h.b16 %v4966
    %v5055 = vunpack.c.l.b16 %v4967
    %v5056 = vunpack.c.h.b16 %v4967
    %v5057 = vunpack.c.l.b16 %v4968
    %v5058 = vunpack.c.h.b16 %v4968
    %v5059 = vunpack.c.l.b16 %v4969
    %v5060 = vunpack.c.h.b16 %v4969
    %v5061 = vunpack.c.l.b16 %v4970
    %v5062 = vunpack.c.h.b16 %v4970
    %v5063 = vunpack.c.l.b16 %v4971
    %v5064 = vunpack.c.h.b16 %v4971
    %v5065 = vunpack.c.l.b16 %v4972
    %v5066 = vunpack.c.h.b16 %v4972
    %v5067 = vunpack.c.l.b16 %v4973
    %v5068 = vunpack.c.h.b16 %v4973
    %v5069 = vunpack.c.l.b16 %v4974
    %v5070 = vunpack.c.h.b16 %v4974
    %v5071 = vunpack.c.l.b16 %v4975
    %v5072 = vunpack.c.h.b16 %v4975
    %v5073 = vunpack.c.l.b16 %v4976
    %v5074 = vunpack.c.h.b16 %v4976
    %v5075 = vunpack.c.l.b16 %v4977
    %v5076 = vunpack.c.h.b16 %v4977
    %v5077 = vunpack.c.l.b16 %v4978
    %v5078 = vunpack.c.h.b16 %v4978
    %v5079 = vunpack.c.l.b16 %v4979
    %v5080 = vunpack.c.h.b16 %v4979
    %v5081 = vunpack.c.l.b16 %v4980
    %v5082 = vunpack.c.h.b16 %v4980
    %v5083 = vunpack.c.l.b16 %v4981
    %v5084 = vunpack.c.h.b16 %v4981
    %v5085 = vunpack.c.l.b16 %v4982
    %v5086 = vunpack.c.h.b16 %v4982
    %v5087 = vunpack.c.l.b16 %v4983
    %v5088 = vunpack.c.h.b16 %v4983
    %v5089 = vunpack.c.l.b16 %v4984
    %v5090 = vunpack.c.h.b16 %v4984
    %v5091 = vunpack.c.l.b16 %v4985
    %v5092 = vunpack.c.h.b16 %v4985
    %v5093 = vunpack.c.l.b16 %v4986
    %v5094 = vunpack.c.h.b16 %v4986
    %v5095 = vunpack.c.l.b16 %v4987
    %v5096 = vunpack.c.h.b16 %v4987
    %v5097 = vunpack.c.l.b16 %v4988
    %v5098 = vunpack.c.h.b16 %v4988
    %v5099 = vunpack.c.l.b16 %v4989
    %v5100 = vunpack.c.h.b16 %v4989
    %v5101 = vpack.c.b16 %v5039, %v5037
    %v5102 = vpack.c.b16 %v5040, %v5038
    %v5103 = vpack.c.b16 %v5043, %v5041
    %v5104 = vpack.c.b16 %v5044, %v5042
    %v5105 = vpack.c.b16 %v5047, %v5045
    %v5106 = vpack.c.b16 %v5048, %v5046
    %v5107 = vpack.c.b16 %v5051, %v5049
    %v5108 = vpack.c.b16 %v5052, %v5050
    %v5109 = vpack.c.b16 %v5055, %v5053
    %v5110 = vpack.c.b16 %v5056, %v5054
    %v5111 = vpack.c.b16 %v5059, %v5057
    %v5112 = vpack.c.b16 %v5060, %v5058
    %v5113 = vpack.c.b16 %v5063, %v5061
    %v5114 = vpack.c.b16 %v5064, %v5062
    %v5115 = vpack.c.b16 %v5067, %v5065
    %v5116 = vpack.c.b16 %v5068, %v5066
    %v5117 = vpack.c.b16 %v5071, %v5069
    %v5118 = vpack.c.b16 %v5072, %v5070
    %v5119 = vpack.c.b16 %v5075, %v5073
    %v5120 = vpack.c.b16 %v5076, %v5074
    %v5121 = vpack.c.b16 %v5079, %v5077
    %v5122 = vpack.c.b16 %v5080, %v5078
    %v5123 = vpack.c.b16 %v5083, %v5081
    %v5124 = vpack.c.b16 %v5084, %v5082
    %v5125 = vpack.c.b16 %v5087, %v5085
    %v5126 = vpack.c.b16 %v5088, %v5086
    %v5127 = vpack.c.b16 %v5091, %v5089
    %v5128 = vpack.c.b16 %v5092, %v5090
    %v5129 = vpack.c.b16 %v5095, %v5093
    %v5130 = vpack.c.b16 %v5096, %v5094
    %v5131 = vpack.c.b16 %v5099, %v5097
    %v5132 = vpack.c.b16 %v5100, %v5098
    %5165 = vmatprep.subr.bf16.mxu0 %v5116
    %5166 = vmatpush1.bf16.msra.mxu0 %v5115
    %5167 = vmatprep.subr.bf16.mxu0 %v5114
    %5168 = vmatpush1.bf16.msra.mxu0 %v5113
    %5169 = vmatprep.subr.bf16.mxu0 %v5112
    %5170 = vmatpush1.bf16.msra.mxu0 %v5111
    %5171 = vmatprep.subr.bf16.mxu0 %v5110
    %5172 = vmatpush1.bf16.msra.mxu0 %v5109
    %5173 = vmatprep.subr.bf16.mxu0 %v5108
    %5174 = vmatpush1.bf16.msra.mxu0 %v5107
    %5175 = vmatprep.subr.bf16.mxu0 %v5106
    %5176 = vmatpush1.bf16.msra.mxu0 %v5105
    %5177 = vmatprep.subr.bf16.mxu0 %v5104
    %5178 = vmatpush1.bf16.msra.mxu0 %v5103
    %5179 = vmatprep.subr.bf16.mxu0 %v5102
    %5180 = vmatpush1.bf16.msra.mxu0 %v5101
    %5181 = vmatprep.subr.bf16.mxu0 %v5132
    %5182 = vmatpush2.bf16.msra.mxu0 %v5131
    %5183 = vmatprep.subr.bf16.mxu0 %v5130
    %5184 = vmatpush2.bf16.msra.mxu0 %v5129
    %5185 = vmatprep.subr.bf16.mxu0 %v5128
    %5186 = vmatpush2.bf16.msra.mxu0 %v5127
    %5187 = vmatprep.subr.bf16.mxu0 %v5126
    %5188 = vmatpush2.bf16.msra.mxu0 %v5125
    %5189 = vmatprep.subr.bf16.mxu0 %v5124
    %5190 = vmatpush2.bf16.msra.mxu0 %v5123
    %5191 = vmatprep.subr.bf16.mxu0 %v5122
    %5192 = vmatpush2.bf16.msra.mxu0 %v5121
    %5193 = vmatprep.subr.bf16.mxu0 %v5120
    %5194 = vmatpush2.bf16.msra.mxu0 %v5119
    %5195 = vmatprep.subr.bf16.mxu0 %v5118
    %5196 = vmatpush2.bf16.msra.mxu0 %v5117
    %5197 = vmatprep.mubr.bf16.mxu0 %v4991
    %5198 = vmatmul.mubr.bf16.gmra.mxu0 %v4990
    %v5199 = vpop.f32.mrf.mxu0
    %v5200 = vadd.f32 %v4998, %v5199
    %v5201 = vpop.f32.mrf.mxu0
    %v5202 = vadd.f32 %v5002, %v5201
    %v5203 = vpop.f32.mrf.mxu0
    %v5204 = vpop.f32.mrf.mxu0
    %5205 = vdwg.mxu0
    %v5206 = vmul.f32 %v5200, 0.5
    %v5207 = vmul.f32 %v5202, 0.5
    %v5208 = vtanh.pop %v5206
    %v5209 = vtanh.pop %v5207
    %v5210 = vadd.f32 %v5208, 1.0
    %v5211 = vadd.f32 %v5209, 1.0
    %v5212 = vmul.f32 %v5210, 0.5
    %v5213 = vmul.f32 %v5211, 0.5
    %v5214 = vmul.f32 %v5200, %v5212
    %v5215 = vmul.f32 %v5202, %v5213
    %v5216 = vld [vmem:[#allocation14] sm:$0xff]
    %v5217 = vld [vmem:[#allocation14 + $0x8] sm:$0xff]
    %v5218 = vld [vmem:[#allocation14 + $0x10] sm:$0xff]
    %v5219 = vld [vmem:[#allocation14 + $0x18] sm:$0xff]
    %v5220 = vld [vmem:[#allocation14 + $0x20] sm:$0xff]
    %v5221 = vld [vmem:[#allocation14 + $0x28] sm:$0xff]
    %v5222 = vld [vmem:[#allocation14 + $0x30] sm:$0xff]
    %v5223 = vld [vmem:[#allocation14 + $0x38] sm:$0xff]
    %v5224 = vld [vmem:[#allocation14 + $0x40] sm:$0xff]
    %v5225 = vld [vmem:[#allocation14 + $0x48] sm:$0xff]
    %v5226 = vld [vmem:[#allocation14 + $0x50] sm:$0xff]
    %v5227 = vld [vmem:[#allocation14 + $0x58] sm:$0xff]
    %v5228 = vld [vmem:[#allocation14 + $0x60] sm:$0xff]
    %v5229 = vld [vmem:[#allocation14 + $0x68] sm:$0xff]
    %v5230 = vld [vmem:[#allocation14 + $0x70] sm:$0xff]
    %v5231 = vld [vmem:[#allocation14 + $0x78] sm:$0xff]
    %v5232 = vld [vmem:[#allocation14 + $0x80] sm:$0xff]
    %v5233 = vld [vmem:[#allocation14 + $0x88] sm:$0xff]
    %v5234 = vld [vmem:[#allocation14 + $0x90] sm:$0xff]
    %v5235 = vld [vmem:[#allocation14 + $0x98] sm:$0xff]
    %v5236 = vld [vmem:[#allocation14 + $0xa0] sm:$0xff]
    %v5237 = vld [vmem:[#allocation14 + $0xa8] sm:$0xff]
    %v5238 = vld [vmem:[#allocation14 + $0xb0] sm:$0xff]
    %v5239 = vld [vmem:[#allocation14 + $0xb8] sm:$0xff]
    %v5240 = vld [vmem:[#allocation14 + $0xc0] sm:$0xff]
    %v5241 = vld [vmem:[#allocation14 + $0xc8] sm:$0xff]
    %v5242 = vld [vmem:[#allocation14 + $0xd0] sm:$0xff]
    %v5243 = vld [vmem:[#allocation14 + $0xd8] sm:$0xff]
    %v5244 = vld [vmem:[#allocation14 + $0xe0] sm:$0xff]
    %v5245 = vld [vmem:[#allocation14 + $0xe8] sm:$0xff]
    %v5246 = vld [vmem:[#allocation14 + $0xf0] sm:$0xff]
    %v5247 = vld [vmem:[#allocation14 + $0xf8] sm:$0xff]
    %v5248 = vld [vmem:[#allocation14 + $0x100] sm:$0xff]
    %v5249 = vld [vmem:[#allocation14 + $0x108] sm:$0xff]
    %v5250 = vld [vmem:[#allocation14 + $0x110] sm:$0xff]
    %v5251 = vld [vmem:[#allocation14 + $0x118] sm:$0xff]
    %v5252 = vld [vmem:[#allocation14 + $0x120] sm:$0xff]
    %v5253 = vld [vmem:[#allocation14 + $0x128] sm:$0xff]
    %v5254 = vld [vmem:[#allocation14 + $0x130] sm:$0xff]
    %v5255 = vld [vmem:[#allocation14 + $0x138] sm:$0xff]
    %v5256 = vld [vmem:[#allocation14 + $0x140] sm:$0xff]
    %v5257 = vld [vmem:[#allocation14 + $0x148] sm:$0xff]
    %v5258 = vld [vmem:[#allocation14 + $0x150] sm:$0xff]
    %v5259 = vld [vmem:[#allocation14 + $0x158] sm:$0xff]
    %v5260 = vld [vmem:[#allocation14 + $0x160] sm:$0xff]
    %v5261 = vld [vmem:[#allocation14 + $0x168] sm:$0xff]
    %v5262 = vld [vmem:[#allocation14 + $0x170] sm:$0xff]
    %v5263 = vld [vmem:[#allocation14 + $0x178] sm:$0xff]
    %v5264 = vld [vmem:[#allocation14 + $0x180] sm:$0xff]
    %v5265 = vld [vmem:[#allocation14 + $0x188] sm:$0xff]
    %v5266 = vld [vmem:[#allocation14 + $0x190] sm:$0xff]
    %v5267 = vld [vmem:[#allocation14 + $0x198] sm:$0xff]
    %v5268 = vld [vmem:[#allocation14 + $0x1a0] sm:$0xff]
    %v5269 = vld [vmem:[#allocation14 + $0x1a8] sm:$0xff]
    %v5270 = vld [vmem:[#allocation14 + $0x1b0] sm:$0xff]
    %v5271 = vld [vmem:[#allocation14 + $0x1b8] sm:$0xff]
    %v5272 = vld [vmem:[#allocation14 + $0x1c0] sm:$0xff]
    %v5273 = vld [vmem:[#allocation14 + $0x1c8] sm:$0xff]
    %v5274 = vld [vmem:[#allocation14 + $0x1d0] sm:$0xff]
    %v5275 = vld [vmem:[#allocation14 + $0x1d8] sm:$0xff]
    %v5276 = vld [vmem:[#allocation14 + $0x1e0] sm:$0xff]
    %v5277 = vld [vmem:[#allocation14 + $0x1e8] sm:$0xff]
    %v5278 = vld [vmem:[#allocation14 + $0x1f0] sm:$0xff]
    %v5279 = vld [vmem:[#allocation14 + $0x1f8] sm:$0xff]
    %v5280 = vpack.c.bf16 %v5214, %v5214
    %v5281 = vpack.c.bf16 %v5215, %v5215
    %v5346 = vunpack.c.l.b16 %v5216
    %v5347 = vunpack.c.h.b16 %v5216
    %v5348 = vunpack.c.l.b16 %v5217
    %v5349 = vunpack.c.h.b16 %v5217
    %v5350 = vunpack.c.l.b16 %v5218
    %v5351 = vunpack.c.h.b16 %v5218
    %v5352 = vunpack.c.l.b16 %v5219
    %v5353 = vunpack.c.h.b16 %v5219
    %v5354 = vunpack.c.l.b16 %v5220
    %v5355 = vunpack.c.h.b16 %v5220
    %v5356 = vunpack.c.l.b16 %v5221
    %v5357 = vunpack.c.h.b16 %v5221
    %v5358 = vunpack.c.l.b16 %v5222
    %v5359 = vunpack.c.h.b16 %v5222
    %v5360 = vunpack.c.l.b16 %v5223
    %v5361 = vunpack.c.h.b16 %v5223
    %v5362 = vunpack.c.l.b16 %v5224
    %v5363 = vunpack.c.h.b16 %v5224
    %v5364 = vunpack.c.l.b16 %v5225
    %v5365 = vunpack.c.h.b16 %v5225
    %v5366 = vunpack.c.l.b16 %v5226
    %v5367 = vunpack.c.h.b16 %v5226
    %v5368 = vunpack.c.l.b16 %v5227
    %v5369 = vunpack.c.h.b16 %v5227
    %v5370 = vunpack.c.l.b16 %v5228
    %v5371 = vunpack.c.h.b16 %v5228
    %v5372 = vunpack.c.l.b16 %v5229
    %v5373 = vunpack.c.h.b16 %v5229
    %v5374 = vunpack.c.l.b16 %v5230
    %v5375 = vunpack.c.h.b16 %v5230
    %v5376 = vunpack.c.l.b16 %v5231
    %v5377 = vunpack.c.h.b16 %v5231
    %v5378 = vunpack.c.l.b16 %v5232
    %v5379 = vunpack.c.h.b16 %v5232
    %v5380 = vunpack.c.l.b16 %v5233
    %v5381 = vunpack.c.h.b16 %v5233
    %v5382 = vunpack.c.l.b16 %v5234
    %v5383 = vunpack.c.h.b16 %v5234
    %v5384 = vunpack.c.l.b16 %v5235
    %v5385 = vunpack.c.h.b16 %v5235
    %v5386 = vunpack.c.l.b16 %v5236
    %v5387 = vunpack.c.h.b16 %v5236
    %v5388 = vunpack.c.l.b16 %v5237
    %v5389 = vunpack.c.h.b16 %v5237
    %v5390 = vunpack.c.l.b16 %v5238
    %v5391 = vunpack.c.h.b16 %v5238
    %v5392 = vunpack.c.l.b16 %v5239
    %v5393 = vunpack.c.h.b16 %v5239
    %v5394 = vunpack.c.l.b16 %v5240
    %v5395 = vunpack.c.h.b16 %v5240
    %v5396 = vunpack.c.l.b16 %v5241
    %v5397 = vunpack.c.h.b16 %v5241
    %v5398 = vunpack.c.l.b16 %v5242
    %v5399 = vunpack.c.h.b16 %v5242
    %v5400 = vunpack.c.l.b16 %v5243
    %v5401 = vunpack.c.h.b16 %v5243
    %v5402 = vunpack.c.l.b16 %v5244
    %v5403 = vunpack.c.h.b16 %v5244
    %v5404 = vunpack.c.l.b16 %v5245
    %v5405 = vunpack.c.h.b16 %v5245
    %v5406 = vunpack.c.l.b16 %v5246
    %v5407 = vunpack.c.h.b16 %v5246
    %v5408 = vunpack.c.l.b16 %v5247
    %v5409 = vunpack.c.h.b16 %v5247
    %v5410 = vunpack.c.l.b16 %v5248
    %v5411 = vunpack.c.h.b16 %v5248
    %v5412 = vunpack.c.l.b16 %v5249
    %v5413 = vunpack.c.h.b16 %v5249
    %v5414 = vunpack.c.l.b16 %v5250
    %v5415 = vunpack.c.h.b16 %v5250
    %v5416 = vunpack.c.l.b16 %v5251
    %v5417 = vunpack.c.h.b16 %v5251
    %v5418 = vunpack.c.l.b16 %v5252
    %v5419 = vunpack.c.h.b16 %v5252
    %v5420 = vunpack.c.l.b16 %v5253
    %v5421 = vunpack.c.h.b16 %v5253
    %v5422 = vunpack.c.l.b16 %v5254
    %v5423 = vunpack.c.h.b16 %v5254
    %v5424 = vunpack.c.l.b16 %v5255
    %v5425 = vunpack.c.h.b16 %v5255
    %v5426 = vunpack.c.l.b16 %v5256
    %v5427 = vunpack.c.h.b16 %v5256
    %v5428 = vunpack.c.l.b16 %v5257
    %v5429 = vunpack.c.h.b16 %v5257
    %v5430 = vunpack.c.l.b16 %v5258
    %v5431 = vunpack.c.h.b16 %v5258
    %v5432 = vunpack.c.l.b16 %v5259
    %v5433 = vunpack.c.h.b16 %v5259
    %v5434 = vunpack.c.l.b16 %v5260
    %v5435 = vunpack.c.h.b16 %v5260
    %v5436 = vunpack.c.l.b16 %v5261
    %v5437 = vunpack.c.h.b16 %v5261
    %v5438 = vunpack.c.l.b16 %v5262
    %v5439 = vunpack.c.h.b16 %v5262
    %v5440 = vunpack.c.l.b16 %v5263
    %v5441 = vunpack.c.h.b16 %v5263
    %v5442 = vunpack.c.l.b16 %v5264
    %v5443 = vunpack.c.h.b16 %v5264
    %v5444 = vunpack.c.l.b16 %v5265
    %v5445 = vunpack.c.h.b16 %v5265
    %v5446 = vunpack.c.l.b16 %v5266
    %v5447 = vunpack.c.h.b16 %v5266
    %v5448 = vunpack.c.l.b16 %v5267
    %v5449 = vunpack.c.h.b16 %v5267
    %v5450 = vunpack.c.l.b16 %v5268
    %v5451 = vunpack.c.h.b16 %v5268
    %v5452 = vunpack.c.l.b16 %v5269
    %v5453 = vunpack.c.h.b16 %v5269
    %v5454 = vunpack.c.l.b16 %v5270
    %v5455 = vunpack.c.h.b16 %v5270
    %v5456 = vunpack.c.l.b16 %v5271
    %v5457 = vunpack.c.h.b16 %v5271
    %v5458 = vunpack.c.l.b16 %v5272
    %v5459 = vunpack.c.h.b16 %v5272
    %v5460 = vunpack.c.l.b16 %v5273
    %v5461 = vunpack.c.h.b16 %v5273
    %v5462 = vunpack.c.l.b16 %v5274
    %v5463 = vunpack.c.h.b16 %v5274
    %v5464 = vunpack.c.l.b16 %v5275
    %v5465 = vunpack.c.h.b16 %v5275
    %v5466 = vunpack.c.l.b16 %v5276
    %v5467 = vunpack.c.h.b16 %v5276
    %v5468 = vunpack.c.l.b16 %v5277
    %v5469 = vunpack.c.h.b16 %v5277
    %v5470 = vunpack.c.l.b16 %v5278
    %v5471 = vunpack.c.h.b16 %v5278
    %v5472 = vunpack.c.l.b16 %v5279
    %v5473 = vunpack.c.h.b16 %v5279
    %v5474 = vpack.c.b16 %v5350, %v5346
    %v5475 = vpack.c.b16 %v5351, %v5347
    %v5476 = vpack.c.b16 %v5352, %v5348
    %v5477 = vpack.c.b16 %v5353, %v5349
    %v5478 = vpack.c.b16 %v5358, %v5354
    %v5479 = vpack.c.b16 %v5359, %v5355
    %v5480 = vpack.c.b16 %v5360, %v5356
    %v5481 = vpack.c.b16 %v5361, %v5357
    %v5482 = vpack.c.b16 %v5366, %v5362
    %v5483 = vpack.c.b16 %v5367, %v5363
    %v5484 = vpack.c.b16 %v5368, %v5364
    %v5485 = vpack.c.b16 %v5369, %v5365
    %v5486 = vpack.c.b16 %v5374, %v5370
    %v5487 = vpack.c.b16 %v5375, %v5371
    %v5488 = vpack.c.b16 %v5376, %v5372
    %v5489 = vpack.c.b16 %v5377, %v5373
    %v5490 = vpack.c.b16 %v5382, %v5378
    %v5491 = vpack.c.b16 %v5383, %v5379
    %v5492 = vpack.c.b16 %v5384, %v5380
    %v5493 = vpack.c.b16 %v5385, %v5381
    %v5494 = vpack.c.b16 %v5390, %v5386
    %v5495 = vpack.c.b16 %v5391, %v5387
    %v5496 = vpack.c.b16 %v5392, %v5388
    %v5497 = vpack.c.b16 %v5393, %v5389
    %v5498 = vpack.c.b16 %v5398, %v5394
    %v5499 = vpack.c.b16 %v5399, %v5395
    %v5500 = vpack.c.b16 %v5400, %v5396
    %v5501 = vpack.c.b16 %v5401, %v5397
    %v5502 = vpack.c.b16 %v5406, %v5402
    %v5503 = vpack.c.b16 %v5407, %v5403
    %v5504 = vpack.c.b16 %v5408, %v5404
    %v5505 = vpack.c.b16 %v5409, %v5405
    %v5506 = vpack.c.b16 %v5414, %v5410
    %v5507 = vpack.c.b16 %v5415, %v5411
    %v5508 = vpack.c.b16 %v5416, %v5412
    %v5509 = vpack.c.b16 %v5417, %v5413
    %v5510 = vpack.c.b16 %v5422, %v5418
    %v5511 = vpack.c.b16 %v5423, %v5419
    %v5512 = vpack.c.b16 %v5424, %v5420
    %v5513 = vpack.c.b16 %v5425, %v5421
    %v5514 = vpack.c.b16 %v5430, %v5426
    %v5515 = vpack.c.b16 %v5431, %v5427
    %v5516 = vpack.c.b16 %v5432, %v5428
    %v5517 = vpack.c.b16 %v5433, %v5429
    %v5518 = vpack.c.b16 %v5438, %v5434
    %v5519 = vpack.c.b16 %v5439, %v5435
    %v5520 = vpack.c.b16 %v5440, %v5436
    %v5521 = vpack.c.b16 %v5441, %v5437
    %v5522 = vpack.c.b16 %v5446, %v5442
    %v5523 = vpack.c.b16 %v5447, %v5443
    %v5524 = vpack.c.b16 %v5448, %v5444
    %v5525 = vpack.c.b16 %v5449, %v5445
    %v5526 = vpack.c.b16 %v5454, %v5450
    %v5527 = vpack.c.b16 %v5455, %v5451
    %v5528 = vpack.c.b16 %v5456, %v5452
    %v5529 = vpack.c.b16 %v5457, %v5453
    %v5530 = vpack.c.b16 %v5462, %v5458
    %v5531 = vpack.c.b16 %v5463, %v5459
    %v5532 = vpack.c.b16 %v5464, %v5460
    %v5533 = vpack.c.b16 %v5465, %v5461
    %v5534 = vpack.c.b16 %v5470, %v5466
    %v5535 = vpack.c.b16 %v5471, %v5467
    %v5536 = vpack.c.b16 %v5472, %v5468
    %v5537 = vpack.c.b16 %v5473, %v5469
    %5602 = vmatprep.subr.bf16.mxu0 %v5503
    %5603 = vmatpush1.bf16.msra.mxu0 %v5502
    %5604 = vmatprep.subr.bf16.mxu0 %v5499
    %5605 = vmatpush1.bf16.msra.mxu0 %v5498
    %5606 = vmatprep.subr.bf16.mxu0 %v5495
    %5607 = vmatpush1.bf16.msra.mxu0 %v5494
    %5608 = vmatprep.subr.bf16.mxu0 %v5491
    %5609 = vmatpush1.bf16.msra.mxu0 %v5490
    %5610 = vmatprep.subr.bf16.mxu0 %v5487
    %5611 = vmatpush1.bf16.msra.mxu0 %v5486
    %5612 = vmatprep.subr.bf16.mxu0 %v5483
    %5613 = vmatpush1.bf16.msra.mxu0 %v5482
    %5614 = vmatprep.subr.bf16.mxu0 %v5479
    %5615 = vmatpush1.bf16.msra.mxu0 %v5478
    %5616 = vmatprep.subr.bf16.mxu0 %v5475
    %5617 = vmatpush1.bf16.msra.mxu0 %v5474
    %5618 = vmatprep.subr.bf16.mxu0 %v5535
    %5619 = vmatpush2.bf16.msra.mxu0 %v5534
    %5620 = vmatprep.subr.bf16.mxu0 %v5531
    %5621 = vmatpush2.bf16.msra.mxu0 %v5530
    %5622 = vmatprep.subr.bf16.mxu0 %v5527
    %5623 = vmatpush2.bf16.msra.mxu0 %v5526
    %5624 = vmatprep.subr.bf16.mxu0 %v5523
    %5625 = vmatpush2.bf16.msra.mxu0 %v5522
    %5626 = vmatprep.subr.bf16.mxu0 %v5519
    %5627 = vmatpush2.bf16.msra.mxu0 %v5518
    %5628 = vmatprep.subr.bf16.mxu0 %v5515
    %5629 = vmatpush2.bf16.msra.mxu0 %v5514
    %5630 = vmatprep.subr.bf16.mxu0 %v5511
    %5631 = vmatpush2.bf16.msra.mxu0 %v5510
    %5632 = vmatprep.subr.bf16.mxu0 %v5507
    %5633 = vmatpush2.bf16.msra.mxu0 %v5506
    %5634 = vmatprep.mubr.bf16.mxu0 %v5281
    %5635 = vmatmul.mubr.bf16.gmra.mxu0 %v5280
    %v5636 = vpop.f32.mrf.mxu0
    %v5637 = vadd.f32 0.0, %v5636
    %v5638 = vpop.f32.mrf.mxu0
    %v5639 = vadd.f32 0.0, %v5638
    %v5640 = vpop.f32.mrf.mxu0
    %v5641 = vpop.f32.mrf.mxu0
    %5642 = vdwg.mxu0
    %5643 = vmatprep.subr.bf16.mxu0 %v5505
    %5644 = vmatpush1.bf16.msra.mxu0 %v5504
    %5645 = vmatprep.subr.bf16.mxu0 %v5501
    %5646 = vmatpush1.bf16.msra.mxu0 %v5500
    %5647 = vmatprep.subr.bf16.mxu0 %v5497
    %5648 = vmatpush1.bf16.msra.mxu0 %v5496
    %5649 = vmatprep.subr.bf16.mxu0 %v5493
    %5650 = vmatpush1.bf16.msra.mxu0 %v5492
    %5651 = vmatprep.subr.bf16.mxu0 %v5489
    %5652 = vmatpush1.bf16.msra.mxu0 %v5488
    %5653 = vmatprep.subr.bf16.mxu0 %v5485
    %5654 = vmatpush1.bf16.msra.mxu0 %v5484
    %5655 = vmatprep.subr.bf16.mxu0 %v5481
    %5656 = vmatpush1.bf16.msra.mxu0 %v5480
    %5657 = vmatprep.subr.bf16.mxu0 %v5477
    %5658 = vmatpush1.bf16.msra.mxu0 %v5476
    %5659 = vmatprep.subr.bf16.mxu0 %v5537
    %5660 = vmatpush2.bf16.msra.mxu0 %v5536
    %5661 = vmatprep.subr.bf16.mxu0 %v5533
    %5662 = vmatpush2.bf16.msra.mxu0 %v5532
    %5663 = vmatprep.subr.bf16.mxu0 %v5529
    %5664 = vmatpush2.bf16.msra.mxu0 %v5528
    %5665 = vmatprep.subr.bf16.mxu0 %v5525
    %5666 = vmatpush2.bf16.msra.mxu0 %v5524
    %5667 = vmatprep.subr.bf16.mxu0 %v5521
    %5668 = vmatpush2.bf16.msra.mxu0 %v5520
    %5669 = vmatprep.subr.bf16.mxu0 %v5517
    %5670 = vmatpush2.bf16.msra.mxu0 %v5516
    %5671 = vmatprep.subr.bf16.mxu0 %v5513
    %5672 = vmatpush2.bf16.msra.mxu0 %v5512
    %5673 = vmatprep.subr.bf16.mxu0 %v5509
    %5674 = vmatpush2.bf16.msra.mxu0 %v5508
    %5675 = vmatprep.mubr.bf16.mxu0 %v5281
    %5676 = vmatmul.mubr.bf16.gmra.mxu0 %v5280
    %v5677 = vpop.f32.mrf.mxu0
    %v5678 = vadd.f32 0.0, %v5677
    %v5679 = vpop.f32.mrf.mxu0
    %v5680 = vadd.f32 0.0, %v5679
    %v5681 = vpop.f32.mrf.mxu0
    %v5682 = vpop.f32.mrf.mxu0
    %5683 = vdwg.mxu0
    %s5684 = scalar_lea.vmem [#allocation17], 16
    %v5685 = vld [vmem:[%s5684] ss:$8 sm:$0x3]
    %v5687 = vlaneseq
    %v5688 = vshrl.u32 %v5687, 7
    %v5689 = vsub.s32 0, %v5688
    %v5690 = vrot.slane %v5685, %v5689
    %v5691 = vlaneseq
    %v5692 = vshrl.u32 %v5691, 7
    %v5693 = vsub.s32 1, %v5692
    %v5694 = vrot.slane %v5685, %v5693
    %v5697 = vadd.f32 %v5637, %v5690
    %v5698 = vadd.f32 %v5639, %v5694
    %s5699 = smul.u32 4, 11
    %s5700 = smul.u32 %s5699, 32
    %s5701 = smul.u32 %s5700, 2
    %s5702 = sshll.u32 %s5701, 4
    %5703 = dma.done [#allocation4], %s5702
    %v5704 = vadd.f32 %v5678, %v1934
    %v5705 = vadd.f32 %v5680, %v1936
    %s5706 = scalar_lea.vmem [#allocation17], 17
    %v5707 = vld [vmem:[%s5706] ss:$8 sm:$0x3]
    %v5709 = vlaneseq
    %v5710 = vshrl.u32 %v5709, 7
    %v5711 = vsub.s32 0, %v5710
    %v5712 = vrot.slane %v5707, %v5711
    %v5713 = vlaneseq
    %v5714 = vshrl.u32 %v5713, 7
    %v5715 = vsub.s32 1, %v5714
    %v5716 = vrot.slane %v5707, %v5715
    %v5719 = vadd.f32 %v5704, %v5712
    %v5720 = vadd.f32 %v5705, %v5716
    %v5721 = vmul.f32 %v5719, 0.5
    %v5722 = vmul.f32 %v5720, 0.5
    %v5723 = vtanh.pop %v5721
    %v5724 = vtanh.pop %v5722
    %v5725 = vadd.f32 %v5723, 1.0
    %v5726 = vadd.f32 %v5724, 1.0
    %v5727 = vmul.f32 %v5725, 0.5
    %v5728 = vmul.f32 %v5726, 0.5
    %v5729 = vmul.f32 %v5719, %v5727
    %v5730 = vmul.f32 %v5720, %v5728
    %v5731 = vld [vmem:[#allocation2] sm:$0xff]
    %v5732 = vld [vmem:[#allocation2 + $0x8] sm:$0xff]
    %v5733 = vld [vmem:[#allocation2 + $0x10] sm:$0xff]
    %v5734 = vld [vmem:[#allocation2 + $0x18] sm:$0xff]
    %v5735 = vld [vmem:[#allocation2 + $0x20] sm:$0xff]
    %v5736 = vld [vmem:[#allocation2 + $0x28] sm:$0xff]
    %v5737 = vld [vmem:[#allocation2 + $0x30] sm:$0xff]
    %v5738 = vld [vmem:[#allocation2 + $0x38] sm:$0xff]
    %v5739 = vld [vmem:[#allocation2 + $0x40] sm:$0xff]
    %v5740 = vld [vmem:[#allocation2 + $0x48] sm:$0xff]
    %v5741 = vld [vmem:[#allocation2 + $0x50] sm:$0xff]
    %v5742 = vld [vmem:[#allocation2 + $0x58] sm:$0xff]
    %v5743 = vld [vmem:[#allocation2 + $0x60] sm:$0xff]
    %v5744 = vld [vmem:[#allocation2 + $0x68] sm:$0xff]
    %v5745 = vld [vmem:[#allocation2 + $0x70] sm:$0xff]
    %v5746 = vld [vmem:[#allocation2 + $0x78] sm:$0xff]
    %v5747 = vld [vmem:[#allocation2 + $0x80] sm:$0xff]
    %v5748 = vld [vmem:[#allocation2 + $0x88] sm:$0xff]
    %v5749 = vld [vmem:[#allocation2 + $0x90] sm:$0xff]
    %v5750 = vld [vmem:[#allocation2 + $0x98] sm:$0xff]
    %v5751 = vld [vmem:[#allocation2 + $0xa0] sm:$0xff]
    %v5752 = vld [vmem:[#allocation2 + $0xa8] sm:$0xff]
    %v5753 = vld [vmem:[#allocation2 + $0xb0] sm:$0xff]
    %v5754 = vld [vmem:[#allocation2 + $0xb8] sm:$0xff]
    %v5755 = vld [vmem:[#allocation2 + $0xc0] sm:$0xff]
    %v5756 = vld [vmem:[#allocation2 + $0xc8] sm:$0xff]
    %v5757 = vld [vmem:[#allocation2 + $0xd0] sm:$0xff]
    %v5758 = vld [vmem:[#allocation2 + $0xd8] sm:$0xff]
    %v5759 = vld [vmem:[#allocation2 + $0xe0] sm:$0xff]
    %v5760 = vld [vmem:[#allocation2 + $0xe8] sm:$0xff]
    %v5761 = vld [vmem:[#allocation2 + $0xf0] sm:$0xff]
    %v5762 = vld [vmem:[#allocation2 + $0xf8] sm:$0xff]
    %v5763 = vpack.c.bf16 %v5729, %v5729
    %v5764 = vpack.c.bf16 %v5730, %v5730
    %v5797 = vunpack.c.l.b16 %v5731
    %v5798 = vunpack.c.h.b16 %v5731
    %v5799 = vunpack.c.l.b16 %v5732
    %v5800 = vunpack.c.h.b16 %v5732
    %v5801 = vunpack.c.l.b16 %v5733
    %v5802 = vunpack.c.h.b16 %v5733
    %v5803 = vunpack.c.l.b16 %v5734
    %v5804 = vunpack.c.h.b16 %v5734
    %v5805 = vunpack.c.l.b16 %v5735
    %v5806 = vunpack.c.h.b16 %v5735
    %v5807 = vunpack.c.l.b16 %v5736
    %v5808 = vunpack.c.h.b16 %v5736
    %v5809 = vunpack.c.l.b16 %v5737
    %v5810 = vunpack.c.h.b16 %v5737
    %v5811 = vunpack.c.l.b16 %v5738
    %v5812 = vunpack.c.h.b16 %v5738
    %v5813 = vunpack.c.l.b16 %v5739
    %v5814 = vunpack.c.h.b16 %v5739
    %v5815 = vunpack.c.l.b16 %v5740
    %v5816 = vunpack.c.h.b16 %v5740
    %v5817 = vunpack.c.l.b16 %v5741
    %v5818 = vunpack.c.h.b16 %v5741
    %v5819 = vunpack.c.l.b16 %v5742
    %v5820 = vunpack.c.h.b16 %v5742
    %v5821 = vunpack.c.l.b16 %v5743
    %v5822 = vunpack.c.h.b16 %v5743
    %v5823 = vunpack.c.l.b16 %v5744
    %v5824 = vunpack.c.h.b16 %v5744
    %v5825 = vunpack.c.l.b16 %v5745
    %v5826 = vunpack.c.h.b16 %v5745
    %v5827 = vunpack.c.l.b16 %v5746
    %v5828 = vunpack.c.h.b16 %v5746
    %v5829 = vunpack.c.l.b16 %v5747
    %v5830 = vunpack.c.h.b16 %v5747
    %v5831 = vunpack.c.l.b16 %v5748
    %v5832 = vunpack.c.h.b16 %v5748
    %v5833 = vunpack.c.l.b16 %v5749
    %v5834 = vunpack.c.h.b16 %v5749
    %v5835 = vunpack.c.l.b16 %v5750
    %v5836 = vunpack.c.h.b16 %v5750
    %v5837 = vunpack.c.l.b16 %v5751
    %v5838 = vunpack.c.h.b16 %v5751
    %v5839 = vunpack.c.l.b16 %v5752
    %v5840 = vunpack.c.h.b16 %v5752
    %v5841 = vunpack.c.l.b16 %v5753
    %v5842 = vunpack.c.h.b16 %v5753
    %v5843 = vunpack.c.l.b16 %v5754
    %v5844 = vunpack.c.h.b16 %v5754
    %v5845 = vunpack.c.l.b16 %v5755
    %v5846 = vunpack.c.h.b16 %v5755
    %v5847 = vunpack.c.l.b16 %v5756
    %v5848 = vunpack.c.h.b16 %v5756
    %v5849 = vunpack.c.l.b16 %v5757
    %v5850 = vunpack.c.h.b16 %v5757
    %v5851 = vunpack.c.l.b16 %v5758
    %v5852 = vunpack.c.h.b16 %v5758
    %v5853 = vunpack.c.l.b16 %v5759
    %v5854 = vunpack.c.h.b16 %v5759
    %v5855 = vunpack.c.l.b16 %v5760
    %v5856 = vunpack.c.h.b16 %v5760
    %v5857 = vunpack.c.l.b16 %v5761
    %v5858 = vunpack.c.h.b16 %v5761
    %v5859 = vunpack.c.l.b16 %v5762
    %v5860 = vunpack.c.h.b16 %v5762
    %v5861 = vpack.c.b16 %v5799, %v5797
    %v5862 = vpack.c.b16 %v5800, %v5798
    %v5863 = vpack.c.b16 %v5803, %v5801
    %v5864 = vpack.c.b16 %v5804, %v5802
    %v5865 = vpack.c.b16 %v5807, %v5805
    %v5866 = vpack.c.b16 %v5808, %v5806
    %v5867 = vpack.c.b16 %v5811, %v5809
    %v5868 = vpack.c.b16 %v5812, %v5810
    %v5869 = vpack.c.b16 %v5815, %v5813
    %v5870 = vpack.c.b16 %v5816, %v5814
    %v5871 = vpack.c.b16 %v5819, %v5817
    %v5872 = vpack.c.b16 %v5820, %v5818
    %v5873 = vpack.c.b16 %v5823, %v5821
    %v5874 = vpack.c.b16 %v5824, %v5822
    %v5875 = vpack.c.b16 %v5827, %v5825
    %v5876 = vpack.c.b16 %v5828, %v5826
    %v5877 = vpack.c.b16 %v5831, %v5829
    %v5878 = vpack.c.b16 %v5832, %v5830
    %v5879 = vpack.c.b16 %v5835, %v5833
    %v5880 = vpack.c.b16 %v5836, %v5834
    %v5881 = vpack.c.b16 %v5839, %v5837
    %v5882 = vpack.c.b16 %v5840, %v5838
    %v5883 = vpack.c.b16 %v5843, %v5841
    %v5884 = vpack.c.b16 %v5844, %v5842
    %v5885 = vpack.c.b16 %v5847, %v5845
    %v5886 = vpack.c.b16 %v5848, %v5846
    %v5887 = vpack.c.b16 %v5851, %v5849
    %v5888 = vpack.c.b16 %v5852, %v5850
    %v5889 = vpack.c.b16 %v5855, %v5853
    %v5890 = vpack.c.b16 %v5856, %v5854
    %v5891 = vpack.c.b16 %v5859, %v5857
    %v5892 = vpack.c.b16 %v5860, %v5858
    %5925 = vmatprep.subr.bf16.mxu0 %v5876
    %5926 = vmatpush1.bf16.msra.mxu0 %v5875
    %5927 = vmatprep.subr.bf16.mxu0 %v5874
    %5928 = vmatpush1.bf16.msra.mxu0 %v5873
    %5929 = vmatprep.subr.bf16.mxu0 %v5872
    %5930 = vmatpush1.bf16.msra.mxu0 %v5871
    %5931 = vmatprep.subr.bf16.mxu0 %v5870
    %5932 = vmatpush1.bf16.msra.mxu0 %v5869
    %5933 = vmatprep.subr.bf16.mxu0 %v5868
    %5934 = vmatpush1.bf16.msra.mxu0 %v5867
    %5935 = vmatprep.subr.bf16.mxu0 %v5866
    %5936 = vmatpush1.bf16.msra.mxu0 %v5865
    %5937 = vmatprep.subr.bf16.mxu0 %v5864
    %5938 = vmatpush1.bf16.msra.mxu0 %v5863
    %5939 = vmatprep.subr.bf16.mxu0 %v5862
    %5940 = vmatpush1.bf16.msra.mxu0 %v5861
    %5941 = vmatprep.subr.bf16.mxu0 %v5892
    %5942 = vmatpush2.bf16.msra.mxu0 %v5891
    %5943 = vmatprep.subr.bf16.mxu0 %v5890
    %5944 = vmatpush2.bf16.msra.mxu0 %v5889
    %5945 = vmatprep.subr.bf16.mxu0 %v5888
    %5946 = vmatpush2.bf16.msra.mxu0 %v5887
    %5947 = vmatprep.subr.bf16.mxu0 %v5886
    %5948 = vmatpush2.bf16.msra.mxu0 %v5885
    %5949 = vmatprep.subr.bf16.mxu0 %v5884
    %5950 = vmatpush2.bf16.msra.mxu0 %v5883
    %5951 = vmatprep.subr.bf16.mxu0 %v5882
    %5952 = vmatpush2.bf16.msra.mxu0 %v5881
    %5953 = vmatprep.subr.bf16.mxu0 %v5880
    %5954 = vmatpush2.bf16.msra.mxu0 %v5879
    %5955 = vmatprep.subr.bf16.mxu0 %v5878
    %5956 = vmatpush2.bf16.msra.mxu0 %v5877
    %5957 = vmatprep.mubr.bf16.mxu0 %v5764
    %5958 = vmatmul.mubr.bf16.gmra.mxu0 %v5763
    %v5959 = vpop.f32.mrf.mxu0
    %v5960 = vadd.f32 %v1975, %v5959
    %v5961 = vpop.f32.mrf.mxu0
    %v5962 = vadd.f32 %v1977, %v5961
    %v5963 = vpop.f32.mrf.mxu0
    %v5964 = vpop.f32.mrf.mxu0
    %5965 = vdwg.mxu0
    %s5966 = scalar_lea.vmem [#allocation17], 21
    %v5967 = vld [vmem:[%s5966] ss:$8 sm:$0x3]
    %v5969 = vlaneseq
    %v5970 = vshrl.u32 %v5969, 7
    %v5971 = vsub.s32 0, %v5970
    %v5972 = vrot.slane %v5967, %v5971
    %v5973 = vlaneseq
    %v5974 = vshrl.u32 %v5973, 7
    %v5975 = vsub.s32 1, %v5974
    %v5976 = vrot.slane %v5967, %v5975
    %v5979 = vadd.f32 %v5960, %v5972
    %v5980 = vadd.f32 %v5962, %v5976
    %v5981 = vmul.f32 %v5979, 0.5
    %v5982 = vmul.f32 %v5980, 0.5
    %v5983 = vtanh.pop %v5981
    %v5984 = vtanh.pop %v5982
    %v5985 = vadd.f32 %v5983, 1.0
    %v5986 = vadd.f32 %v5984, 1.0
    %v5987 = vmul.f32 %v5985, 0.5
    %v5988 = vmul.f32 %v5986, 0.5
    %v5989 = vmul.f32 %v5979, %v5987
    %v5990 = vmul.f32 %v5980, %v5988
    %s5991 = scalar_lea.vmem [#allocation2], 256
    %v5992 = vld [vmem:[%s5991] sm:$0xff]
    %v5993 = vld [vmem:[%s5991 + $0x8] sm:$0xff]
    %v5994 = vld [vmem:[%s5991 + $0x10] sm:$0xff]
    %v5995 = vld [vmem:[%s5991 + $0x18] sm:$0xff]
    %v5996 = vld [vmem:[%s5991 + $0x20] sm:$0xff]
    %v5997 = vld [vmem:[%s5991 + $0x28] sm:$0xff]
    %v5998 = vld [vmem:[%s5991 + $0x30] sm:$0xff]
    %v5999 = vld [vmem:[%s5991 + $0x38] sm:$0xff]
    %v6000 = vld [vmem:[%s5991 + $0x40] sm:$0xff]
    %v6001 = vld [vmem:[%s5991 + $0x48] sm:$0xff]
    %v6002 = vld [vmem:[%s5991 + $0x50] sm:$0xff]
    %v6003 = vld [vmem:[%s5991 + $0x58] sm:$0xff]
    %v6004 = vld [vmem:[%s5991 + $0x60] sm:$0xff]
    %v6005 = vld [vmem:[%s5991 + $0x68] sm:$0xff]
    %v6006 = vld [vmem:[%s5991 + $0x70] sm:$0xff]
    %v6007 = vld [vmem:[%s5991 + $0x78] sm:$0xff]
    %v6008 = vld [vmem:[%s5991 + $0x80] sm:$0xff]
    %v6009 = vld [vmem:[%s5991 + $0x88] sm:$0xff]
    %v6010 = vld [vmem:[%s5991 + $0x90] sm:$0xff]
    %v6011 = vld [vmem:[%s5991 + $0x98] sm:$0xff]
    %v6012 = vld [vmem:[%s5991 + $0xa0] sm:$0xff]
    %v6013 = vld [vmem:[%s5991 + $0xa8] sm:$0xff]
    %v6014 = vld [vmem:[%s5991 + $0xb0] sm:$0xff]
    %v6015 = vld [vmem:[%s5991 + $0xb8] sm:$0xff]
    %v6016 = vld [vmem:[%s5991 + $0xc0] sm:$0xff]
    %v6017 = vld [vmem:[%s5991 + $0xc8] sm:$0xff]
    %v6018 = vld [vmem:[%s5991 + $0xd0] sm:$0xff]
    %v6019 = vld [vmem:[%s5991 + $0xd8] sm:$0xff]
    %v6020 = vld [vmem:[%s5991 + $0xe0] sm:$0xff]
    %v6021 = vld [vmem:[%s5991 + $0xe8] sm:$0xff]
    %v6022 = vld [vmem:[%s5991 + $0xf0] sm:$0xff]
    %v6023 = vld [vmem:[%s5991 + $0xf8] sm:$0xff]
    %v6024 = vpack.c.bf16 %v5989, %v5989
    %v6025 = vpack.c.bf16 %v5990, %v5990
    %s6026 = scalar_lea.vmem [#allocation17], 33
    %v6027 = vld [vmem:[%s6026] ss:$8 sm:$0x3]
    %v6029 = vlaneseq
    %v6030 = vshrl.u32 %v6029, 7
    %v6031 = vsub.s32 0, %v6030
    %v6032 = vrot.slane %v6027, %v6031
    %v6033 = vlaneseq
    %v6034 = vshrl.u32 %v6033, 7
    %v6035 = vsub.s32 1, %v6034
    %v6036 = vrot.slane %v6027, %v6035
    %v6071 = vunpack.c.l.b16 %v5992
    %v6072 = vunpack.c.h.b16 %v5992
    %v6073 = vunpack.c.l.b16 %v5993
    %v6074 = vunpack.c.h.b16 %v5993
    %v6075 = vunpack.c.l.b16 %v5994
    %v6076 = vunpack.c.h.b16 %v5994
    %v6077 = vunpack.c.l.b16 %v5995
    %v6078 = vunpack.c.h.b16 %v5995
    %v6079 = vunpack.c.l.b16 %v5996
    %v6080 = vunpack.c.h.b16 %v5996
    %v6081 = vunpack.c.l.b16 %v5997
    %v6082 = vunpack.c.h.b16 %v5997
    %v6083 = vunpack.c.l.b16 %v5998
    %v6084 = vunpack.c.h.b16 %v5998
    %v6085 = vunpack.c.l.b16 %v5999
    %v6086 = vunpack.c.h.b16 %v5999
    %v6087 = vunpack.c.l.b16 %v6000
    %v6088 = vunpack.c.h.b16 %v6000
    %v6089 = vunpack.c.l.b16 %v6001
    %v6090 = vunpack.c.h.b16 %v6001
    %v6091 = vunpack.c.l.b16 %v6002
    %v6092 = vunpack.c.h.b16 %v6002
    %v6093 = vunpack.c.l.b16 %v6003
    %v6094 = vunpack.c.h.b16 %v6003
    %v6095 = vunpack.c.l.b16 %v6004
    %v6096 = vunpack.c.h.b16 %v6004
    %v6097 = vunpack.c.l.b16 %v6005
    %v6098 = vunpack.c.h.b16 %v6005
    %v6099 = vunpack.c.l.b16 %v6006
    %v6100 = vunpack.c.h.b16 %v6006
    %v6101 = vunpack.c.l.b16 %v6007
    %v6102 = vunpack.c.h.b16 %v6007
    %v6103 = vunpack.c.l.b16 %v6008
    %v6104 = vunpack.c.h.b16 %v6008
    %v6105 = vunpack.c.l.b16 %v6009
    %v6106 = vunpack.c.h.b16 %v6009
    %v6107 = vunpack.c.l.b16 %v6010
    %v6108 = vunpack.c.h.b16 %v6010
    %v6109 = vunpack.c.l.b16 %v6011
    %v6110 = vunpack.c.h.b16 %v6011
    %v6111 = vunpack.c.l.b16 %v6012
    %v6112 = vunpack.c.h.b16 %v6012
    %v6113 = vunpack.c.l.b16 %v6013
    %v6114 = vunpack.c.h.b16 %v6013
    %v6115 = vunpack.c.l.b16 %v6014
    %v6116 = vunpack.c.h.b16 %v6014
    %v6117 = vunpack.c.l.b16 %v6015
    %v6118 = vunpack.c.h.b16 %v6015
    %v6119 = vunpack.c.l.b16 %v6016
    %v6120 = vunpack.c.h.b16 %v6016
    %v6121 = vunpack.c.l.b16 %v6017
    %v6122 = vunpack.c.h.b16 %v6017
    %v6123 = vunpack.c.l.b16 %v6018
    %v6124 = vunpack.c.h.b16 %v6018
    %v6125 = vunpack.c.l.b16 %v6019
    %v6126 = vunpack.c.h.b16 %v6019
    %v6127 = vunpack.c.l.b16 %v6020
    %v6128 = vunpack.c.h.b16 %v6020
    %v6129 = vunpack.c.l.b16 %v6021
    %v6130 = vunpack.c.h.b16 %v6021
    %v6131 = vunpack.c.l.b16 %v6022
    %v6132 = vunpack.c.h.b16 %v6022
    %v6133 = vunpack.c.l.b16 %v6023
    %v6134 = vunpack.c.h.b16 %v6023
    %v6135 = vpack.c.b16 %v6073, %v6071
    %v6136 = vpack.c.b16 %v6074, %v6072
    %v6137 = vpack.c.b16 %v6077, %v6075
    %v6138 = vpack.c.b16 %v6078, %v6076
    %v6139 = vpack.c.b16 %v6081, %v6079
    %v6140 = vpack.c.b16 %v6082, %v6080
    %v6141 = vpack.c.b16 %v6085, %v6083
    %v6142 = vpack.c.b16 %v6086, %v6084
    %v6143 = vpack.c.b16 %v6089, %v6087
    %v6144 = vpack.c.b16 %v6090, %v6088
    %v6145 = vpack.c.b16 %v6093, %v6091
    %v6146 = vpack.c.b16 %v6094, %v6092
    %v6147 = vpack.c.b16 %v6097, %v6095
    %v6148 = vpack.c.b16 %v6098, %v6096
    %v6149 = vpack.c.b16 %v6101, %v6099
    %v6150 = vpack.c.b16 %v6102, %v6100
    %v6151 = vpack.c.b16 %v6105, %v6103
    %v6152 = vpack.c.b16 %v6106, %v6104
    %v6153 = vpack.c.b16 %v6109, %v6107
    %v6154 = vpack.c.b16 %v6110, %v6108
    %v6155 = vpack.c.b16 %v6113, %v6111
    %v6156 = vpack.c.b16 %v6114, %v6112
    %v6157 = vpack.c.b16 %v6117, %v6115
    %v6158 = vpack.c.b16 %v6118, %v6116
    %v6159 = vpack.c.b16 %v6121, %v6119
    %v6160 = vpack.c.b16 %v6122, %v6120
    %v6161 = vpack.c.b16 %v6125, %v6123
    %v6162 = vpack.c.b16 %v6126, %v6124
    %v6163 = vpack.c.b16 %v6129, %v6127
    %v6164 = vpack.c.b16 %v6130, %v6128
    %v6165 = vpack.c.b16 %v6133, %v6131
    %v6166 = vpack.c.b16 %v6134, %v6132
    %6199 = vmatprep.subr.bf16.mxu0 %v6150
    %6200 = vmatpush1.bf16.msra.mxu0 %v6149
    %6201 = vmatprep.subr.bf16.mxu0 %v6148
    %6202 = vmatpush1.bf16.msra.mxu0 %v6147
    %6203 = vmatprep.subr.bf16.mxu0 %v6146
    %6204 = vmatpush1.bf16.msra.mxu0 %v6145
    %6205 = vmatprep.subr.bf16.mxu0 %v6144
    %6206 = vmatpush1.bf16.msra.mxu0 %v6143
    %6207 = vmatprep.subr.bf16.mxu0 %v6142
    %6208 = vmatpush1.bf16.msra.mxu0 %v6141
    %6209 = vmatprep.subr.bf16.mxu0 %v6140
    %6210 = vmatpush1.bf16.msra.mxu0 %v6139
    %6211 = vmatprep.subr.bf16.mxu0 %v6138
    %6212 = vmatpush1.bf16.msra.mxu0 %v6137
    %6213 = vmatprep.subr.bf16.mxu0 %v6136
    %6214 = vmatpush1.bf16.msra.mxu0 %v6135
    %6215 = vmatprep.subr.bf16.mxu0 %v6166
    %6216 = vmatpush2.bf16.msra.mxu0 %v6165
    %6217 = vmatprep.subr.bf16.mxu0 %v6164
    %6218 = vmatpush2.bf16.msra.mxu0 %v6163
    %6219 = vmatprep.subr.bf16.mxu0 %v6162
    %6220 = vmatpush2.bf16.msra.mxu0 %v6161
    %6221 = vmatprep.subr.bf16.mxu0 %v6160
    %6222 = vmatpush2.bf16.msra.mxu0 %v6159
    %6223 = vmatprep.subr.bf16.mxu0 %v6158
    %6224 = vmatpush2.bf16.msra.mxu0 %v6157
    %6225 = vmatprep.subr.bf16.mxu0 %v6156
    %6226 = vmatpush2.bf16.msra.mxu0 %v6155
    %6227 = vmatprep.subr.bf16.mxu0 %v6154
    %6228 = vmatpush2.bf16.msra.mxu0 %v6153
    %6229 = vmatprep.subr.bf16.mxu0 %v6152
    %6230 = vmatpush2.bf16.msra.mxu0 %v6151
    %6231 = vmatprep.mubr.bf16.mxu0 %v6025
    %6232 = vmatmul.mubr.bf16.gmra.mxu0 %v6024
    %v6233 = vpop.f32.mrf.mxu0
    %v6234 = vadd.f32 %v6032, %v6233
    %v6235 = vpop.f32.mrf.mxu0
    %v6236 = vadd.f32 %v6036, %v6235
    %v6237 = vpop.f32.mrf.mxu0
    %v6238 = vpop.f32.mrf.mxu0
    %6239 = vdwg.mxu0
    %v6240 = vadd.f32 %v6234, %v5697
    %v6241 = vadd.f32 %v6236, %v5698
    %s6242 = scalar_lea.vmem [#allocation2], 512
    %v6243 = vld [vmem:[%s6242] sm:$0xff]
    %v6244 = vld [vmem:[%s6242 + $0x8] sm:$0xff]
    %v6245 = vld [vmem:[%s6242 + $0x10] sm:$0xff]
    %v6246 = vld [vmem:[%s6242 + $0x18] sm:$0xff]
    %v6247 = vld [vmem:[%s6242 + $0x20] sm:$0xff]
    %v6248 = vld [vmem:[%s6242 + $0x28] sm:$0xff]
    %v6249 = vld [vmem:[%s6242 + $0x30] sm:$0xff]
    %v6250 = vld [vmem:[%s6242 + $0x38] sm:$0xff]
    %v6251 = vld [vmem:[%s6242 + $0x40] sm:$0xff]
    %v6252 = vld [vmem:[%s6242 + $0x48] sm:$0xff]
    %v6253 = vld [vmem:[%s6242 + $0x50] sm:$0xff]
    %v6254 = vld [vmem:[%s6242 + $0x58] sm:$0xff]
    %v6255 = vld [vmem:[%s6242 + $0x60] sm:$0xff]
    %v6256 = vld [vmem:[%s6242 + $0x68] sm:$0xff]
    %v6257 = vld [vmem:[%s6242 + $0x70] sm:$0xff]
    %v6258 = vld [vmem:[%s6242 + $0x78] sm:$0xff]
    %v6259 = vld [vmem:[%s6242 + $0x80] sm:$0xff]
    %v6260 = vld [vmem:[%s6242 + $0x88] sm:$0xff]
    %v6261 = vld [vmem:[%s6242 + $0x90] sm:$0xff]
    %v6262 = vld [vmem:[%s6242 + $0x98] sm:$0xff]
    %v6263 = vld [vmem:[%s6242 + $0xa0] sm:$0xff]
    %v6264 = vld [vmem:[%s6242 + $0xa8] sm:$0xff]
    %v6265 = vld [vmem:[%s6242 + $0xb0] sm:$0xff]
    %v6266 = vld [vmem:[%s6242 + $0xb8] sm:$0xff]
    %v6267 = vld [vmem:[%s6242 + $0xc0] sm:$0xff]
    %v6268 = vld [vmem:[%s6242 + $0xc8] sm:$0xff]
    %v6269 = vld [vmem:[%s6242 + $0xd0] sm:$0xff]
    %v6270 = vld [vmem:[%s6242 + $0xd8] sm:$0xff]
    %v6271 = vld [vmem:[%s6242 + $0xe0] sm:$0xff]
    %v6272 = vld [vmem:[%s6242 + $0xe8] sm:$0xff]
    %v6273 = vld [vmem:[%s6242 + $0xf0] sm:$0xff]
    %v6274 = vld [vmem:[%s6242 + $0xf8] sm:$0xff]
    %v6275 = vpack.c.bf16 %v6240, %v6240
    %v6276 = vpack.c.bf16 %v6241, %v6241
    %v6309 = vunpack.c.l.b16 %v6243
    %v6310 = vunpack.c.h.b16 %v6243
    %v6311 = vunpack.c.l.b16 %v6244
    %v6312 = vunpack.c.h.b16 %v6244
    %v6313 = vunpack.c.l.b16 %v6245
    %v6314 = vunpack.c.h.b16 %v6245
    %v6315 = vunpack.c.l.b16 %v6246
    %v6316 = vunpack.c.h.b16 %v6246
    %v6317 = vunpack.c.l.b16 %v6247
    %v6318 = vunpack.c.h.b16 %v6247
    %v6319 = vunpack.c.l.b16 %v6248
    %v6320 = vunpack.c.h.b16 %v6248
    %v6321 = vunpack.c.l.b16 %v6249
    %v6322 = vunpack.c.h.b16 %v6249
    %v6323 = vunpack.c.l.b16 %v6250
    %v6324 = vunpack.c.h.b16 %v6250
    %v6325 = vunpack.c.l.b16 %v6251
    %v6326 = vunpack.c.h.b16 %v6251
    %v6327 = vunpack.c.l.b16 %v6252
    %v6328 = vunpack.c.h.b16 %v6252
    %v6329 = vunpack.c.l.b16 %v6253
    %v6330 = vunpack.c.h.b16 %v6253
    %v6331 = vunpack.c.l.b16 %v6254
    %v6332 = vunpack.c.h.b16 %v6254
    %v6333 = vunpack.c.l.b16 %v6255
    %v6334 = vunpack.c.h.b16 %v6255
    %v6335 = vunpack.c.l.b16 %v6256
    %v6336 = vunpack.c.h.b16 %v6256
    %v6337 = vunpack.c.l.b16 %v6257
    %v6338 = vunpack.c.h.b16 %v6257
    %v6339 = vunpack.c.l.b16 %v6258
    %v6340 = vunpack.c.h.b16 %v6258
    %v6341 = vunpack.c.l.b16 %v6259
    %v6342 = vunpack.c.h.b16 %v6259
    %v6343 = vunpack.c.l.b16 %v6260
    %v6344 = vunpack.c.h.b16 %v6260
    %v6345 = vunpack.c.l.b16 %v6261
    %v6346 = vunpack.c.h.b16 %v6261
    %v6347 = vunpack.c.l.b16 %v6262
    %v6348 = vunpack.c.h.b16 %v6262
    %v6349 = vunpack.c.l.b16 %v6263
    %v6350 = vunpack.c.h.b16 %v6263
    %v6351 = vunpack.c.l.b16 %v6264
    %v6352 = vunpack.c.h.b16 %v6264
    %v6353 = vunpack.c.l.b16 %v6265
    %v6354 = vunpack.c.h.b16 %v6265
    %v6355 = vunpack.c.l.b16 %v6266
    %v6356 = vunpack.c.h.b16 %v6266
    %v6357 = vunpack.c.l.b16 %v6267
    %v6358 = vunpack.c.h.b16 %v6267
    %v6359 = vunpack.c.l.b16 %v6268
    %v6360 = vunpack.c.h.b16 %v6268
    %v6361 = vunpack.c.l.b16 %v6269
    %v6362 = vunpack.c.h.b16 %v6269
    %v6363 = vunpack.c.l.b16 %v6270
    %v6364 = vunpack.c.h.b16 %v6270
    %v6365 = vunpack.c.l.b16 %v6271
    %v6366 = vunpack.c.h.b16 %v6271
    %v6367 = vunpack.c.l.b16 %v6272
    %v6368 = vunpack.c.h.b16 %v6272
    %v6369 = vunpack.c.l.b16 %v6273
    %v6370 = vunpack.c.h.b16 %v6273
    %v6371 = vunpack.c.l.b16 %v6274
    %v6372 = vunpack.c.h.b16 %v6274
    %v6373 = vpack.c.b16 %v6311, %v6309
    %v6374 = vpack.c.b16 %v6312, %v6310
    %v6375 = vpack.c.b16 %v6315, %v6313
    %v6376 = vpack.c.b16 %v6316, %v6314
    %v6377 = vpack.c.b16 %v6319, %v6317
    %v6378 = vpack.c.b16 %v6320, %v6318
    %v6379 = vpack.c.b16 %v6323, %v6321
    %v6380 = vpack.c.b16 %v6324, %v6322
    %v6381 = vpack.c.b16 %v6327, %v6325
    %v6382 = vpack.c.b16 %v6328, %v6326
    %v6383 = vpack.c.b16 %v6331, %v6329
    %v6384 = vpack.c.b16 %v6332, %v6330
    %v6385 = vpack.c.b16 %v6335, %v6333
    %v6386 = vpack.c.b16 %v6336, %v6334
    %v6387 = vpack.c.b16 %v6339, %v6337
    %v6388 = vpack.c.b16 %v6340, %v6338
    %v6389 = vpack.c.b16 %v6343, %v6341
    %v6390 = vpack.c.b16 %v6344, %v6342
    %v6391 = vpack.c.b16 %v6347, %v6345
    %v6392 = vpack.c.b16 %v6348, %v6346
    %v6393 = vpack.c.b16 %v6351, %v6349
    %v6394 = vpack.c.b16 %v6352, %v6350
    %v6395 = vpack.c.b16 %v6355, %v6353
    %v6396 = vpack.c.b16 %v6356, %v6354
    %v6397 = vpack.c.b16 %v6359, %v6357
    %v6398 = vpack.c.b16 %v6360, %v6358
    %v6399 = vpack.c.b16 %v6363, %v6361
    %v6400 = vpack.c.b16 %v6364, %v6362
    %v6401 = vpack.c.b16 %v6367, %v6365
    %v6402 = vpack.c.b16 %v6368, %v6366
    %v6403 = vpack.c.b16 %v6371, %v6369
    %v6404 = vpack.c.b16 %v6372, %v6370
    %6437 = vmatprep.subr.bf16.mxu0 %v6388
    %6438 = vmatpush1.bf16.msra.mxu0 %v6387
    %6439 = vmatprep.subr.bf16.mxu0 %v6386
    %6440 = vmatpush1.bf16.msra.mxu0 %v6385
    %6441 = vmatprep.subr.bf16.mxu0 %v6384
    %6442 = vmatpush1.bf16.msra.mxu0 %v6383
    %6443 = vmatprep.subr.bf16.mxu0 %v6382
    %6444 = vmatpush1.bf16.msra.mxu0 %v6381
    %6445 = vmatprep.subr.bf16.mxu0 %v6380
    %6446 = vmatpush1.bf16.msra.mxu0 %v6379
    %6447 = vmatprep.subr.bf16.mxu0 %v6378
    %6448 = vmatpush1.bf16.msra.mxu0 %v6377
    %6449 = vmatprep.subr.bf16.mxu0 %v6376
    %6450 = vmatpush1.bf16.msra.mxu0 %v6375
    %6451 = vmatprep.subr.bf16.mxu0 %v6374
    %6452 = vmatpush1.bf16.msra.mxu0 %v6373
    %6453 = vmatprep.subr.bf16.mxu0 %v6404
    %6454 = vmatpush2.bf16.msra.mxu0 %v6403
    %6455 = vmatprep.subr.bf16.mxu0 %v6402
    %6456 = vmatpush2.bf16.msra.mxu0 %v6401
    %6457 = vmatprep.subr.bf16.mxu0 %v6400
    %6458 = vmatpush2.bf16.msra.mxu0 %v6399
    %6459 = vmatprep.subr.bf16.mxu0 %v6398
    %6460 = vmatpush2.bf16.msra.mxu0 %v6397
    %6461 = vmatprep.subr.bf16.mxu0 %v6396
    %6462 = vmatpush2.bf16.msra.mxu0 %v6395
    %6463 = vmatprep.subr.bf16.mxu0 %v6394
    %6464 = vmatpush2.bf16.msra.mxu0 %v6393
    %6465 = vmatprep.subr.bf16.mxu0 %v6392
    %6466 = vmatpush2.bf16.msra.mxu0 %v6391
    %6467 = vmatprep.subr.bf16.mxu0 %v6390
    %6468 = vmatpush2.bf16.msra.mxu0 %v6389
    %6469 = vmatprep.mubr.bf16.mxu0 %v6276
    %6470 = vmatmul.mubr.bf16.gmra.mxu0 %v6275
    %v6471 = vpop.f32.mrf.mxu0
    %v6472 = vadd.f32 %v2016, %v6471
    %v6473 = vpop.f32.mrf.mxu0
    %v6474 = vadd.f32 %v2018, %v6473
    %v6475 = vpop.f32.mrf.mxu0
    %v6476 = vpop.f32.mrf.mxu0
    %6477 = vdwg.mxu0
    %s6478 = scalar_lea.vmem [#allocation17], 18
    %v6479 = vld [vmem:[%s6478] ss:$8 sm:$0x3]
    %v6481 = vlaneseq
    %v6482 = vshrl.u32 %v6481, 7
    %v6483 = vsub.s32 0, %v6482
    %v6484 = vrot.slane %v6479, %v6483
    %v6485 = vlaneseq
    %v6486 = vshrl.u32 %v6485, 7
    %v6487 = vsub.s32 1, %v6486
    %v6488 = vrot.slane %v6479, %v6487
    %v6491 = vadd.f32 %v6472, %v6484
    %v6492 = vadd.f32 %v6474, %v6488
    %v6493 = vmul.f32 %v6491, 0.5
    %v6494 = vmul.f32 %v6492, 0.5
    %v6495 = vtanh.pop %v6493
    %v6496 = vtanh.pop %v6494
    %v6497 = vadd.f32 %v6495, 1.0
    %v6498 = vadd.f32 %v6496, 1.0
    %v6499 = vmul.f32 %v6497, 0.5
    %v6500 = vmul.f32 %v6498, 0.5
    %v6501 = vmul.f32 %v6491, %v6499
    %v6502 = vmul.f32 %v6492, %v6500
    %s6503 = scalar_lea.vmem [#allocation2], 768
    %v6504 = vld [vmem:[%s6503] sm:$0xff]
    %v6505 = vld [vmem:[%s6503 + $0x8] sm:$0xff]
    %v6506 = vld [vmem:[%s6503 + $0x10] sm:$0xff]
    %v6507 = vld [vmem:[%s6503 + $0x18] sm:$0xff]
    %v6508 = vld [vmem:[%s6503 + $0x20] sm:$0xff]
    %v6509 = vld [vmem:[%s6503 + $0x28] sm:$0xff]
    %v6510 = vld [vmem:[%s6503 + $0x30] sm:$0xff]
    %v6511 = vld [vmem:[%s6503 + $0x38] sm:$0xff]
    %v6512 = vld [vmem:[%s6503 + $0x40] sm:$0xff]
    %v6513 = vld [vmem:[%s6503 + $0x48] sm:$0xff]
    %v6514 = vld [vmem:[%s6503 + $0x50] sm:$0xff]
    %v6515 = vld [vmem:[%s6503 + $0x58] sm:$0xff]
    %v6516 = vld [vmem:[%s6503 + $0x60] sm:$0xff]
    %v6517 = vld [vmem:[%s6503 + $0x68] sm:$0xff]
    %v6518 = vld [vmem:[%s6503 + $0x70] sm:$0xff]
    %v6519 = vld [vmem:[%s6503 + $0x78] sm:$0xff]
    %v6520 = vld [vmem:[%s6503 + $0x80] sm:$0xff]
    %v6521 = vld [vmem:[%s6503 + $0x88] sm:$0xff]
    %v6522 = vld [vmem:[%s6503 + $0x90] sm:$0xff]
    %v6523 = vld [vmem:[%s6503 + $0x98] sm:$0xff]
    %v6524 = vld [vmem:[%s6503 + $0xa0] sm:$0xff]
    %v6525 = vld [vmem:[%s6503 + $0xa8] sm:$0xff]
    %v6526 = vld [vmem:[%s6503 + $0xb0] sm:$0xff]
    %v6527 = vld [vmem:[%s6503 + $0xb8] sm:$0xff]
    %v6528 = vld [vmem:[%s6503 + $0xc0] sm:$0xff]
    %v6529 = vld [vmem:[%s6503 + $0xc8] sm:$0xff]
    %v6530 = vld [vmem:[%s6503 + $0xd0] sm:$0xff]
    %v6531 = vld [vmem:[%s6503 + $0xd8] sm:$0xff]
    %v6532 = vld [vmem:[%s6503 + $0xe0] sm:$0xff]
    %v6533 = vld [vmem:[%s6503 + $0xe8] sm:$0xff]
    %v6534 = vld [vmem:[%s6503 + $0xf0] sm:$0xff]
    %v6535 = vld [vmem:[%s6503 + $0xf8] sm:$0xff]
    %v6536 = vpack.c.bf16 %v6501, %v6501
    %v6537 = vpack.c.bf16 %v6502, %v6502
    %v6570 = vunpack.c.l.b16 %v6504
    %v6571 = vunpack.c.h.b16 %v6504
    %v6572 = vunpack.c.l.b16 %v6505
    %v6573 = vunpack.c.h.b16 %v6505
    %v6574 = vunpack.c.l.b16 %v6506
    %v6575 = vunpack.c.h.b16 %v6506
    %v6576 = vunpack.c.l.b16 %v6507
    %v6577 = vunpack.c.h.b16 %v6507
    %v6578 = vunpack.c.l.b16 %v6508
    %v6579 = vunpack.c.h.b16 %v6508
    %v6580 = vunpack.c.l.b16 %v6509
    %v6581 = vunpack.c.h.b16 %v6509
    %v6582 = vunpack.c.l.b16 %v6510
    %v6583 = vunpack.c.h.b16 %v6510
    %v6584 = vunpack.c.l.b16 %v6511
    %v6585 = vunpack.c.h.b16 %v6511
    %v6586 = vunpack.c.l.b16 %v6512
    %v6587 = vunpack.c.h.b16 %v6512
    %v6588 = vunpack.c.l.b16 %v6513
    %v6589 = vunpack.c.h.b16 %v6513
    %v6590 = vunpack.c.l.b16 %v6514
    %v6591 = vunpack.c.h.b16 %v6514
    %v6592 = vunpack.c.l.b16 %v6515
    %v6593 = vunpack.c.h.b16 %v6515
    %v6594 = vunpack.c.l.b16 %v6516
    %v6595 = vunpack.c.h.b16 %v6516
    %v6596 = vunpack.c.l.b16 %v6517
    %v6597 = vunpack.c.h.b16 %v6517
    %v6598 = vunpack.c.l.b16 %v6518
    %v6599 = vunpack.c.h.b16 %v6518
    %v6600 = vunpack.c.l.b16 %v6519
    %v6601 = vunpack.c.h.b16 %v6519
    %v6602 = vunpack.c.l.b16 %v6520
    %v6603 = vunpack.c.h.b16 %v6520
    %v6604 = vunpack.c.l.b16 %v6521
    %v6605 = vunpack.c.h.b16 %v6521
    %v6606 = vunpack.c.l.b16 %v6522
    %v6607 = vunpack.c.h.b16 %v6522
    %v6608 = vunpack.c.l.b16 %v6523
    %v6609 = vunpack.c.h.b16 %v6523
    %v6610 = vunpack.c.l.b16 %v6524
    %v6611 = vunpack.c.h.b16 %v6524
    %v6612 = vunpack.c.l.b16 %v6525
    %v6613 = vunpack.c.h.b16 %v6525
    %v6614 = vunpack.c.l.b16 %v6526
    %v6615 = vunpack.c.h.b16 %v6526
    %v6616 = vunpack.c.l.b16 %v6527
    %v6617 = vunpack.c.h.b16 %v6527
    %v6618 = vunpack.c.l.b16 %v6528
    %v6619 = vunpack.c.h.b16 %v6528
    %v6620 = vunpack.c.l.b16 %v6529
    %v6621 = vunpack.c.h.b16 %v6529
    %v6622 = vunpack.c.l.b16 %v6530
    %v6623 = vunpack.c.h.b16 %v6530
    %v6624 = vunpack.c.l.b16 %v6531
    %v6625 = vunpack.c.h.b16 %v6531
    %v6626 = vunpack.c.l.b16 %v6532
    %v6627 = vunpack.c.h.b16 %v6532
    %v6628 = vunpack.c.l.b16 %v6533
    %v6629 = vunpack.c.h.b16 %v6533
    %v6630 = vunpack.c.l.b16 %v6534
    %v6631 = vunpack.c.h.b16 %v6534
    %v6632 = vunpack.c.l.b16 %v6535
    %v6633 = vunpack.c.h.b16 %v6535
    %v6634 = vpack.c.b16 %v6572, %v6570
    %v6635 = vpack.c.b16 %v6573, %v6571
    %v6636 = vpack.c.b16 %v6576, %v6574
    %v6637 = vpack.c.b16 %v6577, %v6575
    %v6638 = vpack.c.b16 %v6580, %v6578
    %v6639 = vpack.c.b16 %v6581, %v6579
    %v6640 = vpack.c.b16 %v6584, %v6582
    %v6641 = vpack.c.b16 %v6585, %v6583
    %v6642 = vpack.c.b16 %v6588, %v6586
    %v6643 = vpack.c.b16 %v6589, %v6587
    %v6644 = vpack.c.b16 %v6592, %v6590
    %v6645 = vpack.c.b16 %v6593, %v6591
    %v6646 = vpack.c.b16 %v6596, %v6594
    %v6647 = vpack.c.b16 %v6597, %v6595
    %v6648 = vpack.c.b16 %v6600, %v6598
    %v6649 = vpack.c.b16 %v6601, %v6599
    %v6650 = vpack.c.b16 %v6604, %v6602
    %v6651 = vpack.c.b16 %v6605, %v6603
    %v6652 = vpack.c.b16 %v6608, %v6606
    %v6653 = vpack.c.b16 %v6609, %v6607
    %v6654 = vpack.c.b16 %v6612, %v6610
    %v6655 = vpack.c.b16 %v6613, %v6611
    %v6656 = vpack.c.b16 %v6616, %v6614
    %v6657 = vpack.c.b16 %v6617, %v6615
    %v6658 = vpack.c.b16 %v6620, %v6618
    %v6659 = vpack.c.b16 %v6621, %v6619
    %v6660 = vpack.c.b16 %v6624, %v6622
    %v6661 = vpack.c.b16 %v6625, %v6623
    %v6662 = vpack.c.b16 %v6628, %v6626
    %v6663 = vpack.c.b16 %v6629, %v6627
    %v6664 = vpack.c.b16 %v6632, %v6630
    %v6665 = vpack.c.b16 %v6633, %v6631
    %6698 = vmatprep.subr.bf16.mxu0 %v6649
    %6699 = vmatpush1.bf16.msra.mxu0 %v6648
    %6700 = vmatprep.subr.bf16.mxu0 %v6647
    %6701 = vmatpush1.bf16.msra.mxu0 %v6646
    %6702 = vmatprep.subr.bf16.mxu0 %v6645
    %6703 = vmatpush1.bf16.msra.mxu0 %v6644
    %6704 = vmatprep.subr.bf16.mxu0 %v6643
    %6705 = vmatpush1.bf16.msra.mxu0 %v6642
    %6706 = vmatprep.subr.bf16.mxu0 %v6641
    %6707 = vmatpush1.bf16.msra.mxu0 %v6640
    %6708 = vmatprep.subr.bf16.mxu0 %v6639
    %6709 = vmatpush1.bf16.msra.mxu0 %v6638
    %6710 = vmatprep.subr.bf16.mxu0 %v6637
    %6711 = vmatpush1.bf16.msra.mxu0 %v6636
    %6712 = vmatprep.subr.bf16.mxu0 %v6635
    %6713 = vmatpush1.bf16.msra.mxu0 %v6634
    %6714 = vmatprep.subr.bf16.mxu0 %v6665
    %6715 = vmatpush2.bf16.msra.mxu0 %v6664
    %6716 = vmatprep.subr.bf16.mxu0 %v6663
    %6717 = vmatpush2.bf16.msra.mxu0 %v6662
    %6718 = vmatprep.subr.bf16.mxu0 %v6661
    %6719 = vmatpush2.bf16.msra.mxu0 %v6660
    %6720 = vmatprep.subr.bf16.mxu0 %v6659
    %6721 = vmatpush2.bf16.msra.mxu0 %v6658
    %6722 = vmatprep.subr.bf16.mxu0 %v6657
    %6723 = vmatpush2.bf16.msra.mxu0 %v6656
    %6724 = vmatprep.subr.bf16.mxu0 %v6655
    %6725 = vmatpush2.bf16.msra.mxu0 %v6654
    %6726 = vmatprep.subr.bf16.mxu0 %v6653
    %6727 = vmatpush2.bf16.msra.mxu0 %v6652
    %6728 = vmatprep.subr.bf16.mxu0 %v6651
    %6729 = vmatpush2.bf16.msra.mxu0 %v6650
    %6730 = vmatprep.mubr.bf16.mxu0 %v6537
    %6731 = vmatmul.mubr.bf16.gmra.mxu0 %v6536
    %v6732 = vpop.f32.mrf.mxu0
    %v6733 = vadd.f32 %v2057, %v6732
    %v6734 = vpop.f32.mrf.mxu0
    %v6735 = vadd.f32 %v2059, %v6734
    %v6736 = vpop.f32.mrf.mxu0
    %v6737 = vpop.f32.mrf.mxu0
    %6738 = vdwg.mxu0
    %s6739 = scalar_lea.vmem [#allocation17], 22
    %v6740 = vld [vmem:[%s6739] ss:$8 sm:$0x3]
    %v6742 = vlaneseq
    %v6743 = vshrl.u32 %v6742, 7
    %v6744 = vsub.s32 0, %v6743
    %v6745 = vrot.slane %v6740, %v6744
    %v6746 = vlaneseq
    %v6747 = vshrl.u32 %v6746, 7
    %v6748 = vsub.s32 1, %v6747
    %v6749 = vrot.slane %v6740, %v6748
    %v6752 = vadd.f32 %v6733, %v6745
    %v6753 = vadd.f32 %v6735, %v6749
    %v6754 = vmul.f32 %v6752, 0.5
    %v6755 = vmul.f32 %v6753, 0.5
    %v6756 = vtanh.pop %v6754
    %v6757 = vtanh.pop %v6755
    %v6758 = vadd.f32 %v6756, 1.0
    %v6759 = vadd.f32 %v6757, 1.0
    %v6760 = vmul.f32 %v6758, 0.5
    %v6761 = vmul.f32 %v6759, 0.5
    %v6762 = vmul.f32 %v6752, %v6760
    %v6763 = vmul.f32 %v6753, %v6761
    %s6764 = scalar_lea.vmem [#allocation2], 1024
    %v6765 = vld [vmem:[%s6764] sm:$0xff]
    %v6766 = vld [vmem:[%s6764 + $0x8] sm:$0xff]
    %v6767 = vld [vmem:[%s6764 + $0x10] sm:$0xff]
    %v6768 = vld [vmem:[%s6764 + $0x18] sm:$0xff]
    %v6769 = vld [vmem:[%s6764 + $0x20] sm:$0xff]
    %v6770 = vld [vmem:[%s6764 + $0x28] sm:$0xff]
    %v6771 = vld [vmem:[%s6764 + $0x30] sm:$0xff]
    %v6772 = vld [vmem:[%s6764 + $0x38] sm:$0xff]
    %v6773 = vld [vmem:[%s6764 + $0x40] sm:$0xff]
    %v6774 = vld [vmem:[%s6764 + $0x48] sm:$0xff]
    %v6775 = vld [vmem:[%s6764 + $0x50] sm:$0xff]
    %v6776 = vld [vmem:[%s6764 + $0x58] sm:$0xff]
    %v6777 = vld [vmem:[%s6764 + $0x60] sm:$0xff]
    %v6778 = vld [vmem:[%s6764 + $0x68] sm:$0xff]
    %v6779 = vld [vmem:[%s6764 + $0x70] sm:$0xff]
    %v6780 = vld [vmem:[%s6764 + $0x78] sm:$0xff]
    %v6781 = vld [vmem:[%s6764 + $0x80] sm:$0xff]
    %v6782 = vld [vmem:[%s6764 + $0x88] sm:$0xff]
    %v6783 = vld [vmem:[%s6764 + $0x90] sm:$0xff]
    %v6784 = vld [vmem:[%s6764 + $0x98] sm:$0xff]
    %v6785 = vld [vmem:[%s6764 + $0xa0] sm:$0xff]
    %v6786 = vld [vmem:[%s6764 + $0xa8] sm:$0xff]
    %v6787 = vld [vmem:[%s6764 + $0xb0] sm:$0xff]
    %v6788 = vld [vmem:[%s6764 + $0xb8] sm:$0xff]
    %v6789 = vld [vmem:[%s6764 + $0xc0] sm:$0xff]
    %v6790 = vld [vmem:[%s6764 + $0xc8] sm:$0xff]
    %v6791 = vld [vmem:[%s6764 + $0xd0] sm:$0xff]
    %v6792 = vld [vmem:[%s6764 + $0xd8] sm:$0xff]
    %v6793 = vld [vmem:[%s6764 + $0xe0] sm:$0xff]
    %v6794 = vld [vmem:[%s6764 + $0xe8] sm:$0xff]
    %v6795 = vld [vmem:[%s6764 + $0xf0] sm:$0xff]
    %v6796 = vld [vmem:[%s6764 + $0xf8] sm:$0xff]
    %v6797 = vpack.c.bf16 %v6762, %v6762
    %v6798 = vpack.c.bf16 %v6763, %v6763
    %s6799 = scalar_lea.vmem [#allocation17], 34
    %v6800 = vld [vmem:[%s6799] ss:$8 sm:$0x3]
    %v6802 = vlaneseq
    %v6803 = vshrl.u32 %v6802, 7
    %v6804 = vsub.s32 0, %v6803
    %v6805 = vrot.slane %v6800, %v6804
    %v6806 = vlaneseq
    %v6807 = vshrl.u32 %v6806, 7
    %v6808 = vsub.s32 1, %v6807
    %v6809 = vrot.slane %v6800, %v6808
    %v6844 = vunpack.c.l.b16 %v6765
    %v6845 = vunpack.c.h.b16 %v6765
    %v6846 = vunpack.c.l.b16 %v6766
    %v6847 = vunpack.c.h.b16 %v6766
    %v6848 = vunpack.c.l.b16 %v6767
    %v6849 = vunpack.c.h.b16 %v6767
    %v6850 = vunpack.c.l.b16 %v6768
    %v6851 = vunpack.c.h.b16 %v6768
    %v6852 = vunpack.c.l.b16 %v6769
    %v6853 = vunpack.c.h.b16 %v6769
    %v6854 = vunpack.c.l.b16 %v6770
    %v6855 = vunpack.c.h.b16 %v6770
    %v6856 = vunpack.c.l.b16 %v6771
    %v6857 = vunpack.c.h.b16 %v6771
    %v6858 = vunpack.c.l.b16 %v6772
    %v6859 = vunpack.c.h.b16 %v6772
    %v6860 = vunpack.c.l.b16 %v6773
    %v6861 = vunpack.c.h.b16 %v6773
    %v6862 = vunpack.c.l.b16 %v6774
    %v6863 = vunpack.c.h.b16 %v6774
    %v6864 = vunpack.c.l.b16 %v6775
    %v6865 = vunpack.c.h.b16 %v6775
    %v6866 = vunpack.c.l.b16 %v6776
    %v6867 = vunpack.c.h.b16 %v6776
    %v6868 = vunpack.c.l.b16 %v6777
    %v6869 = vunpack.c.h.b16 %v6777
    %v6870 = vunpack.c.l.b16 %v6778
    %v6871 = vunpack.c.h.b16 %v6778
    %v6872 = vunpack.c.l.b16 %v6779
    %v6873 = vunpack.c.h.b16 %v6779
    %v6874 = vunpack.c.l.b16 %v6780
    %v6875 = vunpack.c.h.b16 %v6780
    %v6876 = vunpack.c.l.b16 %v6781
    %v6877 = vunpack.c.h.b16 %v6781
    %v6878 = vunpack.c.l.b16 %v6782
    %v6879 = vunpack.c.h.b16 %v6782
    %v6880 = vunpack.c.l.b16 %v6783
    %v6881 = vunpack.c.h.b16 %v6783
    %v6882 = vunpack.c.l.b16 %v6784
    %v6883 = vunpack.c.h.b16 %v6784
    %v6884 = vunpack.c.l.b16 %v6785
    %v6885 = vunpack.c.h.b16 %v6785
    %v6886 = vunpack.c.l.b16 %v6786
    %v6887 = vunpack.c.h.b16 %v6786
    %v6888 = vunpack.c.l.b16 %v6787
    %v6889 = vunpack.c.h.b16 %v6787
    %v6890 = vunpack.c.l.b16 %v6788
    %v6891 = vunpack.c.h.b16 %v6788
    %v6892 = vunpack.c.l.b16 %v6789
    %v6893 = vunpack.c.h.b16 %v6789
    %v6894 = vunpack.c.l.b16 %v6790
    %v6895 = vunpack.c.h.b16 %v6790
    %v6896 = vunpack.c.l.b16 %v6791
    %v6897 = vunpack.c.h.b16 %v6791
    %v6898 = vunpack.c.l.b16 %v6792
    %v6899 = vunpack.c.h.b16 %v6792
    %v6900 = vunpack.c.l.b16 %v6793
    %v6901 = vunpack.c.h.b16 %v6793
    %v6902 = vunpack.c.l.b16 %v6794
    %v6903 = vunpack.c.h.b16 %v6794
    %v6904 = vunpack.c.l.b16 %v6795
    %v6905 = vunpack.c.h.b16 %v6795
    %v6906 = vunpack.c.l.b16 %v6796
    %v6907 = vunpack.c.h.b16 %v6796
    %v6908 = vpack.c.b16 %v6846, %v6844
    %v6909 = vpack.c.b16 %v6847, %v6845
    %v6910 = vpack.c.b16 %v6850, %v6848
    %v6911 = vpack.c.b16 %v6851, %v6849
    %v6912 = vpack.c.b16 %v6854, %v6852
    %v6913 = vpack.c.b16 %v6855, %v6853
    %v6914 = vpack.c.b16 %v6858, %v6856
    %v6915 = vpack.c.b16 %v6859, %v6857
    %v6916 = vpack.c.b16 %v6862, %v6860
    %v6917 = vpack.c.b16 %v6863, %v6861
    %v6918 = vpack.c.b16 %v6866, %v6864
    %v6919 = vpack.c.b16 %v6867, %v6865
    %v6920 = vpack.c.b16 %v6870, %v6868
    %v6921 = vpack.c.b16 %v6871, %v6869
    %v6922 = vpack.c.b16 %v6874, %v6872
    %v6923 = vpack.c.b16 %v6875, %v6873
    %v6924 = vpack.c.b16 %v6878, %v6876
    %v6925 = vpack.c.b16 %v6879, %v6877
    %v6926 = vpack.c.b16 %v6882, %v6880
    %v6927 = vpack.c.b16 %v6883, %v6881
    %v6928 = vpack.c.b16 %v6886, %v6884
    %v6929 = vpack.c.b16 %v6887, %v6885
    %v6930 = vpack.c.b16 %v6890, %v6888
    %v6931 = vpack.c.b16 %v6891, %v6889
    %v6932 = vpack.c.b16 %v6894, %v6892
    %v6933 = vpack.c.b16 %v6895, %v6893
    %v6934 = vpack.c.b16 %v6898, %v6896
    %v6935 = vpack.c.b16 %v6899, %v6897
    %v6936 = vpack.c.b16 %v6902, %v6900
    %v6937 = vpack.c.b16 %v6903, %v6901
    %v6938 = vpack.c.b16 %v6906, %v6904
    %v6939 = vpack.c.b16 %v6907, %v6905
    %6972 = vmatprep.subr.bf16.mxu0 %v6923
    %6973 = vmatpush1.bf16.msra.mxu0 %v6922
    %6974 = vmatprep.subr.bf16.mxu0 %v6921
    %6975 = vmatpush1.bf16.msra.mxu0 %v6920
    %6976 = vmatprep.subr.bf16.mxu0 %v6919
    %6977 = vmatpush1.bf16.msra.mxu0 %v6918
    %6978 = vmatprep.subr.bf16.mxu0 %v6917
    %6979 = vmatpush1.bf16.msra.mxu0 %v6916
    %6980 = vmatprep.subr.bf16.mxu0 %v6915
    %6981 = vmatpush1.bf16.msra.mxu0 %v6914
    %6982 = vmatprep.subr.bf16.mxu0 %v6913
    %6983 = vmatpush1.bf16.msra.mxu0 %v6912
    %6984 = vmatprep.subr.bf16.mxu0 %v6911
    %6985 = vmatpush1.bf16.msra.mxu0 %v6910
    %6986 = vmatprep.subr.bf16.mxu0 %v6909
    %6987 = vmatpush1.bf16.msra.mxu0 %v6908
    %6988 = vmatprep.subr.bf16.mxu0 %v6939
    %6989 = vmatpush2.bf16.msra.mxu0 %v6938
    %6990 = vmatprep.subr.bf16.mxu0 %v6937
    %6991 = vmatpush2.bf16.msra.mxu0 %v6936
    %6992 = vmatprep.subr.bf16.mxu0 %v6935
    %6993 = vmatpush2.bf16.msra.mxu0 %v6934
    %6994 = vmatprep.subr.bf16.mxu0 %v6933
    %6995 = vmatpush2.bf16.msra.mxu0 %v6932
    %6996 = vmatprep.subr.bf16.mxu0 %v6931
    %6997 = vmatpush2.bf16.msra.mxu0 %v6930
    %6998 = vmatprep.subr.bf16.mxu0 %v6929
    %6999 = vmatpush2.bf16.msra.mxu0 %v6928
    %7000 = vmatprep.subr.bf16.mxu0 %v6927
    %7001 = vmatpush2.bf16.msra.mxu0 %v6926
    %7002 = vmatprep.subr.bf16.mxu0 %v6925
    %7003 = vmatpush2.bf16.msra.mxu0 %v6924
    %7004 = vmatprep.mubr.bf16.mxu0 %v6798
    %7005 = vmatmul.mubr.bf16.gmra.mxu0 %v6797
    %v7006 = vpop.f32.mrf.mxu0
    %v7007 = vadd.f32 %v6805, %v7006
    %v7008 = vpop.f32.mrf.mxu0
    %v7009 = vadd.f32 %v6809, %v7008
    %v7010 = vpop.f32.mrf.mxu0
    %v7011 = vpop.f32.mrf.mxu0
    %7012 = vdwg.mxu0
    %v7013 = vadd.f32 %v7007, %v6240
    %v7014 = vadd.f32 %v7009, %v6241
    %s7015 = scalar_lea.vmem [#allocation2], 1280
    %v7016 = vld [vmem:[%s7015] sm:$0xff]
    %v7017 = vld [vmem:[%s7015 + $0x8] sm:$0xff]
    %v7018 = vld [vmem:[%s7015 + $0x10] sm:$0xff]
    %v7019 = vld [vmem:[%s7015 + $0x18] sm:$0xff]
    %v7020 = vld [vmem:[%s7015 + $0x20] sm:$0xff]
    %v7021 = vld [vmem:[%s7015 + $0x28] sm:$0xff]
    %v7022 = vld [vmem:[%s7015 + $0x30] sm:$0xff]
    %v7023 = vld [vmem:[%s7015 + $0x38] sm:$0xff]
    %v7024 = vld [vmem:[%s7015 + $0x40] sm:$0xff]
    %v7025 = vld [vmem:[%s7015 + $0x48] sm:$0xff]
    %v7026 = vld [vmem:[%s7015 + $0x50] sm:$0xff]
    %v7027 = vld [vmem:[%s7015 + $0x58] sm:$0xff]
    %v7028 = vld [vmem:[%s7015 + $0x60] sm:$0xff]
    %v7029 = vld [vmem:[%s7015 + $0x68] sm:$0xff]
    %v7030 = vld [vmem:[%s7015 + $0x70] sm:$0xff]
    %v7031 = vld [vmem:[%s7015 + $0x78] sm:$0xff]
    %v7032 = vld [vmem:[%s7015 + $0x80] sm:$0xff]
    %v7033 = vld [vmem:[%s7015 + $0x88] sm:$0xff]
    %v7034 = vld [vmem:[%s7015 + $0x90] sm:$0xff]
    %v7035 = vld [vmem:[%s7015 + $0x98] sm:$0xff]
    %v7036 = vld [vmem:[%s7015 + $0xa0] sm:$0xff]
    %v7037 = vld [vmem:[%s7015 + $0xa8] sm:$0xff]
    %v7038 = vld [vmem:[%s7015 + $0xb0] sm:$0xff]
    %v7039 = vld [vmem:[%s7015 + $0xb8] sm:$0xff]
    %v7040 = vld [vmem:[%s7015 + $0xc0] sm:$0xff]
    %v7041 = vld [vmem:[%s7015 + $0xc8] sm:$0xff]
    %v7042 = vld [vmem:[%s7015 + $0xd0] sm:$0xff]
    %v7043 = vld [vmem:[%s7015 + $0xd8] sm:$0xff]
    %v7044 = vld [vmem:[%s7015 + $0xe0] sm:$0xff]
    %v7045 = vld [vmem:[%s7015 + $0xe8] sm:$0xff]
    %v7046 = vld [vmem:[%s7015 + $0xf0] sm:$0xff]
    %v7047 = vld [vmem:[%s7015 + $0xf8] sm:$0xff]
    %v7048 = vpack.c.bf16 %v7013, %v7013
    %v7049 = vpack.c.bf16 %v7014, %v7014
    %v7082 = vunpack.c.l.b16 %v7016
    %v7083 = vunpack.c.h.b16 %v7016
    %v7084 = vunpack.c.l.b16 %v7017
    %v7085 = vunpack.c.h.b16 %v7017
    %v7086 = vunpack.c.l.b16 %v7018
    %v7087 = vunpack.c.h.b16 %v7018
    %v7088 = vunpack.c.l.b16 %v7019
    %v7089 = vunpack.c.h.b16 %v7019
    %v7090 = vunpack.c.l.b16 %v7020
    %v7091 = vunpack.c.h.b16 %v7020
    %v7092 = vunpack.c.l.b16 %v7021
    %v7093 = vunpack.c.h.b16 %v7021
    %v7094 = vunpack.c.l.b16 %v7022
    %v7095 = vunpack.c.h.b16 %v7022
    %v7096 = vunpack.c.l.b16 %v7023
    %v7097 = vunpack.c.h.b16 %v7023
    %v7098 = vunpack.c.l.b16 %v7024
    %v7099 = vunpack.c.h.b16 %v7024
    %v7100 = vunpack.c.l.b16 %v7025
    %v7101 = vunpack.c.h.b16 %v7025
    %v7102 = vunpack.c.l.b16 %v7026
    %v7103 = vunpack.c.h.b16 %v7026
    %v7104 = vunpack.c.l.b16 %v7027
    %v7105 = vunpack.c.h.b16 %v7027
    %v7106 = vunpack.c.l.b16 %v7028
    %v7107 = vunpack.c.h.b16 %v7028
    %v7108 = vunpack.c.l.b16 %v7029
    %v7109 = vunpack.c.h.b16 %v7029
    %v7110 = vunpack.c.l.b16 %v7030
    %v7111 = vunpack.c.h.b16 %v7030
    %v7112 = vunpack.c.l.b16 %v7031
    %v7113 = vunpack.c.h.b16 %v7031
    %v7114 = vunpack.c.l.b16 %v7032
    %v7115 = vunpack.c.h.b16 %v7032
    %v7116 = vunpack.c.l.b16 %v7033
    %v7117 = vunpack.c.h.b16 %v7033
    %v7118 = vunpack.c.l.b16 %v7034
    %v7119 = vunpack.c.h.b16 %v7034
    %v7120 = vunpack.c.l.b16 %v7035
    %v7121 = vunpack.c.h.b16 %v7035
    %v7122 = vunpack.c.l.b16 %v7036
    %v7123 = vunpack.c.h.b16 %v7036
    %v7124 = vunpack.c.l.b16 %v7037
    %v7125 = vunpack.c.h.b16 %v7037
    %v7126 = vunpack.c.l.b16 %v7038
    %v7127 = vunpack.c.h.b16 %v7038
    %v7128 = vunpack.c.l.b16 %v7039
    %v7129 = vunpack.c.h.b16 %v7039
    %v7130 = vunpack.c.l.b16 %v7040
    %v7131 = vunpack.c.h.b16 %v7040
    %v7132 = vunpack.c.l.b16 %v7041
    %v7133 = vunpack.c.h.b16 %v7041
    %v7134 = vunpack.c.l.b16 %v7042
    %v7135 = vunpack.c.h.b16 %v7042
    %v7136 = vunpack.c.l.b16 %v7043
    %v7137 = vunpack.c.h.b16 %v7043
    %v7138 = vunpack.c.l.b16 %v7044
    %v7139 = vunpack.c.h.b16 %v7044
    %v7140 = vunpack.c.l.b16 %v7045
    %v7141 = vunpack.c.h.b16 %v7045
    %v7142 = vunpack.c.l.b16 %v7046
    %v7143 = vunpack.c.h.b16 %v7046
    %v7144 = vunpack.c.l.b16 %v7047
    %v7145 = vunpack.c.h.b16 %v7047
    %v7146 = vpack.c.b16 %v7084, %v7082
    %v7147 = vpack.c.b16 %v7085, %v7083
    %v7148 = vpack.c.b16 %v7088, %v7086
    %v7149 = vpack.c.b16 %v7089, %v7087
    %v7150 = vpack.c.b16 %v7092, %v7090
    %v7151 = vpack.c.b16 %v7093, %v7091
    %v7152 = vpack.c.b16 %v7096, %v7094
    %v7153 = vpack.c.b16 %v7097, %v7095
    %v7154 = vpack.c.b16 %v7100, %v7098
    %v7155 = vpack.c.b16 %v7101, %v7099
    %v7156 = vpack.c.b16 %v7104, %v7102
    %v7157 = vpack.c.b16 %v7105, %v7103
    %v7158 = vpack.c.b16 %v7108, %v7106
    %v7159 = vpack.c.b16 %v7109, %v7107
    %v7160 = vpack.c.b16 %v7112, %v7110
    %v7161 = vpack.c.b16 %v7113, %v7111
    %v7162 = vpack.c.b16 %v7116, %v7114
    %v7163 = vpack.c.b16 %v7117, %v7115
    %v7164 = vpack.c.b16 %v7120, %v7118
    %v7165 = vpack.c.b16 %v7121, %v7119
    %v7166 = vpack.c.b16 %v7124, %v7122
    %v7167 = vpack.c.b16 %v7125, %v7123
    %v7168 = vpack.c.b16 %v7128, %v7126
    %v7169 = vpack.c.b16 %v7129, %v7127
    %v7170 = vpack.c.b16 %v7132, %v7130
    %v7171 = vpack.c.b16 %v7133, %v7131
    %v7172 = vpack.c.b16 %v7136, %v7134
    %v7173 = vpack.c.b16 %v7137, %v7135
    %v7174 = vpack.c.b16 %v7140, %v7138
    %v7175 = vpack.c.b16 %v7141, %v7139
    %v7176 = vpack.c.b16 %v7144, %v7142
    %v7177 = vpack.c.b16 %v7145, %v7143
    %7210 = vmatprep.subr.bf16.mxu0 %v7161
    %7211 = vmatpush1.bf16.msra.mxu0 %v7160
    %7212 = vmatprep.subr.bf16.mxu0 %v7159
    %7213 = vmatpush1.bf16.msra.mxu0 %v7158
    %7214 = vmatprep.subr.bf16.mxu0 %v7157
    %7215 = vmatpush1.bf16.msra.mxu0 %v7156
    %7216 = vmatprep.subr.bf16.mxu0 %v7155
    %7217 = vmatpush1.bf16.msra.mxu0 %v7154
    %7218 = vmatprep.subr.bf16.mxu0 %v7153
    %7219 = vmatpush1.bf16.msra.mxu0 %v7152
    %7220 = vmatprep.subr.bf16.mxu0 %v7151
    %7221 = vmatpush1.bf16.msra.mxu0 %v7150
    %7222 = vmatprep.subr.bf16.mxu0 %v7149
    %7223 = vmatpush1.bf16.msra.mxu0 %v7148
    %7224 = vmatprep.subr.bf16.mxu0 %v7147
    %7225 = vmatpush1.bf16.msra.mxu0 %v7146
    %7226 = vmatprep.subr.bf16.mxu0 %v7177
    %7227 = vmatpush2.bf16.msra.mxu0 %v7176
    %7228 = vmatprep.subr.bf16.mxu0 %v7175
    %7229 = vmatpush2.bf16.msra.mxu0 %v7174
    %7230 = vmatprep.subr.bf16.mxu0 %v7173
    %7231 = vmatpush2.bf16.msra.mxu0 %v7172
    %7232 = vmatprep.subr.bf16.mxu0 %v7171
    %7233 = vmatpush2.bf16.msra.mxu0 %v7170
    %7234 = vmatprep.subr.bf16.mxu0 %v7169
    %7235 = vmatpush2.bf16.msra.mxu0 %v7168
    %7236 = vmatprep.subr.bf16.mxu0 %v7167
    %7237 = vmatpush2.bf16.msra.mxu0 %v7166
    %7238 = vmatprep.subr.bf16.mxu0 %v7165
    %7239 = vmatpush2.bf16.msra.mxu0 %v7164
    %7240 = vmatprep.subr.bf16.mxu0 %v7163
    %7241 = vmatpush2.bf16.msra.mxu0 %v7162
    %7242 = vmatprep.mubr.bf16.mxu0 %v7049
    %7243 = vmatmul.mubr.bf16.gmra.mxu0 %v7048
    %v7244 = vpop.f32.mrf.mxu0
    %v7245 = vadd.f32 %v2098, %v7244
    %v7246 = vpop.f32.mrf.mxu0
    %v7247 = vadd.f32 %v2100, %v7246
    %v7248 = vpop.f32.mrf.mxu0
    %v7249 = vpop.f32.mrf.mxu0
    %7250 = vdwg.mxu0
    %s7251 = scalar_lea.vmem [#allocation17], 19
    %v7252 = vld [vmem:[%s7251] ss:$8 sm:$0x3]
    %v7254 = vlaneseq
    %v7255 = vshrl.u32 %v7254, 7
    %v7256 = vsub.s32 0, %v7255
    %v7257 = vrot.slane %v7252, %v7256
    %v7258 = vlaneseq
    %v7259 = vshrl.u32 %v7258, 7
    %v7260 = vsub.s32 1, %v7259
    %v7261 = vrot.slane %v7252, %v7260
    %v7264 = vadd.f32 %v7245, %v7257
    %v7265 = vadd.f32 %v7247, %v7261
    %v7266 = vmul.f32 %v7264, 0.5
    %v7267 = vmul.f32 %v7265, 0.5
    %v7268 = vtanh.pop %v7266
    %v7269 = vtanh.pop %v7267
    %v7270 = vadd.f32 %v7268, 1.0
    %v7271 = vadd.f32 %v7269, 1.0
    %v7272 = vmul.f32 %v7270, 0.5
    %v7273 = vmul.f32 %v7271, 0.5
    %v7274 = vmul.f32 %v7264, %v7272
    %v7275 = vmul.f32 %v7265, %v7273
    %s7276 = scalar_lea.vmem [#allocation2], 1536
    %v7277 = vld [vmem:[%s7276] sm:$0xff]
    %v7278 = vld [vmem:[%s7276 + $0x8] sm:$0xff]
    %v7279 = vld [vmem:[%s7276 + $0x10] sm:$0xff]
    %v7280 = vld [vmem:[%s7276 + $0x18] sm:$0xff]
    %v7281 = vld [vmem:[%s7276 + $0x20] sm:$0xff]
    %v7282 = vld [vmem:[%s7276 + $0x28] sm:$0xff]
    %v7283 = vld [vmem:[%s7276 + $0x30] sm:$0xff]
    %v7284 = vld [vmem:[%s7276 + $0x38] sm:$0xff]
    %v7285 = vld [vmem:[%s7276 + $0x40] sm:$0xff]
    %v7286 = vld [vmem:[%s7276 + $0x48] sm:$0xff]
    %v7287 = vld [vmem:[%s7276 + $0x50] sm:$0xff]
    %v7288 = vld [vmem:[%s7276 + $0x58] sm:$0xff]
    %v7289 = vld [vmem:[%s7276 + $0x60] sm:$0xff]
    %v7290 = vld [vmem:[%s7276 + $0x68] sm:$0xff]
    %v7291 = vld [vmem:[%s7276 + $0x70] sm:$0xff]
    %v7292 = vld [vmem:[%s7276 + $0x78] sm:$0xff]
    %v7293 = vld [vmem:[%s7276 + $0x80] sm:$0xff]
    %v7294 = vld [vmem:[%s7276 + $0x88] sm:$0xff]
    %v7295 = vld [vmem:[%s7276 + $0x90] sm:$0xff]
    %v7296 = vld [vmem:[%s7276 + $0x98] sm:$0xff]
    %v7297 = vld [vmem:[%s7276 + $0xa0] sm:$0xff]
    %v7298 = vld [vmem:[%s7276 + $0xa8] sm:$0xff]
    %v7299 = vld [vmem:[%s7276 + $0xb0] sm:$0xff]
    %v7300 = vld [vmem:[%s7276 + $0xb8] sm:$0xff]
    %v7301 = vld [vmem:[%s7276 + $0xc0] sm:$0xff]
    %v7302 = vld [vmem:[%s7276 + $0xc8] sm:$0xff]
    %v7303 = vld [vmem:[%s7276 + $0xd0] sm:$0xff]
    %v7304 = vld [vmem:[%s7276 + $0xd8] sm:$0xff]
    %v7305 = vld [vmem:[%s7276 + $0xe0] sm:$0xff]
    %v7306 = vld [vmem:[%s7276 + $0xe8] sm:$0xff]
    %v7307 = vld [vmem:[%s7276 + $0xf0] sm:$0xff]
    %v7308 = vld [vmem:[%s7276 + $0xf8] sm:$0xff]
    %v7309 = vpack.c.bf16 %v7274, %v7274
    %v7310 = vpack.c.bf16 %v7275, %v7275
    %v7343 = vunpack.c.l.b16 %v7277
    %v7344 = vunpack.c.h.b16 %v7277
    %v7345 = vunpack.c.l.b16 %v7278
    %v7346 = vunpack.c.h.b16 %v7278
    %v7347 = vunpack.c.l.b16 %v7279
    %v7348 = vunpack.c.h.b16 %v7279
    %v7349 = vunpack.c.l.b16 %v7280
    %v7350 = vunpack.c.h.b16 %v7280
    %v7351 = vunpack.c.l.b16 %v7281
    %v7352 = vunpack.c.h.b16 %v7281
    %v7353 = vunpack.c.l.b16 %v7282
    %v7354 = vunpack.c.h.b16 %v7282
    %v7355 = vunpack.c.l.b16 %v7283
    %v7356 = vunpack.c.h.b16 %v7283
    %v7357 = vunpack.c.l.b16 %v7284
    %v7358 = vunpack.c.h.b16 %v7284
    %v7359 = vunpack.c.l.b16 %v7285
    %v7360 = vunpack.c.h.b16 %v7285
    %v7361 = vunpack.c.l.b16 %v7286
    %v7362 = vunpack.c.h.b16 %v7286
    %v7363 = vunpack.c.l.b16 %v7287
    %v7364 = vunpack.c.h.b16 %v7287
    %v7365 = vunpack.c.l.b16 %v7288
    %v7366 = vunpack.c.h.b16 %v7288
    %v7367 = vunpack.c.l.b16 %v7289
    %v7368 = vunpack.c.h.b16 %v7289
    %v7369 = vunpack.c.l.b16 %v7290
    %v7370 = vunpack.c.h.b16 %v7290
    %v7371 = vunpack.c.l.b16 %v7291
    %v7372 = vunpack.c.h.b16 %v7291
    %v7373 = vunpack.c.l.b16 %v7292
    %v7374 = vunpack.c.h.b16 %v7292
    %v7375 = vunpack.c.l.b16 %v7293
    %v7376 = vunpack.c.h.b16 %v7293
    %v7377 = vunpack.c.l.b16 %v7294
    %v7378 = vunpack.c.h.b16 %v7294
    %v7379 = vunpack.c.l.b16 %v7295
    %v7380 = vunpack.c.h.b16 %v7295
    %v7381 = vunpack.c.l.b16 %v7296
    %v7382 = vunpack.c.h.b16 %v7296
    %v7383 = vunpack.c.l.b16 %v7297
    %v7384 = vunpack.c.h.b16 %v7297
    %v7385 = vunpack.c.l.b16 %v7298
    %v7386 = vunpack.c.h.b16 %v7298
    %v7387 = vunpack.c.l.b16 %v7299
    %v7388 = vunpack.c.h.b16 %v7299
    %v7389 = vunpack.c.l.b16 %v7300
    %v7390 = vunpack.c.h.b16 %v7300
    %v7391 = vunpack.c.l.b16 %v7301
    %v7392 = vunpack.c.h.b16 %v7301
    %v7393 = vunpack.c.l.b16 %v7302
    %v7394 = vunpack.c.h.b16 %v7302
    %v7395 = vunpack.c.l.b16 %v7303
    %v7396 = vunpack.c.h.b16 %v7303
    %v7397 = vunpack.c.l.b16 %v7304
    %v7398 = vunpack.c.h.b16 %v7304
    %v7399 = vunpack.c.l.b16 %v7305
    %v7400 = vunpack.c.h.b16 %v7305
    %v7401 = vunpack.c.l.b16 %v7306
    %v7402 = vunpack.c.h.b16 %v7306
    %v7403 = vunpack.c.l.b16 %v7307
    %v7404 = vunpack.c.h.b16 %v7307
    %v7405 = vunpack.c.l.b16 %v7308
    %v7406 = vunpack.c.h.b16 %v7308
    %v7407 = vpack.c.b16 %v7345, %v7343
    %v7408 = vpack.c.b16 %v7346, %v7344
    %v7409 = vpack.c.b16 %v7349, %v7347
    %v7410 = vpack.c.b16 %v7350, %v7348
    %v7411 = vpack.c.b16 %v7353, %v7351
    %v7412 = vpack.c.b16 %v7354, %v7352
    %v7413 = vpack.c.b16 %v7357, %v7355
    %v7414 = vpack.c.b16 %v7358, %v7356
    %v7415 = vpack.c.b16 %v7361, %v7359
    %v7416 = vpack.c.b16 %v7362, %v7360
    %v7417 = vpack.c.b16 %v7365, %v7363
    %v7418 = vpack.c.b16 %v7366, %v7364
    %v7419 = vpack.c.b16 %v7369, %v7367
    %v7420 = vpack.c.b16 %v7370, %v7368
    %v7421 = vpack.c.b16 %v7373, %v7371
    %v7422 = vpack.c.b16 %v7374, %v7372
    %v7423 = vpack.c.b16 %v7377, %v7375
    %v7424 = vpack.c.b16 %v7378, %v7376
    %v7425 = vpack.c.b16 %v7381, %v7379
    %v7426 = vpack.c.b16 %v7382, %v7380
    %v7427 = vpack.c.b16 %v7385, %v7383
    %v7428 = vpack.c.b16 %v7386, %v7384
    %v7429 = vpack.c.b16 %v7389, %v7387
    %v7430 = vpack.c.b16 %v7390, %v7388
    %v7431 = vpack.c.b16 %v7393, %v7391
    %v7432 = vpack.c.b16 %v7394, %v7392
    %v7433 = vpack.c.b16 %v7397, %v7395
    %v7434 = vpack.c.b16 %v7398, %v7396
    %v7435 = vpack.c.b16 %v7401, %v7399
    %v7436 = vpack.c.b16 %v7402, %v7400
    %v7437 = vpack.c.b16 %v7405, %v7403
    %v7438 = vpack.c.b16 %v7406, %v7404
    %7471 = vmatprep.subr.bf16.mxu0 %v7422
    %7472 = vmatpush1.bf16.msra.mxu0 %v7421
    %7473 = vmatprep.subr.bf16.mxu0 %v7420
    %7474 = vmatpush1.bf16.msra.mxu0 %v7419
    %7475 = vmatprep.subr.bf16.mxu0 %v7418
    %7476 = vmatpush1.bf16.msra.mxu0 %v7417
    %7477 = vmatprep.subr.bf16.mxu0 %v7416
    %7478 = vmatpush1.bf16.msra.mxu0 %v7415
    %7479 = vmatprep.subr.bf16.mxu0 %v7414
    %7480 = vmatpush1.bf16.msra.mxu0 %v7413
    %7481 = vmatprep.subr.bf16.mxu0 %v7412
    %7482 = vmatpush1.bf16.msra.mxu0 %v7411
    %7483 = vmatprep.subr.bf16.mxu0 %v7410
    %7484 = vmatpush1.bf16.msra.mxu0 %v7409
    %7485 = vmatprep.subr.bf16.mxu0 %v7408
    %7486 = vmatpush1.bf16.msra.mxu0 %v7407
    %7487 = vmatprep.subr.bf16.mxu0 %v7438
    %7488 = vmatpush2.bf16.msra.mxu0 %v7437
    %7489 = vmatprep.subr.bf16.mxu0 %v7436
    %7490 = vmatpush2.bf16.msra.mxu0 %v7435
    %7491 = vmatprep.subr.bf16.mxu0 %v7434
    %7492 = vmatpush2.bf16.msra.mxu0 %v7433
    %7493 = vmatprep.subr.bf16.mxu0 %v7432
    %7494 = vmatpush2.bf16.msra.mxu0 %v7431
    %7495 = vmatprep.subr.bf16.mxu0 %v7430
    %7496 = vmatpush2.bf16.msra.mxu0 %v7429
    %7497 = vmatprep.subr.bf16.mxu0 %v7428
    %7498 = vmatpush2.bf16.msra.mxu0 %v7427
    %7499 = vmatprep.subr.bf16.mxu0 %v7426
    %7500 = vmatpush2.bf16.msra.mxu0 %v7425
    %7501 = vmatprep.subr.bf16.mxu0 %v7424
    %7502 = vmatpush2.bf16.msra.mxu0 %v7423
    %7503 = vmatprep.mubr.bf16.mxu0 %v7310
    %7504 = vmatmul.mubr.bf16.gmra.mxu0 %v7309
    %v7505 = vpop.f32.mrf.mxu0
    %v7506 = vadd.f32 %v2139, %v7505
    %v7507 = vpop.f32.mrf.mxu0
    %v7508 = vadd.f32 %v2141, %v7507
    %v7509 = vpop.f32.mrf.mxu0
    %v7510 = vpop.f32.mrf.mxu0
    %7511 = vdwg.mxu0
    %s7512 = scalar_lea.vmem [#allocation17], 23
    %v7513 = vld [vmem:[%s7512] ss:$8 sm:$0x3]
    %v7515 = vlaneseq
    %v7516 = vshrl.u32 %v7515, 7
    %v7517 = vsub.s32 0, %v7516
    %v7518 = vrot.slane %v7513, %v7517
    %v7519 = vlaneseq
    %v7520 = vshrl.u32 %v7519, 7
    %v7521 = vsub.s32 1, %v7520
    %v7522 = vrot.slane %v7513, %v7521
    %v7525 = vadd.f32 %v7506, %v7518
    %v7526 = vadd.f32 %v7508, %v7522
    %v7527 = vmul.f32 %v7525, 0.5
    %v7528 = vmul.f32 %v7526, 0.5
    %v7529 = vtanh.pop %v7527
    %v7530 = vtanh.pop %v7528
    %v7531 = vadd.f32 %v7529, 1.0
    %v7532 = vadd.f32 %v7530, 1.0
    %v7533 = vmul.f32 %v7531, 0.5
    %v7534 = vmul.f32 %v7532, 0.5
    %v7535 = vmul.f32 %v7525, %v7533
    %v7536 = vmul.f32 %v7526, %v7534
    %s7537 = scalar_lea.vmem [#allocation2], 1792
    %v7538 = vld [vmem:[%s7537] sm:$0xff]
    %v7539 = vld [vmem:[%s7537 + $0x8] sm:$0xff]
    %v7540 = vld [vmem:[%s7537 + $0x10] sm:$0xff]
    %v7541 = vld [vmem:[%s7537 + $0x18] sm:$0xff]
    %v7542 = vld [vmem:[%s7537 + $0x20] sm:$0xff]
    %v7543 = vld [vmem:[%s7537 + $0x28] sm:$0xff]
    %v7544 = vld [vmem:[%s7537 + $0x30] sm:$0xff]
    %v7545 = vld [vmem:[%s7537 + $0x38] sm:$0xff]
    %v7546 = vld [vmem:[%s7537 + $0x40] sm:$0xff]
    %v7547 = vld [vmem:[%s7537 + $0x48] sm:$0xff]
    %v7548 = vld [vmem:[%s7537 + $0x50] sm:$0xff]
    %v7549 = vld [vmem:[%s7537 + $0x58] sm:$0xff]
    %v7550 = vld [vmem:[%s7537 + $0x60] sm:$0xff]
    %v7551 = vld [vmem:[%s7537 + $0x68] sm:$0xff]
    %v7552 = vld [vmem:[%s7537 + $0x70] sm:$0xff]
    %v7553 = vld [vmem:[%s7537 + $0x78] sm:$0xff]
    %v7554 = vld [vmem:[%s7537 + $0x80] sm:$0xff]
    %v7555 = vld [vmem:[%s7537 + $0x88] sm:$0xff]
    %v7556 = vld [vmem:[%s7537 + $0x90] sm:$0xff]
    %v7557 = vld [vmem:[%s7537 + $0x98] sm:$0xff]
    %v7558 = vld [vmem:[%s7537 + $0xa0] sm:$0xff]
    %v7559 = vld [vmem:[%s7537 + $0xa8] sm:$0xff]
    %v7560 = vld [vmem:[%s7537 + $0xb0] sm:$0xff]
    %v7561 = vld [vmem:[%s7537 + $0xb8] sm:$0xff]
    %v7562 = vld [vmem:[%s7537 + $0xc0] sm:$0xff]
    %v7563 = vld [vmem:[%s7537 + $0xc8] sm:$0xff]
    %v7564 = vld [vmem:[%s7537 + $0xd0] sm:$0xff]
    %v7565 = vld [vmem:[%s7537 + $0xd8] sm:$0xff]
    %v7566 = vld [vmem:[%s7537 + $0xe0] sm:$0xff]
    %v7567 = vld [vmem:[%s7537 + $0xe8] sm:$0xff]
    %v7568 = vld [vmem:[%s7537 + $0xf0] sm:$0xff]
    %v7569 = vld [vmem:[%s7537 + $0xf8] sm:$0xff]
    %v7570 = vpack.c.bf16 %v7535, %v7535
    %v7571 = vpack.c.bf16 %v7536, %v7536
    %s7572 = scalar_lea.vmem [#allocation17], 35
    %v7573 = vld [vmem:[%s7572] ss:$8 sm:$0x3]
    %v7575 = vlaneseq
    %v7576 = vshrl.u32 %v7575, 7
    %v7577 = vsub.s32 0, %v7576
    %v7578 = vrot.slane %v7573, %v7577
    %v7579 = vlaneseq
    %v7580 = vshrl.u32 %v7579, 7
    %v7581 = vsub.s32 1, %v7580
    %v7582 = vrot.slane %v7573, %v7581
    %v7617 = vunpack.c.l.b16 %v7538
    %v7618 = vunpack.c.h.b16 %v7538
    %v7619 = vunpack.c.l.b16 %v7539
    %v7620 = vunpack.c.h.b16 %v7539
    %v7621 = vunpack.c.l.b16 %v7540
    %v7622 = vunpack.c.h.b16 %v7540
    %v7623 = vunpack.c.l.b16 %v7541
    %v7624 = vunpack.c.h.b16 %v7541
    %v7625 = vunpack.c.l.b16 %v7542
    %v7626 = vunpack.c.h.b16 %v7542
    %v7627 = vunpack.c.l.b16 %v7543
    %v7628 = vunpack.c.h.b16 %v7543
    %v7629 = vunpack.c.l.b16 %v7544
    %v7630 = vunpack.c.h.b16 %v7544
    %v7631 = vunpack.c.l.b16 %v7545
    %v7632 = vunpack.c.h.b16 %v7545
    %v7633 = vunpack.c.l.b16 %v7546
    %v7634 = vunpack.c.h.b16 %v7546
    %v7635 = vunpack.c.l.b16 %v7547
    %v7636 = vunpack.c.h.b16 %v7547
    %v7637 = vunpack.c.l.b16 %v7548
    %v7638 = vunpack.c.h.b16 %v7548
    %v7639 = vunpack.c.l.b16 %v7549
    %v7640 = vunpack.c.h.b16 %v7549
    %v7641 = vunpack.c.l.b16 %v7550
    %v7642 = vunpack.c.h.b16 %v7550
    %v7643 = vunpack.c.l.b16 %v7551
    %v7644 = vunpack.c.h.b16 %v7551
    %v7645 = vunpack.c.l.b16 %v7552
    %v7646 = vunpack.c.h.b16 %v7552
    %v7647 = vunpack.c.l.b16 %v7553
    %v7648 = vunpack.c.h.b16 %v7553
    %v7649 = vunpack.c.l.b16 %v7554
    %v7650 = vunpack.c.h.b16 %v7554
    %v7651 = vunpack.c.l.b16 %v7555
    %v7652 = vunpack.c.h.b16 %v7555
    %v7653 = vunpack.c.l.b16 %v7556
    %v7654 = vunpack.c.h.b16 %v7556
    %v7655 = vunpack.c.l.b16 %v7557
    %v7656 = vunpack.c.h.b16 %v7557
    %v7657 = vunpack.c.l.b16 %v7558
    %v7658 = vunpack.c.h.b16 %v7558
    %v7659 = vunpack.c.l.b16 %v7559
    %v7660 = vunpack.c.h.b16 %v7559
    %v7661 = vunpack.c.l.b16 %v7560
    %v7662 = vunpack.c.h.b16 %v7560
    %v7663 = vunpack.c.l.b16 %v7561
    %v7664 = vunpack.c.h.b16 %v7561
    %v7665 = vunpack.c.l.b16 %v7562
    %v7666 = vunpack.c.h.b16 %v7562
    %v7667 = vunpack.c.l.b16 %v7563
    %v7668 = vunpack.c.h.b16 %v7563
    %v7669 = vunpack.c.l.b16 %v7564
    %v7670 = vunpack.c.h.b16 %v7564
    %v7671 = vunpack.c.l.b16 %v7565
    %v7672 = vunpack.c.h.b16 %v7565
    %v7673 = vunpack.c.l.b16 %v7566
    %v7674 = vunpack.c.h.b16 %v7566
    %v7675 = vunpack.c.l.b16 %v7567
    %v7676 = vunpack.c.h.b16 %v7567
    %v7677 = vunpack.c.l.b16 %v7568
    %v7678 = vunpack.c.h.b16 %v7568
    %v7679 = vunpack.c.l.b16 %v7569
    %v7680 = vunpack.c.h.b16 %v7569
    %v7681 = vpack.c.b16 %v7619, %v7617
    %v7682 = vpack.c.b16 %v7620, %v7618
    %v7683 = vpack.c.b16 %v7623, %v7621
    %v7684 = vpack.c.b16 %v7624, %v7622
    %v7685 = vpack.c.b16 %v7627, %v7625
    %v7686 = vpack.c.b16 %v7628, %v7626
    %v7687 = vpack.c.b16 %v7631, %v7629
    %v7688 = vpack.c.b16 %v7632, %v7630
    %v7689 = vpack.c.b16 %v7635, %v7633
    %v7690 = vpack.c.b16 %v7636, %v7634
    %v7691 = vpack.c.b16 %v7639, %v7637
    %v7692 = vpack.c.b16 %v7640, %v7638
    %v7693 = vpack.c.b16 %v7643, %v7641
    %v7694 = vpack.c.b16 %v7644, %v7642
    %v7695 = vpack.c.b16 %v7647, %v7645
    %v7696 = vpack.c.b16 %v7648, %v7646
    %v7697 = vpack.c.b16 %v7651, %v7649
    %v7698 = vpack.c.b16 %v7652, %v7650
    %v7699 = vpack.c.b16 %v7655, %v7653
    %v7700 = vpack.c.b16 %v7656, %v7654
    %v7701 = vpack.c.b16 %v7659, %v7657
    %v7702 = vpack.c.b16 %v7660, %v7658
    %v7703 = vpack.c.b16 %v7663, %v7661
    %v7704 = vpack.c.b16 %v7664, %v7662
    %v7705 = vpack.c.b16 %v7667, %v7665
    %v7706 = vpack.c.b16 %v7668, %v7666
    %v7707 = vpack.c.b16 %v7671, %v7669
    %v7708 = vpack.c.b16 %v7672, %v7670
    %v7709 = vpack.c.b16 %v7675, %v7673
    %v7710 = vpack.c.b16 %v7676, %v7674
    %v7711 = vpack.c.b16 %v7679, %v7677
    %v7712 = vpack.c.b16 %v7680, %v7678
    %7745 = vmatprep.subr.bf16.mxu0 %v7696
    %7746 = vmatpush1.bf16.msra.mxu0 %v7695
    %7747 = vmatprep.subr.bf16.mxu0 %v7694
    %7748 = vmatpush1.bf16.msra.mxu0 %v7693
    %7749 = vmatprep.subr.bf16.mxu0 %v7692
    %7750 = vmatpush1.bf16.msra.mxu0 %v7691
    %7751 = vmatprep.subr.bf16.mxu0 %v7690
    %7752 = vmatpush1.bf16.msra.mxu0 %v7689
    %7753 = vmatprep.subr.bf16.mxu0 %v7688
    %7754 = vmatpush1.bf16.msra.mxu0 %v7687
    %7755 = vmatprep.subr.bf16.mxu0 %v7686
    %7756 = vmatpush1.bf16.msra.mxu0 %v7685
    %7757 = vmatprep.subr.bf16.mxu0 %v7684
    %7758 = vmatpush1.bf16.msra.mxu0 %v7683
    %7759 = vmatprep.subr.bf16.mxu0 %v7682
    %7760 = vmatpush1.bf16.msra.mxu0 %v7681
    %7761 = vmatprep.subr.bf16.mxu0 %v7712
    %7762 = vmatpush2.bf16.msra.mxu0 %v7711
    %7763 = vmatprep.subr.bf16.mxu0 %v7710
    %7764 = vmatpush2.bf16.msra.mxu0 %v7709
    %7765 = vmatprep.subr.bf16.mxu0 %v7708
    %7766 = vmatpush2.bf16.msra.mxu0 %v7707
    %7767 = vmatprep.subr.bf16.mxu0 %v7706
    %7768 = vmatpush2.bf16.msra.mxu0 %v7705
    %7769 = vmatprep.subr.bf16.mxu0 %v7704
    %7770 = vmatpush2.bf16.msra.mxu0 %v7703
    %7771 = vmatprep.subr.bf16.mxu0 %v7702
    %7772 = vmatpush2.bf16.msra.mxu0 %v7701
    %7773 = vmatprep.subr.bf16.mxu0 %v7700
    %7774 = vmatpush2.bf16.msra.mxu0 %v7699
    %7775 = vmatprep.subr.bf16.mxu0 %v7698
    %7776 = vmatpush2.bf16.msra.mxu0 %v7697
    %7777 = vmatprep.mubr.bf16.mxu0 %v7571
    %7778 = vmatmul.mubr.bf16.gmra.mxu0 %v7570
    %v7779 = vpop.f32.mrf.mxu0
    %v7780 = vadd.f32 %v7578, %v7779
    %v7781 = vpop.f32.mrf.mxu0
    %v7782 = vadd.f32 %v7582, %v7781
    %v7783 = vpop.f32.mrf.mxu0
    %v7784 = vpop.f32.mrf.mxu0
    %7785 = vdwg.mxu0
    %v7786 = vadd.f32 %v7780, %v7013
    %v7787 = vadd.f32 %v7782, %v7014
    %s7788 = scalar_lea.vmem [#allocation2], 2048
    %v7789 = vld [vmem:[%s7788] sm:$0xff]
    %v7790 = vld [vmem:[%s7788 + $0x8] sm:$0xff]
    %v7791 = vld [vmem:[%s7788 + $0x10] sm:$0xff]
    %v7792 = vld [vmem:[%s7788 + $0x18] sm:$0xff]
    %v7793 = vld [vmem:[%s7788 + $0x20] sm:$0xff]
    %v7794 = vld [vmem:[%s7788 + $0x28] sm:$0xff]
    %v7795 = vld [vmem:[%s7788 + $0x30] sm:$0xff]
    %v7796 = vld [vmem:[%s7788 + $0x38] sm:$0xff]
    %v7797 = vld [vmem:[%s7788 + $0x40] sm:$0xff]
    %v7798 = vld [vmem:[%s7788 + $0x48] sm:$0xff]
    %v7799 = vld [vmem:[%s7788 + $0x50] sm:$0xff]
    %v7800 = vld [vmem:[%s7788 + $0x58] sm:$0xff]
    %v7801 = vld [vmem:[%s7788 + $0x60] sm:$0xff]
    %v7802 = vld [vmem:[%s7788 + $0x68] sm:$0xff]
    %v7803 = vld [vmem:[%s7788 + $0x70] sm:$0xff]
    %v7804 = vld [vmem:[%s7788 + $0x78] sm:$0xff]
    %v7805 = vld [vmem:[%s7788 + $0x80] sm:$0xff]
    %v7806 = vld [vmem:[%s7788 + $0x88] sm:$0xff]
    %v7807 = vld [vmem:[%s7788 + $0x90] sm:$0xff]
    %v7808 = vld [vmem:[%s7788 + $0x98] sm:$0xff]
    %v7809 = vld [vmem:[%s7788 + $0xa0] sm:$0xff]
    %v7810 = vld [vmem:[%s7788 + $0xa8] sm:$0xff]
    %v7811 = vld [vmem:[%s7788 + $0xb0] sm:$0xff]
    %v7812 = vld [vmem:[%s7788 + $0xb8] sm:$0xff]
    %v7813 = vld [vmem:[%s7788 + $0xc0] sm:$0xff]
    %v7814 = vld [vmem:[%s7788 + $0xc8] sm:$0xff]
    %v7815 = vld [vmem:[%s7788 + $0xd0] sm:$0xff]
    %v7816 = vld [vmem:[%s7788 + $0xd8] sm:$0xff]
    %v7817 = vld [vmem:[%s7788 + $0xe0] sm:$0xff]
    %v7818 = vld [vmem:[%s7788 + $0xe8] sm:$0xff]
    %v7819 = vld [vmem:[%s7788 + $0xf0] sm:$0xff]
    %v7820 = vld [vmem:[%s7788 + $0xf8] sm:$0xff]
    %v7821 = vpack.c.bf16 %v7786, %v7786
    %v7822 = vpack.c.bf16 %v7787, %v7787
    %v7855 = vunpack.c.l.b16 %v7789
    %v7856 = vunpack.c.h.b16 %v7789
    %v7857 = vunpack.c.l.b16 %v7790
    %v7858 = vunpack.c.h.b16 %v7790
    %v7859 = vunpack.c.l.b16 %v7791
    %v7860 = vunpack.c.h.b16 %v7791
    %v7861 = vunpack.c.l.b16 %v7792
    %v7862 = vunpack.c.h.b16 %v7792
    %v7863 = vunpack.c.l.b16 %v7793
    %v7864 = vunpack.c.h.b16 %v7793
    %v7865 = vunpack.c.l.b16 %v7794
    %v7866 = vunpack.c.h.b16 %v7794
    %v7867 = vunpack.c.l.b16 %v7795
    %v7868 = vunpack.c.h.b16 %v7795
    %v7869 = vunpack.c.l.b16 %v7796
    %v7870 = vunpack.c.h.b16 %v7796
    %v7871 = vunpack.c.l.b16 %v7797
    %v7872 = vunpack.c.h.b16 %v7797
    %v7873 = vunpack.c.l.b16 %v7798
    %v7874 = vunpack.c.h.b16 %v7798
    %v7875 = vunpack.c.l.b16 %v7799
    %v7876 = vunpack.c.h.b16 %v7799
    %v7877 = vunpack.c.l.b16 %v7800
    %v7878 = vunpack.c.h.b16 %v7800
    %v7879 = vunpack.c.l.b16 %v7801
    %v7880 = vunpack.c.h.b16 %v7801
    %v7881 = vunpack.c.l.b16 %v7802
    %v7882 = vunpack.c.h.b16 %v7802
    %v7883 = vunpack.c.l.b16 %v7803
    %v7884 = vunpack.c.h.b16 %v7803
    %v7885 = vunpack.c.l.b16 %v7804
    %v7886 = vunpack.c.h.b16 %v7804
    %v7887 = vunpack.c.l.b16 %v7805
    %v7888 = vunpack.c.h.b16 %v7805
    %v7889 = vunpack.c.l.b16 %v7806
    %v7890 = vunpack.c.h.b16 %v7806
    %v7891 = vunpack.c.l.b16 %v7807
    %v7892 = vunpack.c.h.b16 %v7807
    %v7893 = vunpack.c.l.b16 %v7808
    %v7894 = vunpack.c.h.b16 %v7808
    %v7895 = vunpack.c.l.b16 %v7809
    %v7896 = vunpack.c.h.b16 %v7809
    %v7897 = vunpack.c.l.b16 %v7810
    %v7898 = vunpack.c.h.b16 %v7810
    %v7899 = vunpack.c.l.b16 %v7811
    %v7900 = vunpack.c.h.b16 %v7811
    %v7901 = vunpack.c.l.b16 %v7812
    %v7902 = vunpack.c.h.b16 %v7812
    %v7903 = vunpack.c.l.b16 %v7813
    %v7904 = vunpack.c.h.b16 %v7813
    %v7905 = vunpack.c.l.b16 %v7814
    %v7906 = vunpack.c.h.b16 %v7814
    %v7907 = vunpack.c.l.b16 %v7815
    %v7908 = vunpack.c.h.b16 %v7815
    %v7909 = vunpack.c.l.b16 %v7816
    %v7910 = vunpack.c.h.b16 %v7816
    %v7911 = vunpack.c.l.b16 %v7817
    %v7912 = vunpack.c.h.b16 %v7817
    %v7913 = vunpack.c.l.b16 %v7818
    %v7914 = vunpack.c.h.b16 %v7818
    %v7915 = vunpack.c.l.b16 %v7819
    %v7916 = vunpack.c.h.b16 %v7819
    %v7917 = vunpack.c.l.b16 %v7820
    %v7918 = vunpack.c.h.b16 %v7820
    %v7919 = vpack.c.b16 %v7857, %v7855
    %v7920 = vpack.c.b16 %v7858, %v7856
    %v7921 = vpack.c.b16 %v7861, %v7859
    %v7922 = vpack.c.b16 %v7862, %v7860
    %v7923 = vpack.c.b16 %v7865, %v7863
    %v7924 = vpack.c.b16 %v7866, %v7864
    %v7925 = vpack.c.b16 %v7869, %v7867
    %v7926 = vpack.c.b16 %v7870, %v7868
    %v7927 = vpack.c.b16 %v7873, %v7871
    %v7928 = vpack.c.b16 %v7874, %v7872
    %v7929 = vpack.c.b16 %v7877, %v7875
    %v7930 = vpack.c.b16 %v7878, %v7876
    %v7931 = vpack.c.b16 %v7881, %v7879
    %v7932 = vpack.c.b16 %v7882, %v7880
    %v7933 = vpack.c.b16 %v7885, %v7883
    %v7934 = vpack.c.b16 %v7886, %v7884
    %v7935 = vpack.c.b16 %v7889, %v7887
    %v7936 = vpack.c.b16 %v7890, %v7888
    %v7937 = vpack.c.b16 %v7893, %v7891
    %v7938 = vpack.c.b16 %v7894, %v7892
    %v7939 = vpack.c.b16 %v7897, %v7895
    %v7940 = vpack.c.b16 %v7898, %v7896
    %v7941 = vpack.c.b16 %v7901, %v7899
    %v7942 = vpack.c.b16 %v7902, %v7900
    %v7943 = vpack.c.b16 %v7905, %v7903
    %v7944 = vpack.c.b16 %v7906, %v7904
    %v7945 = vpack.c.b16 %v7909, %v7907
    %v7946 = vpack.c.b16 %v7910, %v7908
    %v7947 = vpack.c.b16 %v7913, %v7911
    %v7948 = vpack.c.b16 %v7914, %v7912
    %v7949 = vpack.c.b16 %v7917, %v7915
    %v7950 = vpack.c.b16 %v7918, %v7916
    %7983 = vmatprep.subr.bf16.mxu0 %v7934
    %7984 = vmatpush1.bf16.msra.mxu0 %v7933
    %7985 = vmatprep.subr.bf16.mxu0 %v7932
    %7986 = vmatpush1.bf16.msra.mxu0 %v7931
    %7987 = vmatprep.subr.bf16.mxu0 %v7930
    %7988 = vmatpush1.bf16.msra.mxu0 %v7929
    %7989 = vmatprep.subr.bf16.mxu0 %v7928
    %7990 = vmatpush1.bf16.msra.mxu0 %v7927
    %7991 = vmatprep.subr.bf16.mxu0 %v7926
    %7992 = vmatpush1.bf16.msra.mxu0 %v7925
    %7993 = vmatprep.subr.bf16.mxu0 %v7924
    %7994 = vmatpush1.bf16.msra.mxu0 %v7923
    %7995 = vmatprep.subr.bf16.mxu0 %v7922
    %7996 = vmatpush1.bf16.msra.mxu0 %v7921
    %7997 = vmatprep.subr.bf16.mxu0 %v7920
    %7998 = vmatpush1.bf16.msra.mxu0 %v7919
    %7999 = vmatprep.subr.bf16.mxu0 %v7950
    %8000 = vmatpush2.bf16.msra.mxu0 %v7949
    %8001 = vmatprep.subr.bf16.mxu0 %v7948
    %8002 = vmatpush2.bf16.msra.mxu0 %v7947
    %8003 = vmatprep.subr.bf16.mxu0 %v7946
    %8004 = vmatpush2.bf16.msra.mxu0 %v7945
    %8005 = vmatprep.subr.bf16.mxu0 %v7944
    %8006 = vmatpush2.bf16.msra.mxu0 %v7943
    %8007 = vmatprep.subr.bf16.mxu0 %v7942
    %8008 = vmatpush2.bf16.msra.mxu0 %v7941
    %8009 = vmatprep.subr.bf16.mxu0 %v7940
    %8010 = vmatpush2.bf16.msra.mxu0 %v7939
    %8011 = vmatprep.subr.bf16.mxu0 %v7938
    %8012 = vmatpush2.bf16.msra.mxu0 %v7937
    %8013 = vmatprep.subr.bf16.mxu0 %v7936
    %8014 = vmatpush2.bf16.msra.mxu0 %v7935
    %8015 = vmatprep.mubr.bf16.mxu0 %v7822
    %8016 = vmatmul.mubr.bf16.gmra.mxu0 %v7821
    %v8017 = vpop.f32.mrf.mxu0
    %v8018 = vadd.f32 %v2180, %v8017
    %v8019 = vpop.f32.mrf.mxu0
    %v8020 = vadd.f32 %v2182, %v8019
    %v8021 = vpop.f32.mrf.mxu0
    %v8022 = vpop.f32.mrf.mxu0
    %8023 = vdwg.mxu0
    %s8024 = scalar_lea.vmem [#allocation17], 20
    %v8025 = vld [vmem:[%s8024] ss:$8 sm:$0x3]
    %v8027 = vlaneseq
    %v8028 = vshrl.u32 %v8027, 7
    %v8029 = vsub.s32 0, %v8028
    %v8030 = vrot.slane %v8025, %v8029
    %v8031 = vlaneseq
    %v8032 = vshrl.u32 %v8031, 7
    %v8033 = vsub.s32 1, %v8032
    %v8034 = vrot.slane %v8025, %v8033
    %v8037 = vadd.f32 %v8018, %v8030
    %v8038 = vadd.f32 %v8020, %v8034
    %v8039 = vmul.f32 %v8037, 0.5
    %v8040 = vmul.f32 %v8038, 0.5
    %v8041 = vtanh.pop %v8039
    %v8042 = vtanh.pop %v8040
    %v8043 = vadd.f32 %v8041, 1.0
    %v8044 = vadd.f32 %v8042, 1.0
    %v8045 = vmul.f32 %v8043, 0.5
    %v8046 = vmul.f32 %v8044, 0.5
    %v8047 = vmul.f32 %v8037, %v8045
    %v8048 = vmul.f32 %v8038, %v8046
    %s8049 = scalar_lea.vmem [#allocation2], 2304
    %v8050 = vld [vmem:[%s8049] sm:$0xff]
    %v8051 = vld [vmem:[%s8049 + $0x8] sm:$0xff]
    %v8052 = vld [vmem:[%s8049 + $0x10] sm:$0xff]
    %v8053 = vld [vmem:[%s8049 + $0x18] sm:$0xff]
    %v8054 = vld [vmem:[%s8049 + $0x20] sm:$0xff]
    %v8055 = vld [vmem:[%s8049 + $0x28] sm:$0xff]
    %v8056 = vld [vmem:[%s8049 + $0x30] sm:$0xff]
    %v8057 = vld [vmem:[%s8049 + $0x38] sm:$0xff]
    %v8058 = vld [vmem:[%s8049 + $0x40] sm:$0xff]
    %v8059 = vld [vmem:[%s8049 + $0x48] sm:$0xff]
    %v8060 = vld [vmem:[%s8049 + $0x50] sm:$0xff]
    %v8061 = vld [vmem:[%s8049 + $0x58] sm:$0xff]
    %v8062 = vld [vmem:[%s8049 + $0x60] sm:$0xff]
    %v8063 = vld [vmem:[%s8049 + $0x68] sm:$0xff]
    %v8064 = vld [vmem:[%s8049 + $0x70] sm:$0xff]
    %v8065 = vld [vmem:[%s8049 + $0x78] sm:$0xff]
    %v8066 = vld [vmem:[%s8049 + $0x80] sm:$0xff]
    %v8067 = vld [vmem:[%s8049 + $0x88] sm:$0xff]
    %v8068 = vld [vmem:[%s8049 + $0x90] sm:$0xff]
    %v8069 = vld [vmem:[%s8049 + $0x98] sm:$0xff]
    %v8070 = vld [vmem:[%s8049 + $0xa0] sm:$0xff]
    %v8071 = vld [vmem:[%s8049 + $0xa8] sm:$0xff]
    %v8072 = vld [vmem:[%s8049 + $0xb0] sm:$0xff]
    %v8073 = vld [vmem:[%s8049 + $0xb8] sm:$0xff]
    %v8074 = vld [vmem:[%s8049 + $0xc0] sm:$0xff]
    %v8075 = vld [vmem:[%s8049 + $0xc8] sm:$0xff]
    %v8076 = vld [vmem:[%s8049 + $0xd0] sm:$0xff]
    %v8077 = vld [vmem:[%s8049 + $0xd8] sm:$0xff]
    %v8078 = vld [vmem:[%s8049 + $0xe0] sm:$0xff]
    %v8079 = vld [vmem:[%s8049 + $0xe8] sm:$0xff]
    %v8080 = vld [vmem:[%s8049 + $0xf0] sm:$0xff]
    %v8081 = vld [vmem:[%s8049 + $0xf8] sm:$0xff]
    %v8082 = vpack.c.bf16 %v8047, %v8047
    %v8083 = vpack.c.bf16 %v8048, %v8048
    %v8116 = vunpack.c.l.b16 %v8050
    %v8117 = vunpack.c.h.b16 %v8050
    %v8118 = vunpack.c.l.b16 %v8051
    %v8119 = vunpack.c.h.b16 %v8051
    %v8120 = vunpack.c.l.b16 %v8052
    %v8121 = vunpack.c.h.b16 %v8052
    %v8122 = vunpack.c.l.b16 %v8053
    %v8123 = vunpack.c.h.b16 %v8053
    %v8124 = vunpack.c.l.b16 %v8054
    %v8125 = vunpack.c.h.b16 %v8054
    %v8126 = vunpack.c.l.b16 %v8055
    %v8127 = vunpack.c.h.b16 %v8055
    %v8128 = vunpack.c.l.b16 %v8056
    %v8129 = vunpack.c.h.b16 %v8056
    %v8130 = vunpack.c.l.b16 %v8057
    %v8131 = vunpack.c.h.b16 %v8057
    %v8132 = vunpack.c.l.b16 %v8058
    %v8133 = vunpack.c.h.b16 %v8058
    %v8134 = vunpack.c.l.b16 %v8059
    %v8135 = vunpack.c.h.b16 %v8059
    %v8136 = vunpack.c.l.b16 %v8060
    %v8137 = vunpack.c.h.b16 %v8060
    %v8138 = vunpack.c.l.b16 %v8061
    %v8139 = vunpack.c.h.b16 %v8061
    %v8140 = vunpack.c.l.b16 %v8062
    %v8141 = vunpack.c.h.b16 %v8062
    %v8142 = vunpack.c.l.b16 %v8063
    %v8143 = vunpack.c.h.b16 %v8063
    %v8144 = vunpack.c.l.b16 %v8064
    %v8145 = vunpack.c.h.b16 %v8064
    %v8146 = vunpack.c.l.b16 %v8065
    %v8147 = vunpack.c.h.b16 %v8065
    %v8148 = vunpack.c.l.b16 %v8066
    %v8149 = vunpack.c.h.b16 %v8066
    %v8150 = vunpack.c.l.b16 %v8067
    %v8151 = vunpack.c.h.b16 %v8067
    %v8152 = vunpack.c.l.b16 %v8068
    %v8153 = vunpack.c.h.b16 %v8068
    %v8154 = vunpack.c.l.b16 %v8069
    %v8155 = vunpack.c.h.b16 %v8069
    %v8156 = vunpack.c.l.b16 %v8070
    %v8157 = vunpack.c.h.b16 %v8070
    %v8158 = vunpack.c.l.b16 %v8071
    %v8159 = vunpack.c.h.b16 %v8071
    %v8160 = vunpack.c.l.b16 %v8072
    %v8161 = vunpack.c.h.b16 %v8072
    %v8162 = vunpack.c.l.b16 %v8073
    %v8163 = vunpack.c.h.b16 %v8073
    %v8164 = vunpack.c.l.b16 %v8074
    %v8165 = vunpack.c.h.b16 %v8074
    %v8166 = vunpack.c.l.b16 %v8075
    %v8167 = vunpack.c.h.b16 %v8075
    %v8168 = vunpack.c.l.b16 %v8076
    %v8169 = vunpack.c.h.b16 %v8076
    %v8170 = vunpack.c.l.b16 %v8077
    %v8171 = vunpack.c.h.b16 %v8077
    %v8172 = vunpack.c.l.b16 %v8078
    %v8173 = vunpack.c.h.b16 %v8078
    %v8174 = vunpack.c.l.b16 %v8079
    %v8175 = vunpack.c.h.b16 %v8079
    %v8176 = vunpack.c.l.b16 %v8080
    %v8177 = vunpack.c.h.b16 %v8080
    %v8178 = vunpack.c.l.b16 %v8081
    %v8179 = vunpack.c.h.b16 %v8081
    %v8180 = vpack.c.b16 %v8118, %v8116
    %v8181 = vpack.c.b16 %v8119, %v8117
    %v8182 = vpack.c.b16 %v8122, %v8120
    %v8183 = vpack.c.b16 %v8123, %v8121
    %v8184 = vpack.c.b16 %v8126, %v8124
    %v8185 = vpack.c.b16 %v8127, %v8125
    %v8186 = vpack.c.b16 %v8130, %v8128
    %v8187 = vpack.c.b16 %v8131, %v8129
    %v8188 = vpack.c.b16 %v8134, %v8132
    %v8189 = vpack.c.b16 %v8135, %v8133
    %v8190 = vpack.c.b16 %v8138, %v8136
    %v8191 = vpack.c.b16 %v8139, %v8137
    %v8192 = vpack.c.b16 %v8142, %v8140
    %v8193 = vpack.c.b16 %v8143, %v8141
    %v8194 = vpack.c.b16 %v8146, %v8144
    %v8195 = vpack.c.b16 %v8147, %v8145
    %v8196 = vpack.c.b16 %v8150, %v8148
    %v8197 = vpack.c.b16 %v8151, %v8149
    %v8198 = vpack.c.b16 %v8154, %v8152
    %v8199 = vpack.c.b16 %v8155, %v8153
    %v8200 = vpack.c.b16 %v8158, %v8156
    %v8201 = vpack.c.b16 %v8159, %v8157
    %v8202 = vpack.c.b16 %v8162, %v8160
    %v8203 = vpack.c.b16 %v8163, %v8161
    %v8204 = vpack.c.b16 %v8166, %v8164
    %v8205 = vpack.c.b16 %v8167, %v8165
    %v8206 = vpack.c.b16 %v8170, %v8168
    %v8207 = vpack.c.b16 %v8171, %v8169
    %v8208 = vpack.c.b16 %v8174, %v8172
    %v8209 = vpack.c.b16 %v8175, %v8173
    %v8210 = vpack.c.b16 %v8178, %v8176
    %v8211 = vpack.c.b16 %v8179, %v8177
    %8244 = vmatprep.subr.bf16.mxu0 %v8195
    %8245 = vmatpush1.bf16.msra.mxu0 %v8194
    %8246 = vmatprep.subr.bf16.mxu0 %v8193
    %8247 = vmatpush1.bf16.msra.mxu0 %v8192
    %8248 = vmatprep.subr.bf16.mxu0 %v8191
    %8249 = vmatpush1.bf16.msra.mxu0 %v8190
    %8250 = vmatprep.subr.bf16.mxu0 %v8189
    %8251 = vmatpush1.bf16.msra.mxu0 %v8188
    %8252 = vmatprep.subr.bf16.mxu0 %v8187
    %8253 = vmatpush1.bf16.msra.mxu0 %v8186
    %8254 = vmatprep.subr.bf16.mxu0 %v8185
    %8255 = vmatpush1.bf16.msra.mxu0 %v8184
    %8256 = vmatprep.subr.bf16.mxu0 %v8183
    %8257 = vmatpush1.bf16.msra.mxu0 %v8182
    %8258 = vmatprep.subr.bf16.mxu0 %v8181
    %8259 = vmatpush1.bf16.msra.mxu0 %v8180
    %8260 = vmatprep.subr.bf16.mxu0 %v8211
    %8261 = vmatpush2.bf16.msra.mxu0 %v8210
    %8262 = vmatprep.subr.bf16.mxu0 %v8209
    %8263 = vmatpush2.bf16.msra.mxu0 %v8208
    %8264 = vmatprep.subr.bf16.mxu0 %v8207
    %8265 = vmatpush2.bf16.msra.mxu0 %v8206
    %8266 = vmatprep.subr.bf16.mxu0 %v8205
    %8267 = vmatpush2.bf16.msra.mxu0 %v8204
    %8268 = vmatprep.subr.bf16.mxu0 %v8203
    %8269 = vmatpush2.bf16.msra.mxu0 %v8202
    %8270 = vmatprep.subr.bf16.mxu0 %v8201
    %8271 = vmatpush2.bf16.msra.mxu0 %v8200
    %8272 = vmatprep.subr.bf16.mxu0 %v8199
    %8273 = vmatpush2.bf16.msra.mxu0 %v8198
    %8274 = vmatprep.subr.bf16.mxu0 %v8197
    %8275 = vmatpush2.bf16.msra.mxu0 %v8196
    %8276 = vmatprep.mubr.bf16.mxu0 %v8083
    %8277 = vmatmul.mubr.bf16.gmra.mxu0 %v8082
    %v8278 = vpop.f32.mrf.mxu0
    %v8279 = vadd.f32 %v2221, %v8278
    %v8280 = vpop.f32.mrf.mxu0
    %v8281 = vadd.f32 %v2223, %v8280
    %v8282 = vpop.f32.mrf.mxu0
    %v8283 = vpop.f32.mrf.mxu0
    %8284 = vdwg.mxu0
    %s8285 = scalar_lea.vmem [#allocation17], 32
    %v8286 = vld [vmem:[%s8285] ss:$8 sm:$0x3]
    %v8288 = vlaneseq
    %v8289 = vshrl.u32 %v8288, 7
    %v8290 = vsub.s32 0, %v8289
    %v8291 = vrot.slane %v8286, %v8290
    %v8292 = vlaneseq
    %v8293 = vshrl.u32 %v8292, 7
    %v8294 = vsub.s32 1, %v8293
    %v8295 = vrot.slane %v8286, %v8294
    %v8298 = vadd.f32 %v8279, %v8291
    %v8299 = vadd.f32 %v8281, %v8295
    %v8300 = vmul.f32 %v8298, 0.5
    %v8301 = vmul.f32 %v8299, 0.5
    %v8302 = vtanh.pop %v8300
    %v8303 = vtanh.pop %v8301
    %v8304 = vadd.f32 %v8302, 1.0
    %v8305 = vadd.f32 %v8303, 1.0
    %v8306 = vmul.f32 %v8304, 0.5
    %v8307 = vmul.f32 %v8305, 0.5
    %v8308 = vmul.f32 %v8298, %v8306
    %v8309 = vmul.f32 %v8299, %v8307
    %s8310 = scalar_lea.vmem [#allocation2], 2560
    %v8311 = vld [vmem:[%s8310] sm:$0xff]
    %v8312 = vld [vmem:[%s8310 + $0x8] sm:$0xff]
    %v8313 = vld [vmem:[%s8310 + $0x10] sm:$0xff]
    %v8314 = vld [vmem:[%s8310 + $0x18] sm:$0xff]
    %v8315 = vld [vmem:[%s8310 + $0x20] sm:$0xff]
    %v8316 = vld [vmem:[%s8310 + $0x28] sm:$0xff]
    %v8317 = vld [vmem:[%s8310 + $0x30] sm:$0xff]
    %v8318 = vld [vmem:[%s8310 + $0x38] sm:$0xff]
    %v8319 = vld [vmem:[%s8310 + $0x40] sm:$0xff]
    %v8320 = vld [vmem:[%s8310 + $0x48] sm:$0xff]
    %v8321 = vld [vmem:[%s8310 + $0x50] sm:$0xff]
    %v8322 = vld [vmem:[%s8310 + $0x58] sm:$0xff]
    %v8323 = vld [vmem:[%s8310 + $0x60] sm:$0xff]
    %v8324 = vld [vmem:[%s8310 + $0x68] sm:$0xff]
    %v8325 = vld [vmem:[%s8310 + $0x70] sm:$0xff]
    %v8326 = vld [vmem:[%s8310 + $0x78] sm:$0xff]
    %v8327 = vld [vmem:[%s8310 + $0x80] sm:$0xff]
    %v8328 = vld [vmem:[%s8310 + $0x88] sm:$0xff]
    %v8329 = vld [vmem:[%s8310 + $0x90] sm:$0xff]
    %v8330 = vld [vmem:[%s8310 + $0x98] sm:$0xff]
    %v8331 = vld [vmem:[%s8310 + $0xa0] sm:$0xff]
    %v8332 = vld [vmem:[%s8310 + $0xa8] sm:$0xff]
    %v8333 = vld [vmem:[%s8310 + $0xb0] sm:$0xff]
    %v8334 = vld [vmem:[%s8310 + $0xb8] sm:$0xff]
    %v8335 = vld [vmem:[%s8310 + $0xc0] sm:$0xff]
    %v8336 = vld [vmem:[%s8310 + $0xc8] sm:$0xff]
    %v8337 = vld [vmem:[%s8310 + $0xd0] sm:$0xff]
    %v8338 = vld [vmem:[%s8310 + $0xd8] sm:$0xff]
    %v8339 = vld [vmem:[%s8310 + $0xe0] sm:$0xff]
    %v8340 = vld [vmem:[%s8310 + $0xe8] sm:$0xff]
    %v8341 = vld [vmem:[%s8310 + $0xf0] sm:$0xff]
    %v8342 = vld [vmem:[%s8310 + $0xf8] sm:$0xff]
    %v8343 = vpack.c.bf16 %v8308, %v8308
    %v8344 = vpack.c.bf16 %v8309, %v8309
    %s8345 = scalar_lea.vmem [#allocation17], 36
    %v8346 = vld [vmem:[%s8345] ss:$8 sm:$0x3]
    %v8348 = vlaneseq
    %v8349 = vshrl.u32 %v8348, 7
    %v8350 = vsub.s32 0, %v8349
    %v8351 = vrot.slane %v8346, %v8350
    %v8352 = vlaneseq
    %v8353 = vshrl.u32 %v8352, 7
    %v8354 = vsub.s32 1, %v8353
    %v8355 = vrot.slane %v8346, %v8354
    %v8390 = vunpack.c.l.b16 %v8311
    %v8391 = vunpack.c.h.b16 %v8311
    %v8392 = vunpack.c.l.b16 %v8312
    %v8393 = vunpack.c.h.b16 %v8312
    %v8394 = vunpack.c.l.b16 %v8313
    %v8395 = vunpack.c.h.b16 %v8313
    %v8396 = vunpack.c.l.b16 %v8314
    %v8397 = vunpack.c.h.b16 %v8314
    %v8398 = vunpack.c.l.b16 %v8315
    %v8399 = vunpack.c.h.b16 %v8315
    %v8400 = vunpack.c.l.b16 %v8316
    %v8401 = vunpack.c.h.b16 %v8316
    %v8402 = vunpack.c.l.b16 %v8317
    %v8403 = vunpack.c.h.b16 %v8317
    %v8404 = vunpack.c.l.b16 %v8318
    %v8405 = vunpack.c.h.b16 %v8318
    %v8406 = vunpack.c.l.b16 %v8319
    %v8407 = vunpack.c.h.b16 %v8319
    %v8408 = vunpack.c.l.b16 %v8320
    %v8409 = vunpack.c.h.b16 %v8320
    %v8410 = vunpack.c.l.b16 %v8321
    %v8411 = vunpack.c.h.b16 %v8321
    %v8412 = vunpack.c.l.b16 %v8322
    %v8413 = vunpack.c.h.b16 %v8322
    %v8414 = vunpack.c.l.b16 %v8323
    %v8415 = vunpack.c.h.b16 %v8323
    %v8416 = vunpack.c.l.b16 %v8324
    %v8417 = vunpack.c.h.b16 %v8324
    %v8418 = vunpack.c.l.b16 %v8325
    %v8419 = vunpack.c.h.b16 %v8325
    %v8420 = vunpack.c.l.b16 %v8326
    %v8421 = vunpack.c.h.b16 %v8326
    %v8422 = vunpack.c.l.b16 %v8327
    %v8423 = vunpack.c.h.b16 %v8327
    %v8424 = vunpack.c.l.b16 %v8328
    %v8425 = vunpack.c.h.b16 %v8328
    %v8426 = vunpack.c.l.b16 %v8329
    %v8427 = vunpack.c.h.b16 %v8329
    %v8428 = vunpack.c.l.b16 %v8330
    %v8429 = vunpack.c.h.b16 %v8330
    %v8430 = vunpack.c.l.b16 %v8331
    %v8431 = vunpack.c.h.b16 %v8331
    %v8432 = vunpack.c.l.b16 %v8332
    %v8433 = vunpack.c.h.b16 %v8332
    %v8434 = vunpack.c.l.b16 %v8333
    %v8435 = vunpack.c.h.b16 %v8333
    %v8436 = vunpack.c.l.b16 %v8334
    %v8437 = vunpack.c.h.b16 %v8334
    %v8438 = vunpack.c.l.b16 %v8335
    %v8439 = vunpack.c.h.b16 %v8335
    %v8440 = vunpack.c.l.b16 %v8336
    %v8441 = vunpack.c.h.b16 %v8336
    %v8442 = vunpack.c.l.b16 %v8337
    %v8443 = vunpack.c.h.b16 %v8337
    %v8444 = vunpack.c.l.b16 %v8338
    %v8445 = vunpack.c.h.b16 %v8338
    %v8446 = vunpack.c.l.b16 %v8339
    %v8447 = vunpack.c.h.b16 %v8339
    %v8448 = vunpack.c.l.b16 %v8340
    %v8449 = vunpack.c.h.b16 %v8340
    %v8450 = vunpack.c.l.b16 %v8341
    %v8451 = vunpack.c.h.b16 %v8341
    %v8452 = vunpack.c.l.b16 %v8342
    %v8453 = vunpack.c.h.b16 %v8342
    %v8454 = vpack.c.b16 %v8392, %v8390
    %v8455 = vpack.c.b16 %v8393, %v8391
    %v8456 = vpack.c.b16 %v8396, %v8394
    %v8457 = vpack.c.b16 %v8397, %v8395
    %v8458 = vpack.c.b16 %v8400, %v8398
    %v8459 = vpack.c.b16 %v8401, %v8399
    %v8460 = vpack.c.b16 %v8404, %v8402
    %v8461 = vpack.c.b16 %v8405, %v8403
    %v8462 = vpack.c.b16 %v8408, %v8406
    %v8463 = vpack.c.b16 %v8409, %v8407
    %v8464 = vpack.c.b16 %v8412, %v8410
    %v8465 = vpack.c.b16 %v8413, %v8411
    %v8466 = vpack.c.b16 %v8416, %v8414
    %v8467 = vpack.c.b16 %v8417, %v8415
    %v8468 = vpack.c.b16 %v8420, %v8418
    %v8469 = vpack.c.b16 %v8421, %v8419
    %v8470 = vpack.c.b16 %v8424, %v8422
    %v8471 = vpack.c.b16 %v8425, %v8423
    %v8472 = vpack.c.b16 %v8428, %v8426
    %v8473 = vpack.c.b16 %v8429, %v8427
    %v8474 = vpack.c.b16 %v8432, %v8430
    %v8475 = vpack.c.b16 %v8433, %v8431
    %v8476 = vpack.c.b16 %v8436, %v8434
    %v8477 = vpack.c.b16 %v8437, %v8435
    %v8478 = vpack.c.b16 %v8440, %v8438
    %v8479 = vpack.c.b16 %v8441, %v8439
    %v8480 = vpack.c.b16 %v8444, %v8442
    %v8481 = vpack.c.b16 %v8445, %v8443
    %v8482 = vpack.c.b16 %v8448, %v8446
    %v8483 = vpack.c.b16 %v8449, %v8447
    %v8484 = vpack.c.b16 %v8452, %v8450
    %v8485 = vpack.c.b16 %v8453, %v8451
    %8518 = vmatprep.subr.bf16.mxu0 %v8469
    %8519 = vmatpush1.bf16.msra.mxu0 %v8468
    %8520 = vmatprep.subr.bf16.mxu0 %v8467
    %8521 = vmatpush1.bf16.msra.mxu0 %v8466
    %8522 = vmatprep.subr.bf16.mxu0 %v8465
    %8523 = vmatpush1.bf16.msra.mxu0 %v8464
    %8524 = vmatprep.subr.bf16.mxu0 %v8463
    %8525 = vmatpush1.bf16.msra.mxu0 %v8462
    %8526 = vmatprep.subr.bf16.mxu0 %v8461
    %8527 = vmatpush1.bf16.msra.mxu0 %v8460
    %8528 = vmatprep.subr.bf16.mxu0 %v8459
    %8529 = vmatpush1.bf16.msra.mxu0 %v8458
    %8530 = vmatprep.subr.bf16.mxu0 %v8457
    %8531 = vmatpush1.bf16.msra.mxu0 %v8456
    %8532 = vmatprep.subr.bf16.mxu0 %v8455
    %8533 = vmatpush1.bf16.msra.mxu0 %v8454
    %8534 = vmatprep.subr.bf16.mxu0 %v8485
    %8535 = vmatpush2.bf16.msra.mxu0 %v8484
    %8536 = vmatprep.subr.bf16.mxu0 %v8483
    %8537 = vmatpush2.bf16.msra.mxu0 %v8482
    %8538 = vmatprep.subr.bf16.mxu0 %v8481
    %8539 = vmatpush2.bf16.msra.mxu0 %v8480
    %8540 = vmatprep.subr.bf16.mxu0 %v8479
    %8541 = vmatpush2.bf16.msra.mxu0 %v8478
    %8542 = vmatprep.subr.bf16.mxu0 %v8477
    %8543 = vmatpush2.bf16.msra.mxu0 %v8476
    %8544 = vmatprep.subr.bf16.mxu0 %v8475
    %8545 = vmatpush2.bf16.msra.mxu0 %v8474
    %8546 = vmatprep.subr.bf16.mxu0 %v8473
    %8547 = vmatpush2.bf16.msra.mxu0 %v8472
    %8548 = vmatprep.subr.bf16.mxu0 %v8471
    %8549 = vmatpush2.bf16.msra.mxu0 %v8470
    %8550 = vmatprep.mubr.bf16.mxu0 %v8344
    %8551 = vmatmul.mubr.bf16.gmra.mxu0 %v8343
    %v8552 = vpop.f32.mrf.mxu0
    %v8553 = vadd.f32 %v8351, %v8552
    %v8554 = vpop.f32.mrf.mxu0
    %v8555 = vadd.f32 %v8355, %v8554
    %v8556 = vpop.f32.mrf.mxu0
    %v8557 = vpop.f32.mrf.mxu0
    %8558 = vdwg.mxu0
    %v8559 = vadd.f32 %v8553, %v7786
    %v8560 = vadd.f32 %v8555, %v7787
    %s8561 = smul.u32 4, 5
    %s8562 = smul.u32 %s8561, 32
    %s8563 = smul.u32 %s8562, 2
    %s8564 = sshll.u32 %s8563, 4
    %8565 = dma.done %s155, %s8564
    %v8566 = vld [vmem:[#allocation3] sm:$0xff]
    %v8567 = vld [vmem:[#allocation3 + $0x8] sm:$0xff]
    %v8568 = vld [vmem:[#allocation3 + $0x10] sm:$0xff]
    %v8569 = vld [vmem:[#allocation3 + $0x18] sm:$0xff]
    %v8570 = vld [vmem:[#allocation3 + $0x20] sm:$0xff]
    %v8571 = vld [vmem:[#allocation3 + $0x28] sm:$0xff]
    %v8572 = vld [vmem:[#allocation3 + $0x30] sm:$0xff]
    %v8573 = vld [vmem:[#allocation3 + $0x38] sm:$0xff]
    %v8574 = vld [vmem:[#allocation3 + $0x40] sm:$0xff]
    %v8575 = vld [vmem:[#allocation3 + $0x48] sm:$0xff]
    %v8576 = vld [vmem:[#allocation3 + $0x50] sm:$0xff]
    %v8577 = vld [vmem:[#allocation3 + $0x58] sm:$0xff]
    %v8578 = vld [vmem:[#allocation3 + $0x60] sm:$0xff]
    %v8579 = vld [vmem:[#allocation3 + $0x68] sm:$0xff]
    %v8580 = vld [vmem:[#allocation3 + $0x70] sm:$0xff]
    %v8581 = vld [vmem:[#allocation3 + $0x78] sm:$0xff]
    %v8582 = vld [vmem:[#allocation3 + $0x80] sm:$0xff]
    %v8583 = vld [vmem:[#allocation3 + $0x88] sm:$0xff]
    %v8584 = vld [vmem:[#allocation3 + $0x90] sm:$0xff]
    %v8585 = vld [vmem:[#allocation3 + $0x98] sm:$0xff]
    %v8586 = vld [vmem:[#allocation3 + $0xa0] sm:$0xff]
    %v8587 = vld [vmem:[#allocation3 + $0xa8] sm:$0xff]
    %v8588 = vld [vmem:[#allocation3 + $0xb0] sm:$0xff]
    %v8589 = vld [vmem:[#allocation3 + $0xb8] sm:$0xff]
    %v8590 = vld [vmem:[#allocation3 + $0xc0] sm:$0xff]
    %v8591 = vld [vmem:[#allocation3 + $0xc8] sm:$0xff]
    %v8592 = vld [vmem:[#allocation3 + $0xd0] sm:$0xff]
    %v8593 = vld [vmem:[#allocation3 + $0xd8] sm:$0xff]
    %v8594 = vld [vmem:[#allocation3 + $0xe0] sm:$0xff]
    %v8595 = vld [vmem:[#allocation3 + $0xe8] sm:$0xff]
    %v8596 = vld [vmem:[#allocation3 + $0xf0] sm:$0xff]
    %v8597 = vld [vmem:[#allocation3 + $0xf8] sm:$0xff]
    %v8598 = vpack.c.bf16 %v8559, %v8559
    %v8599 = vpack.c.bf16 %v8560, %v8560
    %v8632 = vunpack.c.l.b16 %v8566
    %v8633 = vunpack.c.h.b16 %v8566
    %v8634 = vunpack.c.l.b16 %v8567
    %v8635 = vunpack.c.h.b16 %v8567
    %v8636 = vunpack.c.l.b16 %v8568
    %v8637 = vunpack.c.h.b16 %v8568
    %v8638 = vunpack.c.l.b16 %v8569
    %v8639 = vunpack.c.h.b16 %v8569
    %v8640 = vunpack.c.l.b16 %v8570
    %v8641 = vunpack.c.h.b16 %v8570
    %v8642 = vunpack.c.l.b16 %v8571
    %v8643 = vunpack.c.h.b16 %v8571
    %v8644 = vunpack.c.l.b16 %v8572
    %v8645 = vunpack.c.h.b16 %v8572
    %v8646 = vunpack.c.l.b16 %v8573
    %v8647 = vunpack.c.h.b16 %v8573
    %v8648 = vunpack.c.l.b16 %v8574
    %v8649 = vunpack.c.h.b16 %v8574
    %v8650 = vunpack.c.l.b16 %v8575
    %v8651 = vunpack.c.h.b16 %v8575
    %v8652 = vunpack.c.l.b16 %v8576
    %v8653 = vunpack.c.h.b16 %v8576
    %v8654 = vunpack.c.l.b16 %v8577
    %v8655 = vunpack.c.h.b16 %v8577
    %v8656 = vunpack.c.l.b16 %v8578
    %v8657 = vunpack.c.h.b16 %v8578
    %v8658 = vunpack.c.l.b16 %v8579
    %v8659 = vunpack.c.h.b16 %v8579
    %v8660 = vunpack.c.l.b16 %v8580
    %v8661 = vunpack.c.h.b16 %v8580
    %v8662 = vunpack.c.l.b16 %v8581
    %v8663 = vunpack.c.h.b16 %v8581
    %v8664 = vunpack.c.l.b16 %v8582
    %v8665 = vunpack.c.h.b16 %v8582
    %v8666 = vunpack.c.l.b16 %v8583
    %v8667 = vunpack.c.h.b16 %v8583
    %v8668 = vunpack.c.l.b16 %v8584
    %v8669 = vunpack.c.h.b16 %v8584
    %v8670 = vunpack.c.l.b16 %v8585
    %v8671 = vunpack.c.h.b16 %v8585
    %v8672 = vunpack.c.l.b16 %v8586
    %v8673 = vunpack.c.h.b16 %v8586
    %v8674 = vunpack.c.l.b16 %v8587
    %v8675 = vunpack.c.h.b16 %v8587
    %v8676 = vunpack.c.l.b16 %v8588
    %v8677 = vunpack.c.h.b16 %v8588
    %v8678 = vunpack.c.l.b16 %v8589
    %v8679 = vunpack.c.h.b16 %v8589
    %v8680 = vunpack.c.l.b16 %v8590
    %v8681 = vunpack.c.h.b16 %v8590
    %v8682 = vunpack.c.l.b16 %v8591
    %v8683 = vunpack.c.h.b16 %v8591
    %v8684 = vunpack.c.l.b16 %v8592
    %v8685 = vunpack.c.h.b16 %v8592
    %v8686 = vunpack.c.l.b16 %v8593
    %v8687 = vunpack.c.h.b16 %v8593
    %v8688 = vunpack.c.l.b16 %v8594
    %v8689 = vunpack.c.h.b16 %v8594
    %v8690 = vunpack.c.l.b16 %v8595
    %v8691 = vunpack.c.h.b16 %v8595
    %v8692 = vunpack.c.l.b16 %v8596
    %v8693 = vunpack.c.h.b16 %v8596
    %v8694 = vunpack.c.l.b16 %v8597
    %v8695 = vunpack.c.h.b16 %v8597
    %v8696 = vpack.c.b16 %v8634, %v8632
    %v8697 = vpack.c.b16 %v8635, %v8633
    %v8698 = vpack.c.b16 %v8638, %v8636
    %v8699 = vpack.c.b16 %v8639, %v8637
    %v8700 = vpack.c.b16 %v8642, %v8640
    %v8701 = vpack.c.b16 %v8643, %v8641
    %v8702 = vpack.c.b16 %v8646, %v8644
    %v8703 = vpack.c.b16 %v8647, %v8645
    %v8704 = vpack.c.b16 %v8650, %v8648
    %v8705 = vpack.c.b16 %v8651, %v8649
    %v8706 = vpack.c.b16 %v8654, %v8652
    %v8707 = vpack.c.b16 %v8655, %v8653
    %v8708 = vpack.c.b16 %v8658, %v8656
    %v8709 = vpack.c.b16 %v8659, %v8657
    %v8710 = vpack.c.b16 %v8662, %v8660
    %v8711 = vpack.c.b16 %v8663, %v8661
    %v8712 = vpack.c.b16 %v8666, %v8664
    %v8713 = vpack.c.b16 %v8667, %v8665
    %v8714 = vpack.c.b16 %v8670, %v8668
    %v8715 = vpack.c.b16 %v8671, %v8669
    %v8716 = vpack.c.b16 %v8674, %v8672
    %v8717 = vpack.c.b16 %v8675, %v8673
    %v8718 = vpack.c.b16 %v8678, %v8676
    %v8719 = vpack.c.b16 %v8679, %v8677
    %v8720 = vpack.c.b16 %v8682, %v8680
    %v8721 = vpack.c.b16 %v8683, %v8681
    %v8722 = vpack.c.b16 %v8686, %v8684
    %v8723 = vpack.c.b16 %v8687, %v8685
    %v8724 = vpack.c.b16 %v8690, %v8688
    %v8725 = vpack.c.b16 %v8691, %v8689
    %v8726 = vpack.c.b16 %v8694, %v8692
    %v8727 = vpack.c.b16 %v8695, %v8693
    %8760 = vmatprep.subr.bf16.mxu0 %v8711
    %8761 = vmatpush1.bf16.msra.mxu0 %v8710
    %8762 = vmatprep.subr.bf16.mxu0 %v8709
    %8763 = vmatpush1.bf16.msra.mxu0 %v8708
    %8764 = vmatprep.subr.bf16.mxu0 %v8707
    %8765 = vmatpush1.bf16.msra.mxu0 %v8706
    %8766 = vmatprep.subr.bf16.mxu0 %v8705
    %8767 = vmatpush1.bf16.msra.mxu0 %v8704
    %8768 = vmatprep.subr.bf16.mxu0 %v8703
    %8769 = vmatpush1.bf16.msra.mxu0 %v8702
    %8770 = vmatprep.subr.bf16.mxu0 %v8701
    %8771 = vmatpush1.bf16.msra.mxu0 %v8700
    %8772 = vmatprep.subr.bf16.mxu0 %v8699
    %8773 = vmatpush1.bf16.msra.mxu0 %v8698
    %8774 = vmatprep.subr.bf16.mxu0 %v8697
    %8775 = vmatpush1.bf16.msra.mxu0 %v8696
    %8776 = vmatprep.subr.bf16.mxu0 %v8727
    %8777 = vmatpush2.bf16.msra.mxu0 %v8726
    %8778 = vmatprep.subr.bf16.mxu0 %v8725
    %8779 = vmatpush2.bf16.msra.mxu0 %v8724
    %8780 = vmatprep.subr.bf16.mxu0 %v8723
    %8781 = vmatpush2.bf16.msra.mxu0 %v8722
    %8782 = vmatprep.subr.bf16.mxu0 %v8721
    %8783 = vmatpush2.bf16.msra.mxu0 %v8720
    %8784 = vmatprep.subr.bf16.mxu0 %v8719
    %8785 = vmatpush2.bf16.msra.mxu0 %v8718
    %8786 = vmatprep.subr.bf16.mxu0 %v8717
    %8787 = vmatpush2.bf16.msra.mxu0 %v8716
    %8788 = vmatprep.subr.bf16.mxu0 %v8715
    %8789 = vmatpush2.bf16.msra.mxu0 %v8714
    %8790 = vmatprep.subr.bf16.mxu0 %v8713
    %8791 = vmatpush2.bf16.msra.mxu0 %v8712
    %8792 = vmatprep.mubr.bf16.mxu0 %v8599
    %8793 = vmatmul.mubr.bf16.gmra.mxu0 %v8598
    %v8794 = vpop.f32.mrf.mxu0
    %v8795 = vadd.f32 %v2262, %v8794
    %v8796 = vpop.f32.mrf.mxu0
    %v8797 = vadd.f32 %v2264, %v8796
    %v8798 = vpop.f32.mrf.mxu0
    %v8799 = vpop.f32.mrf.mxu0
    %8800 = vdwg.mxu0
    %s8801 = scalar_lea.vmem [#allocation17], 37
    %v8802 = vld [vmem:[%s8801] ss:$8 sm:$0x3]
    %v8804 = vlaneseq
    %v8805 = vshrl.u32 %v8804, 7
    %v8806 = vsub.s32 0, %v8805
    %v8807 = vrot.slane %v8802, %v8806
    %v8808 = vlaneseq
    %v8809 = vshrl.u32 %v8808, 7
    %v8810 = vsub.s32 1, %v8809
    %v8811 = vrot.slane %v8802, %v8810
    %v8814 = vadd.f32 %v8795, %v8807
    %v8815 = vadd.f32 %v8797, %v8811
    %v8816 = vmul.f32 %v8814, 0.5
    %v8817 = vmul.f32 %v8815, 0.5
    %v8818 = vtanh.pop %v8816
    %v8819 = vtanh.pop %v8817
    %v8820 = vadd.f32 %v8818, 1.0
    %v8821 = vadd.f32 %v8819, 1.0
    %v8822 = vmul.f32 %v8820, 0.5
    %v8823 = vmul.f32 %v8821, 0.5
    %v8824 = vmul.f32 %v8814, %v8822
    %v8825 = vmul.f32 %v8815, %v8823
    %s8826 = scalar_lea.vmem [#allocation3], 256
    %v8827 = vld [vmem:[%s8826] sm:$0xff]
    %v8828 = vld [vmem:[%s8826 + $0x8] sm:$0xff]
    %v8829 = vld [vmem:[%s8826 + $0x10] sm:$0xff]
    %v8830 = vld [vmem:[%s8826 + $0x18] sm:$0xff]
    %v8831 = vld [vmem:[%s8826 + $0x20] sm:$0xff]
    %v8832 = vld [vmem:[%s8826 + $0x28] sm:$0xff]
    %v8833 = vld [vmem:[%s8826 + $0x30] sm:$0xff]
    %v8834 = vld [vmem:[%s8826 + $0x38] sm:$0xff]
    %v8835 = vld [vmem:[%s8826 + $0x40] sm:$0xff]
    %v8836 = vld [vmem:[%s8826 + $0x48] sm:$0xff]
    %v8837 = vld [vmem:[%s8826 + $0x50] sm:$0xff]
    %v8838 = vld [vmem:[%s8826 + $0x58] sm:$0xff]
    %v8839 = vld [vmem:[%s8826 + $0x60] sm:$0xff]
    %v8840 = vld [vmem:[%s8826 + $0x68] sm:$0xff]
    %v8841 = vld [vmem:[%s8826 + $0x70] sm:$0xff]
    %v8842 = vld [vmem:[%s8826 + $0x78] sm:$0xff]
    %v8843 = vld [vmem:[%s8826 + $0x80] sm:$0xff]
    %v8844 = vld [vmem:[%s8826 + $0x88] sm:$0xff]
    %v8845 = vld [vmem:[%s8826 + $0x90] sm:$0xff]
    %v8846 = vld [vmem:[%s8826 + $0x98] sm:$0xff]
    %v8847 = vld [vmem:[%s8826 + $0xa0] sm:$0xff]
    %v8848 = vld [vmem:[%s8826 + $0xa8] sm:$0xff]
    %v8849 = vld [vmem:[%s8826 + $0xb0] sm:$0xff]
    %v8850 = vld [vmem:[%s8826 + $0xb8] sm:$0xff]
    %v8851 = vld [vmem:[%s8826 + $0xc0] sm:$0xff]
    %v8852 = vld [vmem:[%s8826 + $0xc8] sm:$0xff]
    %v8853 = vld [vmem:[%s8826 + $0xd0] sm:$0xff]
    %v8854 = vld [vmem:[%s8826 + $0xd8] sm:$0xff]
    %v8855 = vld [vmem:[%s8826 + $0xe0] sm:$0xff]
    %v8856 = vld [vmem:[%s8826 + $0xe8] sm:$0xff]
    %v8857 = vld [vmem:[%s8826 + $0xf0] sm:$0xff]
    %v8858 = vld [vmem:[%s8826 + $0xf8] sm:$0xff]
    %v8859 = vpack.c.bf16 %v8824, %v8824
    %v8860 = vpack.c.bf16 %v8825, %v8825
    %s8861 = scalar_lea.vmem [#allocation17], 38
    %v8862 = vld [vmem:[%s8861] ss:$8 sm:$0x3]
    %v8864 = vlaneseq
    %v8865 = vshrl.u32 %v8864, 7
    %v8866 = vsub.s32 0, %v8865
    %v8867 = vrot.slane %v8862, %v8866
    %v8868 = vlaneseq
    %v8869 = vshrl.u32 %v8868, 7
    %v8870 = vsub.s32 1, %v8869
    %v8871 = vrot.slane %v8862, %v8870
    %v8906 = vunpack.c.l.b16 %v8827
    %v8907 = vunpack.c.h.b16 %v8827
    %v8908 = vunpack.c.l.b16 %v8828
    %v8909 = vunpack.c.h.b16 %v8828
    %v8910 = vunpack.c.l.b16 %v8829
    %v8911 = vunpack.c.h.b16 %v8829
    %v8912 = vunpack.c.l.b16 %v8830
    %v8913 = vunpack.c.h.b16 %v8830
    %v8914 = vunpack.c.l.b16 %v8831
    %v8915 = vunpack.c.h.b16 %v8831
    %v8916 = vunpack.c.l.b16 %v8832
    %v8917 = vunpack.c.h.b16 %v8832
    %v8918 = vunpack.c.l.b16 %v8833
    %v8919 = vunpack.c.h.b16 %v8833
    %v8920 = vunpack.c.l.b16 %v8834
    %v8921 = vunpack.c.h.b16 %v8834
    %v8922 = vunpack.c.l.b16 %v8835
    %v8923 = vunpack.c.h.b16 %v8835
    %v8924 = vunpack.c.l.b16 %v8836
    %v8925 = vunpack.c.h.b16 %v8836
    %v8926 = vunpack.c.l.b16 %v8837
    %v8927 = vunpack.c.h.b16 %v8837
    %v8928 = vunpack.c.l.b16 %v8838
    %v8929 = vunpack.c.h.b16 %v8838
    %v8930 = vunpack.c.l.b16 %v8839
    %v8931 = vunpack.c.h.b16 %v8839
    %v8932 = vunpack.c.l.b16 %v8840
    %v8933 = vunpack.c.h.b16 %v8840
    %v8934 = vunpack.c.l.b16 %v8841
    %v8935 = vunpack.c.h.b16 %v8841
    %v8936 = vunpack.c.l.b16 %v8842
    %v8937 = vunpack.c.h.b16 %v8842
    %v8938 = vunpack.c.l.b16 %v8843
    %v8939 = vunpack.c.h.b16 %v8843
    %v8940 = vunpack.c.l.b16 %v8844
    %v8941 = vunpack.c.h.b16 %v8844
    %v8942 = vunpack.c.l.b16 %v8845
    %v8943 = vunpack.c.h.b16 %v8845
    %v8944 = vunpack.c.l.b16 %v8846
    %v8945 = vunpack.c.h.b16 %v8846
    %v8946 = vunpack.c.l.b16 %v8847
    %v8947 = vunpack.c.h.b16 %v8847
    %v8948 = vunpack.c.l.b16 %v8848
    %v8949 = vunpack.c.h.b16 %v8848
    %v8950 = vunpack.c.l.b16 %v8849
    %v8951 = vunpack.c.h.b16 %v8849
    %v8952 = vunpack.c.l.b16 %v8850
    %v8953 = vunpack.c.h.b16 %v8850
    %v8954 = vunpack.c.l.b16 %v8851
    %v8955 = vunpack.c.h.b16 %v8851
    %v8956 = vunpack.c.l.b16 %v8852
    %v8957 = vunpack.c.h.b16 %v8852
    %v8958 = vunpack.c.l.b16 %v8853
    %v8959 = vunpack.c.h.b16 %v8853
    %v8960 = vunpack.c.l.b16 %v8854
    %v8961 = vunpack.c.h.b16 %v8854
    %v8962 = vunpack.c.l.b16 %v8855
    %v8963 = vunpack.c.h.b16 %v8855
    %v8964 = vunpack.c.l.b16 %v8856
    %v8965 = vunpack.c.h.b16 %v8856
    %v8966 = vunpack.c.l.b16 %v8857
    %v8967 = vunpack.c.h.b16 %v8857
    %v8968 = vunpack.c.l.b16 %v8858
    %v8969 = vunpack.c.h.b16 %v8858
    %v8970 = vpack.c.b16 %v8908, %v8906
    %v8971 = vpack.c.b16 %v8909, %v8907
    %v8972 = vpack.c.b16 %v8912, %v8910
    %v8973 = vpack.c.b16 %v8913, %v8911
    %v8974 = vpack.c.b16 %v8916, %v8914
    %v8975 = vpack.c.b16 %v8917, %v8915
    %v8976 = vpack.c.b16 %v8920, %v8918
    %v8977 = vpack.c.b16 %v8921, %v8919
    %v8978 = vpack.c.b16 %v8924, %v8922
    %v8979 = vpack.c.b16 %v8925, %v8923
    %v8980 = vpack.c.b16 %v8928, %v8926
    %v8981 = vpack.c.b16 %v8929, %v8927
    %v8982 = vpack.c.b16 %v8932, %v8930
    %v8983 = vpack.c.b16 %v8933, %v8931
    %v8984 = vpack.c.b16 %v8936, %v8934
    %v8985 = vpack.c.b16 %v8937, %v8935
    %v8986 = vpack.c.b16 %v8940, %v8938
    %v8987 = vpack.c.b16 %v8941, %v8939
    %v8988 = vpack.c.b16 %v8944, %v8942
    %v8989 = vpack.c.b16 %v8945, %v8943
    %v8990 = vpack.c.b16 %v8948, %v8946
    %v8991 = vpack.c.b16 %v8949, %v8947
    %v8992 = vpack.c.b16 %v8952, %v8950
    %v8993 = vpack.c.b16 %v8953, %v8951
    %v8994 = vpack.c.b16 %v8956, %v8954
    %v8995 = vpack.c.b16 %v8957, %v8955
    %v8996 = vpack.c.b16 %v8960, %v8958
    %v8997 = vpack.c.b16 %v8961, %v8959
    %v8998 = vpack.c.b16 %v8964, %v8962
    %v8999 = vpack.c.b16 %v8965, %v8963
    %v9000 = vpack.c.b16 %v8968, %v8966
    %v9001 = vpack.c.b16 %v8969, %v8967
    %9034 = vmatprep.subr.bf16.mxu0 %v8985
    %9035 = vmatpush1.bf16.msra.mxu0 %v8984
    %9036 = vmatprep.subr.bf16.mxu0 %v8983
    %9037 = vmatpush1.bf16.msra.mxu0 %v8982
    %9038 = vmatprep.subr.bf16.mxu0 %v8981
    %9039 = vmatpush1.bf16.msra.mxu0 %v8980
    %9040 = vmatprep.subr.bf16.mxu0 %v8979
    %9041 = vmatpush1.bf16.msra.mxu0 %v8978
    %9042 = vmatprep.subr.bf16.mxu0 %v8977
    %9043 = vmatpush1.bf16.msra.mxu0 %v8976
    %9044 = vmatprep.subr.bf16.mxu0 %v8975
    %9045 = vmatpush1.bf16.msra.mxu0 %v8974
    %9046 = vmatprep.subr.bf16.mxu0 %v8973
    %9047 = vmatpush1.bf16.msra.mxu0 %v8972
    %9048 = vmatprep.subr.bf16.mxu0 %v8971
    %9049 = vmatpush1.bf16.msra.mxu0 %v8970
    %9050 = vmatprep.subr.bf16.mxu0 %v9001
    %9051 = vmatpush2.bf16.msra.mxu0 %v9000
    %9052 = vmatprep.subr.bf16.mxu0 %v8999
    %9053 = vmatpush2.bf16.msra.mxu0 %v8998
    %9054 = vmatprep.subr.bf16.mxu0 %v8997
    %9055 = vmatpush2.bf16.msra.mxu0 %v8996
    %9056 = vmatprep.subr.bf16.mxu0 %v8995
    %9057 = vmatpush2.bf16.msra.mxu0 %v8994
    %9058 = vmatprep.subr.bf16.mxu0 %v8993
    %9059 = vmatpush2.bf16.msra.mxu0 %v8992
    %9060 = vmatprep.subr.bf16.mxu0 %v8991
    %9061 = vmatpush2.bf16.msra.mxu0 %v8990
    %9062 = vmatprep.subr.bf16.mxu0 %v8989
    %9063 = vmatpush2.bf16.msra.mxu0 %v8988
    %9064 = vmatprep.subr.bf16.mxu0 %v8987
    %9065 = vmatpush2.bf16.msra.mxu0 %v8986
    %9066 = vmatprep.mubr.bf16.mxu0 %v8860
    %9067 = vmatmul.mubr.bf16.gmra.mxu0 %v8859
    %v9068 = vpop.f32.mrf.mxu0
    %v9069 = vadd.f32 %v8867, %v9068
    %v9070 = vpop.f32.mrf.mxu0
    %v9071 = vadd.f32 %v8871, %v9070
    %v9072 = vpop.f32.mrf.mxu0
    %v9073 = vpop.f32.mrf.mxu0
    %9074 = vdwg.mxu0
    %v9075 = vmul.f32 %v9069, 0.5
    %v9076 = vmul.f32 %v9071, 0.5
    %v9077 = vtanh.pop %v9075
    %v9078 = vtanh.pop %v9076
    %v9079 = vadd.f32 %v9077, 1.0
    %v9080 = vadd.f32 %v9078, 1.0
    %v9081 = vmul.f32 %v9079, 0.5
    %v9082 = vmul.f32 %v9080, 0.5
    %v9083 = vmul.f32 %v9069, %v9081
    %v9084 = vmul.f32 %v9071, %v9082
    %s9085 = scalar_lea.vmem [#allocation3], 512
    %v9086 = vld [vmem:[%s9085] sm:$0xff]
    %v9087 = vld [vmem:[%s9085 + $0x8] sm:$0xff]
    %v9088 = vld [vmem:[%s9085 + $0x10] sm:$0xff]
    %v9089 = vld [vmem:[%s9085 + $0x18] sm:$0xff]
    %v9090 = vld [vmem:[%s9085 + $0x20] sm:$0xff]
    %v9091 = vld [vmem:[%s9085 + $0x28] sm:$0xff]
    %v9092 = vld [vmem:[%s9085 + $0x30] sm:$0xff]
    %v9093 = vld [vmem:[%s9085 + $0x38] sm:$0xff]
    %v9094 = vld [vmem:[%s9085 + $0x40] sm:$0xff]
    %v9095 = vld [vmem:[%s9085 + $0x48] sm:$0xff]
    %v9096 = vld [vmem:[%s9085 + $0x50] sm:$0xff]
    %v9097 = vld [vmem:[%s9085 + $0x58] sm:$0xff]
    %v9098 = vld [vmem:[%s9085 + $0x60] sm:$0xff]
    %v9099 = vld [vmem:[%s9085 + $0x68] sm:$0xff]
    %v9100 = vld [vmem:[%s9085 + $0x70] sm:$0xff]
    %v9101 = vld [vmem:[%s9085 + $0x78] sm:$0xff]
    %v9102 = vld [vmem:[%s9085 + $0x80] sm:$0xff]
    %v9103 = vld [vmem:[%s9085 + $0x88] sm:$0xff]
    %v9104 = vld [vmem:[%s9085 + $0x90] sm:$0xff]
    %v9105 = vld [vmem:[%s9085 + $0x98] sm:$0xff]
    %v9106 = vld [vmem:[%s9085 + $0xa0] sm:$0xff]
    %v9107 = vld [vmem:[%s9085 + $0xa8] sm:$0xff]
    %v9108 = vld [vmem:[%s9085 + $0xb0] sm:$0xff]
    %v9109 = vld [vmem:[%s9085 + $0xb8] sm:$0xff]
    %v9110 = vld [vmem:[%s9085 + $0xc0] sm:$0xff]
    %v9111 = vld [vmem:[%s9085 + $0xc8] sm:$0xff]
    %v9112 = vld [vmem:[%s9085 + $0xd0] sm:$0xff]
    %v9113 = vld [vmem:[%s9085 + $0xd8] sm:$0xff]
    %v9114 = vld [vmem:[%s9085 + $0xe0] sm:$0xff]
    %v9115 = vld [vmem:[%s9085 + $0xe8] sm:$0xff]
    %v9116 = vld [vmem:[%s9085 + $0xf0] sm:$0xff]
    %v9117 = vld [vmem:[%s9085 + $0xf8] sm:$0xff]
    %v9118 = vpack.c.bf16 %v9083, %v9083
    %v9119 = vpack.c.bf16 %v9084, %v9084
    %s9120 = scalar_lea.vmem [#allocation17], 39
    %v9121 = vld [vmem:[%s9120] ss:$8 sm:$0x3]
    %v9123 = vlaneseq
    %v9124 = vshrl.u32 %v9123, 7
    %v9125 = vsub.s32 0, %v9124
    %v9126 = vrot.slane %v9121, %v9125
    %v9127 = vlaneseq
    %v9128 = vshrl.u32 %v9127, 7
    %v9129 = vsub.s32 1, %v9128
    %v9130 = vrot.slane %v9121, %v9129
    %v9165 = vunpack.c.l.b16 %v9086
    %v9166 = vunpack.c.h.b16 %v9086
    %v9167 = vunpack.c.l.b16 %v9087
    %v9168 = vunpack.c.h.b16 %v9087
    %v9169 = vunpack.c.l.b16 %v9088
    %v9170 = vunpack.c.h.b16 %v9088
    %v9171 = vunpack.c.l.b16 %v9089
    %v9172 = vunpack.c.h.b16 %v9089
    %v9173 = vunpack.c.l.b16 %v9090
    %v9174 = vunpack.c.h.b16 %v9090
    %v9175 = vunpack.c.l.b16 %v9091
    %v9176 = vunpack.c.h.b16 %v9091
    %v9177 = vunpack.c.l.b16 %v9092
    %v9178 = vunpack.c.h.b16 %v9092
    %v9179 = vunpack.c.l.b16 %v9093
    %v9180 = vunpack.c.h.b16 %v9093
    %v9181 = vunpack.c.l.b16 %v9094
    %v9182 = vunpack.c.h.b16 %v9094
    %v9183 = vunpack.c.l.b16 %v9095
    %v9184 = vunpack.c.h.b16 %v9095
    %v9185 = vunpack.c.l.b16 %v9096
    %v9186 = vunpack.c.h.b16 %v9096
    %v9187 = vunpack.c.l.b16 %v9097
    %v9188 = vunpack.c.h.b16 %v9097
    %v9189 = vunpack.c.l.b16 %v9098
    %v9190 = vunpack.c.h.b16 %v9098
    %v9191 = vunpack.c.l.b16 %v9099
    %v9192 = vunpack.c.h.b16 %v9099
    %v9193 = vunpack.c.l.b16 %v9100
    %v9194 = vunpack.c.h.b16 %v9100
    %v9195 = vunpack.c.l.b16 %v9101
    %v9196 = vunpack.c.h.b16 %v9101
    %v9197 = vunpack.c.l.b16 %v9102
    %v9198 = vunpack.c.h.b16 %v9102
    %v9199 = vunpack.c.l.b16 %v9103
    %v9200 = vunpack.c.h.b16 %v9103
    %v9201 = vunpack.c.l.b16 %v9104
    %v9202 = vunpack.c.h.b16 %v9104
    %v9203 = vunpack.c.l.b16 %v9105
    %v9204 = vunpack.c.h.b16 %v9105
    %v9205 = vunpack.c.l.b16 %v9106
    %v9206 = vunpack.c.h.b16 %v9106
    %v9207 = vunpack.c.l.b16 %v9107
    %v9208 = vunpack.c.h.b16 %v9107
    %v9209 = vunpack.c.l.b16 %v9108
    %v9210 = vunpack.c.h.b16 %v9108
    %v9211 = vunpack.c.l.b16 %v9109
    %v9212 = vunpack.c.h.b16 %v9109
    %v9213 = vunpack.c.l.b16 %v9110
    %v9214 = vunpack.c.h.b16 %v9110
    %v9215 = vunpack.c.l.b16 %v9111
    %v9216 = vunpack.c.h.b16 %v9111
    %v9217 = vunpack.c.l.b16 %v9112
    %v9218 = vunpack.c.h.b16 %v9112
    %v9219 = vunpack.c.l.b16 %v9113
    %v9220 = vunpack.c.h.b16 %v9113
    %v9221 = vunpack.c.l.b16 %v9114
    %v9222 = vunpack.c.h.b16 %v9114
    %v9223 = vunpack.c.l.b16 %v9115
    %v9224 = vunpack.c.h.b16 %v9115
    %v9225 = vunpack.c.l.b16 %v9116
    %v9226 = vunpack.c.h.b16 %v9116
    %v9227 = vunpack.c.l.b16 %v9117
    %v9228 = vunpack.c.h.b16 %v9117
    %v9229 = vpack.c.b16 %v9167, %v9165
    %v9230 = vpack.c.b16 %v9168, %v9166
    %v9231 = vpack.c.b16 %v9171, %v9169
    %v9232 = vpack.c.b16 %v9172, %v9170
    %v9233 = vpack.c.b16 %v9175, %v9173
    %v9234 = vpack.c.b16 %v9176, %v9174
    %v9235 = vpack.c.b16 %v9179, %v9177
    %v9236 = vpack.c.b16 %v9180, %v9178
    %v9237 = vpack.c.b16 %v9183, %v9181
    %v9238 = vpack.c.b16 %v9184, %v9182
    %v9239 = vpack.c.b16 %v9187, %v9185
    %v9240 = vpack.c.b16 %v9188, %v9186
    %v9241 = vpack.c.b16 %v9191, %v9189
    %v9242 = vpack.c.b16 %v9192, %v9190
    %v9243 = vpack.c.b16 %v9195, %v9193
    %v9244 = vpack.c.b16 %v9196, %v9194
    %v9245 = vpack.c.b16 %v9199, %v9197
    %v9246 = vpack.c.b16 %v9200, %v9198
    %v9247 = vpack.c.b16 %v9203, %v9201
    %v9248 = vpack.c.b16 %v9204, %v9202
    %v9249 = vpack.c.b16 %v9207, %v9205
    %v9250 = vpack.c.b16 %v9208, %v9206
    %v9251 = vpack.c.b16 %v9211, %v9209
    %v9252 = vpack.c.b16 %v9212, %v9210
    %v9253 = vpack.c.b16 %v9215, %v9213
    %v9254 = vpack.c.b16 %v9216, %v9214
    %v9255 = vpack.c.b16 %v9219, %v9217
    %v9256 = vpack.c.b16 %v9220, %v9218
    %v9257 = vpack.c.b16 %v9223, %v9221
    %v9258 = vpack.c.b16 %v9224, %v9222
    %v9259 = vpack.c.b16 %v9227, %v9225
    %v9260 = vpack.c.b16 %v9228, %v9226
    %9293 = vmatprep.subr.bf16.mxu0 %v9244
    %9294 = vmatpush1.bf16.msra.mxu0 %v9243
    %9295 = vmatprep.subr.bf16.mxu0 %v9242
    %9296 = vmatpush1.bf16.msra.mxu0 %v9241
    %9297 = vmatprep.subr.bf16.mxu0 %v9240
    %9298 = vmatpush1.bf16.msra.mxu0 %v9239
    %9299 = vmatprep.subr.bf16.mxu0 %v9238
    %9300 = vmatpush1.bf16.msra.mxu0 %v9237
    %9301 = vmatprep.subr.bf16.mxu0 %v9236
    %9302 = vmatpush1.bf16.msra.mxu0 %v9235
    %9303 = vmatprep.subr.bf16.mxu0 %v9234
    %9304 = vmatpush1.bf16.msra.mxu0 %v9233
    %9305 = vmatprep.subr.bf16.mxu0 %v9232
    %9306 = vmatpush1.bf16.msra.mxu0 %v9231
    %9307 = vmatprep.subr.bf16.mxu0 %v9230
    %9308 = vmatpush1.bf16.msra.mxu0 %v9229
    %9309 = vmatprep.subr.bf16.mxu0 %v9260
    %9310 = vmatpush2.bf16.msra.mxu0 %v9259
    %9311 = vmatprep.subr.bf16.mxu0 %v9258
    %9312 = vmatpush2.bf16.msra.mxu0 %v9257
    %9313 = vmatprep.subr.bf16.mxu0 %v9256
    %9314 = vmatpush2.bf16.msra.mxu0 %v9255
    %9315 = vmatprep.subr.bf16.mxu0 %v9254
    %9316 = vmatpush2.bf16.msra.mxu0 %v9253
    %9317 = vmatprep.subr.bf16.mxu0 %v9252
    %9318 = vmatpush2.bf16.msra.mxu0 %v9251
    %9319 = vmatprep.subr.bf16.mxu0 %v9250
    %9320 = vmatpush2.bf16.msra.mxu0 %v9249
    %9321 = vmatprep.subr.bf16.mxu0 %v9248
    %9322 = vmatpush2.bf16.msra.mxu0 %v9247
    %9323 = vmatprep.subr.bf16.mxu0 %v9246
    %9324 = vmatpush2.bf16.msra.mxu0 %v9245
    %9325 = vmatprep.mubr.bf16.mxu0 %v9119
    %9326 = vmatmul.mubr.bf16.gmra.mxu0 %v9118
    %v9327 = vpop.f32.mrf.mxu0
    %v9328 = vadd.f32 %v9126, %v9327
    %v9329 = vpop.f32.mrf.mxu0
    %v9330 = vadd.f32 %v9130, %v9329
    %v9331 = vpop.f32.mrf.mxu0
    %v9332 = vpop.f32.mrf.mxu0
    %9333 = vdwg.mxu0
    %v9334 = vmul.f32 %v9328, 0.5
    %v9335 = vmul.f32 %v9330, 0.5
    %v9336 = vtanh.pop %v9334
    %v9337 = vtanh.pop %v9335
    %v9338 = vadd.f32 %v9336, 1.0
    %v9339 = vadd.f32 %v9337, 1.0
    %v9340 = vmul.f32 %v9338, 0.5
    %v9341 = vmul.f32 %v9339, 0.5
    %v9342 = vmul.f32 %v9328, %v9340
    %v9343 = vmul.f32 %v9330, %v9341
    %s9344 = scalar_lea.vmem [#allocation3], 768
    %v9345 = vld [vmem:[%s9344] sm:$0xff]
    %v9346 = vld [vmem:[%s9344 + $0x8] sm:$0xff]
    %v9347 = vld [vmem:[%s9344 + $0x10] sm:$0xff]
    %v9348 = vld [vmem:[%s9344 + $0x18] sm:$0xff]
    %v9349 = vld [vmem:[%s9344 + $0x20] sm:$0xff]
    %v9350 = vld [vmem:[%s9344 + $0x28] sm:$0xff]
    %v9351 = vld [vmem:[%s9344 + $0x30] sm:$0xff]
    %v9352 = vld [vmem:[%s9344 + $0x38] sm:$0xff]
    %v9353 = vld [vmem:[%s9344 + $0x40] sm:$0xff]
    %v9354 = vld [vmem:[%s9344 + $0x48] sm:$0xff]
    %v9355 = vld [vmem:[%s9344 + $0x50] sm:$0xff]
    %v9356 = vld [vmem:[%s9344 + $0x58] sm:$0xff]
    %v9357 = vld [vmem:[%s9344 + $0x60] sm:$0xff]
    %v9358 = vld [vmem:[%s9344 + $0x68] sm:$0xff]
    %v9359 = vld [vmem:[%s9344 + $0x70] sm:$0xff]
    %v9360 = vld [vmem:[%s9344 + $0x78] sm:$0xff]
    %v9361 = vld [vmem:[%s9344 + $0x80] sm:$0xff]
    %v9362 = vld [vmem:[%s9344 + $0x88] sm:$0xff]
    %v9363 = vld [vmem:[%s9344 + $0x90] sm:$0xff]
    %v9364 = vld [vmem:[%s9344 + $0x98] sm:$0xff]
    %v9365 = vld [vmem:[%s9344 + $0xa0] sm:$0xff]
    %v9366 = vld [vmem:[%s9344 + $0xa8] sm:$0xff]
    %v9367 = vld [vmem:[%s9344 + $0xb0] sm:$0xff]
    %v9368 = vld [vmem:[%s9344 + $0xb8] sm:$0xff]
    %v9369 = vld [vmem:[%s9344 + $0xc0] sm:$0xff]
    %v9370 = vld [vmem:[%s9344 + $0xc8] sm:$0xff]
    %v9371 = vld [vmem:[%s9344 + $0xd0] sm:$0xff]
    %v9372 = vld [vmem:[%s9344 + $0xd8] sm:$0xff]
    %v9373 = vld [vmem:[%s9344 + $0xe0] sm:$0xff]
    %v9374 = vld [vmem:[%s9344 + $0xe8] sm:$0xff]
    %v9375 = vld [vmem:[%s9344 + $0xf0] sm:$0xff]
    %v9376 = vld [vmem:[%s9344 + $0xf8] sm:$0xff]
    %v9377 = vpack.c.bf16 %v9342, %v9342
    %v9378 = vpack.c.bf16 %v9343, %v9343
    %s9379 = scalar_lea.vmem [#allocation17], 48
    %v9380 = vld [vmem:[%s9379] ss:$8 sm:$0x3]
    %v9382 = vlaneseq
    %v9383 = vshrl.u32 %v9382, 7
    %v9384 = vsub.s32 0, %v9383
    %v9385 = vrot.slane %v9380, %v9384
    %v9386 = vlaneseq
    %v9387 = vshrl.u32 %v9386, 7
    %v9388 = vsub.s32 1, %v9387
    %v9389 = vrot.slane %v9380, %v9388
    %v9424 = vunpack.c.l.b16 %v9345
    %v9425 = vunpack.c.h.b16 %v9345
    %v9426 = vunpack.c.l.b16 %v9346
    %v9427 = vunpack.c.h.b16 %v9346
    %v9428 = vunpack.c.l.b16 %v9347
    %v9429 = vunpack.c.h.b16 %v9347
    %v9430 = vunpack.c.l.b16 %v9348
    %v9431 = vunpack.c.h.b16 %v9348
    %v9432 = vunpack.c.l.b16 %v9349
    %v9433 = vunpack.c.h.b16 %v9349
    %v9434 = vunpack.c.l.b16 %v9350
    %v9435 = vunpack.c.h.b16 %v9350
    %v9436 = vunpack.c.l.b16 %v9351
    %v9437 = vunpack.c.h.b16 %v9351
    %v9438 = vunpack.c.l.b16 %v9352
    %v9439 = vunpack.c.h.b16 %v9352
    %v9440 = vunpack.c.l.b16 %v9353
    %v9441 = vunpack.c.h.b16 %v9353
    %v9442 = vunpack.c.l.b16 %v9354
    %v9443 = vunpack.c.h.b16 %v9354
    %v9444 = vunpack.c.l.b16 %v9355
    %v9445 = vunpack.c.h.b16 %v9355
    %v9446 = vunpack.c.l.b16 %v9356
    %v9447 = vunpack.c.h.b16 %v9356
    %v9448 = vunpack.c.l.b16 %v9357
    %v9449 = vunpack.c.h.b16 %v9357
    %v9450 = vunpack.c.l.b16 %v9358
    %v9451 = vunpack.c.h.b16 %v9358
    %v9452 = vunpack.c.l.b16 %v9359
    %v9453 = vunpack.c.h.b16 %v9359
    %v9454 = vunpack.c.l.b16 %v9360
    %v9455 = vunpack.c.h.b16 %v9360
    %v9456 = vunpack.c.l.b16 %v9361
    %v9457 = vunpack.c.h.b16 %v9361
    %v9458 = vunpack.c.l.b16 %v9362
    %v9459 = vunpack.c.h.b16 %v9362
    %v9460 = vunpack.c.l.b16 %v9363
    %v9461 = vunpack.c.h.b16 %v9363
    %v9462 = vunpack.c.l.b16 %v9364
    %v9463 = vunpack.c.h.b16 %v9364
    %v9464 = vunpack.c.l.b16 %v9365
    %v9465 = vunpack.c.h.b16 %v9365
    %v9466 = vunpack.c.l.b16 %v9366
    %v9467 = vunpack.c.h.b16 %v9366
    %v9468 = vunpack.c.l.b16 %v9367
    %v9469 = vunpack.c.h.b16 %v9367
    %v9470 = vunpack.c.l.b16 %v9368
    %v9471 = vunpack.c.h.b16 %v9368
    %v9472 = vunpack.c.l.b16 %v9369
    %v9473 = vunpack.c.h.b16 %v9369
    %v9474 = vunpack.c.l.b16 %v9370
    %v9475 = vunpack.c.h.b16 %v9370
    %v9476 = vunpack.c.l.b16 %v9371
    %v9477 = vunpack.c.h.b16 %v9371
    %v9478 = vunpack.c.l.b16 %v9372
    %v9479 = vunpack.c.h.b16 %v9372
    %v9480 = vunpack.c.l.b16 %v9373
    %v9481 = vunpack.c.h.b16 %v9373
    %v9482 = vunpack.c.l.b16 %v9374
    %v9483 = vunpack.c.h.b16 %v9374
    %v9484 = vunpack.c.l.b16 %v9375
    %v9485 = vunpack.c.h.b16 %v9375
    %v9486 = vunpack.c.l.b16 %v9376
    %v9487 = vunpack.c.h.b16 %v9376
    %v9488 = vpack.c.b16 %v9426, %v9424
    %v9489 = vpack.c.b16 %v9427, %v9425
    %v9490 = vpack.c.b16 %v9430, %v9428
    %v9491 = vpack.c.b16 %v9431, %v9429
    %v9492 = vpack.c.b16 %v9434, %v9432
    %v9493 = vpack.c.b16 %v9435, %v9433
    %v9494 = vpack.c.b16 %v9438, %v9436
    %v9495 = vpack.c.b16 %v9439, %v9437
    %v9496 = vpack.c.b16 %v9442, %v9440
    %v9497 = vpack.c.b16 %v9443, %v9441
    %v9498 = vpack.c.b16 %v9446, %v9444
    %v9499 = vpack.c.b16 %v9447, %v9445
    %v9500 = vpack.c.b16 %v9450, %v9448
    %v9501 = vpack.c.b16 %v9451, %v9449
    %v9502 = vpack.c.b16 %v9454, %v9452
    %v9503 = vpack.c.b16 %v9455, %v9453
    %v9504 = vpack.c.b16 %v9458, %v9456
    %v9505 = vpack.c.b16 %v9459, %v9457
    %v9506 = vpack.c.b16 %v9462, %v9460
    %v9507 = vpack.c.b16 %v9463, %v9461
    %v9508 = vpack.c.b16 %v9466, %v9464
    %v9509 = vpack.c.b16 %v9467, %v9465
    %v9510 = vpack.c.b16 %v9470, %v9468
    %v9511 = vpack.c.b16 %v9471, %v9469
    %v9512 = vpack.c.b16 %v9474, %v9472
    %v9513 = vpack.c.b16 %v9475, %v9473
    %v9514 = vpack.c.b16 %v9478, %v9476
    %v9515 = vpack.c.b16 %v9479, %v9477
    %v9516 = vpack.c.b16 %v9482, %v9480
    %v9517 = vpack.c.b16 %v9483, %v9481
    %v9518 = vpack.c.b16 %v9486, %v9484
    %v9519 = vpack.c.b16 %v9487, %v9485
    %9552 = vmatprep.subr.bf16.mxu0 %v9503
    %9553 = vmatpush1.bf16.msra.mxu0 %v9502
    %9554 = vmatprep.subr.bf16.mxu0 %v9501
    %9555 = vmatpush1.bf16.msra.mxu0 %v9500
    %9556 = vmatprep.subr.bf16.mxu0 %v9499
    %9557 = vmatpush1.bf16.msra.mxu0 %v9498
    %9558 = vmatprep.subr.bf16.mxu0 %v9497
    %9559 = vmatpush1.bf16.msra.mxu0 %v9496
    %9560 = vmatprep.subr.bf16.mxu0 %v9495
    %9561 = vmatpush1.bf16.msra.mxu0 %v9494
    %9562 = vmatprep.subr.bf16.mxu0 %v9493
    %9563 = vmatpush1.bf16.msra.mxu0 %v9492
    %9564 = vmatprep.subr.bf16.mxu0 %v9491
    %9565 = vmatpush1.bf16.msra.mxu0 %v9490
    %9566 = vmatprep.subr.bf16.mxu0 %v9489
    %9567 = vmatpush1.bf16.msra.mxu0 %v9488
    %9568 = vmatprep.subr.bf16.mxu0 %v9519
    %9569 = vmatpush2.bf16.msra.mxu0 %v9518
    %9570 = vmatprep.subr.bf16.mxu0 %v9517
    %9571 = vmatpush2.bf16.msra.mxu0 %v9516
    %9572 = vmatprep.subr.bf16.mxu0 %v9515
    %9573 = vmatpush2.bf16.msra.mxu0 %v9514
    %9574 = vmatprep.subr.bf16.mxu0 %v9513
    %9575 = vmatpush2.bf16.msra.mxu0 %v9512
    %9576 = vmatprep.subr.bf16.mxu0 %v9511
    %9577 = vmatpush2.bf16.msra.mxu0 %v9510
    %9578 = vmatprep.subr.bf16.mxu0 %v9509
    %9579 = vmatpush2.bf16.msra.mxu0 %v9508
    %9580 = vmatprep.subr.bf16.mxu0 %v9507
    %9581 = vmatpush2.bf16.msra.mxu0 %v9506
    %9582 = vmatprep.subr.bf16.mxu0 %v9505
    %9583 = vmatpush2.bf16.msra.mxu0 %v9504
    %9584 = vmatprep.mubr.bf16.mxu0 %v9378
    %9585 = vmatmul.mubr.bf16.gmra.mxu0 %v9377
    %v9586 = vpop.f32.mrf.mxu0
    %v9587 = vadd.f32 %v9385, %v9586
    %v9588 = vpop.f32.mrf.mxu0
    %v9589 = vadd.f32 %v9389, %v9588
    %v9590 = vpop.f32.mrf.mxu0
    %v9591 = vpop.f32.mrf.mxu0
    %9592 = vdwg.mxu0
    %v9593 = vmul.f32 %v9587, 0.5
    %v9594 = vmul.f32 %v9589, 0.5
    %v9595 = vtanh.pop %v9593
    %v9596 = vtanh.pop %v9594
    %v9597 = vadd.f32 %v9595, 1.0
    %v9598 = vadd.f32 %v9596, 1.0
    %v9599 = vmul.f32 %v9597, 0.5
    %v9600 = vmul.f32 %v9598, 0.5
    %v9601 = vmul.f32 %v9587, %v9599
    %v9602 = vmul.f32 %v9589, %v9600
    %s9603 = scalar_lea.vmem [#allocation3], 1024
    %v9604 = vld [vmem:[%s9603] sm:$0xff]
    %v9605 = vld [vmem:[%s9603 + $0x8] sm:$0xff]
    %v9606 = vld [vmem:[%s9603 + $0x10] sm:$0xff]
    %v9607 = vld [vmem:[%s9603 + $0x18] sm:$0xff]
    %v9608 = vld [vmem:[%s9603 + $0x20] sm:$0xff]
    %v9609 = vld [vmem:[%s9603 + $0x28] sm:$0xff]
    %v9610 = vld [vmem:[%s9603 + $0x30] sm:$0xff]
    %v9611 = vld [vmem:[%s9603 + $0x38] sm:$0xff]
    %v9612 = vld [vmem:[%s9603 + $0x40] sm:$0xff]
    %v9613 = vld [vmem:[%s9603 + $0x48] sm:$0xff]
    %v9614 = vld [vmem:[%s9603 + $0x50] sm:$0xff]
    %v9615 = vld [vmem:[%s9603 + $0x58] sm:$0xff]
    %v9616 = vld [vmem:[%s9603 + $0x60] sm:$0xff]
    %v9617 = vld [vmem:[%s9603 + $0x68] sm:$0xff]
    %v9618 = vld [vmem:[%s9603 + $0x70] sm:$0xff]
    %v9619 = vld [vmem:[%s9603 + $0x78] sm:$0xff]
    %v9620 = vld [vmem:[%s9603 + $0x80] sm:$0xff]
    %v9621 = vld [vmem:[%s9603 + $0x88] sm:$0xff]
    %v9622 = vld [vmem:[%s9603 + $0x90] sm:$0xff]
    %v9623 = vld [vmem:[%s9603 + $0x98] sm:$0xff]
    %v9624 = vld [vmem:[%s9603 + $0xa0] sm:$0xff]
    %v9625 = vld [vmem:[%s9603 + $0xa8] sm:$0xff]
    %v9626 = vld [vmem:[%s9603 + $0xb0] sm:$0xff]
    %v9627 = vld [vmem:[%s9603 + $0xb8] sm:$0xff]
    %v9628 = vld [vmem:[%s9603 + $0xc0] sm:$0xff]
    %v9629 = vld [vmem:[%s9603 + $0xc8] sm:$0xff]
    %v9630 = vld [vmem:[%s9603 + $0xd0] sm:$0xff]
    %v9631 = vld [vmem:[%s9603 + $0xd8] sm:$0xff]
    %v9632 = vld [vmem:[%s9603 + $0xe0] sm:$0xff]
    %v9633 = vld [vmem:[%s9603 + $0xe8] sm:$0xff]
    %v9634 = vld [vmem:[%s9603 + $0xf0] sm:$0xff]
    %v9635 = vld [vmem:[%s9603 + $0xf8] sm:$0xff]
    %v9636 = vpack.c.bf16 %v9601, %v9601
    %v9637 = vpack.c.bf16 %v9602, %v9602
    %s9638 = scalar_lea.vmem [#allocation17], 49
    %v9639 = vld [vmem:[%s9638] ss:$8 sm:$0x3]
    %v9641 = vlaneseq
    %v9642 = vshrl.u32 %v9641, 7
    %v9643 = vsub.s32 0, %v9642
    %v9644 = vrot.slane %v9639, %v9643
    %v9645 = vlaneseq
    %v9646 = vshrl.u32 %v9645, 7
    %v9647 = vsub.s32 1, %v9646
    %v9648 = vrot.slane %v9639, %v9647
    %v9683 = vunpack.c.l.b16 %v9604
    %v9684 = vunpack.c.h.b16 %v9604
    %v9685 = vunpack.c.l.b16 %v9605
    %v9686 = vunpack.c.h.b16 %v9605
    %v9687 = vunpack.c.l.b16 %v9606
    %v9688 = vunpack.c.h.b16 %v9606
    %v9689 = vunpack.c.l.b16 %v9607
    %v9690 = vunpack.c.h.b16 %v9607
    %v9691 = vunpack.c.l.b16 %v9608
    %v9692 = vunpack.c.h.b16 %v9608
    %v9693 = vunpack.c.l.b16 %v9609
    %v9694 = vunpack.c.h.b16 %v9609
    %v9695 = vunpack.c.l.b16 %v9610
    %v9696 = vunpack.c.h.b16 %v9610
    %v9697 = vunpack.c.l.b16 %v9611
    %v9698 = vunpack.c.h.b16 %v9611
    %v9699 = vunpack.c.l.b16 %v9612
    %v9700 = vunpack.c.h.b16 %v9612
    %v9701 = vunpack.c.l.b16 %v9613
    %v9702 = vunpack.c.h.b16 %v9613
    %v9703 = vunpack.c.l.b16 %v9614
    %v9704 = vunpack.c.h.b16 %v9614
    %v9705 = vunpack.c.l.b16 %v9615
    %v9706 = vunpack.c.h.b16 %v9615
    %v9707 = vunpack.c.l.b16 %v9616
    %v9708 = vunpack.c.h.b16 %v9616
    %v9709 = vunpack.c.l.b16 %v9617
    %v9710 = vunpack.c.h.b16 %v9617
    %v9711 = vunpack.c.l.b16 %v9618
    %v9712 = vunpack.c.h.b16 %v9618
    %v9713 = vunpack.c.l.b16 %v9619
    %v9714 = vunpack.c.h.b16 %v9619
    %v9715 = vunpack.c.l.b16 %v9620
    %v9716 = vunpack.c.h.b16 %v9620
    %v9717 = vunpack.c.l.b16 %v9621
    %v9718 = vunpack.c.h.b16 %v9621
    %v9719 = vunpack.c.l.b16 %v9622
    %v9720 = vunpack.c.h.b16 %v9622
    %v9721 = vunpack.c.l.b16 %v9623
    %v9722 = vunpack.c.h.b16 %v9623
    %v9723 = vunpack.c.l.b16 %v9624
    %v9724 = vunpack.c.h.b16 %v9624
    %v9725 = vunpack.c.l.b16 %v9625
    %v9726 = vunpack.c.h.b16 %v9625
    %v9727 = vunpack.c.l.b16 %v9626
    %v9728 = vunpack.c.h.b16 %v9626
    %v9729 = vunpack.c.l.b16 %v9627
    %v9730 = vunpack.c.h.b16 %v9627
    %v9731 = vunpack.c.l.b16 %v9628
    %v9732 = vunpack.c.h.b16 %v9628
    %v9733 = vunpack.c.l.b16 %v9629
    %v9734 = vunpack.c.h.b16 %v9629
    %v9735 = vunpack.c.l.b16 %v9630
    %v9736 = vunpack.c.h.b16 %v9630
    %v9737 = vunpack.c.l.b16 %v9631
    %v9738 = vunpack.c.h.b16 %v9631
    %v9739 = vunpack.c.l.b16 %v9632
    %v9740 = vunpack.c.h.b16 %v9632
    %v9741 = vunpack.c.l.b16 %v9633
    %v9742 = vunpack.c.h.b16 %v9633
    %v9743 = vunpack.c.l.b16 %v9634
    %v9744 = vunpack.c.h.b16 %v9634
    %v9745 = vunpack.c.l.b16 %v9635
    %v9746 = vunpack.c.h.b16 %v9635
    %v9747 = vpack.c.b16 %v9685, %v9683
    %v9748 = vpack.c.b16 %v9686, %v9684
    %v9749 = vpack.c.b16 %v9689, %v9687
    %v9750 = vpack.c.b16 %v9690, %v9688
    %v9751 = vpack.c.b16 %v9693, %v9691
    %v9752 = vpack.c.b16 %v9694, %v9692
    %v9753 = vpack.c.b16 %v9697, %v9695
    %v9754 = vpack.c.b16 %v9698, %v9696
    %v9755 = vpack.c.b16 %v9701, %v9699
    %v9756 = vpack.c.b16 %v9702, %v9700
    %v9757 = vpack.c.b16 %v9705, %v9703
    %v9758 = vpack.c.b16 %v9706, %v9704
    %v9759 = vpack.c.b16 %v9709, %v9707
    %v9760 = vpack.c.b16 %v9710, %v9708
    %v9761 = vpack.c.b16 %v9713, %v9711
    %v9762 = vpack.c.b16 %v9714, %v9712
    %v9763 = vpack.c.b16 %v9717, %v9715
    %v9764 = vpack.c.b16 %v9718, %v9716
    %v9765 = vpack.c.b16 %v9721, %v9719
    %v9766 = vpack.c.b16 %v9722, %v9720
    %v9767 = vpack.c.b16 %v9725, %v9723
    %v9768 = vpack.c.b16 %v9726, %v9724
    %v9769 = vpack.c.b16 %v9729, %v9727
    %v9770 = vpack.c.b16 %v9730, %v9728
    %v9771 = vpack.c.b16 %v9733, %v9731
    %v9772 = vpack.c.b16 %v9734, %v9732
    %v9773 = vpack.c.b16 %v9737, %v9735
    %v9774 = vpack.c.b16 %v9738, %v9736
    %v9775 = vpack.c.b16 %v9741, %v9739
    %v9776 = vpack.c.b16 %v9742, %v9740
    %v9777 = vpack.c.b16 %v9745, %v9743
    %v9778 = vpack.c.b16 %v9746, %v9744
    %9811 = vmatprep.subr.bf16.mxu0 %v9762
    %9812 = vmatpush1.bf16.msra.mxu0 %v9761
    %9813 = vmatprep.subr.bf16.mxu0 %v9760
    %9814 = vmatpush1.bf16.msra.mxu0 %v9759
    %9815 = vmatprep.subr.bf16.mxu0 %v9758
    %9816 = vmatpush1.bf16.msra.mxu0 %v9757
    %9817 = vmatprep.subr.bf16.mxu0 %v9756
    %9818 = vmatpush1.bf16.msra.mxu0 %v9755
    %9819 = vmatprep.subr.bf16.mxu0 %v9754
    %9820 = vmatpush1.bf16.msra.mxu0 %v9753
    %9821 = vmatprep.subr.bf16.mxu0 %v9752
    %9822 = vmatpush1.bf16.msra.mxu0 %v9751
    %9823 = vmatprep.subr.bf16.mxu0 %v9750
    %9824 = vmatpush1.bf16.msra.mxu0 %v9749
    %9825 = vmatprep.subr.bf16.mxu0 %v9748
    %9826 = vmatpush1.bf16.msra.mxu0 %v9747
    %9827 = vmatprep.subr.bf16.mxu0 %v9778
    %9828 = vmatpush2.bf16.msra.mxu0 %v9777
    %9829 = vmatprep.subr.bf16.mxu0 %v9776
    %9830 = vmatpush2.bf16.msra.mxu0 %v9775
    %9831 = vmatprep.subr.bf16.mxu0 %v9774
    %9832 = vmatpush2.bf16.msra.mxu0 %v9773
    %9833 = vmatprep.subr.bf16.mxu0 %v9772
    %9834 = vmatpush2.bf16.msra.mxu0 %v9771
    %9835 = vmatprep.subr.bf16.mxu0 %v9770
    %9836 = vmatpush2.bf16.msra.mxu0 %v9769
    %9837 = vmatprep.subr.bf16.mxu0 %v9768
    %9838 = vmatpush2.bf16.msra.mxu0 %v9767
    %9839 = vmatprep.subr.bf16.mxu0 %v9766
    %9840 = vmatpush2.bf16.msra.mxu0 %v9765
    %9841 = vmatprep.subr.bf16.mxu0 %v9764
    %9842 = vmatpush2.bf16.msra.mxu0 %v9763
    %9843 = vmatprep.mubr.bf16.mxu0 %v9637
    %9844 = vmatmul.mubr.bf16.gmra.mxu0 %v9636
    %v9845 = vpop.f32.mrf.mxu0
    %v9846 = vadd.f32 %v9644, %v9845
    %v9847 = vpop.f32.mrf.mxu0
    %v9848 = vadd.f32 %v9648, %v9847
    %v9849 = vpop.f32.mrf.mxu0
    %v9850 = vpop.f32.mrf.mxu0
    %9851 = vdwg.mxu0
    %9852 = vst [vmem:[#allocation19] sm:$0xff] %v2891
    %9853 = vst [vmem:[#allocation19 + $0x8] sm:$0xff] %v2893
    %9854 = vst [vmem:[#allocation20] sm:$0xff] %v9846
    %9855 = vst [vmem:[#allocation20 + $0x8] sm:$0xff] %v9848
    %9856 = vst [vmem:[#allocation22] sm:$0xff] %v4408
    %9857 = vst [vmem:[#allocation22 + $0x8] sm:$0xff] %v4410
    // Predicated region
    $region74: #{tpu_custom_call.1} parent=1 // pred_check
      _
    $region75: #{tpu_custom_call.1} parent=1 // pred_check_branch
      %9859 = sbr.rel (0) target = $region77
    $region76: #{tpu_custom_call.1} parent=1 // pred_region
      %s9861 = ssub.s32 256, 256
      %9862 = vsyncadd [#allocation7], %s9861
      %s9864 = sshll.u32 [#allocation19], 4
      %s9865 = int_to_ptr.vmem [resolvable:$true] %s9864
      %9867 = dma.vmem_to_hbm [thread:$0]  %s9865, 256, %s10, [#allocation7]
    $region77: #{tpu_custom_call.1} parent=1 // pred_fallthru
      _
    // Predicated region
    $region78: #{tpu_custom_call.1} parent=1 // pred_check
      _
    $region79: #{tpu_custom_call.1} parent=1 // pred_check_branch
      %9869 = sbr.rel (0) target = $region81
    $region80: #{tpu_custom_call.1} parent=1 // pred_region
      %s9871 = ssub.s32 256, 256
      %9872 = vsyncadd [#allocation21], %s9871
      %s9874 = sshll.u32 [#allocation20], 4
      %s9875 = int_to_ptr.vmem [resolvable:$true] %s9874
      %9877 = dma.vmem_to_hbm [thread:$0]  %s9875, 256, %s11, [#allocation21]
    $region81: #{tpu_custom_call.1} parent=1 // pred_fallthru
      _
    // Predicated region
    $region82: #{tpu_custom_call.1} parent=1 // pred_check
      _
    $region83: #{tpu_custom_call.1} parent=1 // pred_check_branch
      %9879 = sbr.rel (0) target = $region85
    $region84: #{tpu_custom_call.1} parent=1 // pred_region
      %s9881 = ssub.s32 256, 256
      %9882 = vsyncadd [#allocation21], %s9881
      %s9884 = sshll.u32 [#allocation22], 4
      %s9885 = int_to_ptr.vmem [resolvable:$true] %s9884
      %9887 = dma.vmem_to_hbm [thread:$0]  %s9885, 256, %s12, [#allocation21]
    $region85: #{tpu_custom_call.1} parent=1 // pred_fallthru
      _
    // Predicated region
    $region86: #{tpu_custom_call.1} parent=1 // pred_check
      _
    $region87: #{tpu_custom_call.1} parent=1 // pred_check_branch
      %9889 = sbr.rel (0) target = $region89
    $region88: #{tpu_custom_call.1} parent=1 // pred_region
      %9890 = dma.done [#allocation7], 256
    $region89: #{tpu_custom_call.1} parent=1 // pred_fallthru
      _
    // Predicated region
    $region90: #{tpu_custom_call.1} parent=1 // pred_check
      _
    $region91: #{tpu_custom_call.1} parent=1 // pred_check_branch
      %9892 = sbr.rel (0) target = $region93
    $region92: #{tpu_custom_call.1} parent=1 // pred_region
      %9893 = dma.done [#allocation21], 256
    $region93: #{tpu_custom_call.1} parent=1 // pred_fallthru
      _
    // Predicated region
    $region94: #{tpu_custom_call.1} parent=1 // pred_check
      _
    $region95: #{tpu_custom_call.1} parent=1 // pred_check_branch
      %9895 = sbr.rel (0) target = $region97
    $region96: #{tpu_custom_call.1} parent=1 // pred_region
      %9896 = dma.done [#allocation21], 256
    $region97: #{tpu_custom_call.1} parent=1 // pred_fallthru
      _
    %9897 = vsyncpa [#allocation6], 1
    %9898 = vsyncpa [#allocation9], 1
    %9899 = vsyncpa [#allocation12], 1
    %9900 = vsyncpa [#allocation15], 1
    %9901 = vsyncpa [#allocation18], 1
    %9902 = vsyncpa [#allocation7], 1
    %9903 = vsyncpa [#allocation21], 1
  %9904 = vsyncmov [#allocation4]
  %s9905 = vpop.sfrf %9904
  %p9906 = scmp.eq.s32.totalorder %s9905, 0
  %p9907 = pneg %p9906
  %9909 = shalt.err (%p9907)
  %s9910 = scalar_lea.sflag [#allocation4], 1
  %9911 = vsyncmov %s9910
  %s9912 = vpop.sfrf %9911
  %p9913 = scmp.eq.s32.totalorder %s9912, 0
  %p9914 = pneg %p9913
  %9916 = shalt.err (%p9914)

</llo_original>
